<compile_context>
chip_gen: v7x
topology: tpu7x:2x2x1
jax: 0.10.0
libtpu: 0.0.40
codegen_flags: <defaults>
</compile_context>

<pallas_src>
import functools

import numpy as np
import jax
import jax.numpy as jnp
from jax import lax
from jax.experimental import pallas as pl
from jax.experimental.pallas import tpu as pltpu


IMAGENET_MEAN = jnp.array([0.485, 0.456, 0.406], jnp.float32)
IMAGENET_STD = jnp.array([0.229, 0.224, 0.225], jnp.float32)


# -----------------------------------------------------------------------------
# In-kernel helpers (pure value ops: everything stays in VMEM / vregs)
# -----------------------------------------------------------------------------
def _pad1_hw(x):
    """(H, W, C) -> (H+2, W+2, C) zero halo, built with concatenates."""
    H, W, C = x.shape
    zrow = jnp.zeros((1, W, C), x.dtype)
    x = jnp.concatenate([zrow, x, zrow], axis=0)       # (H+2, W, C)
    zcol = jnp.zeros((H + 2, 1, C), x.dtype)
    return jnp.concatenate([zcol, x, zcol], axis=1)    # (H+2, W+2, C)


def _im2col3x3(xpad):
    """(H+2, W+2, C) -> (H*W, 9*C) patch matrix; tap order (ky, kx, c) = HWIO flat."""
    Hp, Wp, C = xpad.shape
    H, W = Hp - 2, Wp - 2
    taps = []
    for ky in range(3):
        rows = xpad[ky:ky + H]                          # major-dim slice (cheap)
        for kx in range(3):
            taps.append(rows[:, kx:kx + W, :])          # (H, W, C)
    patch = jnp.concatenate(taps, axis=-1)              # (H, W, 9C)
    return patch.reshape(H * W, 9 * C)                  # W % 8 == 0 -> cheap merge


def _conv3x3_bn(x_f32, w_ref, s_ref, b_ref):
    """3x3 conv (pad 1) + folded-BN as ONE fat-K MXU matmul.

    x_f32: (H, W, Cin) f32.  Patch is cast to bf16 at the dot (same values as
    casting the activation itself, since rounding is elementwise); accumulation
    and the BN affine stay in f32.  Returns (H*W, Cout) f32 (pre-ReLU).
    """
    patch = _im2col3x3(_pad1_hw(x_f32)).astype(jnp.bfloat16)   # (H*W, 9*Cin)
    acc = jnp.dot(patch, w_ref[...], preferred_element_type=jnp.float32)
    return acc * s_ref[0] + b_ref[0]


# -----------------------------------------------------------------------------
# Fused kernel for VGG block 0: conv0+BN+ReLU -> conv1+BN (+ SSD of f0)
# -----------------------------------------------------------------------------
def _block0_kernel(xin_ref, xtg_ref, w0_ref, w1_ref, s0_ref, b0_ref,
                   s1_ref, b1_ref, act_ref, ssd_ref, *, H, W):
    # xin_ref/xtg_ref : (1, H, W, 8)   normalized images (channels zero-padded 3->8)
    # w0_ref          : (72, 64) bf16  im2col-flattened conv0 weight
    # w1_ref          : (576, 64) bf16 im2col-flattened conv1 weight
    # s*/b*           : (1, 64) f32    folded BN scale / bias
    # act_ref         : (1, H*W, 128) bf16  ReLU(f0) packed [input | target] on lanes
    # ssd_ref         : (1, 8, 128) f32     per-batch sum((f0_in - f0_tg)^2), broadcast
    c1 = w0_ref.shape[-1]

    def stream(x_ref):
        x = x_ref[0]                                            # (H, W, 8) f32
        a = _conv3x3_bn(x, w0_ref, s0_ref, b0_ref)              # conv0 + BN
        a = jnp.maximum(a, 0.0)                                 # ReLU
        f = _conv3x3_bn(a.reshape(H, W, c1), w1_ref, s1_ref, b1_ref)
        return f                                                # (H*W, 64) f32 hooked feature

    f_in = stream(xin_ref)
    f_tg = stream(xtg_ref)

    d = f_in - f_tg
    ssd_ref[0] = jnp.full((8, 128), jnp.sum(d * d), jnp.float32)

    # ReLU'd features packed on lanes -> single 128-wide lane-dense bf16 store.
    act_ref[0] = jnp.concatenate(
        [jnp.maximum(f_in, 0.0), jnp.maximum(f_tg, 0.0)], axis=-1
    ).astype(act_ref.dtype)


def _run_block0(xin, xtg, p0, p1):
    B, H, W, C0 = xin.shape
    c1 = p0["wflat"].shape[-1]
    kernel = functools.partial(_block0_kernel, H=H, W=W)
    act, ssd = pl.pallas_call(
        kernel,
        out_shape=(jax.ShapeDtypeStruct((B, H * W, 2 * c1), jnp.bfloat16),
                   jax.ShapeDtypeStruct((B, 8, 128), jnp.float32)),
        grid=(B,),
        in_specs=[
            pl.BlockSpec((1, H, W, C0), lambda b: (b, 0, 0, 0)),
            pl.BlockSpec((1, H, W, C0), lambda b: (b, 0, 0, 0)),
            pl.BlockSpec(p0["wflat"].shape, lambda b: (0, 0)),
            pl.BlockSpec(p1["wflat"].shape, lambda b: (0, 0)),
            pl.BlockSpec((1, c1), lambda b: (0, 0)),
            pl.BlockSpec((1, c1), lambda b: (0, 0)),
            pl.BlockSpec((1, c1), lambda b: (0, 0)),
            pl.BlockSpec((1, c1), lambda b: (0, 0)),
        ],
        out_specs=(
            pl.BlockSpec((1, H * W, 2 * c1), lambda b: (b, 0, 0)),
            pl.BlockSpec((1, 8, 128), lambda b: (b, 0, 0)),
        ),
        compiler_params=pltpu.CompilerParams(
            dimension_semantics=("parallel",)),   # batch elems independent (v7x megacore)
    )(xin, xtg, p0["wflat"], p1["wflat"], p0["scale"], p0["bias"],
      p1["scale"], p1["bias"])
    return act, ssd


# -----------------------------------------------------------------------------
# Fused kernel for VGG block 1: conv2+BN+ReLU -> conv3+BN + SSD of f1
# (f1 is only needed for the loss, so it is reduced in-kernel and never stored)
# -----------------------------------------------------------------------------
def _block1_kernel(pin_ref, ptg_ref, w2_ref, w3_ref, s2_ref, b2_ref,
                   s3_ref, b3_ref, ssd_ref, *, H, W):
    # pin_ref/ptg_ref : (1, H, W, 64) bf16 pooled ReLU(f0) for input / target
    # w2_ref          : (576, 128) bf16,   w3_ref : (1152, 128) bf16
    # ssd_ref         : (1, 8, 128) f32    per-batch sum((f1_in - f1_tg)^2)
    c2 = w2_ref.shape[-1]

    def stream(p_ref):
        x = p_ref[0].astype(jnp.float32)                        # (H, W, 64)
        a = _conv3x3_bn(x, w2_ref, s2_ref, b2_ref)
        a = jnp.maximum(a, 0.0)
        return _conv3x3_bn(a.reshape(H, W, c2), w3_ref, s3_ref, b3_ref)

    d = stream(pin_ref) - stream(ptg_ref)
    ssd_ref[0] = jnp.full((8, 128), jnp.sum(d * d), jnp.float32)


def _run_block1(p_in, p_tg, p2, p3):
    B, H, W, C1 = p_in.shape
    c2 = p2["wflat"].shape[-1]
    kernel = functools.partial(_block1_kernel, H=H, W=W)
    ssd = pl.pallas_call(
        kernel,
        out_shape=jax.ShapeDtypeStruct((B, 8, 128), jnp.float32),
        grid=(B,),
        in_specs=[
            pl.BlockSpec((1, H, W, C1), lambda b: (b, 0, 0, 0)),
            pl.BlockSpec((1, H, W, C1), lambda b: (b, 0, 0, 0)),
            pl.BlockSpec(p2["wflat"].shape, lambda b: (0, 0)),
            pl.BlockSpec(p3["wflat"].shape, lambda b: (0, 0)),
            pl.BlockSpec((1, c2), lambda b: (0, 0)),
            pl.BlockSpec((1, c2), lambda b: (0, 0)),
            pl.BlockSpec((1, c2), lambda b: (0, 0)),
            pl.BlockSpec((1, c2), lambda b: (0, 0)),
        ],
        out_specs=pl.BlockSpec((1, 8, 128), lambda b: (b, 0, 0)),
        compiler_params=pltpu.CompilerParams(
            dimension_semantics=("parallel",)),
    )(p_in, p_tg, p2["wflat"], p3["wflat"], p2["scale"], p2["bias"],
      p3["scale"], p3["bias"])
    return ssd


# -----------------------------------------------------------------------------
# Wrapper glue: preprocessing, maxpool, parameter init, loss assembly
# -----------------------------------------------------------------------------
def _preprocess(x_nchw):
    """NCHW -> NHWC, ImageNet normalize, zero-pad channels 3 -> 8.

    This operates on the tiny raw image (O(B*H*W*3)), not on activations; the
    channel pad aligns the first conv's im2col contraction to K = 72 (the
    matching weight rows are zero, so the result is unchanged).
    """
    x = jnp.transpose(x_nchw, (0, 2, 3, 1)).astype(jnp.float32)
    x = (x - IMAGENET_MEAN) / IMAGENET_STD
    return jnp.pad(x, ((0, 0), (0, 0), (0, 0), (0, 5)))


def init_params(key):
    """Synthetic, deterministic VGG16-BN prefix params (blocks 0 and 1).

    BN is eval-mode (running stats) folded into per-channel scale/bias; weights
    are also stored im2col-flattened (9*Cin, Cout) in bf16 for the MXU.
    """
    chan_pairs = [(3, 64), (64, 64), (64, 128), (128, 128)]
    eps = 1e-5
    params = []
    for cin, cout in chan_pairs:
        key, k1, k2, k3, k4, k5 = jax.random.split(key, 6)
        w = jax.random.normal(k1, (3, 3, cin, cout), jnp.float32) / (3.0 * cin ** 0.5)
        gamma = 1.0 + 0.1 * jax.random.normal(k2, (cout,), jnp.float32)
        beta = 0.1 * jax.random.normal(k3, (cout,), jnp.float32)
        rmean = 0.1 * jax.random.normal(k4, (cout,), jnp.float32)
        rvar = 1.0 + 0.5 * jax.random.uniform(k5, (cout,), jnp.float32)
        scale = gamma / jnp.sqrt(rvar + eps)
        bias = beta - rmean * scale
        cin_pad = 8 if cin == 3 else cin          # align first conv's K to 8
        wp = w if cin_pad == cin else jnp.pad(w, ((0, 0), (0, 0), (0, cin_pad - cin), (0, 0)))
        params.append(dict(
            w=w,                                                  # HWIO f32 (reference)
            wflat=wp.reshape(9 * cin_pad, cout).astype(jnp.bfloat16),
            scale=scale.reshape(1, cout),
            bias=bias.reshape(1, cout)))
    return params


def feature_loss(inputs_nchw, targets_nchw, params, block_weights):
    B, _, H, W = inputs_nchw.shape
    xin = _preprocess(inputs_nchw)
    xtg = _preprocess(targets_nchw)

    # Block 0 (fused conv pair + f0 SSD), both streams in one kernel.
    act, ssd0 = _run_block0(xin, xtg, params[0], params[1])

    # TODO(synk): 2x2 maxpool kept in plain JAX (even/odd sublane compaction is
    # awkward to lower in Mosaic); it is tiny next to the fused conv kernels.
    r = act.reshape(B, H, W, 128)
    pooled = jnp.max(r.reshape(B, H // 2, 2, W // 2, 2, 128), axis=(2, 4))
    p_in, p_tg = pooled[..., :64], pooled[..., 64:]

    # Block 1 (fused conv pair + f1 SSD); f1 never touches HBM.
    ssd1 = _run_block1(p_in, p_tg, params[2], params[3])

    n0 = B * H * W * 64
    n1 = B * (H // 2) * (W // 2) * 128
    loss = (jnp.float32(block_weights[0]) * jnp.sum(ssd0[:, 0, 0]) / n0 +
            jnp.float32(block_weights[1]) * jnp.sum(ssd1[:, 0, 0]) / n1)
    return loss


# -----------------------------------------------------------------------------
# Pure-JAX reference (mirrors the bf16 matmul inputs / f32 accumulation)
# -----------------------------------------------------------------------------
def _conv_ref(x, p, relu):
    y = lax.conv_general_dilated(
        x.astype(jnp.bfloat16), p["w"].astype(jnp.bfloat16), (1, 1), "SAME",
        dimension_numbers=("NHWC", "HWIO", "NHWC"),
        preferred_element_type=jnp.float32)
    y = y * p["scale"].reshape(-1) + p["bias"].reshape(-1)
    return jnp.maximum(y, 0.0) if relu else y


def _ref_loss(inputs_nchw, targets_nchw, params, block_weights):
    def feats(x_nchw):
        x = jnp.transpose(x_nchw, (0, 2, 3, 1)).astype(jnp.float32)
        x = (x - IMAGENET_MEAN) / IMAGENET_STD
        x = _conv_ref(x, params[0], True)
        f0 = _conv_ref(x, params[1], False)
        B, H, W, C = f0.shape
        x = jnp.maximum(f0, 0.0)
        x = jnp.max(x.reshape(B, H // 2, 2, W // 2, 2, C), axis=(2, 4))
        x = _conv_ref(x, params[2], True)
        f1 = _conv_ref(x, params[3], False)
        return [f0, f1]

    fi, ft = feats(inputs_nchw), feats(targets_nchw)
    loss = jnp.float32(0.0)
    for a, b, w in zip(fi, ft, block_weights):
        loss = loss + jnp.float32(w) * jnp.mean((a - b) ** 2)
    return loss


if __name__ == "__main__":
    key = jax.random.PRNGKey(0)
    kp, ki, kt = jax.random.split(key, 3)

    params = init_params(kp)
    block_weights = [0.5, 1.0]   # weights for blocks=[0, 1]

    B, C, H, W = 2, 3, 16, 16    # NCHW, like the PyTorch module
    inputs = jax.random.uniform(ki, (B, C, H, W), jnp.float32)
    targets = jax.random.uniform(kt, (B, C, H, W), jnp.float32)

    loss_fn = jax.jit(lambda a, b: feature_loss(a, b, params, block_weights))
    loss = jax.block_until_ready(loss_fn(inputs, targets))

    ref = jax.block_until_ready(_ref_loss(inputs, targets, params, block_weights))
    assert np.isfinite(float(loss))
    assert np.allclose(float(loss), float(ref), rtol=5e-2, atol=1e-3), (float(loss), float(ref))

    print("KERNEL_OK")
</pallas_src>

<mosaic_0001>
module attributes {stable_mosaic.version = 11 : i64} {
  func.func @_block0_kernel(%arg0: i32, %arg1: memref<1x16x16x8xf32, #tpu.memory_space<vmem>>, %arg2: memref<1x16x16x8xf32, #tpu.memory_space<vmem>>, %arg3: memref<72x64xbf16, #tpu.memory_space<vmem>>, %arg4: memref<576x64xbf16, #tpu.memory_space<vmem>>, %arg5: memref<1x64xf32, #tpu.memory_space<vmem>>, %arg6: memref<1x64xf32, #tpu.memory_space<vmem>>, %arg7: memref<1x64xf32, #tpu.memory_space<vmem>>, %arg8: memref<1x64xf32, #tpu.memory_space<vmem>>, %arg9: memref<1x256x128xbf16, #tpu.memory_space<vmem>>, %arg10: memref<1x8x128xf32, #tpu.memory_space<vmem>>) attributes {dimension_semantics = [#tpu.dimension_semantics<parallel>], iteration_bounds = array<i64: 2>, scalar_prefetch = 0 : i64, scratch_operands = 0 : i64, tpu.core_type = #tpu.core_type<tc>, window_params = [{transform_indices = @transform_0, window_bounds = array<i64: 1, 16, 16, 8>}, {transform_indices = @transform_1, window_bounds = array<i64: 1, 16, 16, 8>}, {pipeline_mode = #tpu.pipeline_mode<synchronous>, transform_indices = @transform_2, window_bounds = array<i64: 72, 64>}, {pipeline_mode = #tpu.pipeline_mode<synchronous>, transform_indices = @transform_3, window_bounds = array<i64: 576, 64>}, {pipeline_mode = #tpu.pipeline_mode<synchronous>, transform_indices = @transform_4, window_bounds = array<i64: 1, 64>}, {pipeline_mode = #tpu.pipeline_mode<synchronous>, transform_indices = @transform_5, window_bounds = array<i64: 1, 64>}, {pipeline_mode = #tpu.pipeline_mode<synchronous>, transform_indices = @transform_6, window_bounds = array<i64: 1, 64>}, {pipeline_mode = #tpu.pipeline_mode<synchronous>, transform_indices = @transform_7, window_bounds = array<i64: 1, 64>}, {transform_indices = @transform_8, window_bounds = array<i64: 1, 256, 128>}, {transform_indices = @transform_9, window_bounds = array<i64: 1, 8, 128>}]} {
    %c0 = arith.constant 0 : index
    %c0_0 = arith.constant 0 : index
    %c0_1 = arith.constant 0 : index
    %c0_2 = arith.constant 0 : index
    %0 = vector.load %arg1[%c0, %c0_0, %c0_1, %c0_2] : memref<1x16x16x8xf32, #tpu.memory_space<vmem>>, vector<1x16x16x8xf32>
    %1 = vector.shape_cast %0 : vector<1x16x16x8xf32> to vector<16x16x8xf32>
    %cst = arith.constant 0.000000e+00 : f32
    %2 = vector.broadcast %cst : f32 to vector<1x16x8xf32>
    %3 = tpu.concatenate %2, %1, %2 in 0 : vector<1x16x8xf32>, vector<16x16x8xf32>, vector<1x16x8xf32> -> vector<18x16x8xf32>
    %cst_3 = arith.constant 0.000000e+00 : f32
    %4 = vector.broadcast %cst_3 : f32 to vector<18x1x8xf32>
    %5 = tpu.concatenate %4, %3, %4 in 1 : vector<18x1x8xf32>, vector<18x16x8xf32>, vector<18x1x8xf32> -> vector<18x18x8xf32>
    %6 = vector.extract_strided_slice %5 {offsets = [0, 0, 0], sizes = [16, 18, 8], strides = [1, 1, 1]} : vector<18x18x8xf32> to vector<16x18x8xf32>
    %7 = vector.extract_strided_slice %6 {offsets = [0, 0, 0], sizes = [16, 16, 8], strides = [1, 1, 1]} : vector<16x18x8xf32> to vector<16x16x8xf32>
    %8 = vector.extract_strided_slice %6 {offsets = [0, 1, 0], sizes = [16, 16, 8], strides = [1, 1, 1]} : vector<16x18x8xf32> to vector<16x16x8xf32>
    %9 = vector.extract_strided_slice %6 {offsets = [0, 2, 0], sizes = [16, 16, 8], strides = [1, 1, 1]} : vector<16x18x8xf32> to vector<16x16x8xf32>
    %10 = vector.extract_strided_slice %5 {offsets = [1, 0, 0], sizes = [16, 18, 8], strides = [1, 1, 1]} : vector<18x18x8xf32> to vector<16x18x8xf32>
    %11 = vector.extract_strided_slice %10 {offsets = [0, 0, 0], sizes = [16, 16, 8], strides = [1, 1, 1]} : vector<16x18x8xf32> to vector<16x16x8xf32>
    %12 = vector.extract_strided_slice %10 {offsets = [0, 1, 0], sizes = [16, 16, 8], strides = [1, 1, 1]} : vector<16x18x8xf32> to vector<16x16x8xf32>
    %13 = vector.extract_strided_slice %10 {offsets = [0, 2, 0], sizes = [16, 16, 8], strides = [1, 1, 1]} : vector<16x18x8xf32> to vector<16x16x8xf32>
    %14 = vector.extract_strided_slice %5 {offsets = [2, 0, 0], sizes = [16, 18, 8], strides = [1, 1, 1]} : vector<18x18x8xf32> to vector<16x18x8xf32>
    %15 = vector.extract_strided_slice %14 {offsets = [0, 0, 0], sizes = [16, 16, 8], strides = [1, 1, 1]} : vector<16x18x8xf32> to vector<16x16x8xf32>
    %16 = vector.extract_strided_slice %14 {offsets = [0, 1, 0], sizes = [16, 16, 8], strides = [1, 1, 1]} : vector<16x18x8xf32> to vector<16x16x8xf32>
    %17 = vector.extract_strided_slice %14 {offsets = [0, 2, 0], sizes = [16, 16, 8], strides = [1, 1, 1]} : vector<16x18x8xf32> to vector<16x16x8xf32>
    %18 = tpu.concatenate %7, %8, %9, %11, %12, %13, %15, %16, %17 in 2 : vector<16x16x8xf32>, vector<16x16x8xf32>, vector<16x16x8xf32>, vector<16x16x8xf32>, vector<16x16x8xf32>, vector<16x16x8xf32>, vector<16x16x8xf32>, vector<16x16x8xf32>, vector<16x16x8xf32> -> vector<16x16x72xf32>
    %19 = vector.shape_cast %18 : vector<16x16x72xf32> to vector<256x72xf32>
    %20 = arith.truncf %19 : vector<256x72xf32> to vector<256x72xbf16>
    %c0_4 = arith.constant 0 : index
    %c0_5 = arith.constant 0 : index
    %21 = vector.load %arg3[%c0_4, %c0_5] : memref<72x64xbf16, #tpu.memory_space<vmem>>, vector<72x64xbf16>
    %cst_6 = arith.constant dense<0.000000e+00> : vector<256x64xf32>
    %22 = tpu.matmul %20, %21, %cst_6 {dimension_numbers = #tpu.dot_dimension_numbers<[1], [0], [0], [1], [0, 0, 1, 1], [], []>} : vector<256x72xbf16>, vector<72x64xbf16>, vector<256x64xf32> -> vector<256x64xf32>
    %c0_7 = arith.constant 0 : index
    %c0_8 = arith.constant 0 : index
    %23 = vector.load %arg5[%c0_7, %c0_8] : memref<1x64xf32, #tpu.memory_space<vmem>>, vector<1x64xf32>
    %24 = vector.shape_cast %23 : vector<1x64xf32> to vector<64xf32>
    %25 = vector.shape_cast %24 : vector<64xf32> to vector<1x64xf32>
    %26 = vector.broadcast %25 : vector<1x64xf32> to vector<256x64xf32>
    %27 = arith.mulf %22, %26 : vector<256x64xf32>
    %c0_9 = arith.constant 0 : index
    %c0_10 = arith.constant 0 : index
    %28 = vector.load %arg6[%c0_9, %c0_10] : memref<1x64xf32, #tpu.memory_space<vmem>>, vector<1x64xf32>
    %29 = vector.shape_cast %28 : vector<1x64xf32> to vector<64xf32>
    %30 = vector.shape_cast %29 : vector<64xf32> to vector<1x64xf32>
    %31 = vector.broadcast %30 : vector<1x64xf32> to vector<256x64xf32>
    %32 = arith.addf %27, %31 : vector<256x64xf32>
    %cst_11 = arith.constant 0.000000e+00 : f32
    %33 = vector.broadcast %cst_11 : f32 to vector<256x64xf32>
    %34 = arith.maximumf %32, %33 : vector<256x64xf32>
    %35 = vector.shape_cast %34 : vector<256x64xf32> to vector<16x16x64xf32>
    %cst_12 = arith.constant 0.000000e+00 : f32
    %36 = vector.broadcast %cst_12 : f32 to vector<1x16x64xf32>
    %37 = tpu.concatenate %36, %35, %36 in 0 : vector<1x16x64xf32>, vector<16x16x64xf32>, vector<1x16x64xf32> -> vector<18x16x64xf32>
    %cst_13 = arith.constant 0.000000e+00 : f32
    %38 = vector.broadcast %cst_13 : f32 to vector<18x1x64xf32>
    %39 = tpu.concatenate %38, %37, %38 in 1 : vector<18x1x64xf32>, vector<18x16x64xf32>, vector<18x1x64xf32> -> vector<18x18x64xf32>
    %40 = vector.extract_strided_slice %39 {offsets = [0, 0, 0], sizes = [16, 18, 64], strides = [1, 1, 1]} : vector<18x18x64xf32> to vector<16x18x64xf32>
    %41 = vector.extract_strided_slice %40 {offsets = [0, 0, 0], sizes = [16, 16, 64], strides = [1, 1, 1]} : vector<16x18x64xf32> to vector<16x16x64xf32>
    %42 = vector.extract_strided_slice %40 {offsets = [0, 1, 0], sizes = [16, 16, 64], strides = [1, 1, 1]} : vector<16x18x64xf32> to vector<16x16x64xf32>
    %43 = vector.extract_strided_slice %40 {offsets = [0, 2, 0], sizes = [16, 16, 64], strides = [1, 1, 1]} : vector<16x18x64xf32> to vector<16x16x64xf32>
    %44 = vector.extract_strided_slice %39 {offsets = [1, 0, 0], sizes = [16, 18, 64], strides = [1, 1, 1]} : vector<18x18x64xf32> to vector<16x18x64xf32>
    %45 = vector.extract_strided_slice %44 {offsets = [0, 0, 0], sizes = [16, 16, 64], strides = [1, 1, 1]} : vector<16x18x64xf32> to vector<16x16x64xf32>
    %46 = vector.extract_strided_slice %44 {offsets = [0, 1, 0], sizes = [16, 16, 64], strides = [1, 1, 1]} : vector<16x18x64xf32> to vector<16x16x64xf32>
    %47 = vector.extract_strided_slice %44 {offsets = [0, 2, 0], sizes = [16, 16, 64], strides = [1, 1, 1]} : vector<16x18x64xf32> to vector<16x16x64xf32>
    %48 = vector.extract_strided_slice %39 {offsets = [2, 0, 0], sizes = [16, 18, 64], strides = [1, 1, 1]} : vector<18x18x64xf32> to vector<16x18x64xf32>
    %49 = vector.extract_strided_slice %48 {offsets = [0, 0, 0], sizes = [16, 16, 64], strides = [1, 1, 1]} : vector<16x18x64xf32> to vector<16x16x64xf32>
    %50 = vector.extract_strided_slice %48 {offsets = [0, 1, 0], sizes = [16, 16, 64], strides = [1, 1, 1]} : vector<16x18x64xf32> to vector<16x16x64xf32>
    %51 = vector.extract_strided_slice %48 {offsets = [0, 2, 0], sizes = [16, 16, 64], strides = [1, 1, 1]} : vector<16x18x64xf32> to vector<16x16x64xf32>
    %52 = tpu.concatenate %41, %42, %43, %45, %46, %47, %49, %50, %51 in 2 : vector<16x16x64xf32>, vector<16x16x64xf32>, vector<16x16x64xf32>, vector<16x16x64xf32>, vector<16x16x64xf32>, vector<16x16x64xf32>, vector<16x16x64xf32>, vector<16x16x64xf32>, vector<16x16x64xf32> -> vector<16x16x576xf32>
    %53 = vector.shape_cast %52 : vector<16x16x576xf32> to vector<256x576xf32>
    %54 = arith.truncf %53 : vector<256x576xf32> to vector<256x576xbf16>
    %c0_14 = arith.constant 0 : index
    %c0_15 = arith.constant 0 : index
    %55 = vector.load %arg4[%c0_14, %c0_15] : memref<576x64xbf16, #tpu.memory_space<vmem>>, vector<576x64xbf16>
    %cst_16 = arith.constant dense<0.000000e+00> : vector<256x64xf32>
    %56 = tpu.matmul %54, %55, %cst_16 {dimension_numbers = #tpu.dot_dimension_numbers<[1], [0], [0], [1], [0, 0, 1, 1], [], []>} : vector<256x576xbf16>, vector<576x64xbf16>, vector<256x64xf32> -> vector<256x64xf32>
    %c0_17 = arith.constant 0 : index
    %c0_18 = arith.constant 0 : index
    %57 = vector.load %arg7[%c0_17, %c0_18] : memref<1x64xf32, #tpu.memory_space<vmem>>, vector<1x64xf32>
    %58 = vector.shape_cast %57 : vector<1x64xf32> to vector<64xf32>
    %59 = vector.shape_cast %58 : vector<64xf32> to vector<1x64xf32>
    %60 = vector.broadcast %59 : vector<1x64xf32> to vector<256x64xf32>
    %61 = arith.mulf %56, %60 : vector<256x64xf32>
    %c0_19 = arith.constant 0 : index
    %c0_20 = arith.constant 0 : index
    %62 = vector.load %arg8[%c0_19, %c0_20] : memref<1x64xf32, #tpu.memory_space<vmem>>, vector<1x64xf32>
    %63 = vector.shape_cast %62 : vector<1x64xf32> to vector<64xf32>
    %64 = vector.shape_cast %63 : vector<64xf32> to vector<1x64xf32>
    %65 = vector.broadcast %64 : vector<1x64xf32> to vector<256x64xf32>
    %66 = arith.addf %61, %65 : vector<256x64xf32>
    %c0_21 = arith.constant 0 : index
    %c0_22 = arith.constant 0 : index
    %c0_23 = arith.constant 0 : index
    %c0_24 = arith.constant 0 : index
    %67 = vector.load %arg2[%c0_21, %c0_22, %c0_23, %c0_24] : memref<1x16x16x8xf32, #tpu.memory_space<vmem>>, vector<1x16x16x8xf32>
    %68 = vector.shape_cast %67 : vector<1x16x16x8xf32> to vector<16x16x8xf32>
    %cst_25 = arith.constant 0.000000e+00 : f32
    %69 = vector.broadcast %cst_25 : f32 to vector<1x16x8xf32>
    %70 = tpu.concatenate %69, %68, %69 in 0 : vector<1x16x8xf32>, vector<16x16x8xf32>, vector<1x16x8xf32> -> vector<18x16x8xf32>
    %cst_26 = arith.constant 0.000000e+00 : f32
    %71 = vector.broadcast %cst_26 : f32 to vector<18x1x8xf32>
    %72 = tpu.concatenate %71, %70, %71 in 1 : vector<18x1x8xf32>, vector<18x16x8xf32>, vector<18x1x8xf32> -> vector<18x18x8xf32>
    %73 = vector.extract_strided_slice %72 {offsets = [0, 0, 0], sizes = [16, 18, 8], strides = [1, 1, 1]} : vector<18x18x8xf32> to vector<16x18x8xf32>
    %74 = vector.extract_strided_slice %73 {offsets = [0, 0, 0], sizes = [16, 16, 8], strides = [1, 1, 1]} : vector<16x18x8xf32> to vector<16x16x8xf32>
    %75 = vector.extract_strided_slice %73 {offsets = [0, 1, 0], sizes = [16, 16, 8], strides = [1, 1, 1]} : vector<16x18x8xf32> to vector<16x16x8xf32>
    %76 = vector.extract_strided_slice %73 {offsets = [0, 2, 0], sizes = [16, 16, 8], strides = [1, 1, 1]} : vector<16x18x8xf32> to vector<16x16x8xf32>
    %77 = vector.extract_strided_slice %72 {offsets = [1, 0, 0], sizes = [16, 18, 8], strides = [1, 1, 1]} : vector<18x18x8xf32> to vector<16x18x8xf32>
    %78 = vector.extract_strided_slice %77 {offsets = [0, 0, 0], sizes = [16, 16, 8], strides = [1, 1, 1]} : vector<16x18x8xf32> to vector<16x16x8xf32>
    %79 = vector.extract_strided_slice %77 {offsets = [0, 1, 0], sizes = [16, 16, 8], strides = [1, 1, 1]} : vector<16x18x8xf32> to vector<16x16x8xf32>
    %80 = vector.extract_strided_slice %77 {offsets = [0, 2, 0], sizes = [16, 16, 8], strides = [1, 1, 1]} : vector<16x18x8xf32> to vector<16x16x8xf32>
    %81 = vector.extract_strided_slice %72 {offsets = [2, 0, 0], sizes = [16, 18, 8], strides = [1, 1, 1]} : vector<18x18x8xf32> to vector<16x18x8xf32>
    %82 = vector.extract_strided_slice %81 {offsets = [0, 0, 0], sizes = [16, 16, 8], strides = [1, 1, 1]} : vector<16x18x8xf32> to vector<16x16x8xf32>
    %83 = vector.extract_strided_slice %81 {offsets = [0, 1, 0], sizes = [16, 16, 8], strides = [1, 1, 1]} : vector<16x18x8xf32> to vector<16x16x8xf32>
    %84 = vector.extract_strided_slice %81 {offsets = [0, 2, 0], sizes = [16, 16, 8], strides = [1, 1, 1]} : vector<16x18x8xf32> to vector<16x16x8xf32>
    %85 = tpu.concatenate %74, %75, %76, %78, %79, %80, %82, %83, %84 in 2 : vector<16x16x8xf32>, vector<16x16x8xf32>, vector<16x16x8xf32>, vector<16x16x8xf32>, vector<16x16x8xf32>, vector<16x16x8xf32>, vector<16x16x8xf32>, vector<16x16x8xf32>, vector<16x16x8xf32> -> vector<16x16x72xf32>
    %86 = vector.shape_cast %85 : vector<16x16x72xf32> to vector<256x72xf32>
    %87 = arith.truncf %86 : vector<256x72xf32> to vector<256x72xbf16>
    %c0_27 = arith.constant 0 : index
    %c0_28 = arith.constant 0 : index
    %88 = vector.load %arg3[%c0_27, %c0_28] : memref<72x64xbf16, #tpu.memory_space<vmem>>, vector<72x64xbf16>
    %cst_29 = arith.constant dense<0.000000e+00> : vector<256x64xf32>
    %89 = tpu.matmul %87, %88, %cst_29 {dimension_numbers = #tpu.dot_dimension_numbers<[1], [0], [0], [1], [0, 0, 1, 1], [], []>} : vector<256x72xbf16>, vector<72x64xbf16>, vector<256x64xf32> -> vector<256x64xf32>
    %c0_30 = arith.constant 0 : index
    %c0_31 = arith.constant 0 : index
    %90 = vector.load %arg5[%c0_30, %c0_31] : memref<1x64xf32, #tpu.memory_space<vmem>>, vector<1x64xf32>
    %91 = vector.shape_cast %90 : vector<1x64xf32> to vector<64xf32>
    %92 = vector.shape_cast %91 : vector<64xf32> to vector<1x64xf32>
    %93 = vector.broadcast %92 : vector<1x64xf32> to vector<256x64xf32>
    %94 = arith.mulf %89, %93 : vector<256x64xf32>
    %c0_32 = arith.constant 0 : index
    %c0_33 = arith.constant 0 : index
    %95 = vector.load %arg6[%c0_32, %c0_33] : memref<1x64xf32, #tpu.memory_space<vmem>>, vector<1x64xf32>
    %96 = vector.shape_cast %95 : vector<1x64xf32> to vector<64xf32>
    %97 = vector.shape_cast %96 : vector<64xf32> to vector<1x64xf32>
    %98 = vector.broadcast %97 : vector<1x64xf32> to vector<256x64xf32>
    %99 = arith.addf %94, %98 : vector<256x64xf32>
    %cst_34 = arith.constant 0.000000e+00 : f32
    %100 = vector.broadcast %cst_34 : f32 to vector<256x64xf32>
    %101 = arith.maximumf %99, %100 : vector<256x64xf32>
    %102 = vector.shape_cast %101 : vector<256x64xf32> to vector<16x16x64xf32>
    %cst_35 = arith.constant 0.000000e+00 : f32
    %103 = vector.broadcast %cst_35 : f32 to vector<1x16x64xf32>
    %104 = tpu.concatenate %103, %102, %103 in 0 : vector<1x16x64xf32>, vector<16x16x64xf32>, vector<1x16x64xf32> -> vector<18x16x64xf32>
    %cst_36 = arith.constant 0.000000e+00 : f32
    %105 = vector.broadcast %cst_36 : f32 to vector<18x1x64xf32>
    %106 = tpu.concatenate %105, %104, %105 in 1 : vector<18x1x64xf32>, vector<18x16x64xf32>, vector<18x1x64xf32> -> vector<18x18x64xf32>
    %107 = vector.extract_strided_slice %106 {offsets = [0, 0, 0], sizes = [16, 18, 64], strides = [1, 1, 1]} : vector<18x18x64xf32> to vector<16x18x64xf32>
    %108 = vector.extract_strided_slice %107 {offsets = [0, 0, 0], sizes = [16, 16, 64], strides = [1, 1, 1]} : vector<16x18x64xf32> to vector<16x16x64xf32>
    %109 = vector.extract_strided_slice %107 {offsets = [0, 1, 0], sizes = [16, 16, 64], strides = [1, 1, 1]} : vector<16x18x64xf32> to vector<16x16x64xf32>
    %110 = vector.extract_strided_slice %107 {offsets = [0, 2, 0], sizes = [16, 16, 64], strides = [1, 1, 1]} : vector<16x18x64xf32> to vector<16x16x64xf32>
    %111 = vector.extract_strided_slice %106 {offsets = [1, 0, 0], sizes = [16, 18, 64], strides = [1, 1, 1]} : vector<18x18x64xf32> to vector<16x18x64xf32>
    %112 = vector.extract_strided_slice %111 {offsets = [0, 0, 0], sizes = [16, 16, 64], strides = [1, 1, 1]} : vector<16x18x64xf32> to vector<16x16x64xf32>
    %113 = vector.extract_strided_slice %111 {offsets = [0, 1, 0], sizes = [16, 16, 64], strides = [1, 1, 1]} : vector<16x18x64xf32> to vector<16x16x64xf32>
    %114 = vector.extract_strided_slice %111 {offsets = [0, 2, 0], sizes = [16, 16, 64], strides = [1, 1, 1]} : vector<16x18x64xf32> to vector<16x16x64xf32>
    %115 = vector.extract_strided_slice %106 {offsets = [2, 0, 0], sizes = [16, 18, 64], strides = [1, 1, 1]} : vector<18x18x64xf32> to vector<16x18x64xf32>
    %116 = vector.extract_strided_slice %115 {offsets = [0, 0, 0], sizes = [16, 16, 64], strides = [1, 1, 1]} : vector<16x18x64xf32> to vector<16x16x64xf32>
    %117 = vector.extract_strided_slice %115 {offsets = [0, 1, 0], sizes = [16, 16, 64], strides = [1, 1, 1]} : vector<16x18x64xf32> to vector<16x16x64xf32>
    %118 = vector.extract_strided_slice %115 {offsets = [0, 2, 0], sizes = [16, 16, 64], strides = [1, 1, 1]} : vector<16x18x64xf32> to vector<16x16x64xf32>
    %119 = tpu.concatenate %108, %109, %110, %112, %113, %114, %116, %117, %118 in 2 : vector<16x16x64xf32>, vector<16x16x64xf32>, vector<16x16x64xf32>, vector<16x16x64xf32>, vector<16x16x64xf32>, vector<16x16x64xf32>, vector<16x16x64xf32>, vector<16x16x64xf32>, vector<16x16x64xf32> -> vector<16x16x576xf32>
    %120 = vector.shape_cast %119 : vector<16x16x576xf32> to vector<256x576xf32>
    %121 = arith.truncf %120 : vector<256x576xf32> to vector<256x576xbf16>
    %c0_37 = arith.constant 0 : index
    %c0_38 = arith.constant 0 : index
    %122 = vector.load %arg4[%c0_37, %c0_38] : memref<576x64xbf16, #tpu.memory_space<vmem>>, vector<576x64xbf16>
    %cst_39 = arith.constant dense<0.000000e+00> : vector<256x64xf32>
    %123 = tpu.matmul %121, %122, %cst_39 {dimension_numbers = #tpu.dot_dimension_numbers<[1], [0], [0], [1], [0, 0, 1, 1], [], []>} : vector<256x576xbf16>, vector<576x64xbf16>, vector<256x64xf32> -> vector<256x64xf32>
    %c0_40 = arith.constant 0 : index
    %c0_41 = arith.constant 0 : index
    %124 = vector.load %arg7[%c0_40, %c0_41] : memref<1x64xf32, #tpu.memory_space<vmem>>, vector<1x64xf32>
    %125 = vector.shape_cast %124 : vector<1x64xf32> to vector<64xf32>
    %126 = vector.shape_cast %125 : vector<64xf32> to vector<1x64xf32>
    %127 = vector.broadcast %126 : vector<1x64xf32> to vector<256x64xf32>
    %128 = arith.mulf %123, %127 : vector<256x64xf32>
    %c0_42 = arith.constant 0 : index
    %c0_43 = arith.constant 0 : index
    %129 = vector.load %arg8[%c0_42, %c0_43] : memref<1x64xf32, #tpu.memory_space<vmem>>, vector<1x64xf32>
    %130 = vector.shape_cast %129 : vector<1x64xf32> to vector<64xf32>
    %131 = vector.shape_cast %130 : vector<64xf32> to vector<1x64xf32>
    %132 = vector.broadcast %131 : vector<1x64xf32> to vector<256x64xf32>
    %133 = arith.addf %128, %132 : vector<256x64xf32>
    %134 = arith.subf %66, %133 : vector<256x64xf32>
    %135 = arith.mulf %134, %134 : vector<256x64xf32>
    %136 = vector.shape_cast %135 : vector<256x64xf32> to vector<1x256x64xf32>
    %cst_44 = arith.constant dense<0.000000e+00> : vector<1xf32>
    %137 = vector.multi_reduction <add>, %136, %cst_44 [1, 2] : vector<1x256x64xf32> to vector<1xf32>
    %138 = vector.shape_cast %137 : vector<1xf32> to vector<1x1x1xf32>
    %139 = vector.extract %138[0, 0, 0] : f32 from vector<1x1x1xf32>
    %140 = vector.broadcast %139 : f32 to vector<8x128xf32>
    %c0_45 = arith.constant 0 : index
    %c0_46 = arith.constant 0 : index
    %c0_47 = arith.constant 0 : index
    %141 = vector.load %arg10[%c0_45, %c0_46, %c0_47] : memref<1x8x128xf32, #tpu.memory_space<vmem>>, vector<1x8x128xf32>
    %142 = vector.shape_cast %141 : vector<1x8x128xf32> to vector<8x128xf32>
    %143 = vector.shape_cast %140 : vector<8x128xf32> to vector<1x8x128xf32>
    tpu.vector_store %arg10[%c0_45, %c0_46, %c0_47], %143 {strides = array<i32>} : memref<1x8x128xf32, #tpu.memory_space<vmem>>, vector<1x8x128xf32>,
    %cst_48 = arith.constant 0.000000e+00 : f32
    %144 = vector.broadcast %cst_48 : f32 to vector<256x64xf32>
    %145 = arith.maximumf %66, %144 : vector<256x64xf32>
    %cst_49 = arith.constant 0.000000e+00 : f32
    %146 = vector.broadcast %cst_49 : f32 to vector<256x64xf32>
    %147 = arith.maximumf %133, %146 : vector<256x64xf32>
    %148 = tpu.concatenate %145, %147 in 1 : vector<256x64xf32>, vector<256x64xf32> -> vector<256x128xf32>
    %149 = arith.truncf %148 : vector<256x128xf32> to vector<256x128xbf16>
    %c0_50 = arith.constant 0 : index
    %c0_51 = arith.constant 0 : index
    %c0_52 = arith.constant 0 : index
    %150 = vector.load %arg9[%c0_50, %c0_51, %c0_52] : memref<1x256x128xbf16, #tpu.memory_space<vmem>>, vector<1x256x128xbf16>
    %151 = vector.shape_cast %150 : vector<1x256x128xbf16> to vector<256x128xbf16>
    %152 = vector.shape_cast %149 : vector<256x128xbf16> to vector<1x256x128xbf16>
    tpu.vector_store %arg9[%c0_50, %c0_51, %c0_52], %152 {strides = array<i32>} : memref<1x256x128xbf16, #tpu.memory_space<vmem>>, vector<1x256x128xbf16>,
    return
  }
  func.func @transform_0(%arg0: i32) -> (i32, i32, i32, i32) {
    %c0_i32 = arith.constant 0 : i32
    %c0_i32_0 = arith.constant 0 : i32
    %c0_i32_1 = arith.constant 0 : i32
    %c0_i32_2 = arith.constant 0 : i32
    return %arg0, %c0_i32, %c0_i32_0, %c0_i32_1 : i32, i32, i32, i32
  }
  func.func @transform_1(%arg0: i32) -> (i32, i32, i32, i32) {
    %c0_i32 = arith.constant 0 : i32
    %c0_i32_0 = arith.constant 0 : i32
    %c0_i32_1 = arith.constant 0 : i32
    %c0_i32_2 = arith.constant 0 : i32
    return %arg0, %c0_i32, %c0_i32_0, %c0_i32_1 : i32, i32, i32, i32
  }
  func.func @transform_2(%arg0: i32) -> (i32, i32) {
    %c0_i32 = arith.constant 0 : i32
    %c0_i32_0 = arith.constant 0 : i32
    %c0_i32_1 = arith.constant 0 : i32
    return %c0_i32, %c0_i32_0 : i32, i32
  }
  func.func @transform_3(%arg0: i32) -> (i32, i32) {
    %c0_i32 = arith.constant 0 : i32
    %c0_i32_0 = arith.constant 0 : i32
    %c0_i32_1 = arith.constant 0 : i32
    return %c0_i32, %c0_i32_0 : i32, i32
  }
  func.func @transform_4(%arg0: i32) -> (i32, i32) {
    %c0_i32 = arith.constant 0 : i32
    %c0_i32_0 = arith.constant 0 : i32
    %c0_i32_1 = arith.constant 0 : i32
    return %c0_i32, %c0_i32_0 : i32, i32
  }
  func.func @transform_5(%arg0: i32) -> (i32, i32) {
    %c0_i32 = arith.constant 0 : i32
    %c0_i32_0 = arith.constant 0 : i32
    %c0_i32_1 = arith.constant 0 : i32
    return %c0_i32, %c0_i32_0 : i32, i32
  }
  func.func @transform_6(%arg0: i32) -> (i32, i32) {
    %c0_i32 = arith.constant 0 : i32
    %c0_i32_0 = arith.constant 0 : i32
    %c0_i32_1 = arith.constant 0 : i32
    return %c0_i32, %c0_i32_0 : i32, i32
  }
  func.func @transform_7(%arg0: i32) -> (i32, i32) {
    %c0_i32 = arith.constant 0 : i32
    %c0_i32_0 = arith.constant 0 : i32
    %c0_i32_1 = arith.constant 0 : i32
    return %c0_i32, %c0_i32_0 : i32, i32
  }
  func.func @transform_8(%arg0: i32) -> (i32, i32, i32) {
    %c0_i32 = arith.constant 0 : i32
    %c0_i32_0 = arith.constant 0 : i32
    %c0_i32_1 = arith.constant 0 : i32
    return %arg0, %c0_i32, %c0_i32_0 : i32, i32, i32
  }
  func.func @transform_9(%arg0: i32) -> (i32, i32, i32) {
    %c0_i32 = arith.constant 0 : i32
    %c0_i32_0 = arith.constant 0 : i32
    %c0_i32_1 = arith.constant 0 : i32
    return %arg0, %c0_i32, %c0_i32_0 : i32, i32, i32
  }
}

module attributes {stable_mosaic.version = 11 : i64} {
  func.func @_block1_kernel(%arg0: i32, %arg1: memref<1x8x8x64xbf16, #tpu.memory_space<vmem>>, %arg2: memref<1x8x8x64xbf16, #tpu.memory_space<vmem>>, %arg3: memref<576x128xbf16, #tpu.memory_space<vmem>>, %arg4: memref<1152x128xbf16, #tpu.memory_space<vmem>>, %arg5: memref<1x128xf32, #tpu.memory_space<vmem>>, %arg6: memref<1x128xf32, #tpu.memory_space<vmem>>, %arg7: memref<1x128xf32, #tpu.memory_space<vmem>>, %arg8: memref<1x128xf32, #tpu.memory_space<vmem>>, %arg9: memref<1x8x128xf32, #tpu.memory_space<vmem>>) attributes {dimension_semantics = [#tpu.dimension_semantics<parallel>], iteration_bounds = array<i64: 2>, scalar_prefetch = 0 : i64, scratch_operands = 0 : i64, tpu.core_type = #tpu.core_type<tc>, window_params = [{transform_indices = @transform_0, window_bounds = array<i64: 1, 8, 8, 64>}, {transform_indices = @transform_1, window_bounds = array<i64: 1, 8, 8, 64>}, {pipeline_mode = #tpu.pipeline_mode<synchronous>, transform_indices = @transform_2, window_bounds = array<i64: 576, 128>}, {pipeline_mode = #tpu.pipeline_mode<synchronous>, transform_indices = @transform_3, window_bounds = array<i64: 1152, 128>}, {pipeline_mode = #tpu.pipeline_mode<synchronous>, transform_indices = @transform_4, window_bounds = array<i64: 1, 128>}, {pipeline_mode = #tpu.pipeline_mode<synchronous>, transform_indices = @transform_5, window_bounds = array<i64: 1, 128>}, {pipeline_mode = #tpu.pipeline_mode<synchronous>, transform_indices = @transform_6, window_bounds = array<i64: 1, 128>}, {pipeline_mode = #tpu.pipeline_mode<synchronous>, transform_indices = @transform_7, window_bounds = array<i64: 1, 128>}, {transform_indices = @transform_8, window_bounds = array<i64: 1, 8, 128>}]} {
    %c0 = arith.constant 0 : index
    %c0_0 = arith.constant 0 : index
    %c0_1 = arith.constant 0 : index
    %c0_2 = arith.constant 0 : index
    %0 = vector.load %arg1[%c0, %c0_0, %c0_1, %c0_2] : memref<1x8x8x64xbf16, #tpu.memory_space<vmem>>, vector<1x8x8x64xbf16>
    %1 = vector.shape_cast %0 : vector<1x8x8x64xbf16> to vector<8x8x64xbf16>
    %2 = arith.extf %1 : vector<8x8x64xbf16> to vector<8x8x64xf32>
    %cst = arith.constant 0.000000e+00 : f32
    %3 = vector.broadcast %cst : f32 to vector<1x8x64xf32>
    %4 = tpu.concatenate %3, %2, %3 in 0 : vector<1x8x64xf32>, vector<8x8x64xf32>, vector<1x8x64xf32> -> vector<10x8x64xf32>
    %cst_3 = arith.constant 0.000000e+00 : f32
    %5 = vector.broadcast %cst_3 : f32 to vector<10x1x64xf32>
    %6 = tpu.concatenate %5, %4, %5 in 1 : vector<10x1x64xf32>, vector<10x8x64xf32>, vector<10x1x64xf32> -> vector<10x10x64xf32>
    %7 = vector.extract_strided_slice %6 {offsets = [0, 0, 0], sizes = [8, 10, 64], strides = [1, 1, 1]} : vector<10x10x64xf32> to vector<8x10x64xf32>
    %8 = vector.extract_strided_slice %7 {offsets = [0, 0, 0], sizes = [8, 8, 64], strides = [1, 1, 1]} : vector<8x10x64xf32> to vector<8x8x64xf32>
    %9 = vector.extract_strided_slice %7 {offsets = [0, 1, 0], sizes = [8, 8, 64], strides = [1, 1, 1]} : vector<8x10x64xf32> to vector<8x8x64xf32>
    %10 = vector.extract_strided_slice %7 {offsets = [0, 2, 0], sizes = [8, 8, 64], strides = [1, 1, 1]} : vector<8x10x64xf32> to vector<8x8x64xf32>
    %11 = vector.extract_strided_slice %6 {offsets = [1, 0, 0], sizes = [8, 10, 64], strides = [1, 1, 1]} : vector<10x10x64xf32> to vector<8x10x64xf32>
    %12 = vector.extract_strided_slice %11 {offsets = [0, 0, 0], sizes = [8, 8, 64], strides = [1, 1, 1]} : vector<8x10x64xf32> to vector<8x8x64xf32>
    %13 = vector.extract_strided_slice %11 {offsets = [0, 1, 0], sizes = [8, 8, 64], strides = [1, 1, 1]} : vector<8x10x64xf32> to vector<8x8x64xf32>
    %14 = vector.extract_strided_slice %11 {offsets = [0, 2, 0], sizes = [8, 8, 64], strides = [1, 1, 1]} : vector<8x10x64xf32> to vector<8x8x64xf32>
    %15 = vector.extract_strided_slice %6 {offsets = [2, 0, 0], sizes = [8, 10, 64], strides = [1, 1, 1]} : vector<10x10x64xf32> to vector<8x10x64xf32>
    %16 = vector.extract_strided_slice %15 {offsets = [0, 0, 0], sizes = [8, 8, 64], strides = [1, 1, 1]} : vector<8x10x64xf32> to vector<8x8x64xf32>
    %17 = vector.extract_strided_slice %15 {offsets = [0, 1, 0], sizes = [8, 8, 64], strides = [1, 1, 1]} : vector<8x10x64xf32> to vector<8x8x64xf32>
    %18 = vector.extract_strided_slice %15 {offsets = [0, 2, 0], sizes = [8, 8, 64], strides = [1, 1, 1]} : vector<8x10x64xf32> to vector<8x8x64xf32>
    %19 = tpu.concatenate %8, %9, %10, %12, %13, %14, %16, %17, %18 in 2 : vector<8x8x64xf32>, vector<8x8x64xf32>, vector<8x8x64xf32>, vector<8x8x64xf32>, vector<8x8x64xf32>, vector<8x8x64xf32>, vector<8x8x64xf32>, vector<8x8x64xf32>, vector<8x8x64xf32> -> vector<8x8x576xf32>
    %20 = vector.shape_cast %19 : vector<8x8x576xf32> to vector<64x576xf32>
    %21 = arith.truncf %20 : vector<64x576xf32> to vector<64x576xbf16>
    %c0_4 = arith.constant 0 : index
    %c0_5 = arith.constant 0 : index
    %22 = vector.load %arg3[%c0_4, %c0_5] : memref<576x128xbf16, #tpu.memory_space<vmem>>, vector<576x128xbf16>
    %cst_6 = arith.constant dense<0.000000e+00> : vector<64x128xf32>
    %23 = tpu.matmul %21, %22, %cst_6 {dimension_numbers = #tpu.dot_dimension_numbers<[1], [0], [0], [1], [0, 0, 1, 1], [], []>} : vector<64x576xbf16>, vector<576x128xbf16>, vector<64x128xf32> -> vector<64x128xf32>
    %c0_7 = arith.constant 0 : index
    %c0_8 = arith.constant 0 : index
    %24 = vector.load %arg5[%c0_7, %c0_8] : memref<1x128xf32, #tpu.memory_space<vmem>>, vector<1x128xf32>
    %25 = vector.shape_cast %24 : vector<1x128xf32> to vector<128xf32>
    %26 = vector.shape_cast %25 : vector<128xf32> to vector<1x128xf32>
    %27 = vector.broadcast %26 : vector<1x128xf32> to vector<64x128xf32>
    %28 = arith.mulf %23, %27 : vector<64x128xf32>
    %c0_9 = arith.constant 0 : index
    %c0_10 = arith.constant 0 : index
    %29 = vector.load %arg6[%c0_9, %c0_10] : memref<1x128xf32, #tpu.memory_space<vmem>>, vector<1x128xf32>
    %30 = vector.shape_cast %29 : vector<1x128xf32> to vector<128xf32>
    %31 = vector.shape_cast %30 : vector<128xf32> to vector<1x128xf32>
    %32 = vector.broadcast %31 : vector<1x128xf32> to vector<64x128xf32>
    %33 = arith.addf %28, %32 : vector<64x128xf32>
    %cst_11 = arith.constant 0.000000e+00 : f32
    %34 = vector.broadcast %cst_11 : f32 to vector<64x128xf32>
    %35 = arith.maximumf %33, %34 : vector<64x128xf32>
    %36 = vector.shape_cast %35 : vector<64x128xf32> to vector<8x8x128xf32>
    %cst_12 = arith.constant 0.000000e+00 : f32
    %37 = vector.broadcast %cst_12 : f32 to vector<1x8x128xf32>
    %38 = tpu.concatenate %37, %36, %37 in 0 : vector<1x8x128xf32>, vector<8x8x128xf32>, vector<1x8x128xf32> -> vector<10x8x128xf32>
    %cst_13 = arith.constant 0.000000e+00 : f32
    %39 = vector.broadcast %cst_13 : f32 to vector<10x1x128xf32>
    %40 = tpu.concatenate %39, %38, %39 in 1 : vector<10x1x128xf32>, vector<10x8x128xf32>, vector<10x1x128xf32> -> vector<10x10x128xf32>
    %41 = vector.extract_strided_slice %40 {offsets = [0, 0, 0], sizes = [8, 10, 128], strides = [1, 1, 1]} : vector<10x10x128xf32> to vector<8x10x128xf32>
    %42 = vector.extract_strided_slice %41 {offsets = [0, 0, 0], sizes = [8, 8, 128], strides = [1, 1, 1]} : vector<8x10x128xf32> to vector<8x8x128xf32>
    %43 = vector.extract_strided_slice %41 {offsets = [0, 1, 0], sizes = [8, 8, 128], strides = [1, 1, 1]} : vector<8x10x128xf32> to vector<8x8x128xf32>
    %44 = vector.extract_strided_slice %41 {offsets = [0, 2, 0], sizes = [8, 8, 128], strides = [1, 1, 1]} : vector<8x10x128xf32> to vector<8x8x128xf32>
    %45 = vector.extract_strided_slice %40 {offsets = [1, 0, 0], sizes = [8, 10, 128], strides = [1, 1, 1]} : vector<10x10x128xf32> to vector<8x10x128xf32>
    %46 = vector.extract_strided_slice %45 {offsets = [0, 0, 0], sizes = [8, 8, 128], strides = [1, 1, 1]} : vector<8x10x128xf32> to vector<8x8x128xf32>
    %47 = vector.extract_strided_slice %45 {offsets = [0, 1, 0], sizes = [8, 8, 128], strides = [1, 1, 1]} : vector<8x10x128xf32> to vector<8x8x128xf32>
    %48 = vector.extract_strided_slice %45 {offsets = [0, 2, 0], sizes = [8, 8, 128], strides = [1, 1, 1]} : vector<8x10x128xf32> to vector<8x8x128xf32>
    %49 = vector.extract_strided_slice %40 {offsets = [2, 0, 0], sizes = [8, 10, 128], strides = [1, 1, 1]} : vector<10x10x128xf32> to vector<8x10x128xf32>
    %50 = vector.extract_strided_slice %49 {offsets = [0, 0, 0], sizes = [8, 8, 128], strides = [1, 1, 1]} : vector<8x10x128xf32> to vector<8x8x128xf32>
    %51 = vector.extract_strided_slice %49 {offsets = [0, 1, 0], sizes = [8, 8, 128], strides = [1, 1, 1]} : vector<8x10x128xf32> to vector<8x8x128xf32>
    %52 = vector.extract_strided_slice %49 {offsets = [0, 2, 0], sizes = [8, 8, 128], strides = [1, 1, 1]} : vector<8x10x128xf32> to vector<8x8x128xf32>
    %53 = tpu.concatenate %42, %43, %44, %46, %47, %48, %50, %51, %52 in 2 : vector<8x8x128xf32>, vector<8x8x128xf32>, vector<8x8x128xf32>, vector<8x8x128xf32>, vector<8x8x128xf32>, vector<8x8x128xf32>, vector<8x8x128xf32>, vector<8x8x128xf32>, vector<8x8x128xf32> -> vector<8x8x1152xf32>
    %54 = vector.shape_cast %53 : vector<8x8x1152xf32> to vector<64x1152xf32>
    %55 = arith.truncf %54 : vector<64x1152xf32> to vector<64x1152xbf16>
    %c0_14 = arith.constant 0 : index
    %c0_15 = arith.constant 0 : index
    %56 = vector.load %arg4[%c0_14, %c0_15] : memref<1152x128xbf16, #tpu.memory_space<vmem>>, vector<1152x128xbf16>
    %cst_16 = arith.constant dense<0.000000e+00> : vector<64x128xf32>
    %57 = tpu.matmul %55, %56, %cst_16 {dimension_numbers = #tpu.dot_dimension_numbers<[1], [0], [0], [1], [0, 0, 1, 1], [], []>} : vector<64x1152xbf16>, vector<1152x128xbf16>, vector<64x128xf32> -> vector<64x128xf32>
    %c0_17 = arith.constant 0 : index
    %c0_18 = arith.constant 0 : index
    %58 = vector.load %arg7[%c0_17, %c0_18] : memref<1x128xf32, #tpu.memory_space<vmem>>, vector<1x128xf32>
    %59 = vector.shape_cast %58 : vector<1x128xf32> to vector<128xf32>
    %60 = vector.shape_cast %59 : vector<128xf32> to vector<1x128xf32>
    %61 = vector.broadcast %60 : vector<1x128xf32> to vector<64x128xf32>
    %62 = arith.mulf %57, %61 : vector<64x128xf32>
    %c0_19 = arith.constant 0 : index
    %c0_20 = arith.constant 0 : index
    %63 = vector.load %arg8[%c0_19, %c0_20] : memref<1x128xf32, #tpu.memory_space<vmem>>, vector<1x128xf32>
    %64 = vector.shape_cast %63 : vector<1x128xf32> to vector<128xf32>
    %65 = vector.shape_cast %64 : vector<128xf32> to vector<1x128xf32>
    %66 = vector.broadcast %65 : vector<1x128xf32> to vector<64x128xf32>
    %67 = arith.addf %62, %66 : vector<64x128xf32>
    %c0_21 = arith.constant 0 : index
    %c0_22 = arith.constant 0 : index
    %c0_23 = arith.constant 0 : index
    %c0_24 = arith.constant 0 : index
    %68 = vector.load %arg2[%c0_21, %c0_22, %c0_23, %c0_24] : memref<1x8x8x64xbf16, #tpu.memory_space<vmem>>, vector<1x8x8x64xbf16>
    %69 = vector.shape_cast %68 : vector<1x8x8x64xbf16> to vector<8x8x64xbf16>
    %70 = arith.extf %69 : vector<8x8x64xbf16> to vector<8x8x64xf32>
    %cst_25 = arith.constant 0.000000e+00 : f32
    %71 = vector.broadcast %cst_25 : f32 to vector<1x8x64xf32>
    %72 = tpu.concatenate %71, %70, %71 in 0 : vector<1x8x64xf32>, vector<8x8x64xf32>, vector<1x8x64xf32> -> vector<10x8x64xf32>
    %cst_26 = arith.constant 0.000000e+00 : f32
    %73 = vector.broadcast %cst_26 : f32 to vector<10x1x64xf32>
    %74 = tpu.concatenate %73, %72, %73 in 1 : vector<10x1x64xf32>, vector<10x8x64xf32>, vector<10x1x64xf32> -> vector<10x10x64xf32>
    %75 = vector.extract_strided_slice %74 {offsets = [0, 0, 0], sizes = [8, 10, 64], strides = [1, 1, 1]} : vector<10x10x64xf32> to vector<8x10x64xf32>
    %76 = vector.extract_strided_slice %75 {offsets = [0, 0, 0], sizes = [8, 8, 64], strides = [1, 1, 1]} : vector<8x10x64xf32> to vector<8x8x64xf32>
    %77 = vector.extract_strided_slice %75 {offsets = [0, 1, 0], sizes = [8, 8, 64], strides = [1, 1, 1]} : vector<8x10x64xf32> to vector<8x8x64xf32>
    %78 = vector.extract_strided_slice %75 {offsets = [0, 2, 0], sizes = [8, 8, 64], strides = [1, 1, 1]} : vector<8x10x64xf32> to vector<8x8x64xf32>
    %79 = vector.extract_strided_slice %74 {offsets = [1, 0, 0], sizes = [8, 10, 64], strides = [1, 1, 1]} : vector<10x10x64xf32> to vector<8x10x64xf32>
    %80 = vector.extract_strided_slice %79 {offsets = [0, 0, 0], sizes = [8, 8, 64], strides = [1, 1, 1]} : vector<8x10x64xf32> to vector<8x8x64xf32>
    %81 = vector.extract_strided_slice %79 {offsets = [0, 1, 0], sizes = [8, 8, 64], strides = [1, 1, 1]} : vector<8x10x64xf32> to vector<8x8x64xf32>
    %82 = vector.extract_strided_slice %79 {offsets = [0, 2, 0], sizes = [8, 8, 64], strides = [1, 1, 1]} : vector<8x10x64xf32> to vector<8x8x64xf32>
    %83 = vector.extract_strided_slice %74 {offsets = [2, 0, 0], sizes = [8, 10, 64], strides = [1, 1, 1]} : vector<10x10x64xf32> to vector<8x10x64xf32>
    %84 = vector.extract_strided_slice %83 {offsets = [0, 0, 0], sizes = [8, 8, 64], strides = [1, 1, 1]} : vector<8x10x64xf32> to vector<8x8x64xf32>
    %85 = vector.extract_strided_slice %83 {offsets = [0, 1, 0], sizes = [8, 8, 64], strides = [1, 1, 1]} : vector<8x10x64xf32> to vector<8x8x64xf32>
    %86 = vector.extract_strided_slice %83 {offsets = [0, 2, 0], sizes = [8, 8, 64], strides = [1, 1, 1]} : vector<8x10x64xf32> to vector<8x8x64xf32>
    %87 = tpu.concatenate %76, %77, %78, %80, %81, %82, %84, %85, %86 in 2 : vector<8x8x64xf32>, vector<8x8x64xf32>, vector<8x8x64xf32>, vector<8x8x64xf32>, vector<8x8x64xf32>, vector<8x8x64xf32>, vector<8x8x64xf32>, vector<8x8x64xf32>, vector<8x8x64xf32> -> vector<8x8x576xf32>
    %88 = vector.shape_cast %87 : vector<8x8x576xf32> to vector<64x576xf32>
    %89 = arith.truncf %88 : vector<64x576xf32> to vector<64x576xbf16>
    %c0_27 = arith.constant 0 : index
    %c0_28 = arith.constant 0 : index
    %90 = vector.load %arg3[%c0_27, %c0_28] : memref<576x128xbf16, #tpu.memory_space<vmem>>, vector<576x128xbf16>
    %cst_29 = arith.constant dense<0.000000e+00> : vector<64x128xf32>
    %91 = tpu.matmul %89, %90, %cst_29 {dimension_numbers = #tpu.dot_dimension_numbers<[1], [0], [0], [1], [0, 0, 1, 1], [], []>} : vector<64x576xbf16>, vector<576x128xbf16>, vector<64x128xf32> -> vector<64x128xf32>
    %c0_30 = arith.constant 0 : index
    %c0_31 = arith.constant 0 : index
    %92 = vector.load %arg5[%c0_30, %c0_31] : memref<1x128xf32, #tpu.memory_space<vmem>>, vector<1x128xf32>
    %93 = vector.shape_cast %92 : vector<1x128xf32> to vector<128xf32>
    %94 = vector.shape_cast %93 : vector<128xf32> to vector<1x128xf32>
    %95 = vector.broadcast %94 : vector<1x128xf32> to vector<64x128xf32>
    %96 = arith.mulf %91, %95 : vector<64x128xf32>
    %c0_32 = arith.constant 0 : index
    %c0_33 = arith.constant 0 : index
    %97 = vector.load %arg6[%c0_32, %c0_33] : memref<1x128xf32, #tpu.memory_space<vmem>>, vector<1x128xf32>
    %98 = vector.shape_cast %97 : vector<1x128xf32> to vector<128xf32>
    %99 = vector.shape_cast %98 : vector<128xf32> to vector<1x128xf32>
    %100 = vector.broadcast %99 : vector<1x128xf32> to vector<64x128xf32>
    %101 = arith.addf %96, %100 : vector<64x128xf32>
    %cst_34 = arith.constant 0.000000e+00 : f32
    %102 = vector.broadcast %cst_34 : f32 to vector<64x128xf32>
    %103 = arith.maximumf %101, %102 : vector<64x128xf32>
    %104 = vector.shape_cast %103 : vector<64x128xf32> to vector<8x8x128xf32>
    %cst_35 = arith.constant 0.000000e+00 : f32
    %105 = vector.broadcast %cst_35 : f32 to vector<1x8x128xf32>
    %106 = tpu.concatenate %105, %104, %105 in 0 : vector<1x8x128xf32>, vector<8x8x128xf32>, vector<1x8x128xf32> -> vector<10x8x128xf32>
    %cst_36 = arith.constant 0.000000e+00 : f32
    %107 = vector.broadcast %cst_36 : f32 to vector<10x1x128xf32>
    %108 = tpu.concatenate %107, %106, %107 in 1 : vector<10x1x128xf32>, vector<10x8x128xf32>, vector<10x1x128xf32> -> vector<10x10x128xf32>
    %109 = vector.extract_strided_slice %108 {offsets = [0, 0, 0], sizes = [8, 10, 128], strides = [1, 1, 1]} : vector<10x10x128xf32> to vector<8x10x128xf32>
    %110 = vector.extract_strided_slice %109 {offsets = [0, 0, 0], sizes = [8, 8, 128], strides = [1, 1, 1]} : vector<8x10x128xf32> to vector<8x8x128xf32>
    %111 = vector.extract_strided_slice %109 {offsets = [0, 1, 0], sizes = [8, 8, 128], strides = [1, 1, 1]} : vector<8x10x128xf32> to vector<8x8x128xf32>
    %112 = vector.extract_strided_slice %109 {offsets = [0, 2, 0], sizes = [8, 8, 128], strides = [1, 1, 1]} : vector<8x10x128xf32> to vector<8x8x128xf32>
    %113 = vector.extract_strided_slice %108 {offsets = [1, 0, 0], sizes = [8, 10, 128], strides = [1, 1, 1]} : vector<10x10x128xf32> to vector<8x10x128xf32>
    %114 = vector.extract_strided_slice %113 {offsets = [0, 0, 0], sizes = [8, 8, 128], strides = [1, 1, 1]} : vector<8x10x128xf32> to vector<8x8x128xf32>
    %115 = vector.extract_strided_slice %113 {offsets = [0, 1, 0], sizes = [8, 8, 128], strides = [1, 1, 1]} : vector<8x10x128xf32> to vector<8x8x128xf32>
    %116 = vector.extract_strided_slice %113 {offsets = [0, 2, 0], sizes = [8, 8, 128], strides = [1, 1, 1]} : vector<8x10x128xf32> to vector<8x8x128xf32>
    %117 = vector.extract_strided_slice %108 {offsets = [2, 0, 0], sizes = [8, 10, 128], strides = [1, 1, 1]} : vector<10x10x128xf32> to vector<8x10x128xf32>
    %118 = vector.extract_strided_slice %117 {offsets = [0, 0, 0], sizes = [8, 8, 128], strides = [1, 1, 1]} : vector<8x10x128xf32> to vector<8x8x128xf32>
    %119 = vector.extract_strided_slice %117 {offsets = [0, 1, 0], sizes = [8, 8, 128], strides = [1, 1, 1]} : vector<8x10x128xf32> to vector<8x8x128xf32>
    %120 = vector.extract_strided_slice %117 {offsets = [0, 2, 0], sizes = [8, 8, 128], strides = [1, 1, 1]} : vector<8x10x128xf32> to vector<8x8x128xf32>
    %121 = tpu.concatenate %110, %111, %112, %114, %115, %116, %118, %119, %120 in 2 : vector<8x8x128xf32>, vector<8x8x128xf32>, vector<8x8x128xf32>, vector<8x8x128xf32>, vector<8x8x128xf32>, vector<8x8x128xf32>, vector<8x8x128xf32>, vector<8x8x128xf32>, vector<8x8x128xf32> -> vector<8x8x1152xf32>
    %122 = vector.shape_cast %121 : vector<8x8x1152xf32> to vector<64x1152xf32>
    %123 = arith.truncf %122 : vector<64x1152xf32> to vector<64x1152xbf16>
    %c0_37 = arith.constant 0 : index
    %c0_38 = arith.constant 0 : index
    %124 = vector.load %arg4[%c0_37, %c0_38] : memref<1152x128xbf16, #tpu.memory_space<vmem>>, vector<1152x128xbf16>
    %cst_39 = arith.constant dense<0.000000e+00> : vector<64x128xf32>
    %125 = tpu.matmul %123, %124, %cst_39 {dimension_numbers = #tpu.dot_dimension_numbers<[1], [0], [0], [1], [0, 0, 1, 1], [], []>} : vector<64x1152xbf16>, vector<1152x128xbf16>, vector<64x128xf32> -> vector<64x128xf32>
    %c0_40 = arith.constant 0 : index
    %c0_41 = arith.constant 0 : index
    %126 = vector.load %arg7[%c0_40, %c0_41] : memref<1x128xf32, #tpu.memory_space<vmem>>, vector<1x128xf32>
    %127 = vector.shape_cast %126 : vector<1x128xf32> to vector<128xf32>
    %128 = vector.shape_cast %127 : vector<128xf32> to vector<1x128xf32>
    %129 = vector.broadcast %128 : vector<1x128xf32> to vector<64x128xf32>
    %130 = arith.mulf %125, %129 : vector<64x128xf32>
    %c0_42 = arith.constant 0 : index
    %c0_43 = arith.constant 0 : index
    %131 = vector.load %arg8[%c0_42, %c0_43] : memref<1x128xf32, #tpu.memory_space<vmem>>, vector<1x128xf32>
    %132 = vector.shape_cast %131 : vector<1x128xf32> to vector<128xf32>
    %133 = vector.shape_cast %132 : vector<128xf32> to vector<1x128xf32>
    %134 = vector.broadcast %133 : vector<1x128xf32> to vector<64x128xf32>
    %135 = arith.addf %130, %134 : vector<64x128xf32>
    %136 = arith.subf %67, %135 : vector<64x128xf32>
    %137 = arith.mulf %136, %136 : vector<64x128xf32>
    %138 = vector.shape_cast %137 : vector<64x128xf32> to vector<1x64x128xf32>
    %cst_44 = arith.constant dense<0.000000e+00> : vector<1xf32>
    %139 = vector.multi_reduction <add>, %138, %cst_44 [1, 2] : vector<1x64x128xf32> to vector<1xf32>
    %140 = vector.shape_cast %139 : vector<1xf32> to vector<1x1x1xf32>
    %141 = vector.extract %140[0, 0, 0] : f32 from vector<1x1x1xf32>
    %142 = vector.broadcast %141 : f32 to vector<8x128xf32>
    %c0_45 = arith.constant 0 : index
    %c0_46 = arith.constant 0 : index
    %c0_47 = arith.constant 0 : index
    %143 = vector.load %arg9[%c0_45, %c0_46, %c0_47] : memref<1x8x128xf32, #tpu.memory_space<vmem>>, vector<1x8x128xf32>
    %144 = vector.shape_cast %143 : vector<1x8x128xf32> to vector<8x128xf32>
    %145 = vector.shape_cast %142 : vector<8x128xf32> to vector<1x8x128xf32>
    tpu.vector_store %arg9[%c0_45, %c0_46, %c0_47], %145 {strides = array<i32>} : memref<1x8x128xf32, #tpu.memory_space<vmem>>, vector<1x8x128xf32>,
    return
  }
  func.func @transform_0(%arg0: i32) -> (i32, i32, i32, i32) {
    %c0_i32 = arith.constant 0 : i32
    %c0_i32_0 = arith.constant 0 : i32
    %c0_i32_1 = arith.constant 0 : i32
    %c0_i32_2 = arith.constant 0 : i32
    return %arg0, %c0_i32, %c0_i32_0, %c0_i32_1 : i32, i32, i32, i32
  }
  func.func @transform_1(%arg0: i32) -> (i32, i32, i32, i32) {
    %c0_i32 = arith.constant 0 : i32
    %c0_i32_0 = arith.constant 0 : i32
    %c0_i32_1 = arith.constant 0 : i32
    %c0_i32_2 = arith.constant 0 : i32
    return %arg0, %c0_i32, %c0_i32_0, %c0_i32_1 : i32, i32, i32, i32
  }
  func.func @transform_2(%arg0: i32) -> (i32, i32) {
    %c0_i32 = arith.constant 0 : i32
    %c0_i32_0 = arith.constant 0 : i32
    %c0_i32_1 = arith.constant 0 : i32
    return %c0_i32, %c0_i32_0 : i32, i32
  }
  func.func @transform_3(%arg0: i32) -> (i32, i32) {
    %c0_i32 = arith.constant 0 : i32
    %c0_i32_0 = arith.constant 0 : i32
    %c0_i32_1 = arith.constant 0 : i32
    return %c0_i32, %c0_i32_0 : i32, i32
  }
  func.func @transform_4(%arg0: i32) -> (i32, i32) {
    %c0_i32 = arith.constant 0 : i32
    %c0_i32_0 = arith.constant 0 : i32
    %c0_i32_1 = arith.constant 0 : i32
    return %c0_i32, %c0_i32_0 : i32, i32
  }
  func.func @transform_5(%arg0: i32) -> (i32, i32) {
    %c0_i32 = arith.constant 0 : i32
    %c0_i32_0 = arith.constant 0 : i32
    %c0_i32_1 = arith.constant 0 : i32
    return %c0_i32, %c0_i32_0 : i32, i32
  }
  func.func @transform_6(%arg0: i32) -> (i32, i32) {
    %c0_i32 = arith.constant 0 : i32
    %c0_i32_0 = arith.constant 0 : i32
    %c0_i32_1 = arith.constant 0 : i32
    return %c0_i32, %c0_i32_0 : i32, i32
  }
  func.func @transform_7(%arg0: i32) -> (i32, i32) {
    %c0_i32 = arith.constant 0 : i32
    %c0_i32_0 = arith.constant 0 : i32
    %c0_i32_1 = arith.constant 0 : i32
    return %c0_i32, %c0_i32_0 : i32, i32
  }
  func.func @transform_8(%arg0: i32) -> (i32, i32, i32) {
    %c0_i32 = arith.constant 0 : i32
    %c0_i32_0 = arith.constant 0 : i32
    %c0_i32_1 = arith.constant 0 : i32
    return %arg0, %c0_i32, %c0_i32_0 : i32, i32, i32
  }
}

</mosaic_0001>

<llo_original>
// kernel: _lambda_.3
$region0: #{_lambda_.3}
  #allocation0 [shape = 'u32[]', space=smem, size = 0x4, offset = 0x4, fixed_abs, tag = 'smem constant byte address 0x4 - core index']
  #allocation1 [shape = 'u32[144,128]{1,0:T(1,128)}', space=vmem, size = 0x12000, scoped, tag = 'internal scratch']
  %s0 = inlined_call_operand.vmem [shape: bf16[2,8,8,64], index: 0, kind: input, shape index: {}]
  %s1 = inlined_call_operand.vmem [shape: bf16[2,8,8,64], index: 1, kind: input, shape index: {}]
  %s2 = inlined_call_operand.vmem [shape: bf16[576,128], index: 2, kind: input, shape index: {}]
  %s3 = inlined_call_operand.vmem [shape: bf16[1152,128], index: 3, kind: input, shape index: {}]
  %s4 = inlined_call_operand.vmem [shape: f32[1,128], index: 4, kind: input, shape index: {}]
  %s5 = inlined_call_operand.vmem [shape: f32[1,128], index: 5, kind: input, shape index: {}]
  %s6 = inlined_call_operand.vmem [shape: f32[1,128], index: 6, kind: input, shape index: {}]
  %s7 = inlined_call_operand.vmem [shape: f32[1,128], index: 7, kind: input, shape index: {}]
  %s8 = inlined_call_operand.vmem [shape: f32[2,8,128], index: 8, kind: output, shape index: {}]
  %s9 = sld [smem:[#allocation0]]
  $region65: #{_lambda_.3} parent=0
    _
  %s11 = ssub.s32 1, %s9
  %s12 = scalar_select 0, %s11, %s9
  loop: start=0, step=1, limit=4
  $region2: #{_lambda_.3} parent=0 // loop_pre_header
    _
  $region3: #{_lambda_.3} parent=0 // loop_header
    %s14 = sphi 0, %s18
    %p15 = scmp.ge.s32.totalorder %s14, 4
    %s24 = sphi 0, %s26
    %s27 = sphi 0, %s24
    %s28 = sphi 0, %s27
    %s44 = sphi 0, %s28
    %s50 = sphi 0, %s52
    %s53 = sphi 0, %s50
    %s54 = sphi 0, %s53
    %s70 = sphi 0, %s54
    %s74 = sphi 0, %s74
    %s76 = sphi 0, %s74
    %s77 = sphi 0, %s76
    %s91 = sphi 0, %s77
    %s95 = sphi 0, %s95
    %s97 = sphi 0, %s95
    %s98 = sphi 0, %s97
    %s112 = sphi 0, %s98
    %s116 = sphi 0, %s116
    %s118 = sphi 0, %s116
    %s119 = sphi 0, %s118
    %s133 = sphi 0, %s119
    %s137 = sphi 0, %s137
    %s139 = sphi 0, %s137
    %s140 = sphi 0, %s139
    %s154 = sphi 0, %s140
    %s158 = sphi 0, %s158
    %s160 = sphi 0, %s158
    %s161 = sphi 0, %s160
    %s175 = sphi 0, %s161
    %s179 = sphi 0, %s179
    %s181 = sphi 0, %s179
    %s182 = sphi 0, %s181
    %s196 = sphi 0, %s182
    %s202 = sphi 0, %s204
    %s205 = sphi 0, %s202
    %s206 = sphi 0, %s205
    %s222 = sphi 0, %s206
  $region4: #{_lambda_.3} parent=0 // loop_header_branch
    %17 = sbr.rel (%p15) target = $region8
  $region5: #{_lambda_.3} parent=0 // loop_body
    %s19 = ssub.s32 %s14, 1
    %s20 = ssub.s32 %s14, 2
    %s21 = sadd.s32 %s14, 1
    %s22 = ssub.s32 %s14, %s21
    %p23 = scmp.eq.s32.totalorder %s22, 0
    %s25 = sadd.s32 %s24, 1
    %s26 = scalar_select %p23, %s24, %s25
    %p29 = pneg %p23
    %p30 = scmp.eq.s32.totalorder %s14, 1
    %p31 = por %p29, %p30
    %p32 = scmp.ne.s32.totalorder %s24, %s27
    %p33 = scmp.eq.s32.totalorder %s14, 0
    %p34 = por %p32, %p33
    %p35 = scmp.ne.s32.totalorder %s24, %s27
    %p36 = scmp.eq.s32.totalorder %s19, 1
    %p37 = por %p35, %p36
    %p38 = scmp.ne.s32.totalorder %s27, %s28
    %p39 = scmp.eq.s32.totalorder %s19, 0
    %p40 = por %p38, %p39
    %p41 = scmp.ne.s32.totalorder %s27, %s28
    %p42 = scmp.eq.s32.totalorder %s20, 1
    %p43 = por %p41, %p42
    %p45 = scmp.ne.s32.totalorder %s28, %s44
    %p46 = scmp.eq.s32.totalorder %s20, 0
    %p47 = por %p45, %p46
    %s48 = ssub.s32 %s14, %s21
    %p49 = scmp.eq.s32.totalorder %s48, 0
    %s51 = sadd.s32 %s50, 1
    %s52 = scalar_select %p49, %s50, %s51
    %p55 = pneg %p49
    %p56 = scmp.eq.s32.totalorder %s14, 1
    %p57 = por %p55, %p56
    %p58 = scmp.ne.s32.totalorder %s50, %s53
    %p59 = scmp.eq.s32.totalorder %s14, 0
    %p60 = por %p58, %p59
    %p61 = scmp.ne.s32.totalorder %s50, %s53
    %p62 = scmp.eq.s32.totalorder %s19, 1
    %p63 = por %p61, %p62
    %p64 = scmp.ne.s32.totalorder %s53, %s54
    %p65 = scmp.eq.s32.totalorder %s19, 0
    %p66 = por %p64, %p65
    %p67 = scmp.ne.s32.totalorder %s53, %s54
    %p68 = scmp.eq.s32.totalorder %s20, 1
    %p69 = por %p67, %p68
    %p71 = scmp.ne.s32.totalorder %s54, %s70
    %p72 = scmp.eq.s32.totalorder %s20, 0
    %p73 = por %p71, %p72
    %s75 = sadd.s32 %s74, 1
    %p78 = scmp.eq.s32.totalorder %s14, 1
    %p79 = scmp.ne.s32.totalorder %s74, %s76
    %p80 = scmp.eq.s32.totalorder %s14, 0
    %p81 = por %p79, %p80
    %p82 = scmp.ne.s32.totalorder %s74, %s76
    %p83 = scmp.eq.s32.totalorder %s19, 1
    %p84 = por %p82, %p83
    %p85 = scmp.ne.s32.totalorder %s76, %s77
    %p86 = scmp.eq.s32.totalorder %s19, 0
    %p87 = por %p85, %p86
    %p88 = scmp.ne.s32.totalorder %s76, %s77
    %p89 = scmp.eq.s32.totalorder %s20, 1
    %p90 = por %p88, %p89
    %p92 = scmp.ne.s32.totalorder %s77, %s91
    %p93 = scmp.eq.s32.totalorder %s20, 0
    %p94 = por %p92, %p93
    %s96 = sadd.s32 %s95, 1
    %p99 = scmp.eq.s32.totalorder %s14, 1
    %p100 = scmp.ne.s32.totalorder %s95, %s97
    %p101 = scmp.eq.s32.totalorder %s14, 0
    %p102 = por %p100, %p101
    %p103 = scmp.ne.s32.totalorder %s95, %s97
    %p104 = scmp.eq.s32.totalorder %s19, 1
    %p105 = por %p103, %p104
    %p106 = scmp.ne.s32.totalorder %s97, %s98
    %p107 = scmp.eq.s32.totalorder %s19, 0
    %p108 = por %p106, %p107
    %p109 = scmp.ne.s32.totalorder %s97, %s98
    %p110 = scmp.eq.s32.totalorder %s20, 1
    %p111 = por %p109, %p110
    %p113 = scmp.ne.s32.totalorder %s98, %s112
    %p114 = scmp.eq.s32.totalorder %s20, 0
    %p115 = por %p113, %p114
    %s117 = sadd.s32 %s116, 1
    %p120 = scmp.eq.s32.totalorder %s14, 1
    %p121 = scmp.ne.s32.totalorder %s116, %s118
    %p122 = scmp.eq.s32.totalorder %s14, 0
    %p123 = por %p121, %p122
    %p124 = scmp.ne.s32.totalorder %s116, %s118
    %p125 = scmp.eq.s32.totalorder %s19, 1
    %p126 = por %p124, %p125
    %p127 = scmp.ne.s32.totalorder %s118, %s119
    %p128 = scmp.eq.s32.totalorder %s19, 0
    %p129 = por %p127, %p128
    %p130 = scmp.ne.s32.totalorder %s118, %s119
    %p131 = scmp.eq.s32.totalorder %s20, 1
    %p132 = por %p130, %p131
    %p134 = scmp.ne.s32.totalorder %s119, %s133
    %p135 = scmp.eq.s32.totalorder %s20, 0
    %p136 = por %p134, %p135
    %s138 = sadd.s32 %s137, 1
    %p141 = scmp.eq.s32.totalorder %s14, 1
    %p142 = scmp.ne.s32.totalorder %s137, %s139
    %p143 = scmp.eq.s32.totalorder %s14, 0
    %p144 = por %p142, %p143
    %p145 = scmp.ne.s32.totalorder %s137, %s139
    %p146 = scmp.eq.s32.totalorder %s19, 1
    %p147 = por %p145, %p146
    %p148 = scmp.ne.s32.totalorder %s139, %s140
    %p149 = scmp.eq.s32.totalorder %s19, 0
    %p150 = por %p148, %p149
    %p151 = scmp.ne.s32.totalorder %s139, %s140
    %p152 = scmp.eq.s32.totalorder %s20, 1
    %p153 = por %p151, %p152
    %p155 = scmp.ne.s32.totalorder %s140, %s154
    %p156 = scmp.eq.s32.totalorder %s20, 0
    %p157 = por %p155, %p156
    %s159 = sadd.s32 %s158, 1
    %p162 = scmp.eq.s32.totalorder %s14, 1
    %p163 = scmp.ne.s32.totalorder %s158, %s160
    %p164 = scmp.eq.s32.totalorder %s14, 0
    %p165 = por %p163, %p164
    %p166 = scmp.ne.s32.totalorder %s158, %s160
    %p167 = scmp.eq.s32.totalorder %s19, 1
    %p168 = por %p166, %p167
    %p169 = scmp.ne.s32.totalorder %s160, %s161
    %p170 = scmp.eq.s32.totalorder %s19, 0
    %p171 = por %p169, %p170
    %p172 = scmp.ne.s32.totalorder %s160, %s161
    %p173 = scmp.eq.s32.totalorder %s20, 1
    %p174 = por %p172, %p173
    %p176 = scmp.ne.s32.totalorder %s161, %s175
    %p177 = scmp.eq.s32.totalorder %s20, 0
    %p178 = por %p176, %p177
    %s180 = sadd.s32 %s179, 1
    %p183 = scmp.eq.s32.totalorder %s14, 1
    %p184 = scmp.ne.s32.totalorder %s179, %s181
    %p185 = scmp.eq.s32.totalorder %s14, 0
    %p186 = por %p184, %p185
    %p187 = scmp.ne.s32.totalorder %s179, %s181
    %p188 = scmp.eq.s32.totalorder %s19, 1
    %p189 = por %p187, %p188
    %p190 = scmp.ne.s32.totalorder %s181, %s182
    %p191 = scmp.eq.s32.totalorder %s19, 0
    %p192 = por %p190, %p191
    %p193 = scmp.ne.s32.totalorder %s181, %s182
    %p194 = scmp.eq.s32.totalorder %s20, 1
    %p195 = por %p193, %p194
    %p197 = scmp.ne.s32.totalorder %s182, %s196
    %p198 = scmp.eq.s32.totalorder %s20, 0
    %p199 = por %p197, %p198
    %s200 = ssub.s32 %s14, %s21
    %p201 = scmp.eq.s32.totalorder %s200, 0
    %s203 = sadd.s32 %s202, 1
    %s204 = scalar_select %p201, %s202, %s203
    %p207 = pneg %p201
    %p208 = scmp.eq.s32.totalorder %s14, 1
    %p209 = por %p207, %p208
    %p210 = scmp.ne.s32.totalorder %s202, %s205
    %p211 = scmp.eq.s32.totalorder %s14, 0
    %p212 = por %p210, %p211
    %p213 = scmp.ne.s32.totalorder %s202, %s205
    %p214 = scmp.eq.s32.totalorder %s19, 1
    %p215 = por %p213, %p214
    %p216 = scmp.ne.s32.totalorder %s205, %s206
    %p217 = scmp.eq.s32.totalorder %s19, 0
    %p218 = por %p216, %p217
    %p219 = scmp.ne.s32.totalorder %s205, %s206
    %p220 = scmp.eq.s32.totalorder %s20, 1
    %p221 = por %p219, %p220
    %p223 = scmp.ne.s32.totalorder %s206, %s222
    %p224 = scmp.eq.s32.totalorder %s20, 0
    %p225 = por %p223, %p224
    %p226 = scmp.le.s32.totalorder 1, %s14
    %p227 = scmp.lt.s32.totalorder %s14, 3
    %p228 = pnand %p226, %p227
    %p229 = pneg %p228
    // Predicated region
    $region9: #{_lambda_.3} parent=5 // pred_check
      _
    $region10: #{_lambda_.3} parent=5 // pred_check_branch
      %231 = sbr.rel (%p228) target = $region12
    $region11: #{_lambda_.3} parent=5 // pred_region
      %s232 = ssub.s32 %s14, 1
      // Predicated region
      $region13: #{_lambda_.3} parent=11 // pred_check
        %p233 = pneg %p87
      $region14: #{_lambda_.3} parent=11 // pred_check_branch
        %235 = sbr.rel (%p233) target = $region16
      $region15: #{_lambda_.3} parent=11 // pred_region
        _
      $region16: #{_lambda_.3} parent=11 // pred_fallthru
        _
      // Predicated region
      $region17: #{_lambda_.3} parent=11 // pred_check
        %p236 = pneg %p108
      $region18: #{_lambda_.3} parent=11 // pred_check_branch
        %238 = sbr.rel (%p236) target = $region20
      $region19: #{_lambda_.3} parent=11 // pred_region
        _
      $region20: #{_lambda_.3} parent=11 // pred_fallthru
        _
      // Predicated region
      $region21: #{_lambda_.3} parent=11 // pred_check
        %p239 = pneg %p129
      $region22: #{_lambda_.3} parent=11 // pred_check_branch
        %241 = sbr.rel (%p239) target = $region24
      $region23: #{_lambda_.3} parent=11 // pred_region
        _
      $region24: #{_lambda_.3} parent=11 // pred_fallthru
        _
      // Predicated region
      $region25: #{_lambda_.3} parent=11 // pred_check
        %p242 = pneg %p150
      $region26: #{_lambda_.3} parent=11 // pred_check_branch
        %244 = sbr.rel (%p242) target = $region28
      $region27: #{_lambda_.3} parent=11 // pred_region
        _
      $region28: #{_lambda_.3} parent=11 // pred_fallthru
        _
      // Predicated region
      $region29: #{_lambda_.3} parent=11 // pred_check
        %p245 = pneg %p171
      $region30: #{_lambda_.3} parent=11 // pred_check_branch
        %247 = sbr.rel (%p245) target = $region32
      $region31: #{_lambda_.3} parent=11 // pred_region
        _
      $region32: #{_lambda_.3} parent=11 // pred_fallthru
        _
      // Predicated region
      $region33: #{_lambda_.3} parent=11 // pred_check
        %p248 = pneg %p192
      $region34: #{_lambda_.3} parent=11 // pred_check_branch
        %250 = sbr.rel (%p248) target = $region36
      $region35: #{_lambda_.3} parent=11 // pred_region
        _
      $region36: #{_lambda_.3} parent=11 // pred_fallthru
        _
    $region12: #{_lambda_.3} parent=5 // pred_fallthru
      _
    %p251 = scmp.lt.s32.totalorder %s14, 2
    // Predicated region
    $region37: #{_lambda_.3} parent=5 // pred_check
      %p252 = pneg %p251
    $region38: #{_lambda_.3} parent=5 // pred_check_branch
      %254 = sbr.rel (%p252) target = $region40
    $region39: #{_lambda_.3} parent=5 // pred_region
      // Predicated region
      $region41: #{_lambda_.3} parent=39 // pred_check
        %p255 = pneg %p34
      $region42: #{_lambda_.3} parent=39 // pred_check_branch
        %257 = sbr.rel (%p255) target = $region44
      $region43: #{_lambda_.3} parent=39 // pred_region
        %p258 = scmp.lt.s32.totalorder %s14, 1
        %s259 = scalar_select %p258, %s14, 1
        %s260 = smul.addr %s259, 8
        %s261 = smul.addr %s260, 4
        %s262 = scalar_lea.vmem %s0, %s261
      $region44: #{_lambda_.3} parent=39 // pred_fallthru
        _
      // Predicated region
      $region45: #{_lambda_.3} parent=39 // pred_check
        %p263 = pneg %p60
      $region46: #{_lambda_.3} parent=39 // pred_check_branch
        %265 = sbr.rel (%p263) target = $region48
      $region47: #{_lambda_.3} parent=39 // pred_region
        %p266 = scmp.lt.s32.totalorder %s14, 1
        %s267 = scalar_select %p266, %s14, 1
        %s268 = smul.addr %s267, 8
        %s269 = smul.addr %s268, 4
        %s270 = scalar_lea.vmem %s1, %s269
      $region48: #{_lambda_.3} parent=39 // pred_fallthru
        _
    $region40: #{_lambda_.3} parent=5 // pred_fallthru
      _
    %p271 = scmp.le.s32.totalorder 1, %s14
    %p272 = scmp.lt.s32.totalorder %s14, 3
    %p273 = pnand %p271, %p272
    %p274 = pneg %p273
    // Predicated region
    $region49: #{_lambda_.3} parent=5 // pred_check
      _
    $region50: #{_lambda_.3} parent=5 // pred_check_branch
      %276 = sbr.rel (%p273) target = $region52
    $region51: #{_lambda_.3} parent=5 // pred_region
      %s277 = ssub.s32 %s14, 1
      %p278 = scmp.lt.s32.totalorder %s19, 1
      %s279 = scalar_select %p278, %s19, 1
      %s280 = smul.addr %s279, 8
      %s281 = smul.addr %s280, 4
      %s282 = scalar_lea.vmem %s0, %s281
      %p283 = pneg %p40
      %p284 = pneg %p37
      %p285 = scmp.lt.s32.totalorder %s19, 1
      %s286 = scalar_select %p285, %s19, 1
      %s287 = smul.addr %s286, 8
      %s288 = smul.addr %s287, 4
      %s289 = scalar_lea.vmem %s1, %s288
      %p290 = pneg %p66
      %p291 = pneg %p63
      %p292 = pneg %p87
      %p293 = pneg %p84
      %p294 = pneg %p108
      %p295 = pneg %p105
      %p296 = pneg %p129
      %p297 = pneg %p126
      %p298 = pneg %p150
      %p299 = pneg %p147
      %p300 = pneg %p171
      %p301 = pneg %p168
      %p302 = pneg %p192
      %p303 = pneg %p189
      %p304 = pneg %p218
      %p305 = pneg %p215
      %p306 = scmp.lt.s32.totalorder %s19, 1
      %s307 = scalar_select %p306, %s19, 1
      %s308 = smul.addr %s307, 8
      %s309 = scalar_lea.vmem %s8, %s308
      %p310 = scmp.lt.s32.totalorder %s19, 1
      %s311 = scalar_select %p310, %s19, 1
      %s312 = smul.addr %s311, 8
      %s313 = smul.addr %s312, 4
      %s314 = scalar_lea.vmem %s0, %s313
      %p315 = scmp.lt.s32.totalorder %s19, 1
      %s316 = scalar_select %p315, %s19, 1
      %s317 = smul.addr %s316, 8
      %s318 = smul.addr %s317, 4
      %s319 = scalar_lea.vmem %s1, %s318
      %p320 = scmp.lt.s32.totalorder %s19, 1
      %s321 = scalar_select %p320, %s19, 1
      %s322 = smul.addr %s321, 8
      %s323 = scalar_lea.vmem %s8, %s322
      %v325 = vld [vmem:[%s314] sm:$0xf]
      %v326 = vld [vmem:[%s314 + $0x4] sm:$0xf]
      %v327 = vld [vmem:[%s314 + $0x8] sm:$0xf]
      %v328 = vld [vmem:[%s314 + $0xc] sm:$0xf]
      %v329 = vld [vmem:[%s314 + $0x10] sm:$0xf]
      %v330 = vld [vmem:[%s314 + $0x14] sm:$0xf]
      %v331 = vld [vmem:[%s314 + $0x18] sm:$0xf]
      %v332 = vld [vmem:[%s314 + $0x1c] sm:$0xf]
      %v333 = vunpack.c.l.bf16 %v325
      %v334 = vunpack.c.l.bf16 %v326
      %v335 = vunpack.c.l.bf16 %v327
      %v336 = vunpack.c.l.bf16 %v328
      %v337 = vunpack.c.l.bf16 %v329
      %v338 = vunpack.c.l.bf16 %v330
      %v339 = vunpack.c.l.bf16 %v331
      %v340 = vunpack.c.l.bf16 %v332
      %v350 = vrot.slane 0.0, 7
      %v351 = vrot.slane %v333, 7
      %v352 = vrot.slane %v334, 7
      %v353 = vrot.slane %v335, 7
      %v354 = vrot.slane %v336, 7
      %v355 = vrot.slane %v337, 7
      %v356 = vrot.slane %v338, 7
      %v357 = vrot.slane %v339, 7
      %v358 = vrot.slane %v340, 7
      %vm368 = vcmask 1040384
      %v369 = vsel %vm368, 0.0, %v350
      %v370 = vsel %vm368, 0.0, %v351
      %v371 = vsel %vm368, 0.0, %v352
      %v372 = vsel %vm368, 0.0, %v353
      %v373 = vsel %vm368, 0.0, %v354
      %v374 = vsel %vm368, 0.0, %v355
      %v375 = vsel %vm368, 0.0, %v356
      %v376 = vsel %vm368, 0.0, %v357
      %v377 = vsel %vm368, 0.0, %v358
      %v378 = vsel %vm368, %v350, 0.0
      %v379 = vsel %vm368, %v351, 0.0
      %v380 = vsel %vm368, %v352, 0.0
      %v381 = vsel %vm368, %v353, 0.0
      %v382 = vsel %vm368, %v354, 0.0
      %v383 = vsel %vm368, %v355, 0.0
      %v384 = vsel %vm368, %v356, 0.0
      %v385 = vsel %vm368, %v357, 0.0
      %v386 = vsel %vm368, %v358, 0.0
      %vm403 = vcmask 1046528
      %v404 = vrot.slane %v369, 1
      %v405 = vrot.slane %v378, 1
      %v406 = vsel %vm403, %v404, %v405
      %v407 = vrot.slane %v370, 1
      %v408 = vrot.slane %v379, 1
      %v409 = vsel %vm403, %v407, %v408
      %v410 = vrot.slane %v371, 1
      %v411 = vrot.slane %v380, 1
      %v412 = vsel %vm403, %v410, %v411
      %v413 = vrot.slane %v372, 1
      %v414 = vrot.slane %v381, 1
      %v415 = vsel %vm403, %v413, %v414
      %v416 = vrot.slane %v373, 1
      %v417 = vrot.slane %v382, 1
      %v418 = vsel %vm403, %v416, %v417
      %v419 = vrot.slane %v374, 1
      %v420 = vrot.slane %v383, 1
      %v421 = vsel %vm403, %v419, %v420
      %v422 = vrot.slane %v375, 1
      %v423 = vrot.slane %v384, 1
      %v424 = vsel %vm403, %v422, %v423
      %v425 = vrot.slane %v376, 1
      %v426 = vrot.slane %v385, 1
      %v427 = vsel %vm403, %v425, %v426
      %428 = vrot.lane.b32.xlu0 %v406, 64
      %v429 = vpop.permute.xlu0 %428
      %430 = vrot.lane.b32.xlu0 %v409, 64
      %v431 = vpop.permute.xlu0 %430
      %432 = vrot.lane.b32.xlu0 %v412, 64
      %v433 = vpop.permute.xlu0 %432
      %434 = vrot.lane.b32.xlu0 %v415, 64
      %v435 = vpop.permute.xlu0 %434
      %436 = vrot.lane.b32.xlu0 %v418, 64
      %v437 = vpop.permute.xlu0 %436
      %438 = vrot.lane.b32.xlu0 %v421, 64
      %v439 = vpop.permute.xlu0 %438
      %440 = vrot.lane.b32.xlu0 %v424, 64
      %v441 = vpop.permute.xlu0 %440
      %442 = vrot.lane.b32.xlu0 %v427, 64
      %v443 = vpop.permute.xlu0 %442
      %vm452 = vcmask 1045504
      %v453 = vrot.slane %v369, 2
      %v454 = vrot.slane %v378, 2
      %v455 = vsel %vm452, %v453, %v454
      %v456 = vrot.slane %v370, 2
      %v457 = vrot.slane %v379, 2
      %v458 = vsel %vm452, %v456, %v457
      %v459 = vrot.slane %v371, 2
      %v460 = vrot.slane %v380, 2
      %v461 = vsel %vm452, %v459, %v460
      %v462 = vrot.slane %v372, 2
      %v463 = vrot.slane %v381, 2
      %v464 = vsel %vm452, %v462, %v463
      %v465 = vrot.slane %v373, 2
      %v466 = vrot.slane %v382, 2
      %v467 = vsel %vm452, %v465, %v466
      %v468 = vrot.slane %v374, 2
      %v469 = vrot.slane %v383, 2
      %v470 = vsel %vm452, %v468, %v469
      %v471 = vrot.slane %v375, 2
      %v472 = vrot.slane %v384, 2
      %v473 = vsel %vm452, %v471, %v472
      %v474 = vrot.slane %v376, 2
      %v475 = vrot.slane %v385, 2
      %v476 = vsel %vm452, %v474, %v475
      %486 = vrot.lane.b32.xlu0 %v370, 64
      %v487 = vpop.permute.xlu0 %486
      %488 = vrot.lane.b32.xlu0 %v371, 64
      %v489 = vpop.permute.xlu0 %488
      %490 = vrot.lane.b32.xlu0 %v372, 64
      %v491 = vpop.permute.xlu0 %490
      %492 = vrot.lane.b32.xlu0 %v373, 64
      %v493 = vpop.permute.xlu0 %492
      %494 = vrot.lane.b32.xlu0 %v374, 64
      %v495 = vpop.permute.xlu0 %494
      %496 = vrot.lane.b32.xlu0 %v375, 64
      %v497 = vpop.permute.xlu0 %496
      %498 = vrot.lane.b32.xlu0 %v376, 64
      %v499 = vpop.permute.xlu0 %498
      %500 = vrot.lane.b32.xlu0 %v377, 64
      %v501 = vpop.permute.xlu0 %500
      %v511 = vrot.slane %v377, 1
      %v512 = vrot.slane %v386, 1
      %v513 = vsel %vm403, %v511, %v512
      %v522 = vrot.slane %v377, 2
      %v523 = vrot.slane %v386, 2
      %v524 = vsel %vm452, %v522, %v523
      %525 = vrot.lane.b32.xlu0 %v458, 64
      %v526 = vpop.permute.xlu0 %525
      %527 = vrot.lane.b32.xlu0 %v461, 64
      %v528 = vpop.permute.xlu0 %527
      %529 = vrot.lane.b32.xlu0 %v464, 64
      %v530 = vpop.permute.xlu0 %529
      %531 = vrot.lane.b32.xlu0 %v467, 64
      %v532 = vpop.permute.xlu0 %531
      %533 = vrot.lane.b32.xlu0 %v470, 64
      %v534 = vpop.permute.xlu0 %533
      %535 = vrot.lane.b32.xlu0 %v473, 64
      %v536 = vpop.permute.xlu0 %535
      %537 = vrot.lane.b32.xlu0 %v476, 64
      %v538 = vpop.permute.xlu0 %537
      %539 = vrot.lane.b32.xlu0 %v524, 64
      %v540 = vpop.permute.xlu0 %539
      %549 = vrot.lane.b32.xlu0 %v513, 64
      %v550 = vpop.permute.xlu0 %549
      %vm553 = vcmask 523264
      %v554 = vsel %vm553, %v369, %v429
      %v555 = vsel %vm553, %v370, %v431
      %v556 = vsel %vm553, %v371, %v433
      %v557 = vsel %vm553, %v372, %v435
      %v558 = vsel %vm553, %v373, %v437
      %v559 = vsel %vm553, %v374, %v439
      %v560 = vsel %vm553, %v375, %v441
      %v561 = vsel %vm553, %v376, %v443
      %v562 = vsel %vm553, %v455, %v487
      %v563 = vsel %vm553, %v458, %v489
      %v564 = vsel %vm553, %v461, %v491
      %v565 = vsel %vm553, %v464, %v493
      %v566 = vsel %vm553, %v467, %v495
      %v567 = vsel %vm553, %v470, %v497
      %v568 = vsel %vm553, %v473, %v499
      %v569 = vsel %vm553, %v476, %v501
      %v570 = vsel %vm553, %v409, %v526
      %v571 = vsel %vm553, %v412, %v528
      %v572 = vsel %vm553, %v415, %v530
      %v573 = vsel %vm553, %v418, %v532
      %v574 = vsel %vm553, %v421, %v534
      %v575 = vsel %vm553, %v424, %v536
      %v576 = vsel %vm553, %v427, %v538
      %v577 = vsel %vm553, %v513, %v540
      %v578 = vsel %vm553, %v377, %v550
      %v579 = vpack.c.bf16 %v555, %v554
      %v580 = vpack.c.bf16 %v563, %v562
      %v581 = vpack.c.bf16 %v571, %v570
      %v582 = vpack.c.bf16 %v557, %v556
      %v583 = vpack.c.bf16 %v464, %v461
      %v584 = vpack.c.bf16 %v565, %v564
      %v585 = vpack.c.bf16 %v573, %v572
      %v586 = vpack.c.bf16 %v559, %v558
      %v587 = vpack.c.bf16 %v470, %v467
      %v588 = vpack.c.bf16 %v567, %v566
      %v589 = vpack.c.bf16 %v575, %v574
      %v590 = vpack.c.bf16 %v561, %v560
      %v591 = vpack.c.bf16 %v476, %v473
      %v592 = vpack.c.bf16 %v569, %v568
      %v593 = vpack.c.bf16 %v577, %v576
      %v594 = vpack.c.bf16 %v554, %v578
      %v595 = vpack.c.bf16 %v455, %v524
      %v596 = vld [vmem:[%s2] sm:$0xf]
      %v597 = vld [vmem:[%s2 + $0x4] sm:$0xf]
      %v598 = vld [vmem:[%s2 + $0x8] sm:$0xf]
      %v599 = vld [vmem:[%s2 + $0xc] sm:$0xf]
      %v600 = vld [vmem:[%s2 + $0x10] sm:$0xf]
      %v601 = vld [vmem:[%s2 + $0x14] sm:$0xf]
      %v602 = vld [vmem:[%s2 + $0x18] sm:$0xf]
      %v603 = vld [vmem:[%s2 + $0x1c] sm:$0xf]
      %v604 = vld [vmem:[%s2 + $0x20] sm:$0xf]
      %v605 = vld [vmem:[%s2 + $0x24] sm:$0xf]
      %v606 = vld [vmem:[%s2 + $0x28] sm:$0xf]
      %v607 = vld [vmem:[%s2 + $0x2c] sm:$0xf]
      %v608 = vld [vmem:[%s2 + $0x30] sm:$0xf]
      %v609 = vld [vmem:[%s2 + $0x34] sm:$0xf]
      %v610 = vld [vmem:[%s2 + $0x38] sm:$0xf]
      %v611 = vld [vmem:[%s2 + $0x3c] sm:$0xf]
      %v612 = vld [vmem:[%s2 + $0x40] sm:$0xf]
      %v613 = vld [vmem:[%s2 + $0x44] sm:$0xf]
      %v614 = vld [vmem:[%s2 + $0x48] sm:$0xf]
      %v615 = vld [vmem:[%s2 + $0x4c] sm:$0xf]
      %v616 = vld [vmem:[%s2 + $0x50] sm:$0xf]
      %v617 = vld [vmem:[%s2 + $0x54] sm:$0xf]
      %v618 = vld [vmem:[%s2 + $0x58] sm:$0xf]
      %v619 = vld [vmem:[%s2 + $0x5c] sm:$0xf]
      %v620 = vld [vmem:[%s2 + $0x60] sm:$0xf]
      %v621 = vld [vmem:[%s2 + $0x64] sm:$0xf]
      %v622 = vld [vmem:[%s2 + $0x68] sm:$0xf]
      %v623 = vld [vmem:[%s2 + $0x6c] sm:$0xf]
      %v624 = vld [vmem:[%s2 + $0x70] sm:$0xf]
      %v625 = vld [vmem:[%s2 + $0x74] sm:$0xf]
      %v626 = vld [vmem:[%s2 + $0x78] sm:$0xf]
      %v627 = vld [vmem:[%s2 + $0x7c] sm:$0xf]
      %v628 = vld [vmem:[%s2 + $0x80] sm:$0xf]
      %v629 = vld [vmem:[%s2 + $0x84] sm:$0xf]
      %v630 = vld [vmem:[%s2 + $0x88] sm:$0xf]
      %v631 = vld [vmem:[%s2 + $0x8c] sm:$0xf]
      %v632 = vld [vmem:[%s2 + $0x90] sm:$0xf]
      %v633 = vld [vmem:[%s2 + $0x94] sm:$0xf]
      %v634 = vld [vmem:[%s2 + $0x98] sm:$0xf]
      %v635 = vld [vmem:[%s2 + $0x9c] sm:$0xf]
      %v636 = vld [vmem:[%s2 + $0xa0] sm:$0xf]
      %v637 = vld [vmem:[%s2 + $0xa4] sm:$0xf]
      %v638 = vld [vmem:[%s2 + $0xa8] sm:$0xf]
      %v639 = vld [vmem:[%s2 + $0xac] sm:$0xf]
      %v640 = vld [vmem:[%s2 + $0xb0] sm:$0xf]
      %v641 = vld [vmem:[%s2 + $0xb4] sm:$0xf]
      %v642 = vld [vmem:[%s2 + $0xb8] sm:$0xf]
      %v643 = vld [vmem:[%s2 + $0xbc] sm:$0xf]
      %v644 = vld [vmem:[%s2 + $0xc0] sm:$0xf]
      %v645 = vld [vmem:[%s2 + $0xc4] sm:$0xf]
      %v646 = vld [vmem:[%s2 + $0xc8] sm:$0xf]
      %v647 = vld [vmem:[%s2 + $0xcc] sm:$0xf]
      %v648 = vld [vmem:[%s2 + $0xd0] sm:$0xf]
      %v649 = vld [vmem:[%s2 + $0xd4] sm:$0xf]
      %v650 = vld [vmem:[%s2 + $0xd8] sm:$0xf]
      %v651 = vld [vmem:[%s2 + $0xdc] sm:$0xf]
      %v652 = vld [vmem:[%s2 + $0xe0] sm:$0xf]
      %v653 = vld [vmem:[%s2 + $0xe4] sm:$0xf]
      %v654 = vld [vmem:[%s2 + $0xe8] sm:$0xf]
      %v655 = vld [vmem:[%s2 + $0xec] sm:$0xf]
      %v656 = vld [vmem:[%s2 + $0xf0] sm:$0xf]
      %v657 = vld [vmem:[%s2 + $0xf4] sm:$0xf]
      %v658 = vld [vmem:[%s2 + $0xf8] sm:$0xf]
      %v659 = vld [vmem:[%s2 + $0xfc] sm:$0xf]
      %v660 = vld [vmem:[%s2 + $0x100] sm:$0xf]
      %v661 = vld [vmem:[%s2 + $0x104] sm:$0xf]
      %v662 = vld [vmem:[%s2 + $0x108] sm:$0xf]
      %v663 = vld [vmem:[%s2 + $0x10c] sm:$0xf]
      %v664 = vld [vmem:[%s2 + $0x110] sm:$0xf]
      %v665 = vld [vmem:[%s2 + $0x114] sm:$0xf]
      %v666 = vld [vmem:[%s2 + $0x118] sm:$0xf]
      %v667 = vld [vmem:[%s2 + $0x11c] sm:$0xf]
      %v740 = vunpack.c.l.b16 %v596
      %v741 = vunpack.c.l.b16 %v597
      %v742 = vunpack.c.l.b16 %v598
      %v743 = vunpack.c.l.b16 %v599
      %v744 = vunpack.c.l.b16 %v600
      %v745 = vunpack.c.l.b16 %v601
      %v746 = vunpack.c.l.b16 %v602
      %v747 = vunpack.c.l.b16 %v603
      %v748 = vunpack.c.l.b16 %v604
      %v749 = vunpack.c.l.b16 %v605
      %v750 = vunpack.c.l.b16 %v606
      %v751 = vunpack.c.l.b16 %v607
      %v752 = vunpack.c.l.b16 %v608
      %v753 = vunpack.c.l.b16 %v609
      %v754 = vunpack.c.l.b16 %v610
      %v755 = vunpack.c.l.b16 %v611
      %v756 = vunpack.c.l.b16 %v612
      %v757 = vunpack.c.l.b16 %v613
      %v758 = vunpack.c.l.b16 %v614
      %v759 = vunpack.c.l.b16 %v615
      %v760 = vunpack.c.l.b16 %v616
      %v761 = vunpack.c.l.b16 %v617
      %v762 = vunpack.c.l.b16 %v618
      %v763 = vunpack.c.l.b16 %v619
      %v764 = vunpack.c.l.b16 %v620
      %v765 = vunpack.c.l.b16 %v621
      %v766 = vunpack.c.l.b16 %v622
      %v767 = vunpack.c.l.b16 %v623
      %v768 = vunpack.c.l.b16 %v624
      %v769 = vunpack.c.l.b16 %v625
      %v770 = vunpack.c.l.b16 %v626
      %v771 = vunpack.c.l.b16 %v627
      %v772 = vunpack.c.l.b16 %v628
      %v773 = vunpack.c.l.b16 %v629
      %v774 = vunpack.c.l.b16 %v630
      %v775 = vunpack.c.l.b16 %v631
      %v776 = vunpack.c.l.b16 %v632
      %v777 = vunpack.c.l.b16 %v633
      %v778 = vunpack.c.l.b16 %v634
      %v779 = vunpack.c.l.b16 %v635
      %v780 = vunpack.c.l.b16 %v636
      %v781 = vunpack.c.l.b16 %v637
      %v782 = vunpack.c.l.b16 %v638
      %v783 = vunpack.c.l.b16 %v639
      %v784 = vunpack.c.l.b16 %v640
      %v785 = vunpack.c.l.b16 %v641
      %v786 = vunpack.c.l.b16 %v642
      %v787 = vunpack.c.l.b16 %v643
      %v788 = vunpack.c.l.b16 %v644
      %v789 = vunpack.c.l.b16 %v645
      %v790 = vunpack.c.l.b16 %v646
      %v791 = vunpack.c.l.b16 %v647
      %v792 = vunpack.c.l.b16 %v648
      %v793 = vunpack.c.l.b16 %v649
      %v794 = vunpack.c.l.b16 %v650
      %v795 = vunpack.c.l.b16 %v651
      %v796 = vunpack.c.l.b16 %v652
      %v797 = vunpack.c.l.b16 %v653
      %v798 = vunpack.c.l.b16 %v654
      %v799 = vunpack.c.l.b16 %v655
      %v800 = vunpack.c.l.b16 %v656
      %v801 = vunpack.c.l.b16 %v657
      %v802 = vunpack.c.l.b16 %v658
      %v803 = vunpack.c.l.b16 %v659
      %v804 = vunpack.c.l.b16 %v660
      %v805 = vunpack.c.l.b16 %v661
      %v806 = vunpack.c.l.b16 %v662
      %v807 = vunpack.c.l.b16 %v663
      %v808 = vunpack.c.l.b16 %v664
      %v809 = vunpack.c.l.b16 %v665
      %v810 = vunpack.c.l.b16 %v666
      %v811 = vunpack.c.l.b16 %v667
      %v812 = vpack.c.b16 %v741, %v740
      %v813 = vpack.c.b16 %v743, %v742
      %v814 = vpack.c.b16 %v745, %v744
      %v815 = vpack.c.b16 %v747, %v746
      %v816 = vpack.c.b16 %v749, %v748
      %v817 = vpack.c.b16 %v751, %v750
      %v818 = vpack.c.b16 %v753, %v752
      %v819 = vpack.c.b16 %v755, %v754
      %v820 = vpack.c.b16 %v757, %v756
      %v821 = vpack.c.b16 %v759, %v758
      %v822 = vpack.c.b16 %v761, %v760
      %v823 = vpack.c.b16 %v763, %v762
      %v824 = vpack.c.b16 %v765, %v764
      %v825 = vpack.c.b16 %v767, %v766
      %v826 = vpack.c.b16 %v769, %v768
      %v827 = vpack.c.b16 %v771, %v770
      %v828 = vpack.c.b16 %v773, %v772
      %v829 = vpack.c.b16 %v775, %v774
      %v830 = vpack.c.b16 %v777, %v776
      %v831 = vpack.c.b16 %v779, %v778
      %v832 = vpack.c.b16 %v781, %v780
      %v833 = vpack.c.b16 %v783, %v782
      %v834 = vpack.c.b16 %v785, %v784
      %v835 = vpack.c.b16 %v787, %v786
      %v836 = vpack.c.b16 %v789, %v788
      %v837 = vpack.c.b16 %v791, %v790
      %v838 = vpack.c.b16 %v793, %v792
      %v839 = vpack.c.b16 %v795, %v794
      %v840 = vpack.c.b16 %v797, %v796
      %v841 = vpack.c.b16 %v799, %v798
      %v842 = vpack.c.b16 %v801, %v800
      %v843 = vpack.c.b16 %v803, %v802
      %v844 = vpack.c.b16 %v805, %v804
      %v845 = vpack.c.b16 %v807, %v806
      %v846 = vpack.c.b16 %v809, %v808
      %v847 = vpack.c.b16 %v811, %v810
      %v885 = vsel %vm553, %v583, 0
      %v888 = vsel %vm553, %v587, 0
      %v891 = vsel %vm553, %v591, 0
      %v894 = vsel %vm553, %v595, 0
      %896 = vmatprep.subr.bf16.mxu0 0
      %897 = vmatpush1.bf16.msra.mxu0 %v812
      %898 = vmatprep.subr.bf16.mxu0 0
      %899 = vmatpush1.bf16.msra.mxu0 %v813
      %900 = vmatprep.subr.bf16.mxu0 0
      %901 = vmatpush1.bf16.msra.mxu0 %v814
      %902 = vmatprep.subr.bf16.mxu0 0
      %903 = vmatpush1.bf16.msra.mxu0 %v815
      %904 = vmatprep.subr.bf16.mxu0 0
      %905 = vmatpush1.bf16.msra.mxu0 %v816
      %906 = vmatprep.subr.bf16.mxu0 0
      %907 = vmatpush1.bf16.msra.mxu0 %v817
      %908 = vmatprep.subr.bf16.mxu0 0
      %909 = vmatpush1.bf16.msra.mxu0 %v818
      %910 = vmatprep.subr.bf16.mxu0 0
      %911 = vmatpush1.bf16.msra.mxu0 %v819
      %912 = vmatprep.subr.bf16.mxu0 0
      %913 = vmatpush1.bf16.msra.mxu0 %v820
      %914 = vmatprep.subr.bf16.mxu0 0
      %915 = vmatpush1.bf16.msra.mxu0 %v821
      %916 = vmatprep.subr.bf16.mxu0 0
      %917 = vmatpush1.bf16.msra.mxu0 %v822
      %918 = vmatprep.subr.bf16.mxu0 0
      %919 = vmatpush1.bf16.msra.mxu0 %v823
      %920 = vmatprep.subr.bf16.mxu0 0
      %921 = vmatpush1.bf16.msra.mxu0 %v824
      %922 = vmatprep.subr.bf16.mxu0 0
      %923 = vmatpush1.bf16.msra.mxu0 %v825
      %924 = vmatprep.subr.bf16.mxu0 0
      %925 = vmatpush1.bf16.msra.mxu0 %v826
      %926 = vmatprep.subr.bf16.mxu0 0
      %927 = vmatpush1.bf16.msra.mxu0 %v827
      %928 = vmatprep.mubr.bf16.mxu0 %v580
      %929 = vmatmul.mubr.bf16.gmra.mrb[0].mxu0 %v579
      %v930 = vpop.f32.mrb[0].mxu0
      %v931 = vadd.f32 0.0, %v930
      %v932 = vpop.f32.mrb[0].mxu0
      %v933 = vpop.f32.mrb[0].mxu0
      %v934 = vadd.f32 0.0, %v933
      %v935 = vpop.f32.mrb[0].mxu0
      %936 = vmatprep.mubr.bf16.mxu0 %v584
      %937 = vmatmul.mubr.bf16.gmra.mrb[0].mxu0 %v582
      %v938 = vpop.f32.mrb[0].mxu0
      %v939 = vadd.f32 0.0, %v938
      %v940 = vpop.f32.mrb[0].mxu0
      %v941 = vpop.f32.mrb[0].mxu0
      %v942 = vadd.f32 0.0, %v941
      %v943 = vpop.f32.mrb[0].mxu0
      %944 = vmatprep.mubr.bf16.mxu0 %v588
      %945 = vmatmul.mubr.bf16.gmra.mrb[0].mxu0 %v586
      %v946 = vpop.f32.mrb[0].mxu0
      %v947 = vadd.f32 0.0, %v946
      %v948 = vpop.f32.mrb[0].mxu0
      %v949 = vpop.f32.mrb[0].mxu0
      %v950 = vadd.f32 0.0, %v949
      %v951 = vpop.f32.mrb[0].mxu0
      %952 = vmatprep.mubr.bf16.mxu0 %v592
      %953 = vmatmul.mubr.bf16.gmra.mrb[0].mxu0 %v590
      %v954 = vpop.f32.mrb[0].mxu0
      %v955 = vadd.f32 0.0, %v954
      %v956 = vpop.f32.mrb[0].mxu0
      %v957 = vpop.f32.mrb[0].mxu0
      %v958 = vadd.f32 0.0, %v957
      %v959 = vpop.f32.mrb[0].mxu0
      %960 = vdwg.mxu0
      %961 = vmatprep.subr.bf16.mxu0 0
      %962 = vmatpush1.bf16.msra.mxu0 %v828
      %963 = vmatprep.subr.bf16.mxu0 0
      %964 = vmatpush1.bf16.msra.mxu0 %v829
      %965 = vmatprep.subr.bf16.mxu0 0
      %966 = vmatpush1.bf16.msra.mxu0 %v830
      %967 = vmatprep.subr.bf16.mxu0 0
      %968 = vmatpush1.bf16.msra.mxu0 %v831
      %969 = vmatprep.subr.bf16.mxu0 0
      %970 = vmatpush1.bf16.msra.mxu0 %v832
      %971 = vmatprep.subr.bf16.mxu0 0
      %972 = vmatpush1.bf16.msra.mxu0 %v833
      %973 = vmatprep.subr.bf16.mxu0 0
      %974 = vmatpush1.bf16.msra.mxu0 %v834
      %975 = vmatprep.subr.bf16.mxu0 0
      %976 = vmatpush1.bf16.msra.mxu0 %v835
      %977 = vmatprep.subr.bf16.mxu0 0
      %978 = vmatpush1.bf16.msra.mxu0 %v836
      %979 = vmatprep.subr.bf16.mxu0 0
      %980 = vmatpush1.bf16.msra.mxu0 %v837
      %981 = vmatprep.subr.bf16.mxu0 0
      %982 = vmatpush1.bf16.msra.mxu0 %v838
      %983 = vmatprep.subr.bf16.mxu0 0
      %984 = vmatpush1.bf16.msra.mxu0 %v839
      %985 = vmatprep.subr.bf16.mxu0 0
      %986 = vmatpush1.bf16.msra.mxu0 %v840
      %987 = vmatprep.subr.bf16.mxu0 0
      %988 = vmatpush1.bf16.msra.mxu0 %v841
      %989 = vmatprep.subr.bf16.mxu0 0
      %990 = vmatpush1.bf16.msra.mxu0 %v842
      %991 = vmatprep.subr.bf16.mxu0 0
      %992 = vmatpush1.bf16.msra.mxu0 %v843
      %993 = vmatprep.mubr.bf16.mxu0 %v582
      %994 = vmatmul.mubr.bf16.gmra.mrb[0].mxu0 %v581
      %v995 = vpop.f32.mrb[0].mxu0
      %v996 = vadd.f32 %v931, %v995
      %v997 = vpop.f32.mrb[0].mxu0
      %v998 = vpop.f32.mrb[0].mxu0
      %v999 = vadd.f32 %v934, %v998
      %v1000 = vpop.f32.mrb[0].mxu0
      %1001 = vmatprep.mubr.bf16.mxu0 %v586
      %1002 = vmatmul.mubr.bf16.gmra.mrb[0].mxu0 %v585
      %v1003 = vpop.f32.mrb[0].mxu0
      %v1004 = vadd.f32 %v939, %v1003
      %v1005 = vpop.f32.mrb[0].mxu0
      %v1006 = vpop.f32.mrb[0].mxu0
      %v1007 = vadd.f32 %v942, %v1006
      %v1008 = vpop.f32.mrb[0].mxu0
      %1009 = vmatprep.mubr.bf16.mxu0 %v590
      %1010 = vmatmul.mubr.bf16.gmra.mrb[0].mxu0 %v589
      %v1011 = vpop.f32.mrb[0].mxu0
      %v1012 = vadd.f32 %v947, %v1011
      %v1013 = vpop.f32.mrb[0].mxu0
      %v1014 = vpop.f32.mrb[0].mxu0
      %v1015 = vadd.f32 %v950, %v1014
      %v1016 = vpop.f32.mrb[0].mxu0
      %1017 = vmatprep.mubr.bf16.mxu0 %v594
      %1018 = vmatmul.mubr.bf16.gmra.mrb[0].mxu0 %v593
      %v1019 = vpop.f32.mrb[0].mxu0
      %v1020 = vadd.f32 %v955, %v1019
      %v1021 = vpop.f32.mrb[0].mxu0
      %v1022 = vpop.f32.mrb[0].mxu0
      %v1023 = vadd.f32 %v958, %v1022
      %v1024 = vpop.f32.mrb[0].mxu0
      %1025 = vdwg.mxu0
      %1026 = vmatprep.subr.bf16.mxu0 0
      %1027 = vmatpush1.bf16.msra.mxu0 %v844
      %1028 = vmatprep.subr.bf16.mxu0 0
      %1029 = vmatpush1.bf16.msra.mxu0 %v845
      %1030 = vmatprep.subr.bf16.mxu0 0
      %1031 = vmatpush1.bf16.msra.mxu0 %v846
      %1032 = vmatprep.subr.bf16.mxu0 0
      %1033 = vmatpush1.bf16.msra.mxu0 %v847
      %1034 = vmatprep.subr.bf16.mxu0 0
      %1035 = vmatpush1.bf16.msra.mxu0 0
      %1036 = vmatprep.subr.bf16.mxu0 0
      %1037 = vmatpush1.bf16.msra.mxu0 0
      %1038 = vmatprep.subr.bf16.mxu0 0
      %1039 = vmatpush1.bf16.msra.mxu0 0
      %1040 = vmatprep.subr.bf16.mxu0 0
      %1041 = vmatpush1.bf16.msra.mxu0 0
      %1042 = vmatprep.subr.bf16.mxu0 0
      %1043 = vmatpush1.bf16.msra.mxu0 0
      %1044 = vmatprep.subr.bf16.mxu0 0
      %1045 = vmatpush1.bf16.msra.mxu0 0
      %1046 = vmatprep.subr.bf16.mxu0 0
      %1047 = vmatpush1.bf16.msra.mxu0 0
      %1048 = vmatprep.subr.bf16.mxu0 0
      %1049 = vmatpush1.bf16.msra.mxu0 0
      %1050 = vmatprep.subr.bf16.mxu0 0
      %1051 = vmatpush1.bf16.msra.mxu0 0
      %1052 = vmatprep.subr.bf16.mxu0 0
      %1053 = vmatpush1.bf16.msra.mxu0 0
      %1054 = vmatprep.subr.bf16.mxu0 0
      %1055 = vmatpush1.bf16.msra.mxu0 0
      %1056 = vmatprep.subr.bf16.mxu0 0
      %1057 = vmatpush1.bf16.msra.mxu0 0
      %1058 = vmatprep.mubr.bf16.mxu0 0
      %1059 = vmatmul.mubr.bf16.gmra.mrb[0].mxu0 %v885
      %v1060 = vpop.f32.mrb[0].mxu0
      %v1061 = vadd.f32 %v996, %v1060
      %v1062 = vpop.f32.mrb[0].mxu0
      %v1063 = vpop.f32.mrb[0].mxu0
      %v1064 = vadd.f32 %v999, %v1063
      %v1065 = vpop.f32.mrb[0].mxu0
      %1066 = vmatprep.mubr.bf16.mxu0 0
      %1067 = vmatmul.mubr.bf16.gmra.mrb[0].mxu0 %v888
      %v1068 = vpop.f32.mrb[0].mxu0
      %v1069 = vadd.f32 %v1004, %v1068
      %v1070 = vpop.f32.mrb[0].mxu0
      %v1071 = vpop.f32.mrb[0].mxu0
      %v1072 = vadd.f32 %v1007, %v1071
      %v1073 = vpop.f32.mrb[0].mxu0
      %1074 = vmatprep.mubr.bf16.mxu0 0
      %1075 = vmatmul.mubr.bf16.gmra.mrb[0].mxu0 %v891
      %v1076 = vpop.f32.mrb[0].mxu0
      %v1077 = vadd.f32 %v1012, %v1076
      %v1078 = vpop.f32.mrb[0].mxu0
      %v1079 = vpop.f32.mrb[0].mxu0
      %v1080 = vadd.f32 %v1015, %v1079
      %v1081 = vpop.f32.mrb[0].mxu0
      %1082 = vmatprep.mubr.bf16.mxu0 0
      %1083 = vmatmul.mubr.bf16.gmra.mrb[0].mxu0 %v894
      %v1084 = vpop.f32.mrb[0].mxu0
      %v1085 = vadd.f32 %v1020, %v1084
      %v1086 = vpop.f32.mrb[0].mxu0
      %v1087 = vpop.f32.mrb[0].mxu0
      %v1088 = vadd.f32 %v1023, %v1087
      %v1089 = vpop.f32.mrb[0].mxu0
      %1090 = vdwg.mxu0
      %v1091 = vld [vmem:[%s4] sm:$0x1]
      %v1093 = vlaneseq
      %v1094 = vshrl.u32 %v1093, 7
      %v1095 = vsub.s32 0, %v1094
      %v1096 = vrot.slane %v1091, %v1095
      %v1098 = vmul.f32 %v1061, %v1096
      %v1099 = vmul.f32 %v1064, %v1096
      %v1100 = vmul.f32 %v1069, %v1096
      %v1101 = vmul.f32 %v1072, %v1096
      %v1102 = vmul.f32 %v1077, %v1096
      %v1103 = vmul.f32 %v1080, %v1096
      %v1104 = vmul.f32 %v1085, %v1096
      %v1105 = vmul.f32 %v1088, %v1096
      %v1106 = vld [vmem:[%s5] sm:$0x1]
      %v1108 = vlaneseq
      %v1109 = vshrl.u32 %v1108, 7
      %v1110 = vsub.s32 0, %v1109
      %v1111 = vrot.slane %v1106, %v1110
      %v1113 = vadd.f32 %v1098, %v1111
      %v1114 = vadd.f32 %v1099, %v1111
      %v1115 = vadd.f32 %v1100, %v1111
      %v1116 = vadd.f32 %v1101, %v1111
      %v1117 = vadd.f32 %v1102, %v1111
      %v1118 = vadd.f32 %v1103, %v1111
      %v1119 = vadd.f32 %v1104, %v1111
      %v1120 = vadd.f32 %v1105, %v1111
      %v1121 = vmax.f32 %v1113, 0.0
      %v1122 = vmax.f32 %v1114, 0.0
      %v1123 = vmax.f32 %v1115, 0.0
      %v1124 = vmax.f32 %v1116, 0.0
      %v1125 = vmax.f32 %v1117, 0.0
      %v1126 = vmax.f32 %v1118, 0.0
      %v1127 = vmax.f32 %v1119, 0.0
      %v1128 = vmax.f32 %v1120, 0.0
      %v1137 = vrot.slane %v1121, 7
      %v1138 = vrot.slane %v1122, 7
      %v1139 = vrot.slane %v1123, 7
      %v1140 = vrot.slane %v1124, 7
      %v1141 = vrot.slane %v1125, 7
      %v1142 = vrot.slane %v1126, 7
      %v1143 = vrot.slane %v1127, 7
      %v1144 = vrot.slane %v1128, 7
      %v1153 = vsel %vm368, 0.0, %v1137
      %v1154 = vsel %vm368, 0.0, %v1138
      %v1155 = vsel %vm368, 0.0, %v1139
      %v1156 = vsel %vm368, 0.0, %v1140
      %v1157 = vsel %vm368, 0.0, %v1141
      %v1158 = vsel %vm368, 0.0, %v1142
      %v1159 = vsel %vm368, 0.0, %v1143
      %v1160 = vsel %vm368, 0.0, %v1144
      %v1161 = vsel %vm368, %v1137, 0.0
      %v1162 = vsel %vm368, %v1138, 0.0
      %v1163 = vsel %vm368, %v1139, 0.0
      %v1164 = vsel %vm368, %v1140, 0.0
      %v1165 = vsel %vm368, %v1141, 0.0
      %v1166 = vsel %vm368, %v1142, 0.0
      %v1167 = vsel %vm368, %v1143, 0.0
      %v1168 = vsel %vm368, %v1144, 0.0
      %v1183 = vrot.slane %v1153, 1
      %v1184 = vrot.slane %v1161, 1
      %v1185 = vsel %vm403, %v1183, %v1184
      %v1186 = vrot.slane %v1154, 1
      %v1187 = vrot.slane %v1162, 1
      %v1188 = vsel %vm403, %v1186, %v1187
      %v1189 = vrot.slane %v1155, 1
      %v1190 = vrot.slane %v1163, 1
      %v1191 = vsel %vm403, %v1189, %v1190
      %v1192 = vrot.slane %v1156, 1
      %v1193 = vrot.slane %v1164, 1
      %v1194 = vsel %vm403, %v1192, %v1193
      %v1195 = vrot.slane %v1157, 1
      %v1196 = vrot.slane %v1165, 1
      %v1197 = vsel %vm403, %v1195, %v1196
      %v1198 = vrot.slane %v1158, 1
      %v1199 = vrot.slane %v1166, 1
      %v1200 = vsel %vm403, %v1198, %v1199
      %v1201 = vrot.slane %v1159, 1
      %v1202 = vrot.slane %v1167, 1
      %v1203 = vsel %vm403, %v1201, %v1202
      %v1212 = vrot.slane %v1153, 2
      %v1213 = vrot.slane %v1161, 2
      %v1214 = vsel %vm452, %v1212, %v1213
      %v1215 = vrot.slane %v1154, 2
      %v1216 = vrot.slane %v1162, 2
      %v1217 = vsel %vm452, %v1215, %v1216
      %v1218 = vrot.slane %v1155, 2
      %v1219 = vrot.slane %v1163, 2
      %v1220 = vsel %vm452, %v1218, %v1219
      %v1221 = vrot.slane %v1156, 2
      %v1222 = vrot.slane %v1164, 2
      %v1223 = vsel %vm452, %v1221, %v1222
      %v1224 = vrot.slane %v1157, 2
      %v1225 = vrot.slane %v1165, 2
      %v1226 = vsel %vm452, %v1224, %v1225
      %v1227 = vrot.slane %v1158, 2
      %v1228 = vrot.slane %v1166, 2
      %v1229 = vsel %vm452, %v1227, %v1228
      %v1230 = vrot.slane %v1159, 2
      %v1231 = vrot.slane %v1167, 2
      %v1232 = vsel %vm452, %v1230, %v1231
      %v1242 = vrot.slane %v1160, 1
      %v1243 = vrot.slane %v1168, 1
      %v1244 = vsel %vm403, %v1242, %v1243
      %v1246 = vrot.slane %v1160, 2
      %v1247 = vrot.slane %v1168, 2
      %v1248 = vsel %vm452, %v1246, %v1247
      %v1250 = vpack.c.bf16 %v1153, %v369
      %v1251 = vpack.c.bf16 %v1185, %v406
      %v1252 = vpack.c.bf16 %v1214, %v455
      %v1253 = vpack.c.bf16 %v1154, %v1153
      %v1254 = vpack.c.bf16 %v1188, %v1185
      %v1255 = vpack.c.bf16 %v1217, %v1214
      %v1256 = vpack.c.bf16 %v1155, %v1154
      %v1257 = vpack.c.bf16 %v1191, %v1188
      %v1258 = vpack.c.bf16 %v1220, %v1217
      %v1259 = vpack.c.bf16 %v1156, %v1155
      %v1260 = vpack.c.bf16 %v1194, %v1191
      %v1261 = vpack.c.bf16 %v1223, %v1220
      %v1262 = vpack.c.bf16 %v1157, %v1156
      %v1263 = vpack.c.bf16 %v1197, %v1194
      %v1264 = vpack.c.bf16 %v1226, %v1223
      %v1265 = vpack.c.bf16 %v1158, %v1157
      %v1266 = vpack.c.bf16 %v1200, %v1197
      %v1267 = vpack.c.bf16 %v1229, %v1226
      %v1268 = vpack.c.bf16 %v1159, %v1158
      %v1269 = vpack.c.bf16 %v1203, %v1200
      %v1270 = vpack.c.bf16 %v1232, %v1229
      %v1271 = vpack.c.bf16 %v1160, %v1159
      %v1272 = vpack.c.bf16 %v1244, %v1203
      %v1273 = vpack.c.bf16 %v1248, %v1232
      %v1274 = vpack.c.bf16 %v369, %v1160
      %v1275 = vpack.c.bf16 %v406, %v1244
      %v1276 = vpack.c.bf16 %v455, %v1248
      %v1277 = vld [vmem:[%s3] sm:$0xf]
      %v1278 = vld [vmem:[%s3 + $0x4] sm:$0xf]
      %v1279 = vld [vmem:[%s3 + $0x8] sm:$0xf]
      %v1280 = vld [vmem:[%s3 + $0xc] sm:$0xf]
      %v1281 = vld [vmem:[%s3 + $0x10] sm:$0xf]
      %v1282 = vld [vmem:[%s3 + $0x14] sm:$0xf]
      %v1283 = vld [vmem:[%s3 + $0x18] sm:$0xf]
      %v1284 = vld [vmem:[%s3 + $0x1c] sm:$0xf]
      %v1285 = vld [vmem:[%s3 + $0x20] sm:$0xf]
      %v1286 = vld [vmem:[%s3 + $0x24] sm:$0xf]
      %v1287 = vld [vmem:[%s3 + $0x28] sm:$0xf]
      %v1288 = vld [vmem:[%s3 + $0x2c] sm:$0xf]
      %v1289 = vld [vmem:[%s3 + $0x30] sm:$0xf]
      %v1290 = vld [vmem:[%s3 + $0x34] sm:$0xf]
      %v1291 = vld [vmem:[%s3 + $0x38] sm:$0xf]
      %v1292 = vld [vmem:[%s3 + $0x3c] sm:$0xf]
      %v1293 = vld [vmem:[%s3 + $0x40] sm:$0xf]
      %v1294 = vld [vmem:[%s3 + $0x44] sm:$0xf]
      %v1295 = vld [vmem:[%s3 + $0x48] sm:$0xf]
      %v1296 = vld [vmem:[%s3 + $0x4c] sm:$0xf]
      %v1297 = vld [vmem:[%s3 + $0x50] sm:$0xf]
      %v1298 = vld [vmem:[%s3 + $0x54] sm:$0xf]
      %v1299 = vld [vmem:[%s3 + $0x58] sm:$0xf]
      %v1300 = vld [vmem:[%s3 + $0x5c] sm:$0xf]
      %v1301 = vld [vmem:[%s3 + $0x60] sm:$0xf]
      %v1302 = vld [vmem:[%s3 + $0x64] sm:$0xf]
      %v1303 = vld [vmem:[%s3 + $0x68] sm:$0xf]
      %v1304 = vld [vmem:[%s3 + $0x6c] sm:$0xf]
      %v1305 = vld [vmem:[%s3 + $0x70] sm:$0xf]
      %v1306 = vld [vmem:[%s3 + $0x74] sm:$0xf]
      %v1307 = vld [vmem:[%s3 + $0x78] sm:$0xf]
      %v1308 = vld [vmem:[%s3 + $0x7c] sm:$0xf]
      %v1309 = vld [vmem:[%s3 + $0x80] sm:$0xf]
      %v1310 = vld [vmem:[%s3 + $0x84] sm:$0xf]
      %v1311 = vld [vmem:[%s3 + $0x88] sm:$0xf]
      %v1312 = vld [vmem:[%s3 + $0x8c] sm:$0xf]
      %v1313 = vld [vmem:[%s3 + $0x90] sm:$0xf]
      %v1314 = vld [vmem:[%s3 + $0x94] sm:$0xf]
      %v1315 = vld [vmem:[%s3 + $0x98] sm:$0xf]
      %v1316 = vld [vmem:[%s3 + $0x9c] sm:$0xf]
      %v1317 = vld [vmem:[%s3 + $0xa0] sm:$0xf]
      %v1318 = vld [vmem:[%s3 + $0xa4] sm:$0xf]
      %v1319 = vld [vmem:[%s3 + $0xa8] sm:$0xf]
      %v1320 = vld [vmem:[%s3 + $0xac] sm:$0xf]
      %v1321 = vld [vmem:[%s3 + $0xb0] sm:$0xf]
      %v1322 = vld [vmem:[%s3 + $0xb4] sm:$0xf]
      %v1323 = vld [vmem:[%s3 + $0xb8] sm:$0xf]
      %v1324 = vld [vmem:[%s3 + $0xbc] sm:$0xf]
      %v1325 = vld [vmem:[%s3 + $0xc0] sm:$0xf]
      %v1326 = vld [vmem:[%s3 + $0xc4] sm:$0xf]
      %v1327 = vld [vmem:[%s3 + $0xc8] sm:$0xf]
      %v1328 = vld [vmem:[%s3 + $0xcc] sm:$0xf]
      %v1329 = vld [vmem:[%s3 + $0xd0] sm:$0xf]
      %v1330 = vld [vmem:[%s3 + $0xd4] sm:$0xf]
      %v1331 = vld [vmem:[%s3 + $0xd8] sm:$0xf]
      %v1332 = vld [vmem:[%s3 + $0xdc] sm:$0xf]
      %v1333 = vld [vmem:[%s3 + $0xe0] sm:$0xf]
      %v1334 = vld [vmem:[%s3 + $0xe4] sm:$0xf]
      %v1335 = vld [vmem:[%s3 + $0xe8] sm:$0xf]
      %v1336 = vld [vmem:[%s3 + $0xec] sm:$0xf]
      %v1337 = vld [vmem:[%s3 + $0xf0] sm:$0xf]
      %v1338 = vld [vmem:[%s3 + $0xf4] sm:$0xf]
      %v1339 = vld [vmem:[%s3 + $0xf8] sm:$0xf]
      %v1340 = vld [vmem:[%s3 + $0xfc] sm:$0xf]
      %v1341 = vld [vmem:[%s3 + $0x100] sm:$0xf]
      %v1342 = vld [vmem:[%s3 + $0x104] sm:$0xf]
      %v1343 = vld [vmem:[%s3 + $0x108] sm:$0xf]
      %v1344 = vld [vmem:[%s3 + $0x10c] sm:$0xf]
      %v1345 = vld [vmem:[%s3 + $0x110] sm:$0xf]
      %v1346 = vld [vmem:[%s3 + $0x114] sm:$0xf]
      %v1347 = vld [vmem:[%s3 + $0x118] sm:$0xf]
      %v1348 = vld [vmem:[%s3 + $0x11c] sm:$0xf]
      %v1349 = vld [vmem:[%s3 + $0x120] sm:$0xf]
      %v1350 = vld [vmem:[%s3 + $0x124] sm:$0xf]
      %v1351 = vld [vmem:[%s3 + $0x128] sm:$0xf]
      %v1352 = vld [vmem:[%s3 + $0x12c] sm:$0xf]
      %v1353 = vld [vmem:[%s3 + $0x130] sm:$0xf]
      %v1354 = vld [vmem:[%s3 + $0x134] sm:$0xf]
      %v1355 = vld [vmem:[%s3 + $0x138] sm:$0xf]
      %v1356 = vld [vmem:[%s3 + $0x13c] sm:$0xf]
      %v1357 = vld [vmem:[%s3 + $0x140] sm:$0xf]
      %v1358 = vld [vmem:[%s3 + $0x144] sm:$0xf]
      %v1359 = vld [vmem:[%s3 + $0x148] sm:$0xf]
      %v1360 = vld [vmem:[%s3 + $0x14c] sm:$0xf]
      %v1361 = vld [vmem:[%s3 + $0x150] sm:$0xf]
      %v1362 = vld [vmem:[%s3 + $0x154] sm:$0xf]
      %v1363 = vld [vmem:[%s3 + $0x158] sm:$0xf]
      %v1364 = vld [vmem:[%s3 + $0x15c] sm:$0xf]
      %v1365 = vld [vmem:[%s3 + $0x160] sm:$0xf]
      %v1366 = vld [vmem:[%s3 + $0x164] sm:$0xf]
      %v1367 = vld [vmem:[%s3 + $0x168] sm:$0xf]
      %v1368 = vld [vmem:[%s3 + $0x16c] sm:$0xf]
      %v1369 = vld [vmem:[%s3 + $0x170] sm:$0xf]
      %v1370 = vld [vmem:[%s3 + $0x174] sm:$0xf]
      %v1371 = vld [vmem:[%s3 + $0x178] sm:$0xf]
      %v1372 = vld [vmem:[%s3 + $0x17c] sm:$0xf]
      %v1373 = vld [vmem:[%s3 + $0x180] sm:$0xf]
      %v1374 = vld [vmem:[%s3 + $0x184] sm:$0xf]
      %v1375 = vld [vmem:[%s3 + $0x188] sm:$0xf]
      %v1376 = vld [vmem:[%s3 + $0x18c] sm:$0xf]
      %v1377 = vld [vmem:[%s3 + $0x190] sm:$0xf]
      %v1378 = vld [vmem:[%s3 + $0x194] sm:$0xf]
      %v1379 = vld [vmem:[%s3 + $0x198] sm:$0xf]
      %v1380 = vld [vmem:[%s3 + $0x19c] sm:$0xf]
      %v1381 = vld [vmem:[%s3 + $0x1a0] sm:$0xf]
      %v1382 = vld [vmem:[%s3 + $0x1a4] sm:$0xf]
      %v1383 = vld [vmem:[%s3 + $0x1a8] sm:$0xf]
      %v1384 = vld [vmem:[%s3 + $0x1ac] sm:$0xf]
      %v1385 = vld [vmem:[%s3 + $0x1b0] sm:$0xf]
      %v1386 = vld [vmem:[%s3 + $0x1b4] sm:$0xf]
      %v1387 = vld [vmem:[%s3 + $0x1b8] sm:$0xf]
      %v1388 = vld [vmem:[%s3 + $0x1bc] sm:$0xf]
      %v1389 = vld [vmem:[%s3 + $0x1c0] sm:$0xf]
      %v1390 = vld [vmem:[%s3 + $0x1c4] sm:$0xf]
      %v1391 = vld [vmem:[%s3 + $0x1c8] sm:$0xf]
      %v1392 = vld [vmem:[%s3 + $0x1cc] sm:$0xf]
      %v1393 = vld [vmem:[%s3 + $0x1d0] sm:$0xf]
      %v1394 = vld [vmem:[%s3 + $0x1d4] sm:$0xf]
      %v1395 = vld [vmem:[%s3 + $0x1d8] sm:$0xf]
      %v1396 = vld [vmem:[%s3 + $0x1dc] sm:$0xf]
      %v1397 = vld [vmem:[%s3 + $0x1e0] sm:$0xf]
      %v1398 = vld [vmem:[%s3 + $0x1e4] sm:$0xf]
      %v1399 = vld [vmem:[%s3 + $0x1e8] sm:$0xf]
      %v1400 = vld [vmem:[%s3 + $0x1ec] sm:$0xf]
      %v1401 = vld [vmem:[%s3 + $0x1f0] sm:$0xf]
      %v1402 = vld [vmem:[%s3 + $0x1f4] sm:$0xf]
      %v1403 = vld [vmem:[%s3 + $0x1f8] sm:$0xf]
      %v1404 = vld [vmem:[%s3 + $0x1fc] sm:$0xf]
      %v1405 = vld [vmem:[%s3 + $0x200] sm:$0xf]
      %v1406 = vld [vmem:[%s3 + $0x204] sm:$0xf]
      %v1407 = vld [vmem:[%s3 + $0x208] sm:$0xf]
      %v1408 = vld [vmem:[%s3 + $0x20c] sm:$0xf]
      %v1409 = vld [vmem:[%s3 + $0x210] sm:$0xf]
      %v1410 = vld [vmem:[%s3 + $0x214] sm:$0xf]
      %v1411 = vld [vmem:[%s3 + $0x218] sm:$0xf]
      %v1412 = vld [vmem:[%s3 + $0x21c] sm:$0xf]
      %v1413 = vld [vmem:[%s3 + $0x220] sm:$0xf]
      %v1414 = vld [vmem:[%s3 + $0x224] sm:$0xf]
      %v1415 = vld [vmem:[%s3 + $0x228] sm:$0xf]
      %v1416 = vld [vmem:[%s3 + $0x22c] sm:$0xf]
      %v1417 = vld [vmem:[%s3 + $0x230] sm:$0xf]
      %v1418 = vld [vmem:[%s3 + $0x234] sm:$0xf]
      %v1419 = vld [vmem:[%s3 + $0x238] sm:$0xf]
      %v1420 = vld [vmem:[%s3 + $0x23c] sm:$0xf]
      %v1565 = vunpack.c.l.b16 %v1277
      %v1566 = vunpack.c.l.b16 %v1278
      %v1567 = vunpack.c.l.b16 %v1279
      %v1568 = vunpack.c.l.b16 %v1280
      %v1569 = vunpack.c.l.b16 %v1281
      %v1570 = vunpack.c.l.b16 %v1282
      %v1571 = vunpack.c.l.b16 %v1283
      %v1572 = vunpack.c.l.b16 %v1284
      %v1573 = vunpack.c.l.b16 %v1285
      %v1574 = vunpack.c.l.b16 %v1286
      %v1575 = vunpack.c.l.b16 %v1287
      %v1576 = vunpack.c.l.b16 %v1288
      %v1577 = vunpack.c.l.b16 %v1289
      %v1578 = vunpack.c.l.b16 %v1290
      %v1579 = vunpack.c.l.b16 %v1291
      %v1580 = vunpack.c.l.b16 %v1292
      %v1581 = vunpack.c.l.b16 %v1293
      %v1582 = vunpack.c.l.b16 %v1294
      %v1583 = vunpack.c.l.b16 %v1295
      %v1584 = vunpack.c.l.b16 %v1296
      %v1585 = vunpack.c.l.b16 %v1297
      %v1586 = vunpack.c.l.b16 %v1298
      %v1587 = vunpack.c.l.b16 %v1299
      %v1588 = vunpack.c.l.b16 %v1300
      %v1589 = vunpack.c.l.b16 %v1301
      %v1590 = vunpack.c.l.b16 %v1302
      %v1591 = vunpack.c.l.b16 %v1303
      %v1592 = vunpack.c.l.b16 %v1304
      %v1593 = vunpack.c.l.b16 %v1305
      %v1594 = vunpack.c.l.b16 %v1306
      %v1595 = vunpack.c.l.b16 %v1307
      %v1596 = vunpack.c.l.b16 %v1308
      %v1597 = vunpack.c.l.b16 %v1309
      %v1598 = vunpack.c.l.b16 %v1310
      %v1599 = vunpack.c.l.b16 %v1311
      %v1600 = vunpack.c.l.b16 %v1312
      %v1601 = vunpack.c.l.b16 %v1313
      %v1602 = vunpack.c.l.b16 %v1314
      %v1603 = vunpack.c.l.b16 %v1315
      %v1604 = vunpack.c.l.b16 %v1316
      %v1605 = vunpack.c.l.b16 %v1317
      %v1606 = vunpack.c.l.b16 %v1318
      %v1607 = vunpack.c.l.b16 %v1319
      %v1608 = vunpack.c.l.b16 %v1320
      %v1609 = vunpack.c.l.b16 %v1321
      %v1610 = vunpack.c.l.b16 %v1322
      %v1611 = vunpack.c.l.b16 %v1323
      %v1612 = vunpack.c.l.b16 %v1324
      %v1613 = vunpack.c.l.b16 %v1325
      %v1614 = vunpack.c.l.b16 %v1326
      %v1615 = vunpack.c.l.b16 %v1327
      %v1616 = vunpack.c.l.b16 %v1328
      %v1617 = vunpack.c.l.b16 %v1329
      %v1618 = vunpack.c.l.b16 %v1330
      %v1619 = vunpack.c.l.b16 %v1331
      %v1620 = vunpack.c.l.b16 %v1332
      %v1621 = vunpack.c.l.b16 %v1333
      %v1622 = vunpack.c.l.b16 %v1334
      %v1623 = vunpack.c.l.b16 %v1335
      %v1624 = vunpack.c.l.b16 %v1336
      %v1625 = vunpack.c.l.b16 %v1337
      %v1626 = vunpack.c.l.b16 %v1338
      %v1627 = vunpack.c.l.b16 %v1339
      %v1628 = vunpack.c.l.b16 %v1340
      %v1629 = vunpack.c.l.b16 %v1341
      %v1630 = vunpack.c.l.b16 %v1342
      %v1631 = vunpack.c.l.b16 %v1343
      %v1632 = vunpack.c.l.b16 %v1344
      %v1633 = vunpack.c.l.b16 %v1345
      %v1634 = vunpack.c.l.b16 %v1346
      %v1635 = vunpack.c.l.b16 %v1347
      %v1636 = vunpack.c.l.b16 %v1348
      %v1637 = vunpack.c.l.b16 %v1349
      %v1638 = vunpack.c.l.b16 %v1350
      %v1639 = vunpack.c.l.b16 %v1351
      %v1640 = vunpack.c.l.b16 %v1352
      %v1641 = vunpack.c.l.b16 %v1353
      %v1642 = vunpack.c.l.b16 %v1354
      %v1643 = vunpack.c.l.b16 %v1355
      %v1644 = vunpack.c.l.b16 %v1356
      %v1645 = vunpack.c.l.b16 %v1357
      %v1646 = vunpack.c.l.b16 %v1358
      %v1647 = vunpack.c.l.b16 %v1359
      %v1648 = vunpack.c.l.b16 %v1360
      %v1649 = vunpack.c.l.b16 %v1361
      %v1650 = vunpack.c.l.b16 %v1362
      %v1651 = vunpack.c.l.b16 %v1363
      %v1652 = vunpack.c.l.b16 %v1364
      %v1653 = vunpack.c.l.b16 %v1365
      %v1654 = vunpack.c.l.b16 %v1366
      %v1655 = vunpack.c.l.b16 %v1367
      %v1656 = vunpack.c.l.b16 %v1368
      %v1657 = vunpack.c.l.b16 %v1369
      %v1658 = vunpack.c.l.b16 %v1370
      %v1659 = vunpack.c.l.b16 %v1371
      %v1660 = vunpack.c.l.b16 %v1372
      %v1661 = vunpack.c.l.b16 %v1373
      %v1662 = vunpack.c.l.b16 %v1374
      %v1663 = vunpack.c.l.b16 %v1375
      %v1664 = vunpack.c.l.b16 %v1376
      %v1665 = vunpack.c.l.b16 %v1377
      %v1666 = vunpack.c.l.b16 %v1378
      %v1667 = vunpack.c.l.b16 %v1379
      %v1668 = vunpack.c.l.b16 %v1380
      %v1669 = vunpack.c.l.b16 %v1381
      %v1670 = vunpack.c.l.b16 %v1382
      %v1671 = vunpack.c.l.b16 %v1383
      %v1672 = vunpack.c.l.b16 %v1384
      %v1673 = vunpack.c.l.b16 %v1385
      %v1674 = vunpack.c.l.b16 %v1386
      %v1675 = vunpack.c.l.b16 %v1387
      %v1676 = vunpack.c.l.b16 %v1388
      %v1677 = vunpack.c.l.b16 %v1389
      %v1678 = vunpack.c.l.b16 %v1390
      %v1679 = vunpack.c.l.b16 %v1391
      %v1680 = vunpack.c.l.b16 %v1392
      %v1681 = vunpack.c.l.b16 %v1393
      %v1682 = vunpack.c.l.b16 %v1394
      %v1683 = vunpack.c.l.b16 %v1395
      %v1684 = vunpack.c.l.b16 %v1396
      %v1685 = vunpack.c.l.b16 %v1397
      %v1686 = vunpack.c.l.b16 %v1398
      %v1687 = vunpack.c.l.b16 %v1399
      %v1688 = vunpack.c.l.b16 %v1400
      %v1689 = vunpack.c.l.b16 %v1401
      %v1690 = vunpack.c.l.b16 %v1402
      %v1691 = vunpack.c.l.b16 %v1403
      %v1692 = vunpack.c.l.b16 %v1404
      %v1693 = vunpack.c.l.b16 %v1405
      %v1694 = vunpack.c.l.b16 %v1406
      %v1695 = vunpack.c.l.b16 %v1407
      %v1696 = vunpack.c.l.b16 %v1408
      %v1697 = vunpack.c.l.b16 %v1409
      %v1698 = vunpack.c.l.b16 %v1410
      %v1699 = vunpack.c.l.b16 %v1411
      %v1700 = vunpack.c.l.b16 %v1412
      %v1701 = vunpack.c.l.b16 %v1413
      %v1702 = vunpack.c.l.b16 %v1414
      %v1703 = vunpack.c.l.b16 %v1415
      %v1704 = vunpack.c.l.b16 %v1416
      %v1705 = vunpack.c.l.b16 %v1417
      %v1706 = vunpack.c.l.b16 %v1418
      %v1707 = vunpack.c.l.b16 %v1419
      %v1708 = vunpack.c.l.b16 %v1420
      %v1709 = vpack.c.b16 %v1566, %v1565
      %v1710 = vpack.c.b16 %v1568, %v1567
      %v1711 = vpack.c.b16 %v1570, %v1569
      %v1712 = vpack.c.b16 %v1572, %v1571
      %v1713 = vpack.c.b16 %v1574, %v1573
      %v1714 = vpack.c.b16 %v1576, %v1575
      %v1715 = vpack.c.b16 %v1578, %v1577
      %v1716 = vpack.c.b16 %v1580, %v1579
      %v1717 = vpack.c.b16 %v1582, %v1581
      %v1718 = vpack.c.b16 %v1584, %v1583
      %v1719 = vpack.c.b16 %v1586, %v1585
      %v1720 = vpack.c.b16 %v1588, %v1587
      %v1721 = vpack.c.b16 %v1590, %v1589
      %v1722 = vpack.c.b16 %v1592, %v1591
      %v1723 = vpack.c.b16 %v1594, %v1593
      %v1724 = vpack.c.b16 %v1596, %v1595
      %v1725 = vpack.c.b16 %v1598, %v1597
      %v1726 = vpack.c.b16 %v1600, %v1599
      %v1727 = vpack.c.b16 %v1602, %v1601
      %v1728 = vpack.c.b16 %v1604, %v1603
      %v1729 = vpack.c.b16 %v1606, %v1605
      %v1730 = vpack.c.b16 %v1608, %v1607
      %v1731 = vpack.c.b16 %v1610, %v1609
      %v1732 = vpack.c.b16 %v1612, %v1611
      %v1733 = vpack.c.b16 %v1614, %v1613
      %v1734 = vpack.c.b16 %v1616, %v1615
      %v1735 = vpack.c.b16 %v1618, %v1617
      %v1736 = vpack.c.b16 %v1620, %v1619
      %v1737 = vpack.c.b16 %v1622, %v1621
      %v1738 = vpack.c.b16 %v1624, %v1623
      %v1739 = vpack.c.b16 %v1626, %v1625
      %v1740 = vpack.c.b16 %v1628, %v1627
      %v1741 = vpack.c.b16 %v1630, %v1629
      %v1742 = vpack.c.b16 %v1632, %v1631
      %v1743 = vpack.c.b16 %v1634, %v1633
      %v1744 = vpack.c.b16 %v1636, %v1635
      %v1745 = vpack.c.b16 %v1638, %v1637
      %v1746 = vpack.c.b16 %v1640, %v1639
      %v1747 = vpack.c.b16 %v1642, %v1641
      %v1748 = vpack.c.b16 %v1644, %v1643
      %v1749 = vpack.c.b16 %v1646, %v1645
      %v1750 = vpack.c.b16 %v1648, %v1647
      %v1751 = vpack.c.b16 %v1650, %v1649
      %v1752 = vpack.c.b16 %v1652, %v1651
      %v1753 = vpack.c.b16 %v1654, %v1653
      %v1754 = vpack.c.b16 %v1656, %v1655
      %v1755 = vpack.c.b16 %v1658, %v1657
      %v1756 = vpack.c.b16 %v1660, %v1659
      %v1757 = vpack.c.b16 %v1662, %v1661
      %v1758 = vpack.c.b16 %v1664, %v1663
      %v1759 = vpack.c.b16 %v1666, %v1665
      %v1760 = vpack.c.b16 %v1668, %v1667
      %v1761 = vpack.c.b16 %v1670, %v1669
      %v1762 = vpack.c.b16 %v1672, %v1671
      %v1763 = vpack.c.b16 %v1674, %v1673
      %v1764 = vpack.c.b16 %v1676, %v1675
      %v1765 = vpack.c.b16 %v1678, %v1677
      %v1766 = vpack.c.b16 %v1680, %v1679
      %v1767 = vpack.c.b16 %v1682, %v1681
      %v1768 = vpack.c.b16 %v1684, %v1683
      %v1769 = vpack.c.b16 %v1686, %v1685
      %v1770 = vpack.c.b16 %v1688, %v1687
      %v1771 = vpack.c.b16 %v1690, %v1689
      %v1772 = vpack.c.b16 %v1692, %v1691
      %v1773 = vpack.c.b16 %v1694, %v1693
      %v1774 = vpack.c.b16 %v1696, %v1695
      %v1775 = vpack.c.b16 %v1698, %v1697
      %v1776 = vpack.c.b16 %v1700, %v1699
      %v1777 = vpack.c.b16 %v1702, %v1701
      %v1778 = vpack.c.b16 %v1704, %v1703
      %v1779 = vpack.c.b16 %v1706, %v1705
      %v1780 = vpack.c.b16 %v1708, %v1707
      %1853 = vmatprep.subr.bf16.mxu0 0
      %1854 = vmatpush1.bf16.msra.mxu0 %v1709
      %1855 = vmatprep.subr.bf16.mxu0 0
      %1856 = vmatpush1.bf16.msra.mxu0 %v1710
      %1857 = vmatprep.subr.bf16.mxu0 0
      %1858 = vmatpush1.bf16.msra.mxu0 %v1711
      %1859 = vmatprep.subr.bf16.mxu0 0
      %1860 = vmatpush1.bf16.msra.mxu0 %v1712
      %1861 = vmatprep.subr.bf16.mxu0 0
      %1862 = vmatpush1.bf16.msra.mxu0 %v1713
      %1863 = vmatprep.subr.bf16.mxu0 0
      %1864 = vmatpush1.bf16.msra.mxu0 %v1714
      %1865 = vmatprep.subr.bf16.mxu0 0
      %1866 = vmatpush1.bf16.msra.mxu0 %v1715
      %1867 = vmatprep.subr.bf16.mxu0 0
      %1868 = vmatpush1.bf16.msra.mxu0 %v1716
      %1869 = vmatprep.subr.bf16.mxu0 0
      %1870 = vmatpush1.bf16.msra.mxu0 %v1717
      %1871 = vmatprep.subr.bf16.mxu0 0
      %1872 = vmatpush1.bf16.msra.mxu0 %v1718
      %1873 = vmatprep.subr.bf16.mxu0 0
      %1874 = vmatpush1.bf16.msra.mxu0 %v1719
      %1875 = vmatprep.subr.bf16.mxu0 0
      %1876 = vmatpush1.bf16.msra.mxu0 %v1720
      %1877 = vmatprep.subr.bf16.mxu0 0
      %1878 = vmatpush1.bf16.msra.mxu0 %v1721
      %1879 = vmatprep.subr.bf16.mxu0 0
      %1880 = vmatpush1.bf16.msra.mxu0 %v1722
      %1881 = vmatprep.subr.bf16.mxu0 0
      %1882 = vmatpush1.bf16.msra.mxu0 %v1723
      %1883 = vmatprep.subr.bf16.mxu0 0
      %1884 = vmatpush1.bf16.msra.mxu0 %v1724
      %1885 = vmatprep.mubr.bf16.mxu0 %v1251
      %1886 = vmatmul.mubr.bf16.gmra.mrb[0].mxu0 %v1250
      %v1887 = vpop.f32.mrb[0].mxu0
      %v1888 = vadd.f32 0.0, %v1887
      %v1889 = vpop.f32.mrb[0].mxu0
      %v1890 = vpop.f32.mrb[0].mxu0
      %v1891 = vadd.f32 0.0, %v1890
      %v1892 = vpop.f32.mrb[0].mxu0
      %1893 = vmatprep.mubr.bf16.mxu0 %v1257
      %1894 = vmatmul.mubr.bf16.gmra.mrb[0].mxu0 %v1256
      %v1895 = vpop.f32.mrb[0].mxu0
      %v1896 = vadd.f32 0.0, %v1895
      %v1897 = vpop.f32.mrb[0].mxu0
      %v1898 = vpop.f32.mrb[0].mxu0
      %v1899 = vadd.f32 0.0, %v1898
      %v1900 = vpop.f32.mrb[0].mxu0
      %1901 = vmatprep.mubr.bf16.mxu0 %v1263
      %1902 = vmatmul.mubr.bf16.gmra.mrb[0].mxu0 %v1262
      %v1903 = vpop.f32.mrb[0].mxu0
      %v1904 = vadd.f32 0.0, %v1903
      %v1905 = vpop.f32.mrb[0].mxu0
      %v1906 = vpop.f32.mrb[0].mxu0
      %v1907 = vadd.f32 0.0, %v1906
      %v1908 = vpop.f32.mrb[0].mxu0
      %1909 = vmatprep.mubr.bf16.mxu0 %v1269
      %1910 = vmatmul.mubr.bf16.gmra.mrb[0].mxu0 %v1268
      %v1911 = vpop.f32.mrb[0].mxu0
      %v1912 = vadd.f32 0.0, %v1911
      %v1913 = vpop.f32.mrb[0].mxu0
      %v1914 = vpop.f32.mrb[0].mxu0
      %v1915 = vadd.f32 0.0, %v1914
      %v1916 = vpop.f32.mrb[0].mxu0
      %1917 = vdwg.mxu0
      %1918 = vmatprep.subr.bf16.mxu0 0
      %1919 = vmatpush1.bf16.msra.mxu0 %v1725
      %1920 = vmatprep.subr.bf16.mxu0 0
      %1921 = vmatpush1.bf16.msra.mxu0 %v1726
      %1922 = vmatprep.subr.bf16.mxu0 0
      %1923 = vmatpush1.bf16.msra.mxu0 %v1727
      %1924 = vmatprep.subr.bf16.mxu0 0
      %1925 = vmatpush1.bf16.msra.mxu0 %v1728
      %1926 = vmatprep.subr.bf16.mxu0 0
      %1927 = vmatpush1.bf16.msra.mxu0 %v1729
      %1928 = vmatprep.subr.bf16.mxu0 0
      %1929 = vmatpush1.bf16.msra.mxu0 %v1730
      %1930 = vmatprep.subr.bf16.mxu0 0
      %1931 = vmatpush1.bf16.msra.mxu0 %v1731
      %1932 = vmatprep.subr.bf16.mxu0 0
      %1933 = vmatpush1.bf16.msra.mxu0 %v1732
      %1934 = vmatprep.subr.bf16.mxu0 0
      %1935 = vmatpush1.bf16.msra.mxu0 %v1733
      %1936 = vmatprep.subr.bf16.mxu0 0
      %1937 = vmatpush1.bf16.msra.mxu0 %v1734
      %1938 = vmatprep.subr.bf16.mxu0 0
      %1939 = vmatpush1.bf16.msra.mxu0 %v1735
      %1940 = vmatprep.subr.bf16.mxu0 0
      %1941 = vmatpush1.bf16.msra.mxu0 %v1736
      %1942 = vmatprep.subr.bf16.mxu0 0
      %1943 = vmatpush1.bf16.msra.mxu0 %v1737
      %1944 = vmatprep.subr.bf16.mxu0 0
      %1945 = vmatpush1.bf16.msra.mxu0 %v1738
      %1946 = vmatprep.subr.bf16.mxu0 0
      %1947 = vmatpush1.bf16.msra.mxu0 %v1739
      %1948 = vmatprep.subr.bf16.mxu0 0
      %1949 = vmatpush1.bf16.msra.mxu0 %v1740
      %1950 = vmatprep.mubr.bf16.mxu0 %v1253
      %1951 = vmatmul.mubr.bf16.gmra.mrb[0].mxu0 %v1252
      %v1952 = vpop.f32.mrb[0].mxu0
      %v1953 = vadd.f32 %v1888, %v1952
      %v1954 = vpop.f32.mrb[0].mxu0
      %v1955 = vpop.f32.mrb[0].mxu0
      %v1956 = vadd.f32 %v1891, %v1955
      %v1957 = vpop.f32.mrb[0].mxu0
      %1958 = vmatprep.mubr.bf16.mxu0 %v1259
      %1959 = vmatmul.mubr.bf16.gmra.mrb[0].mxu0 %v1258
      %v1960 = vpop.f32.mrb[0].mxu0
      %v1961 = vadd.f32 %v1896, %v1960
      %v1962 = vpop.f32.mrb[0].mxu0
      %v1963 = vpop.f32.mrb[0].mxu0
      %v1964 = vadd.f32 %v1899, %v1963
      %v1965 = vpop.f32.mrb[0].mxu0
      %1966 = vmatprep.mubr.bf16.mxu0 %v1265
      %1967 = vmatmul.mubr.bf16.gmra.mrb[0].mxu0 %v1264
      %v1968 = vpop.f32.mrb[0].mxu0
      %v1969 = vadd.f32 %v1904, %v1968
      %v1970 = vpop.f32.mrb[0].mxu0
      %v1971 = vpop.f32.mrb[0].mxu0
      %v1972 = vadd.f32 %v1907, %v1971
      %v1973 = vpop.f32.mrb[0].mxu0
      %1974 = vmatprep.mubr.bf16.mxu0 %v1271
      %1975 = vmatmul.mubr.bf16.gmra.mrb[0].mxu0 %v1270
      %v1976 = vpop.f32.mrb[0].mxu0
      %v1977 = vadd.f32 %v1912, %v1976
      %v1978 = vpop.f32.mrb[0].mxu0
      %v1979 = vpop.f32.mrb[0].mxu0
      %v1980 = vadd.f32 %v1915, %v1979
      %v1981 = vpop.f32.mrb[0].mxu0
      %1982 = vdwg.mxu0
      %1983 = vmatprep.subr.bf16.mxu0 0
      %1984 = vmatpush1.bf16.msra.mxu0 %v1741
      %1985 = vmatprep.subr.bf16.mxu0 0
      %1986 = vmatpush1.bf16.msra.mxu0 %v1742
      %1987 = vmatprep.subr.bf16.mxu0 0
      %1988 = vmatpush1.bf16.msra.mxu0 %v1743
      %1989 = vmatprep.subr.bf16.mxu0 0
      %1990 = vmatpush1.bf16.msra.mxu0 %v1744
      %1991 = vmatprep.subr.bf16.mxu0 0
      %1992 = vmatpush1.bf16.msra.mxu0 %v1745
      %1993 = vmatprep.subr.bf16.mxu0 0
      %1994 = vmatpush1.bf16.msra.mxu0 %v1746
      %1995 = vmatprep.subr.bf16.mxu0 0
      %1996 = vmatpush1.bf16.msra.mxu0 %v1747
      %1997 = vmatprep.subr.bf16.mxu0 0
      %1998 = vmatpush1.bf16.msra.mxu0 %v1748
      %1999 = vmatprep.subr.bf16.mxu0 0
      %2000 = vmatpush1.bf16.msra.mxu0 %v1749
      %2001 = vmatprep.subr.bf16.mxu0 0
      %2002 = vmatpush1.bf16.msra.mxu0 %v1750
      %2003 = vmatprep.subr.bf16.mxu0 0
      %2004 = vmatpush1.bf16.msra.mxu0 %v1751
      %2005 = vmatprep.subr.bf16.mxu0 0
      %2006 = vmatpush1.bf16.msra.mxu0 %v1752
      %2007 = vmatprep.subr.bf16.mxu0 0
      %2008 = vmatpush1.bf16.msra.mxu0 %v1753
      %2009 = vmatprep.subr.bf16.mxu0 0
      %2010 = vmatpush1.bf16.msra.mxu0 %v1754
      %2011 = vmatprep.subr.bf16.mxu0 0
      %2012 = vmatpush1.bf16.msra.mxu0 %v1755
      %2013 = vmatprep.subr.bf16.mxu0 0
      %2014 = vmatpush1.bf16.msra.mxu0 %v1756
      %2015 = vmatprep.mubr.bf16.mxu0 %v1255
      %2016 = vmatmul.mubr.bf16.gmra.mrb[0].mxu0 %v1254
      %v2017 = vpop.f32.mrb[0].mxu0
      %v2018 = vadd.f32 %v1953, %v2017
      %v2019 = vpop.f32.mrb[0].mxu0
      %v2020 = vpop.f32.mrb[0].mxu0
      %v2021 = vadd.f32 %v1956, %v2020
      %v2022 = vpop.f32.mrb[0].mxu0
      %2023 = vmatprep.mubr.bf16.mxu0 %v1261
      %2024 = vmatmul.mubr.bf16.gmra.mrb[0].mxu0 %v1260
      %v2025 = vpop.f32.mrb[0].mxu0
      %v2026 = vadd.f32 %v1961, %v2025
      %v2027 = vpop.f32.mrb[0].mxu0
      %v2028 = vpop.f32.mrb[0].mxu0
      %v2029 = vadd.f32 %v1964, %v2028
      %v2030 = vpop.f32.mrb[0].mxu0
      %2031 = vmatprep.mubr.bf16.mxu0 %v1267
      %2032 = vmatmul.mubr.bf16.gmra.mrb[0].mxu0 %v1266
      %v2033 = vpop.f32.mrb[0].mxu0
      %v2034 = vadd.f32 %v1969, %v2033
      %v2035 = vpop.f32.mrb[0].mxu0
      %v2036 = vpop.f32.mrb[0].mxu0
      %v2037 = vadd.f32 %v1972, %v2036
      %v2038 = vpop.f32.mrb[0].mxu0
      %2039 = vmatprep.mubr.bf16.mxu0 %v1273
      %2040 = vmatmul.mubr.bf16.gmra.mrb[0].mxu0 %v1272
      %v2041 = vpop.f32.mrb[0].mxu0
      %v2042 = vadd.f32 %v1977, %v2041
      %v2043 = vpop.f32.mrb[0].mxu0
      %v2044 = vpop.f32.mrb[0].mxu0
      %v2045 = vadd.f32 %v1980, %v2044
      %v2046 = vpop.f32.mrb[0].mxu0
      %2047 = vdwg.mxu0
      %2048 = vmatprep.subr.bf16.mxu0 0
      %2049 = vmatpush1.bf16.msra.mxu0 %v1757
      %2050 = vmatprep.subr.bf16.mxu0 0
      %2051 = vmatpush1.bf16.msra.mxu0 %v1758
      %2052 = vmatprep.subr.bf16.mxu0 0
      %2053 = vmatpush1.bf16.msra.mxu0 %v1759
      %2054 = vmatprep.subr.bf16.mxu0 0
      %2055 = vmatpush1.bf16.msra.mxu0 %v1760
      %2056 = vmatprep.subr.bf16.mxu0 0
      %2057 = vmatpush1.bf16.msra.mxu0 %v1761
      %2058 = vmatprep.subr.bf16.mxu0 0
      %2059 = vmatpush1.bf16.msra.mxu0 %v1762
      %2060 = vmatprep.subr.bf16.mxu0 0
      %2061 = vmatpush1.bf16.msra.mxu0 %v1763
      %2062 = vmatprep.subr.bf16.mxu0 0
      %2063 = vmatpush1.bf16.msra.mxu0 %v1764
      %2064 = vmatprep.subr.bf16.mxu0 0
      %2065 = vmatpush1.bf16.msra.mxu0 %v1765
      %2066 = vmatprep.subr.bf16.mxu0 0
      %2067 = vmatpush1.bf16.msra.mxu0 %v1766
      %2068 = vmatprep.subr.bf16.mxu0 0
      %2069 = vmatpush1.bf16.msra.mxu0 %v1767
      %2070 = vmatprep.subr.bf16.mxu0 0
      %2071 = vmatpush1.bf16.msra.mxu0 %v1768
      %2072 = vmatprep.subr.bf16.mxu0 0
      %2073 = vmatpush1.bf16.msra.mxu0 %v1769
      %2074 = vmatprep.subr.bf16.mxu0 0
      %2075 = vmatpush1.bf16.msra.mxu0 %v1770
      %2076 = vmatprep.subr.bf16.mxu0 0
      %2077 = vmatpush1.bf16.msra.mxu0 %v1771
      %2078 = vmatprep.subr.bf16.mxu0 0
      %2079 = vmatpush1.bf16.msra.mxu0 %v1772
      %2080 = vmatprep.mubr.bf16.mxu0 %v1257
      %2081 = vmatmul.mubr.bf16.gmra.mrb[0].mxu0 %v1256
      %v2082 = vpop.f32.mrb[0].mxu0
      %v2083 = vadd.f32 %v2018, %v2082
      %v2084 = vpop.f32.mrb[0].mxu0
      %v2085 = vpop.f32.mrb[0].mxu0
      %v2086 = vadd.f32 %v2021, %v2085
      %v2087 = vpop.f32.mrb[0].mxu0
      %2088 = vmatprep.mubr.bf16.mxu0 %v1263
      %2089 = vmatmul.mubr.bf16.gmra.mrb[0].mxu0 %v1262
      %v2090 = vpop.f32.mrb[0].mxu0
      %v2091 = vadd.f32 %v2026, %v2090
      %v2092 = vpop.f32.mrb[0].mxu0
      %v2093 = vpop.f32.mrb[0].mxu0
      %v2094 = vadd.f32 %v2029, %v2093
      %v2095 = vpop.f32.mrb[0].mxu0
      %2096 = vmatprep.mubr.bf16.mxu0 %v1269
      %2097 = vmatmul.mubr.bf16.gmra.mrb[0].mxu0 %v1268
      %v2098 = vpop.f32.mrb[0].mxu0
      %v2099 = vadd.f32 %v2034, %v2098
      %v2100 = vpop.f32.mrb[0].mxu0
      %v2101 = vpop.f32.mrb[0].mxu0
      %v2102 = vadd.f32 %v2037, %v2101
      %v2103 = vpop.f32.mrb[0].mxu0
      %2104 = vmatprep.mubr.bf16.mxu0 %v1275
      %2105 = vmatmul.mubr.bf16.gmra.mrb[0].mxu0 %v1274
      %v2106 = vpop.f32.mrb[0].mxu0
      %v2107 = vadd.f32 %v2042, %v2106
      %v2108 = vpop.f32.mrb[0].mxu0
      %v2109 = vpop.f32.mrb[0].mxu0
      %v2110 = vadd.f32 %v2045, %v2109
      %v2111 = vpop.f32.mrb[0].mxu0
      %2112 = vdwg.mxu0
      %2113 = vmatprep.subr.bf16.mxu0 0
      %2114 = vmatpush1.bf16.msra.mxu0 %v1773
      %2115 = vmatprep.subr.bf16.mxu0 0
      %2116 = vmatpush1.bf16.msra.mxu0 %v1774
      %2117 = vmatprep.subr.bf16.mxu0 0
      %2118 = vmatpush1.bf16.msra.mxu0 %v1775
      %2119 = vmatprep.subr.bf16.mxu0 0
      %2120 = vmatpush1.bf16.msra.mxu0 %v1776
      %2121 = vmatprep.subr.bf16.mxu0 0
      %2122 = vmatpush1.bf16.msra.mxu0 %v1777
      %2123 = vmatprep.subr.bf16.mxu0 0
      %2124 = vmatpush1.bf16.msra.mxu0 %v1778
      %2125 = vmatprep.subr.bf16.mxu0 0
      %2126 = vmatpush1.bf16.msra.mxu0 %v1779
      %2127 = vmatprep.subr.bf16.mxu0 0
      %2128 = vmatpush1.bf16.msra.mxu0 %v1780
      %2129 = vmatprep.subr.bf16.mxu0 0
      %2130 = vmatpush1.bf16.msra.mxu0 0
      %2131 = vmatprep.subr.bf16.mxu0 0
      %2132 = vmatpush1.bf16.msra.mxu0 0
      %2133 = vmatprep.subr.bf16.mxu0 0
      %2134 = vmatpush1.bf16.msra.mxu0 0
      %2135 = vmatprep.subr.bf16.mxu0 0
      %2136 = vmatpush1.bf16.msra.mxu0 0
      %2137 = vmatprep.subr.bf16.mxu0 0
      %2138 = vmatpush1.bf16.msra.mxu0 0
      %2139 = vmatprep.subr.bf16.mxu0 0
      %2140 = vmatpush1.bf16.msra.mxu0 0
      %2141 = vmatprep.subr.bf16.mxu0 0
      %2142 = vmatpush1.bf16.msra.mxu0 0
      %2143 = vmatprep.subr.bf16.mxu0 0
      %2144 = vmatpush1.bf16.msra.mxu0 0
      %2145 = vmatprep.mubr.bf16.mxu0 0
      %2146 = vmatmul.mubr.bf16.gmra.mrb[0].mxu0 %v1258
      %v2147 = vpop.f32.mrb[0].mxu0
      %v2148 = vadd.f32 %v2083, %v2147
      %v2149 = vpop.f32.mrb[0].mxu0
      %v2150 = vpop.f32.mrb[0].mxu0
      %v2151 = vadd.f32 %v2086, %v2150
      %v2152 = vpop.f32.mrb[0].mxu0
      %2153 = vmatprep.mubr.bf16.mxu0 0
      %2154 = vmatmul.mubr.bf16.gmra.mrb[0].mxu0 %v1264
      %v2155 = vpop.f32.mrb[0].mxu0
      %v2156 = vadd.f32 %v2091, %v2155
      %v2157 = vpop.f32.mrb[0].mxu0
      %v2158 = vpop.f32.mrb[0].mxu0
      %v2159 = vadd.f32 %v2094, %v2158
      %v2160 = vpop.f32.mrb[0].mxu0
      %2161 = vmatprep.mubr.bf16.mxu0 0
      %2162 = vmatmul.mubr.bf16.gmra.mrb[0].mxu0 %v1270
      %v2163 = vpop.f32.mrb[0].mxu0
      %v2164 = vadd.f32 %v2099, %v2163
      %v2165 = vpop.f32.mrb[0].mxu0
      %v2166 = vpop.f32.mrb[0].mxu0
      %v2167 = vadd.f32 %v2102, %v2166
      %v2168 = vpop.f32.mrb[0].mxu0
      %2169 = vmatprep.mubr.bf16.mxu0 0
      %2170 = vmatmul.mubr.bf16.gmra.mrb[0].mxu0 %v1276
      %v2171 = vpop.f32.mrb[0].mxu0
      %v2172 = vadd.f32 %v2107, %v2171
      %v2173 = vpop.f32.mrb[0].mxu0
      %v2174 = vpop.f32.mrb[0].mxu0
      %v2175 = vadd.f32 %v2110, %v2174
      %v2176 = vpop.f32.mrb[0].mxu0
      %2177 = vdwg.mxu0
      %v2178 = vld [vmem:[%s6] sm:$0x1]
      %v2180 = vlaneseq
      %v2181 = vshrl.u32 %v2180, 7
      %v2182 = vsub.s32 0, %v2181
      %v2183 = vrot.slane %v2178, %v2182
      %v2185 = vmul.f32 %v2148, %v2183
      %v2186 = vmul.f32 %v2151, %v2183
      %v2187 = vmul.f32 %v2156, %v2183
      %v2188 = vmul.f32 %v2159, %v2183
      %v2189 = vmul.f32 %v2164, %v2183
      %v2190 = vmul.f32 %v2167, %v2183
      %v2191 = vmul.f32 %v2172, %v2183
      %v2192 = vmul.f32 %v2175, %v2183
      %v2193 = vld [vmem:[%s7] sm:$0x1]
      %v2195 = vlaneseq
      %v2196 = vshrl.u32 %v2195, 7
      %v2197 = vsub.s32 0, %v2196
      %v2198 = vrot.slane %v2193, %v2197
      %v2200 = vadd.f32 %v2185, %v2198
      %v2201 = vadd.f32 %v2186, %v2198
      %v2202 = vadd.f32 %v2187, %v2198
      %v2203 = vadd.f32 %v2188, %v2198
      %v2204 = vadd.f32 %v2189, %v2198
      %v2205 = vadd.f32 %v2190, %v2198
      %v2206 = vadd.f32 %v2191, %v2198
      %v2207 = vadd.f32 %v2192, %v2198
      %v2208 = vld [vmem:[%s319] sm:$0xf]
      %v2209 = vld [vmem:[%s319 + $0x4] sm:$0xf]
      %v2210 = vld [vmem:[%s319 + $0x8] sm:$0xf]
      %v2211 = vld [vmem:[%s319 + $0xc] sm:$0xf]
      %v2212 = vld [vmem:[%s319 + $0x10] sm:$0xf]
      %v2213 = vld [vmem:[%s319 + $0x14] sm:$0xf]
      %v2214 = vld [vmem:[%s319 + $0x18] sm:$0xf]
      %v2215 = vld [vmem:[%s319 + $0x1c] sm:$0xf]
      %v2216 = vunpack.c.l.bf16 %v2208
      %v2217 = vunpack.c.l.bf16 %v2209
      %v2218 = vunpack.c.l.bf16 %v2210
      %v2219 = vunpack.c.l.bf16 %v2211
      %v2220 = vunpack.c.l.bf16 %v2212
      %v2221 = vunpack.c.l.bf16 %v2213
      %v2222 = vunpack.c.l.bf16 %v2214
      %v2223 = vunpack.c.l.bf16 %v2215
      %v2232 = vrot.slane %v2216, 7
      %v2233 = vrot.slane %v2217, 7
      %v2234 = vrot.slane %v2218, 7
      %v2235 = vrot.slane %v2219, 7
      %v2236 = vrot.slane %v2220, 7
      %v2237 = vrot.slane %v2221, 7
      %v2238 = vrot.slane %v2222, 7
      %v2239 = vrot.slane %v2223, 7
      %v2248 = vsel %vm368, 0.0, %v2232
      %v2249 = vsel %vm368, 0.0, %v2233
      %v2250 = vsel %vm368, 0.0, %v2234
      %v2251 = vsel %vm368, 0.0, %v2235
      %v2252 = vsel %vm368, 0.0, %v2236
      %v2253 = vsel %vm368, 0.0, %v2237
      %v2254 = vsel %vm368, 0.0, %v2238
      %v2255 = vsel %vm368, 0.0, %v2239
      %v2256 = vsel %vm368, %v2232, 0.0
      %v2257 = vsel %vm368, %v2233, 0.0
      %v2258 = vsel %vm368, %v2234, 0.0
      %v2259 = vsel %vm368, %v2235, 0.0
      %v2260 = vsel %vm368, %v2236, 0.0
      %v2261 = vsel %vm368, %v2237, 0.0
      %v2262 = vsel %vm368, %v2238, 0.0
      %v2263 = vsel %vm368, %v2239, 0.0
      %v2278 = vrot.slane %v2248, 1
      %v2279 = vrot.slane %v2256, 1
      %v2280 = vsel %vm403, %v2278, %v2279
      %v2281 = vrot.slane %v2249, 1
      %v2282 = vrot.slane %v2257, 1
      %v2283 = vsel %vm403, %v2281, %v2282
      %v2284 = vrot.slane %v2250, 1
      %v2285 = vrot.slane %v2258, 1
      %v2286 = vsel %vm403, %v2284, %v2285
      %v2287 = vrot.slane %v2251, 1
      %v2288 = vrot.slane %v2259, 1
      %v2289 = vsel %vm403, %v2287, %v2288
      %v2290 = vrot.slane %v2252, 1
      %v2291 = vrot.slane %v2260, 1
      %v2292 = vsel %vm403, %v2290, %v2291
      %v2293 = vrot.slane %v2253, 1
      %v2294 = vrot.slane %v2261, 1
      %v2295 = vsel %vm403, %v2293, %v2294
      %v2296 = vrot.slane %v2254, 1
      %v2297 = vrot.slane %v2262, 1
      %v2298 = vsel %vm403, %v2296, %v2297
      %2299 = vrot.lane.b32.xlu0 %v2280, 64
      %v2300 = vpop.permute.xlu0 %2299
      %2301 = vrot.lane.b32.xlu0 %v2283, 64
      %v2302 = vpop.permute.xlu0 %2301
      %2303 = vrot.lane.b32.xlu0 %v2286, 64
      %v2304 = vpop.permute.xlu0 %2303
      %2305 = vrot.lane.b32.xlu0 %v2289, 64
      %v2306 = vpop.permute.xlu0 %2305
      %2307 = vrot.lane.b32.xlu0 %v2292, 64
      %v2308 = vpop.permute.xlu0 %2307
      %2309 = vrot.lane.b32.xlu0 %v2295, 64
      %v2310 = vpop.permute.xlu0 %2309
      %2311 = vrot.lane.b32.xlu0 %v2298, 64
      %v2312 = vpop.permute.xlu0 %2311
      %v2320 = vrot.slane %v2248, 2
      %v2321 = vrot.slane %v2256, 2
      %v2322 = vsel %vm452, %v2320, %v2321
      %v2323 = vrot.slane %v2249, 2
      %v2324 = vrot.slane %v2257, 2
      %v2325 = vsel %vm452, %v2323, %v2324
      %v2326 = vrot.slane %v2250, 2
      %v2327 = vrot.slane %v2258, 2
      %v2328 = vsel %vm452, %v2326, %v2327
      %v2329 = vrot.slane %v2251, 2
      %v2330 = vrot.slane %v2259, 2
      %v2331 = vsel %vm452, %v2329, %v2330
      %v2332 = vrot.slane %v2252, 2
      %v2333 = vrot.slane %v2260, 2
      %v2334 = vsel %vm452, %v2332, %v2333
      %v2335 = vrot.slane %v2253, 2
      %v2336 = vrot.slane %v2261, 2
      %v2337 = vsel %vm452, %v2335, %v2336
      %v2338 = vrot.slane %v2254, 2
      %v2339 = vrot.slane %v2262, 2
      %v2340 = vsel %vm452, %v2338, %v2339
      %2349 = vrot.lane.b32.xlu0 %v2248, 64
      %v2350 = vpop.permute.xlu0 %2349
      %2351 = vrot.lane.b32.xlu0 %v2249, 64
      %v2352 = vpop.permute.xlu0 %2351
      %2353 = vrot.lane.b32.xlu0 %v2250, 64
      %v2354 = vpop.permute.xlu0 %2353
      %2355 = vrot.lane.b32.xlu0 %v2251, 64
      %v2356 = vpop.permute.xlu0 %2355
      %2357 = vrot.lane.b32.xlu0 %v2252, 64
      %v2358 = vpop.permute.xlu0 %2357
      %2359 = vrot.lane.b32.xlu0 %v2253, 64
      %v2360 = vpop.permute.xlu0 %2359
      %2361 = vrot.lane.b32.xlu0 %v2254, 64
      %v2362 = vpop.permute.xlu0 %2361
      %2363 = vrot.lane.b32.xlu0 %v2255, 64
      %v2364 = vpop.permute.xlu0 %2363
      %v2374 = vrot.slane %v2255, 1
      %v2375 = vrot.slane %v2263, 1
      %v2376 = vsel %vm403, %v2374, %v2375
      %v2385 = vrot.slane %v2255, 2
      %v2386 = vrot.slane %v2263, 2
      %v2387 = vsel %vm452, %v2385, %v2386
      %2388 = vrot.lane.b32.xlu0 %v2322, 64
      %v2389 = vpop.permute.xlu0 %2388
      %2390 = vrot.lane.b32.xlu0 %v2325, 64
      %v2391 = vpop.permute.xlu0 %2390
      %2392 = vrot.lane.b32.xlu0 %v2328, 64
      %v2393 = vpop.permute.xlu0 %2392
      %2394 = vrot.lane.b32.xlu0 %v2331, 64
      %v2395 = vpop.permute.xlu0 %2394
      %2396 = vrot.lane.b32.xlu0 %v2334, 64
      %v2397 = vpop.permute.xlu0 %2396
      %2398 = vrot.lane.b32.xlu0 %v2337, 64
      %v2399 = vpop.permute.xlu0 %2398
      %2400 = vrot.lane.b32.xlu0 %v2340, 64
      %v2401 = vpop.permute.xlu0 %2400
      %2402 = vrot.lane.b32.xlu0 %v2387, 64
      %v2403 = vpop.permute.xlu0 %2402
      %2412 = vrot.lane.b32.xlu0 %v2376, 64
      %v2413 = vpop.permute.xlu0 %2412
      %v2416 = vsel %vm553, %v2248, %v2300
      %v2417 = vsel %vm553, %v2249, %v2302
      %v2418 = vsel %vm553, %v2250, %v2304
      %v2419 = vsel %vm553, %v2251, %v2306
      %v2420 = vsel %vm553, %v2252, %v2308
      %v2421 = vsel %vm553, %v2253, %v2310
      %v2422 = vsel %vm553, %v2254, %v2312
      %v2423 = vsel %vm553, %v455, %v2350
      %v2424 = vsel %vm553, %v2322, %v2352
      %v2425 = vsel %vm553, %v2325, %v2354
      %v2426 = vsel %vm553, %v2328, %v2356
      %v2427 = vsel %vm553, %v2331, %v2358
      %v2428 = vsel %vm553, %v2334, %v2360
      %v2429 = vsel %vm553, %v2337, %v2362
      %v2430 = vsel %vm553, %v2340, %v2364
      %v2431 = vsel %vm553, %v2280, %v2389
      %v2432 = vsel %vm553, %v2283, %v2391
      %v2433 = vsel %vm553, %v2286, %v2393
      %v2434 = vsel %vm553, %v2289, %v2395
      %v2435 = vsel %vm553, %v2292, %v2397
      %v2436 = vsel %vm553, %v2295, %v2399
      %v2437 = vsel %vm553, %v2298, %v2401
      %v2438 = vsel %vm553, %v2376, %v2403
      %v2439 = vsel %vm553, %v2255, %v2413
      %v2440 = vpack.c.bf16 %v2416, %v554
      %v2441 = vpack.c.bf16 %v2424, %v2423
      %v2442 = vpack.c.bf16 %v2432, %v2431
      %v2443 = vpack.c.bf16 %v2418, %v2417
      %v2444 = vpack.c.bf16 %v2328, %v2325
      %v2445 = vpack.c.bf16 %v2426, %v2425
      %v2446 = vpack.c.bf16 %v2434, %v2433
      %v2447 = vpack.c.bf16 %v2420, %v2419
      %v2448 = vpack.c.bf16 %v2334, %v2331
      %v2449 = vpack.c.bf16 %v2428, %v2427
      %v2450 = vpack.c.bf16 %v2436, %v2435
      %v2451 = vpack.c.bf16 %v2422, %v2421
      %v2452 = vpack.c.bf16 %v2340, %v2337
      %v2453 = vpack.c.bf16 %v2430, %v2429
      %v2454 = vpack.c.bf16 %v2438, %v2437
      %v2455 = vpack.c.bf16 %v554, %v2439
      %v2456 = vpack.c.bf16 %v455, %v2387
      %v2458 = vsel %vm553, %v2444, 0
      %v2461 = vsel %vm553, %v2448, 0
      %v2464 = vsel %vm553, %v2452, 0
      %v2467 = vsel %vm553, %v2456, 0
      %2469 = vmatprep.subr.bf16.mxu0 0
      %2470 = vmatpush1.bf16.msra.mxu0 %v812
      %2471 = vmatprep.subr.bf16.mxu0 0
      %2472 = vmatpush1.bf16.msra.mxu0 %v813
      %2473 = vmatprep.subr.bf16.mxu0 0
      %2474 = vmatpush1.bf16.msra.mxu0 %v814
      %2475 = vmatprep.subr.bf16.mxu0 0
      %2476 = vmatpush1.bf16.msra.mxu0 %v815
      %2477 = vmatprep.subr.bf16.mxu0 0
      %2478 = vmatpush1.bf16.msra.mxu0 %v816
      %2479 = vmatprep.subr.bf16.mxu0 0
      %2480 = vmatpush1.bf16.msra.mxu0 %v817
      %2481 = vmatprep.subr.bf16.mxu0 0
      %2482 = vmatpush1.bf16.msra.mxu0 %v818
      %2483 = vmatprep.subr.bf16.mxu0 0
      %2484 = vmatpush1.bf16.msra.mxu0 %v819
      %2485 = vmatprep.subr.bf16.mxu0 0
      %2486 = vmatpush1.bf16.msra.mxu0 %v820
      %2487 = vmatprep.subr.bf16.mxu0 0
      %2488 = vmatpush1.bf16.msra.mxu0 %v821
      %2489 = vmatprep.subr.bf16.mxu0 0
      %2490 = vmatpush1.bf16.msra.mxu0 %v822
      %2491 = vmatprep.subr.bf16.mxu0 0
      %2492 = vmatpush1.bf16.msra.mxu0 %v823
      %2493 = vmatprep.subr.bf16.mxu0 0
      %2494 = vmatpush1.bf16.msra.mxu0 %v824
      %2495 = vmatprep.subr.bf16.mxu0 0
      %2496 = vmatpush1.bf16.msra.mxu0 %v825
      %2497 = vmatprep.subr.bf16.mxu0 0
      %2498 = vmatpush1.bf16.msra.mxu0 %v826
      %2499 = vmatprep.subr.bf16.mxu0 0
      %2500 = vmatpush1.bf16.msra.mxu0 %v827
      %2501 = vmatprep.mubr.bf16.mxu0 %v2441
      %2502 = vmatmul.mubr.bf16.gmra.mrb[0].mxu0 %v2440
      %v2503 = vpop.f32.mrb[0].mxu0
      %v2504 = vadd.f32 0.0, %v2503
      %v2505 = vpop.f32.mrb[0].mxu0
      %v2506 = vpop.f32.mrb[0].mxu0
      %v2507 = vadd.f32 0.0, %v2506
      %v2508 = vpop.f32.mrb[0].mxu0
      %2509 = vmatprep.mubr.bf16.mxu0 %v2445
      %2510 = vmatmul.mubr.bf16.gmra.mrb[0].mxu0 %v2443
      %v2511 = vpop.f32.mrb[0].mxu0
      %v2512 = vadd.f32 0.0, %v2511
      %v2513 = vpop.f32.mrb[0].mxu0
      %v2514 = vpop.f32.mrb[0].mxu0
      %v2515 = vadd.f32 0.0, %v2514
      %v2516 = vpop.f32.mrb[0].mxu0
      %2517 = vmatprep.mubr.bf16.mxu0 %v2449
      %2518 = vmatmul.mubr.bf16.gmra.mrb[0].mxu0 %v2447
      %v2519 = vpop.f32.mrb[0].mxu0
      %v2520 = vadd.f32 0.0, %v2519
      %v2521 = vpop.f32.mrb[0].mxu0
      %v2522 = vpop.f32.mrb[0].mxu0
      %v2523 = vadd.f32 0.0, %v2522
      %v2524 = vpop.f32.mrb[0].mxu0
      %2525 = vmatprep.mubr.bf16.mxu0 %v2453
      %2526 = vmatmul.mubr.bf16.gmra.mrb[0].mxu0 %v2451
      %v2527 = vpop.f32.mrb[0].mxu0
      %v2528 = vadd.f32 0.0, %v2527
      %v2529 = vpop.f32.mrb[0].mxu0
      %v2530 = vpop.f32.mrb[0].mxu0
      %v2531 = vadd.f32 0.0, %v2530
      %v2532 = vpop.f32.mrb[0].mxu0
      %2533 = vdwg.mxu0
      %2534 = vmatprep.subr.bf16.mxu0 0
      %2535 = vmatpush1.bf16.msra.mxu0 %v828
      %2536 = vmatprep.subr.bf16.mxu0 0
      %2537 = vmatpush1.bf16.msra.mxu0 %v829
      %2538 = vmatprep.subr.bf16.mxu0 0
      %2539 = vmatpush1.bf16.msra.mxu0 %v830
      %2540 = vmatprep.subr.bf16.mxu0 0
      %2541 = vmatpush1.bf16.msra.mxu0 %v831
      %2542 = vmatprep.subr.bf16.mxu0 0
      %2543 = vmatpush1.bf16.msra.mxu0 %v832
      %2544 = vmatprep.subr.bf16.mxu0 0
      %2545 = vmatpush1.bf16.msra.mxu0 %v833
      %2546 = vmatprep.subr.bf16.mxu0 0
      %2547 = vmatpush1.bf16.msra.mxu0 %v834
      %2548 = vmatprep.subr.bf16.mxu0 0
      %2549 = vmatpush1.bf16.msra.mxu0 %v835
      %2550 = vmatprep.subr.bf16.mxu0 0
      %2551 = vmatpush1.bf16.msra.mxu0 %v836
      %2552 = vmatprep.subr.bf16.mxu0 0
      %2553 = vmatpush1.bf16.msra.mxu0 %v837
      %2554 = vmatprep.subr.bf16.mxu0 0
      %2555 = vmatpush1.bf16.msra.mxu0 %v838
      %2556 = vmatprep.subr.bf16.mxu0 0
      %2557 = vmatpush1.bf16.msra.mxu0 %v839
      %2558 = vmatprep.subr.bf16.mxu0 0
      %2559 = vmatpush1.bf16.msra.mxu0 %v840
      %2560 = vmatprep.subr.bf16.mxu0 0
      %2561 = vmatpush1.bf16.msra.mxu0 %v841
      %2562 = vmatprep.subr.bf16.mxu0 0
      %2563 = vmatpush1.bf16.msra.mxu0 %v842
      %2564 = vmatprep.subr.bf16.mxu0 0
      %2565 = vmatpush1.bf16.msra.mxu0 %v843
      %2566 = vmatprep.mubr.bf16.mxu0 %v2443
      %2567 = vmatmul.mubr.bf16.gmra.mrb[0].mxu0 %v2442
      %v2568 = vpop.f32.mrb[0].mxu0
      %v2569 = vadd.f32 %v2504, %v2568
      %v2570 = vpop.f32.mrb[0].mxu0
      %v2571 = vpop.f32.mrb[0].mxu0
      %v2572 = vadd.f32 %v2507, %v2571
      %v2573 = vpop.f32.mrb[0].mxu0
      %2574 = vmatprep.mubr.bf16.mxu0 %v2447
      %2575 = vmatmul.mubr.bf16.gmra.mrb[0].mxu0 %v2446
      %v2576 = vpop.f32.mrb[0].mxu0
      %v2577 = vadd.f32 %v2512, %v2576
      %v2578 = vpop.f32.mrb[0].mxu0
      %v2579 = vpop.f32.mrb[0].mxu0
      %v2580 = vadd.f32 %v2515, %v2579
      %v2581 = vpop.f32.mrb[0].mxu0
      %2582 = vmatprep.mubr.bf16.mxu0 %v2451
      %2583 = vmatmul.mubr.bf16.gmra.mrb[0].mxu0 %v2450
      %v2584 = vpop.f32.mrb[0].mxu0
      %v2585 = vadd.f32 %v2520, %v2584
      %v2586 = vpop.f32.mrb[0].mxu0
      %v2587 = vpop.f32.mrb[0].mxu0
      %v2588 = vadd.f32 %v2523, %v2587
      %v2589 = vpop.f32.mrb[0].mxu0
      %2590 = vmatprep.mubr.bf16.mxu0 %v2455
      %2591 = vmatmul.mubr.bf16.gmra.mrb[0].mxu0 %v2454
      %v2592 = vpop.f32.mrb[0].mxu0
      %v2593 = vadd.f32 %v2528, %v2592
      %v2594 = vpop.f32.mrb[0].mxu0
      %v2595 = vpop.f32.mrb[0].mxu0
      %v2596 = vadd.f32 %v2531, %v2595
      %v2597 = vpop.f32.mrb[0].mxu0
      %2598 = vdwg.mxu0
      %2599 = vmatprep.subr.bf16.mxu0 0
      %2600 = vmatpush1.bf16.msra.mxu0 %v844
      %2601 = vmatprep.subr.bf16.mxu0 0
      %2602 = vmatpush1.bf16.msra.mxu0 %v845
      %2603 = vmatprep.subr.bf16.mxu0 0
      %2604 = vmatpush1.bf16.msra.mxu0 %v846
      %2605 = vmatprep.subr.bf16.mxu0 0
      %2606 = vmatpush1.bf16.msra.mxu0 %v847
      %2607 = vmatprep.subr.bf16.mxu0 0
      %2608 = vmatpush1.bf16.msra.mxu0 0
      %2609 = vmatprep.subr.bf16.mxu0 0
      %2610 = vmatpush1.bf16.msra.mxu0 0
      %2611 = vmatprep.subr.bf16.mxu0 0
      %2612 = vmatpush1.bf16.msra.mxu0 0
      %2613 = vmatprep.subr.bf16.mxu0 0
      %2614 = vmatpush1.bf16.msra.mxu0 0
      %2615 = vmatprep.subr.bf16.mxu0 0
      %2616 = vmatpush1.bf16.msra.mxu0 0
      %2617 = vmatprep.subr.bf16.mxu0 0
      %2618 = vmatpush1.bf16.msra.mxu0 0
      %2619 = vmatprep.subr.bf16.mxu0 0
      %2620 = vmatpush1.bf16.msra.mxu0 0
      %2621 = vmatprep.subr.bf16.mxu0 0
      %2622 = vmatpush1.bf16.msra.mxu0 0
      %2623 = vmatprep.subr.bf16.mxu0 0
      %2624 = vmatpush1.bf16.msra.mxu0 0
      %2625 = vmatprep.subr.bf16.mxu0 0
      %2626 = vmatpush1.bf16.msra.mxu0 0
      %2627 = vmatprep.subr.bf16.mxu0 0
      %2628 = vmatpush1.bf16.msra.mxu0 0
      %2629 = vmatprep.subr.bf16.mxu0 0
      %2630 = vmatpush1.bf16.msra.mxu0 0
      %2631 = vmatprep.mubr.bf16.mxu0 0
      %2632 = vmatmul.mubr.bf16.gmra.mrb[0].mxu0 %v2458
      %v2633 = vpop.f32.mrb[0].mxu0
      %v2634 = vadd.f32 %v2569, %v2633
      %v2635 = vpop.f32.mrb[0].mxu0
      %v2636 = vpop.f32.mrb[0].mxu0
      %v2637 = vadd.f32 %v2572, %v2636
      %v2638 = vpop.f32.mrb[0].mxu0
      %2639 = vmatprep.mubr.bf16.mxu0 0
      %2640 = vmatmul.mubr.bf16.gmra.mrb[0].mxu0 %v2461
      %v2641 = vpop.f32.mrb[0].mxu0
      %v2642 = vadd.f32 %v2577, %v2641
      %v2643 = vpop.f32.mrb[0].mxu0
      %v2644 = vpop.f32.mrb[0].mxu0
      %v2645 = vadd.f32 %v2580, %v2644
      %v2646 = vpop.f32.mrb[0].mxu0
      %2647 = vmatprep.mubr.bf16.mxu0 0
      %2648 = vmatmul.mubr.bf16.gmra.mrb[0].mxu0 %v2464
      %v2649 = vpop.f32.mrb[0].mxu0
      %v2650 = vadd.f32 %v2585, %v2649
      %v2651 = vpop.f32.mrb[0].mxu0
      %v2652 = vpop.f32.mrb[0].mxu0
      %v2653 = vadd.f32 %v2588, %v2652
      %v2654 = vpop.f32.mrb[0].mxu0
      %2655 = vmatprep.mubr.bf16.mxu0 0
      %2656 = vmatmul.mubr.bf16.gmra.mrb[0].mxu0 %v2467
      %v2657 = vpop.f32.mrb[0].mxu0
      %v2658 = vadd.f32 %v2593, %v2657
      %v2659 = vpop.f32.mrb[0].mxu0
      %v2660 = vpop.f32.mrb[0].mxu0
      %v2661 = vadd.f32 %v2596, %v2660
      %v2662 = vpop.f32.mrb[0].mxu0
      %2663 = vdwg.mxu0
      %v2664 = vmul.f32 %v2634, %v1096
      %v2665 = vmul.f32 %v2637, %v1096
      %v2666 = vmul.f32 %v2642, %v1096
      %v2667 = vmul.f32 %v2645, %v1096
      %v2668 = vmul.f32 %v2650, %v1096
      %v2669 = vmul.f32 %v2653, %v1096
      %v2670 = vmul.f32 %v2658, %v1096
      %v2671 = vmul.f32 %v2661, %v1096
      %v2672 = vadd.f32 %v2664, %v1111
      %v2673 = vadd.f32 %v2665, %v1111
      %v2674 = vadd.f32 %v2666, %v1111
      %v2675 = vadd.f32 %v2667, %v1111
      %v2676 = vadd.f32 %v2668, %v1111
      %v2677 = vadd.f32 %v2669, %v1111
      %v2678 = vadd.f32 %v2670, %v1111
      %v2679 = vadd.f32 %v2671, %v1111
      %v2680 = vmax.f32 %v2672, 0.0
      %v2681 = vmax.f32 %v2673, 0.0
      %v2682 = vmax.f32 %v2674, 0.0
      %v2683 = vmax.f32 %v2675, 0.0
      %v2684 = vmax.f32 %v2676, 0.0
      %v2685 = vmax.f32 %v2677, 0.0
      %v2686 = vmax.f32 %v2678, 0.0
      %v2687 = vmax.f32 %v2679, 0.0
      %v2696 = vrot.slane %v2680, 7
      %v2697 = vrot.slane %v2681, 7
      %v2698 = vrot.slane %v2682, 7
      %v2699 = vrot.slane %v2683, 7
      %v2700 = vrot.slane %v2684, 7
      %v2701 = vrot.slane %v2685, 7
      %v2702 = vrot.slane %v2686, 7
      %v2703 = vrot.slane %v2687, 7
      %v2712 = vsel %vm368, 0.0, %v2696
      %v2713 = vsel %vm368, 0.0, %v2697
      %v2714 = vsel %vm368, 0.0, %v2698
      %v2715 = vsel %vm368, 0.0, %v2699
      %v2716 = vsel %vm368, 0.0, %v2700
      %v2717 = vsel %vm368, 0.0, %v2701
      %v2718 = vsel %vm368, 0.0, %v2702
      %v2719 = vsel %vm368, 0.0, %v2703
      %v2720 = vsel %vm368, %v2696, 0.0
      %v2721 = vsel %vm368, %v2697, 0.0
      %v2722 = vsel %vm368, %v2698, 0.0
      %v2723 = vsel %vm368, %v2699, 0.0
      %v2724 = vsel %vm368, %v2700, 0.0
      %v2725 = vsel %vm368, %v2701, 0.0
      %v2726 = vsel %vm368, %v2702, 0.0
      %v2727 = vsel %vm368, %v2703, 0.0
      %v2742 = vrot.slane %v2712, 1
      %v2743 = vrot.slane %v2720, 1
      %v2744 = vsel %vm403, %v2742, %v2743
      %v2745 = vrot.slane %v2713, 1
      %v2746 = vrot.slane %v2721, 1
      %v2747 = vsel %vm403, %v2745, %v2746
      %v2748 = vrot.slane %v2714, 1
      %v2749 = vrot.slane %v2722, 1
      %v2750 = vsel %vm403, %v2748, %v2749
      %v2751 = vrot.slane %v2715, 1
      %v2752 = vrot.slane %v2723, 1
      %v2753 = vsel %vm403, %v2751, %v2752
      %v2754 = vrot.slane %v2716, 1
      %v2755 = vrot.slane %v2724, 1
      %v2756 = vsel %vm403, %v2754, %v2755
      %v2757 = vrot.slane %v2717, 1
      %v2758 = vrot.slane %v2725, 1
      %v2759 = vsel %vm403, %v2757, %v2758
      %v2760 = vrot.slane %v2718, 1
      %v2761 = vrot.slane %v2726, 1
      %v2762 = vsel %vm403, %v2760, %v2761
      %v2770 = vrot.slane %v2712, 2
      %v2771 = vrot.slane %v2720, 2
      %v2772 = vsel %vm452, %v2770, %v2771
      %v2773 = vrot.slane %v2713, 2
      %v2774 = vrot.slane %v2721, 2
      %v2775 = vsel %vm452, %v2773, %v2774
      %v2776 = vrot.slane %v2714, 2
      %v2777 = vrot.slane %v2722, 2
      %v2778 = vsel %vm452, %v2776, %v2777
      %v2779 = vrot.slane %v2715, 2
      %v2780 = vrot.slane %v2723, 2
      %v2781 = vsel %vm452, %v2779, %v2780
      %v2782 = vrot.slane %v2716, 2
      %v2783 = vrot.slane %v2724, 2
      %v2784 = vsel %vm452, %v2782, %v2783
      %v2785 = vrot.slane %v2717, 2
      %v2786 = vrot.slane %v2725, 2
      %v2787 = vsel %vm452, %v2785, %v2786
      %v2788 = vrot.slane %v2718, 2
      %v2789 = vrot.slane %v2726, 2
      %v2790 = vsel %vm452, %v2788, %v2789
      %v2800 = vrot.slane %v2719, 1
      %v2801 = vrot.slane %v2727, 1
      %v2802 = vsel %vm403, %v2800, %v2801
      %v2804 = vrot.slane %v2719, 2
      %v2805 = vrot.slane %v2727, 2
      %v2806 = vsel %vm452, %v2804, %v2805
      %v2808 = vpack.c.bf16 %v2712, %v369
      %v2809 = vpack.c.bf16 %v2744, %v406
      %v2810 = vpack.c.bf16 %v2772, %v455
      %v2811 = vpack.c.bf16 %v2713, %v2712
      %v2812 = vpack.c.bf16 %v2747, %v2744
      %v2813 = vpack.c.bf16 %v2775, %v2772
      %v2814 = vpack.c.bf16 %v2714, %v2713
      %v2815 = vpack.c.bf16 %v2750, %v2747
      %v2816 = vpack.c.bf16 %v2778, %v2775
      %v2817 = vpack.c.bf16 %v2715, %v2714
      %v2818 = vpack.c.bf16 %v2753, %v2750
      %v2819 = vpack.c.bf16 %v2781, %v2778
      %v2820 = vpack.c.bf16 %v2716, %v2715
      %v2821 = vpack.c.bf16 %v2756, %v2753
      %v2822 = vpack.c.bf16 %v2784, %v2781
      %v2823 = vpack.c.bf16 %v2717, %v2716
      %v2824 = vpack.c.bf16 %v2759, %v2756
      %v2825 = vpack.c.bf16 %v2787, %v2784
      %v2826 = vpack.c.bf16 %v2718, %v2717
      %v2827 = vpack.c.bf16 %v2762, %v2759
      %v2828 = vpack.c.bf16 %v2790, %v2787
      %v2829 = vpack.c.bf16 %v2719, %v2718
      %v2830 = vpack.c.bf16 %v2802, %v2762
      %v2831 = vpack.c.bf16 %v2806, %v2790
      %v2832 = vpack.c.bf16 %v369, %v2719
      %v2833 = vpack.c.bf16 %v406, %v2802
      %v2834 = vpack.c.bf16 %v455, %v2806
      %2835 = vmatprep.subr.bf16.mxu0 0
      %2836 = vmatpush1.bf16.msra.mxu0 %v1709
      %2837 = vmatprep.subr.bf16.mxu0 0
      %2838 = vmatpush1.bf16.msra.mxu0 %v1710
      %2839 = vmatprep.subr.bf16.mxu0 0
      %2840 = vmatpush1.bf16.msra.mxu0 %v1711
      %2841 = vmatprep.subr.bf16.mxu0 0
      %2842 = vmatpush1.bf16.msra.mxu0 %v1712
      %2843 = vmatprep.subr.bf16.mxu0 0
      %2844 = vmatpush1.bf16.msra.mxu0 %v1713
      %2845 = vmatprep.subr.bf16.mxu0 0
      %2846 = vmatpush1.bf16.msra.mxu0 %v1714
      %2847 = vmatprep.subr.bf16.mxu0 0
      %2848 = vmatpush1.bf16.msra.mxu0 %v1715
      %2849 = vmatprep.subr.bf16.mxu0 0
      %2850 = vmatpush1.bf16.msra.mxu0 %v1716
      %2851 = vmatprep.subr.bf16.mxu0 0
      %2852 = vmatpush1.bf16.msra.mxu0 %v1717
      %2853 = vmatprep.subr.bf16.mxu0 0
      %2854 = vmatpush1.bf16.msra.mxu0 %v1718
      %2855 = vmatprep.subr.bf16.mxu0 0
      %2856 = vmatpush1.bf16.msra.mxu0 %v1719
      %2857 = vmatprep.subr.bf16.mxu0 0
      %2858 = vmatpush1.bf16.msra.mxu0 %v1720
      %2859 = vmatprep.subr.bf16.mxu0 0
      %2860 = vmatpush1.bf16.msra.mxu0 %v1721
      %2861 = vmatprep.subr.bf16.mxu0 0
      %2862 = vmatpush1.bf16.msra.mxu0 %v1722
      %2863 = vmatprep.subr.bf16.mxu0 0
      %2864 = vmatpush1.bf16.msra.mxu0 %v1723
      %2865 = vmatprep.subr.bf16.mxu0 0
      %2866 = vmatpush1.bf16.msra.mxu0 %v1724
      %2867 = vmatprep.mubr.bf16.mxu0 %v2809
      %2868 = vmatmul.mubr.bf16.gmra.mrb[0].mxu0 %v2808
      %v2869 = vpop.f32.mrb[0].mxu0
      %v2870 = vadd.f32 0.0, %v2869
      %v2871 = vpop.f32.mrb[0].mxu0
      %v2872 = vpop.f32.mrb[0].mxu0
      %v2873 = vadd.f32 0.0, %v2872
      %v2874 = vpop.f32.mrb[0].mxu0
      %2875 = vmatprep.mubr.bf16.mxu0 %v2815
      %2876 = vmatmul.mubr.bf16.gmra.mrb[0].mxu0 %v2814
      %v2877 = vpop.f32.mrb[0].mxu0
      %v2878 = vadd.f32 0.0, %v2877
      %v2879 = vpop.f32.mrb[0].mxu0
      %v2880 = vpop.f32.mrb[0].mxu0
      %v2881 = vadd.f32 0.0, %v2880
      %v2882 = vpop.f32.mrb[0].mxu0
      %2883 = vmatprep.mubr.bf16.mxu0 %v2821
      %2884 = vmatmul.mubr.bf16.gmra.mrb[0].mxu0 %v2820
      %v2885 = vpop.f32.mrb[0].mxu0
      %v2886 = vadd.f32 0.0, %v2885
      %v2887 = vpop.f32.mrb[0].mxu0
      %v2888 = vpop.f32.mrb[0].mxu0
      %v2889 = vadd.f32 0.0, %v2888
      %v2890 = vpop.f32.mrb[0].mxu0
      %2891 = vmatprep.mubr.bf16.mxu0 %v2827
      %2892 = vmatmul.mubr.bf16.gmra.mrb[0].mxu0 %v2826
      %v2893 = vpop.f32.mrb[0].mxu0
      %v2894 = vadd.f32 0.0, %v2893
      %v2895 = vpop.f32.mrb[0].mxu0
      %v2896 = vpop.f32.mrb[0].mxu0
      %v2897 = vadd.f32 0.0, %v2896
      %v2898 = vpop.f32.mrb[0].mxu0
      %2899 = vdwg.mxu0
      %2900 = vmatprep.subr.bf16.mxu0 0
      %2901 = vmatpush1.bf16.msra.mxu0 %v1725
      %2902 = vmatprep.subr.bf16.mxu0 0
      %2903 = vmatpush1.bf16.msra.mxu0 %v1726
      %2904 = vmatprep.subr.bf16.mxu0 0
      %2905 = vmatpush1.bf16.msra.mxu0 %v1727
      %2906 = vmatprep.subr.bf16.mxu0 0
      %2907 = vmatpush1.bf16.msra.mxu0 %v1728
      %2908 = vmatprep.subr.bf16.mxu0 0
      %2909 = vmatpush1.bf16.msra.mxu0 %v1729
      %2910 = vmatprep.subr.bf16.mxu0 0
      %2911 = vmatpush1.bf16.msra.mxu0 %v1730
      %2912 = vmatprep.subr.bf16.mxu0 0
      %2913 = vmatpush1.bf16.msra.mxu0 %v1731
      %2914 = vmatprep.subr.bf16.mxu0 0
      %2915 = vmatpush1.bf16.msra.mxu0 %v1732
      %2916 = vmatprep.subr.bf16.mxu0 0
      %2917 = vmatpush1.bf16.msra.mxu0 %v1733
      %2918 = vmatprep.subr.bf16.mxu0 0
      %2919 = vmatpush1.bf16.msra.mxu0 %v1734
      %2920 = vmatprep.subr.bf16.mxu0 0
      %2921 = vmatpush1.bf16.msra.mxu0 %v1735
      %2922 = vmatprep.subr.bf16.mxu0 0
      %2923 = vmatpush1.bf16.msra.mxu0 %v1736
      %2924 = vmatprep.subr.bf16.mxu0 0
      %2925 = vmatpush1.bf16.msra.mxu0 %v1737
      %2926 = vmatprep.subr.bf16.mxu0 0
      %2927 = vmatpush1.bf16.msra.mxu0 %v1738
      %2928 = vmatprep.subr.bf16.mxu0 0
      %2929 = vmatpush1.bf16.msra.mxu0 %v1739
      %2930 = vmatprep.subr.bf16.mxu0 0
      %2931 = vmatpush1.bf16.msra.mxu0 %v1740
      %2932 = vmatprep.mubr.bf16.mxu0 %v2811
      %2933 = vmatmul.mubr.bf16.gmra.mrb[0].mxu0 %v2810
      %v2934 = vpop.f32.mrb[0].mxu0
      %v2935 = vadd.f32 %v2870, %v2934
      %v2936 = vpop.f32.mrb[0].mxu0
      %v2937 = vpop.f32.mrb[0].mxu0
      %v2938 = vadd.f32 %v2873, %v2937
      %v2939 = vpop.f32.mrb[0].mxu0
      %2940 = vmatprep.mubr.bf16.mxu0 %v2817
      %2941 = vmatmul.mubr.bf16.gmra.mrb[0].mxu0 %v2816
      %v2942 = vpop.f32.mrb[0].mxu0
      %v2943 = vadd.f32 %v2878, %v2942
      %v2944 = vpop.f32.mrb[0].mxu0
      %v2945 = vpop.f32.mrb[0].mxu0
      %v2946 = vadd.f32 %v2881, %v2945
      %v2947 = vpop.f32.mrb[0].mxu0
      %2948 = vmatprep.mubr.bf16.mxu0 %v2823
      %2949 = vmatmul.mubr.bf16.gmra.mrb[0].mxu0 %v2822
      %v2950 = vpop.f32.mrb[0].mxu0
      %v2951 = vadd.f32 %v2886, %v2950
      %v2952 = vpop.f32.mrb[0].mxu0
      %v2953 = vpop.f32.mrb[0].mxu0
      %v2954 = vadd.f32 %v2889, %v2953
      %v2955 = vpop.f32.mrb[0].mxu0
      %2956 = vmatprep.mubr.bf16.mxu0 %v2829
      %2957 = vmatmul.mubr.bf16.gmra.mrb[0].mxu0 %v2828
      %v2958 = vpop.f32.mrb[0].mxu0
      %v2959 = vadd.f32 %v2894, %v2958
      %v2960 = vpop.f32.mrb[0].mxu0
      %v2961 = vpop.f32.mrb[0].mxu0
      %v2962 = vadd.f32 %v2897, %v2961
      %v2963 = vpop.f32.mrb[0].mxu0
      %2964 = vdwg.mxu0
      %2965 = vmatprep.subr.bf16.mxu0 0
      %2966 = vmatpush1.bf16.msra.mxu0 %v1741
      %2967 = vmatprep.subr.bf16.mxu0 0
      %2968 = vmatpush1.bf16.msra.mxu0 %v1742
      %2969 = vmatprep.subr.bf16.mxu0 0
      %2970 = vmatpush1.bf16.msra.mxu0 %v1743
      %2971 = vmatprep.subr.bf16.mxu0 0
      %2972 = vmatpush1.bf16.msra.mxu0 %v1744
      %2973 = vmatprep.subr.bf16.mxu0 0
      %2974 = vmatpush1.bf16.msra.mxu0 %v1745
      %2975 = vmatprep.subr.bf16.mxu0 0
      %2976 = vmatpush1.bf16.msra.mxu0 %v1746
      %2977 = vmatprep.subr.bf16.mxu0 0
      %2978 = vmatpush1.bf16.msra.mxu0 %v1747
      %2979 = vmatprep.subr.bf16.mxu0 0
      %2980 = vmatpush1.bf16.msra.mxu0 %v1748
      %2981 = vmatprep.subr.bf16.mxu0 0
      %2982 = vmatpush1.bf16.msra.mxu0 %v1749
      %2983 = vmatprep.subr.bf16.mxu0 0
      %2984 = vmatpush1.bf16.msra.mxu0 %v1750
      %2985 = vmatprep.subr.bf16.mxu0 0
      %2986 = vmatpush1.bf16.msra.mxu0 %v1751
      %2987 = vmatprep.subr.bf16.mxu0 0
      %2988 = vmatpush1.bf16.msra.mxu0 %v1752
      %2989 = vmatprep.subr.bf16.mxu0 0
      %2990 = vmatpush1.bf16.msra.mxu0 %v1753
      %2991 = vmatprep.subr.bf16.mxu0 0
      %2992 = vmatpush1.bf16.msra.mxu0 %v1754
      %2993 = vmatprep.subr.bf16.mxu0 0
      %2994 = vmatpush1.bf16.msra.mxu0 %v1755
      %2995 = vmatprep.subr.bf16.mxu0 0
      %2996 = vmatpush1.bf16.msra.mxu0 %v1756
      %2997 = vmatprep.mubr.bf16.mxu0 %v2813
      %2998 = vmatmul.mubr.bf16.gmra.mrb[0].mxu0 %v2812
      %v2999 = vpop.f32.mrb[0].mxu0
      %v3000 = vadd.f32 %v2935, %v2999
      %v3001 = vpop.f32.mrb[0].mxu0
      %v3002 = vpop.f32.mrb[0].mxu0
      %v3003 = vadd.f32 %v2938, %v3002
      %v3004 = vpop.f32.mrb[0].mxu0
      %3005 = vmatprep.mubr.bf16.mxu0 %v2819
      %3006 = vmatmul.mubr.bf16.gmra.mrb[0].mxu0 %v2818
      %v3007 = vpop.f32.mrb[0].mxu0
      %v3008 = vadd.f32 %v2943, %v3007
      %v3009 = vpop.f32.mrb[0].mxu0
      %v3010 = vpop.f32.mrb[0].mxu0
      %v3011 = vadd.f32 %v2946, %v3010
      %v3012 = vpop.f32.mrb[0].mxu0
      %3013 = vmatprep.mubr.bf16.mxu0 %v2825
      %3014 = vmatmul.mubr.bf16.gmra.mrb[0].mxu0 %v2824
      %v3015 = vpop.f32.mrb[0].mxu0
      %v3016 = vadd.f32 %v2951, %v3015
      %v3017 = vpop.f32.mrb[0].mxu0
      %v3018 = vpop.f32.mrb[0].mxu0
      %v3019 = vadd.f32 %v2954, %v3018
      %v3020 = vpop.f32.mrb[0].mxu0
      %3021 = vmatprep.mubr.bf16.mxu0 %v2831
      %3022 = vmatmul.mubr.bf16.gmra.mrb[0].mxu0 %v2830
      %v3023 = vpop.f32.mrb[0].mxu0
      %v3024 = vadd.f32 %v2959, %v3023
      %v3025 = vpop.f32.mrb[0].mxu0
      %v3026 = vpop.f32.mrb[0].mxu0
      %v3027 = vadd.f32 %v2962, %v3026
      %v3028 = vpop.f32.mrb[0].mxu0
      %3029 = vdwg.mxu0
      %3030 = vmatprep.subr.bf16.mxu0 0
      %3031 = vmatpush1.bf16.msra.mxu0 %v1757
      %3032 = vmatprep.subr.bf16.mxu0 0
      %3033 = vmatpush1.bf16.msra.mxu0 %v1758
      %3034 = vmatprep.subr.bf16.mxu0 0
      %3035 = vmatpush1.bf16.msra.mxu0 %v1759
      %3036 = vmatprep.subr.bf16.mxu0 0
      %3037 = vmatpush1.bf16.msra.mxu0 %v1760
      %3038 = vmatprep.subr.bf16.mxu0 0
      %3039 = vmatpush1.bf16.msra.mxu0 %v1761
      %3040 = vmatprep.subr.bf16.mxu0 0
      %3041 = vmatpush1.bf16.msra.mxu0 %v1762
      %3042 = vmatprep.subr.bf16.mxu0 0
      %3043 = vmatpush1.bf16.msra.mxu0 %v1763
      %3044 = vmatprep.subr.bf16.mxu0 0
      %3045 = vmatpush1.bf16.msra.mxu0 %v1764
      %3046 = vmatprep.subr.bf16.mxu0 0
      %3047 = vmatpush1.bf16.msra.mxu0 %v1765
      %3048 = vmatprep.subr.bf16.mxu0 0
      %3049 = vmatpush1.bf16.msra.mxu0 %v1766
      %3050 = vmatprep.subr.bf16.mxu0 0
      %3051 = vmatpush1.bf16.msra.mxu0 %v1767
      %3052 = vmatprep.subr.bf16.mxu0 0
      %3053 = vmatpush1.bf16.msra.mxu0 %v1768
      %3054 = vmatprep.subr.bf16.mxu0 0
      %3055 = vmatpush1.bf16.msra.mxu0 %v1769
      %3056 = vmatprep.subr.bf16.mxu0 0
      %3057 = vmatpush1.bf16.msra.mxu0 %v1770
      %3058 = vmatprep.subr.bf16.mxu0 0
      %3059 = vmatpush1.bf16.msra.mxu0 %v1771
      %3060 = vmatprep.subr.bf16.mxu0 0
      %3061 = vmatpush1.bf16.msra.mxu0 %v1772
      %3062 = vmatprep.mubr.bf16.mxu0 %v2815
      %3063 = vmatmul.mubr.bf16.gmra.mrb[0].mxu0 %v2814
      %v3064 = vpop.f32.mrb[0].mxu0
      %v3065 = vadd.f32 %v3000, %v3064
      %v3066 = vpop.f32.mrb[0].mxu0
      %v3067 = vpop.f32.mrb[0].mxu0
      %v3068 = vadd.f32 %v3003, %v3067
      %v3069 = vpop.f32.mrb[0].mxu0
      %3070 = vmatprep.mubr.bf16.mxu0 %v2821
      %3071 = vmatmul.mubr.bf16.gmra.mrb[0].mxu0 %v2820
      %v3072 = vpop.f32.mrb[0].mxu0
      %v3073 = vadd.f32 %v3008, %v3072
      %v3074 = vpop.f32.mrb[0].mxu0
      %v3075 = vpop.f32.mrb[0].mxu0
      %v3076 = vadd.f32 %v3011, %v3075
      %v3077 = vpop.f32.mrb[0].mxu0
      %3078 = vmatprep.mubr.bf16.mxu0 %v2827
      %3079 = vmatmul.mubr.bf16.gmra.mrb[0].mxu0 %v2826
      %v3080 = vpop.f32.mrb[0].mxu0
      %v3081 = vadd.f32 %v3016, %v3080
      %v3082 = vpop.f32.mrb[0].mxu0
      %v3083 = vpop.f32.mrb[0].mxu0
      %v3084 = vadd.f32 %v3019, %v3083
      %v3085 = vpop.f32.mrb[0].mxu0
      %3086 = vmatprep.mubr.bf16.mxu0 %v2833
      %3087 = vmatmul.mubr.bf16.gmra.mrb[0].mxu0 %v2832
      %v3088 = vpop.f32.mrb[0].mxu0
      %v3089 = vadd.f32 %v3024, %v3088
      %v3090 = vpop.f32.mrb[0].mxu0
      %v3091 = vpop.f32.mrb[0].mxu0
      %v3092 = vadd.f32 %v3027, %v3091
      %v3093 = vpop.f32.mrb[0].mxu0
      %3094 = vdwg.mxu0
      %3095 = vmatprep.subr.bf16.mxu0 0
      %3096 = vmatpush1.bf16.msra.mxu0 %v1773
      %3097 = vmatprep.subr.bf16.mxu0 0
      %3098 = vmatpush1.bf16.msra.mxu0 %v1774
      %3099 = vmatprep.subr.bf16.mxu0 0
      %3100 = vmatpush1.bf16.msra.mxu0 %v1775
      %3101 = vmatprep.subr.bf16.mxu0 0
      %3102 = vmatpush1.bf16.msra.mxu0 %v1776
      %3103 = vmatprep.subr.bf16.mxu0 0
      %3104 = vmatpush1.bf16.msra.mxu0 %v1777
      %3105 = vmatprep.subr.bf16.mxu0 0
      %3106 = vmatpush1.bf16.msra.mxu0 %v1778
      %3107 = vmatprep.subr.bf16.mxu0 0
      %3108 = vmatpush1.bf16.msra.mxu0 %v1779
      %3109 = vmatprep.subr.bf16.mxu0 0
      %3110 = vmatpush1.bf16.msra.mxu0 %v1780
      %3111 = vmatprep.subr.bf16.mxu0 0
      %3112 = vmatpush1.bf16.msra.mxu0 0
      %3113 = vmatprep.subr.bf16.mxu0 0
      %3114 = vmatpush1.bf16.msra.mxu0 0
      %3115 = vmatprep.subr.bf16.mxu0 0
      %3116 = vmatpush1.bf16.msra.mxu0 0
      %3117 = vmatprep.subr.bf16.mxu0 0
      %3118 = vmatpush1.bf16.msra.mxu0 0
      %3119 = vmatprep.subr.bf16.mxu0 0
      %3120 = vmatpush1.bf16.msra.mxu0 0
      %3121 = vmatprep.subr.bf16.mxu0 0
      %3122 = vmatpush1.bf16.msra.mxu0 0
      %3123 = vmatprep.subr.bf16.mxu0 0
      %3124 = vmatpush1.bf16.msra.mxu0 0
      %3125 = vmatprep.subr.bf16.mxu0 0
      %3126 = vmatpush1.bf16.msra.mxu0 0
      %3127 = vmatprep.mubr.bf16.mxu0 0
      %3128 = vmatmul.mubr.bf16.gmra.mrb[0].mxu0 %v2816
      %v3129 = vpop.f32.mrb[0].mxu0
      %v3130 = vadd.f32 %v3065, %v3129
      %v3131 = vpop.f32.mrb[0].mxu0
      %v3132 = vpop.f32.mrb[0].mxu0
      %v3133 = vadd.f32 %v3068, %v3132
      %v3134 = vpop.f32.mrb[0].mxu0
      %3135 = vmatprep.mubr.bf16.mxu0 0
      %3136 = vmatmul.mubr.bf16.gmra.mrb[0].mxu0 %v2822
      %v3137 = vpop.f32.mrb[0].mxu0
      %v3138 = vadd.f32 %v3073, %v3137
      %v3139 = vpop.f32.mrb[0].mxu0
      %v3140 = vpop.f32.mrb[0].mxu0
      %v3141 = vadd.f32 %v3076, %v3140
      %v3142 = vpop.f32.mrb[0].mxu0
      %3143 = vmatprep.mubr.bf16.mxu0 0
      %3144 = vmatmul.mubr.bf16.gmra.mrb[0].mxu0 %v2828
      %v3145 = vpop.f32.mrb[0].mxu0
      %v3146 = vadd.f32 %v3081, %v3145
      %v3147 = vpop.f32.mrb[0].mxu0
      %v3148 = vpop.f32.mrb[0].mxu0
      %v3149 = vadd.f32 %v3084, %v3148
      %v3150 = vpop.f32.mrb[0].mxu0
      %3151 = vmatprep.mubr.bf16.mxu0 0
      %3152 = vmatmul.mubr.bf16.gmra.mrb[0].mxu0 %v2834
      %v3153 = vpop.f32.mrb[0].mxu0
      %v3154 = vadd.f32 %v3089, %v3153
      %v3155 = vpop.f32.mrb[0].mxu0
      %v3156 = vpop.f32.mrb[0].mxu0
      %v3157 = vadd.f32 %v3092, %v3156
      %v3158 = vpop.f32.mrb[0].mxu0
      %3159 = vdwg.mxu0
      %v3160 = vmul.f32 %v3130, %v2183
      %v3161 = vmul.f32 %v3133, %v2183
      %v3162 = vmul.f32 %v3138, %v2183
      %v3163 = vmul.f32 %v3141, %v2183
      %v3164 = vmul.f32 %v3146, %v2183
      %v3165 = vmul.f32 %v3149, %v2183
      %v3166 = vmul.f32 %v3154, %v2183
      %v3167 = vmul.f32 %v3157, %v2183
      %v3168 = vadd.f32 %v3160, %v2198
      %v3169 = vadd.f32 %v3161, %v2198
      %v3170 = vadd.f32 %v3162, %v2198
      %v3171 = vadd.f32 %v3163, %v2198
      %v3172 = vadd.f32 %v3164, %v2198
      %v3173 = vadd.f32 %v3165, %v2198
      %v3174 = vadd.f32 %v3166, %v2198
      %v3175 = vadd.f32 %v3167, %v2198
      %v3176 = vsub.f32 %v2200, %v3168
      %v3177 = vsub.f32 %v2201, %v3169
      %v3178 = vsub.f32 %v2202, %v3170
      %v3179 = vsub.f32 %v2203, %v3171
      %v3180 = vsub.f32 %v2204, %v3172
      %v3181 = vsub.f32 %v2205, %v3173
      %v3182 = vsub.f32 %v2206, %v3174
      %v3183 = vsub.f32 %v2207, %v3175
      %v3184 = vmul.f32 %v3176, %v3176
      %v3185 = vmul.f32 %v3177, %v3177
      %v3186 = vmul.f32 %v3178, %v3178
      %v3187 = vmul.f32 %v3179, %v3179
      %v3188 = vmul.f32 %v3180, %v3180
      %v3189 = vmul.f32 %v3181, %v3181
      %v3190 = vmul.f32 %v3182, %v3182
      %v3191 = vmul.f32 %v3183, %v3183
      %v3192 = vadd.f32 %v3184, %v3185
      %v3193 = vadd.f32 %v3192, %v3186
      %v3194 = vadd.f32 %v3193, %v3187
      %v3195 = vadd.f32 %v3194, %v3188
      %v3196 = vadd.f32 %v3195, %v3189
      %v3197 = vadd.f32 %v3196, %v3190
      %v3198 = vadd.f32 %v3197, %v3191
      %3199 = vadd.xlane.f32.xlu0 %v3198
      %v3200 = vpop.xlane.xlu0 %3199
      %v3201 = vrot.slane %v3200, 4
      %v3202 = vadd.f32 %v3200, %v3201
      %v3203 = vrot.slane %v3202, 2
      %v3204 = vadd.f32 %v3202, %v3203
      %v3205 = vrot.slane %v3204, 1
      %v3206 = vadd.f32 %v3204, %v3205
      %s3207 = vtos %v3206
      %v3208 = vstv %s3207
      %3209 = vst [vmem:[%s323] sm:$0xff] %v3208
      %p3210 = scmp.lt.s32.totalorder %s19, 1
      %s3211 = scalar_select %p3210, %s19, 1
      %s3212 = smul.addr %s3211, 8
      %s3213 = scalar_lea.vmem %s8, %s3212
      // Predicated region
      $region53: #{_lambda_.3} parent=51 // pred_check
        %p3214 = pneg %p215
      $region54: #{_lambda_.3} parent=51 // pred_check_branch
        %3216 = sbr.rel (%p3214) target = $region56
      $region55: #{_lambda_.3} parent=51 // pred_region
        _
      $region56: #{_lambda_.3} parent=51 // pred_fallthru
        _
    $region52: #{_lambda_.3} parent=5 // pred_fallthru
      _
    %p3217 = scmp.le.s32.totalorder 2, %s14
    // Predicated region
    $region57: #{_lambda_.3} parent=5 // pred_check
      %p3218 = pneg %p3217
    $region58: #{_lambda_.3} parent=5 // pred_check_branch
      %3220 = sbr.rel (%p3218) target = $region60
    $region59: #{_lambda_.3} parent=5 // pred_region
      %s3221 = ssub.s32 %s14, 2
      // Predicated region
      $region61: #{_lambda_.3} parent=59 // pred_check
        %p3222 = pneg %p221
      $region62: #{_lambda_.3} parent=59 // pred_check_branch
        %3224 = sbr.rel (%p3222) target = $region64
      $region63: #{_lambda_.3} parent=59 // pred_region
        %p3225 = scmp.lt.s32.totalorder %s20, 1
        %s3226 = scalar_select %p3225, %s20, 1
        %s3227 = smul.addr %s3226, 8
        %s3228 = scalar_lea.vmem %s8, %s3227
      $region64: #{_lambda_.3} parent=59 // pred_fallthru
        _
    $region60: #{_lambda_.3} parent=5 // pred_fallthru
      _
  $region6: #{_lambda_.3} parent=0 // loop_footer
    %s18 = sadd.s32 1, %s14
  $region7: #{_lambda_.3} parent=0 // loop_footer_branch
    %13 = sbr.rel target = $region3
  $region8: #{_lambda_.3} parent=0 // loop_exit
    _

// kernel: _lambda_.2
$region0: #{_lambda_.2}
  #allocation0 [shape = 'u32[]', space=smem, size = 0x4, offset = 0x4, fixed_abs, tag = 'smem constant byte address 0x4 - core index']
  #allocation1 [shape = 'u32[144,128]{1,0:T(1,128)}', space=vmem, size = 0x12000, scoped, tag = 'internal scratch']
  %s0 = inlined_call_operand.vmem [shape: f32[2,16,16,8], index: 0, kind: input, shape index: {}]
  %s1 = inlined_call_operand.vmem [shape: f32[2,16,16,8], index: 1, kind: input, shape index: {}]
  %s2 = inlined_call_operand.vmem [shape: bf16[72,64], index: 2, kind: input, shape index: {}]
  %s3 = inlined_call_operand.vmem [shape: bf16[576,64], index: 3, kind: input, shape index: {}]
  %s4 = inlined_call_operand.vmem [shape: f32[1,64], index: 4, kind: input, shape index: {}]
  %s5 = inlined_call_operand.vmem [shape: f32[1,64], index: 5, kind: input, shape index: {}]
  %s6 = inlined_call_operand.vmem [shape: f32[1,64], index: 6, kind: input, shape index: {}]
  %s7 = inlined_call_operand.vmem [shape: f32[1,64], index: 7, kind: input, shape index: {}]
  %s8 = inlined_call_operand.vmem [shape: bf16[2,256,128], index: 8, kind: output, shape index: {0}]
  %s9 = inlined_call_operand.vmem [shape: f32[2,8,128], index: 9, kind: output, shape index: {1}]
  %10 = xla_tuple %s8, %s9
  %s11 = sld [smem:[#allocation0]]
  $region73: #{_lambda_.2} parent=0
    _
  %s13 = ssub.s32 1, %s11
  %s14 = scalar_select 0, %s13, %s11
  loop: start=0, step=1, limit=4
  $region2: #{_lambda_.2} parent=0 // loop_pre_header
    _
  $region3: #{_lambda_.2} parent=0 // loop_header
    %s16 = sphi 0, %s20
    %p17 = scmp.ge.s32.totalorder %s16, 4
    %s26 = sphi 0, %s28
    %s29 = sphi 0, %s26
    %s30 = sphi 0, %s29
    %s46 = sphi 0, %s30
    %s52 = sphi 0, %s54
    %s55 = sphi 0, %s52
    %s56 = sphi 0, %s55
    %s72 = sphi 0, %s56
    %s76 = sphi 0, %s76
    %s78 = sphi 0, %s76
    %s79 = sphi 0, %s78
    %s93 = sphi 0, %s79
    %s97 = sphi 0, %s97
    %s99 = sphi 0, %s97
    %s100 = sphi 0, %s99
    %s114 = sphi 0, %s100
    %s118 = sphi 0, %s118
    %s120 = sphi 0, %s118
    %s121 = sphi 0, %s120
    %s135 = sphi 0, %s121
    %s139 = sphi 0, %s139
    %s141 = sphi 0, %s139
    %s142 = sphi 0, %s141
    %s156 = sphi 0, %s142
    %s160 = sphi 0, %s160
    %s162 = sphi 0, %s160
    %s163 = sphi 0, %s162
    %s177 = sphi 0, %s163
    %s181 = sphi 0, %s181
    %s183 = sphi 0, %s181
    %s184 = sphi 0, %s183
    %s198 = sphi 0, %s184
    %s204 = sphi 0, %s206
    %s207 = sphi 0, %s204
    %s208 = sphi 0, %s207
    %s224 = sphi 0, %s208
    %s230 = sphi 0, %s232
    %s233 = sphi 0, %s230
    %s234 = sphi 0, %s233
    %s250 = sphi 0, %s234
  $region4: #{_lambda_.2} parent=0 // loop_header_branch
    %19 = sbr.rel (%p17) target = $region8
  $region5: #{_lambda_.2} parent=0 // loop_body
    %s21 = ssub.s32 %s16, 1
    %s22 = ssub.s32 %s16, 2
    %s23 = sadd.s32 %s16, 1
    %s24 = ssub.s32 %s16, %s23
    %p25 = scmp.eq.s32.totalorder %s24, 0
    %s27 = sadd.s32 %s26, 1
    %s28 = scalar_select %p25, %s26, %s27
    %p31 = pneg %p25
    %p32 = scmp.eq.s32.totalorder %s16, 1
    %p33 = por %p31, %p32
    %p34 = scmp.ne.s32.totalorder %s26, %s29
    %p35 = scmp.eq.s32.totalorder %s16, 0
    %p36 = por %p34, %p35
    %p37 = scmp.ne.s32.totalorder %s26, %s29
    %p38 = scmp.eq.s32.totalorder %s21, 1
    %p39 = por %p37, %p38
    %p40 = scmp.ne.s32.totalorder %s29, %s30
    %p41 = scmp.eq.s32.totalorder %s21, 0
    %p42 = por %p40, %p41
    %p43 = scmp.ne.s32.totalorder %s29, %s30
    %p44 = scmp.eq.s32.totalorder %s22, 1
    %p45 = por %p43, %p44
    %p47 = scmp.ne.s32.totalorder %s30, %s46
    %p48 = scmp.eq.s32.totalorder %s22, 0
    %p49 = por %p47, %p48
    %s50 = ssub.s32 %s16, %s23
    %p51 = scmp.eq.s32.totalorder %s50, 0
    %s53 = sadd.s32 %s52, 1
    %s54 = scalar_select %p51, %s52, %s53
    %p57 = pneg %p51
    %p58 = scmp.eq.s32.totalorder %s16, 1
    %p59 = por %p57, %p58
    %p60 = scmp.ne.s32.totalorder %s52, %s55
    %p61 = scmp.eq.s32.totalorder %s16, 0
    %p62 = por %p60, %p61
    %p63 = scmp.ne.s32.totalorder %s52, %s55
    %p64 = scmp.eq.s32.totalorder %s21, 1
    %p65 = por %p63, %p64
    %p66 = scmp.ne.s32.totalorder %s55, %s56
    %p67 = scmp.eq.s32.totalorder %s21, 0
    %p68 = por %p66, %p67
    %p69 = scmp.ne.s32.totalorder %s55, %s56
    %p70 = scmp.eq.s32.totalorder %s22, 1
    %p71 = por %p69, %p70
    %p73 = scmp.ne.s32.totalorder %s56, %s72
    %p74 = scmp.eq.s32.totalorder %s22, 0
    %p75 = por %p73, %p74
    %s77 = sadd.s32 %s76, 1
    %p80 = scmp.eq.s32.totalorder %s16, 1
    %p81 = scmp.ne.s32.totalorder %s76, %s78
    %p82 = scmp.eq.s32.totalorder %s16, 0
    %p83 = por %p81, %p82
    %p84 = scmp.ne.s32.totalorder %s76, %s78
    %p85 = scmp.eq.s32.totalorder %s21, 1
    %p86 = por %p84, %p85
    %p87 = scmp.ne.s32.totalorder %s78, %s79
    %p88 = scmp.eq.s32.totalorder %s21, 0
    %p89 = por %p87, %p88
    %p90 = scmp.ne.s32.totalorder %s78, %s79
    %p91 = scmp.eq.s32.totalorder %s22, 1
    %p92 = por %p90, %p91
    %p94 = scmp.ne.s32.totalorder %s79, %s93
    %p95 = scmp.eq.s32.totalorder %s22, 0
    %p96 = por %p94, %p95
    %s98 = sadd.s32 %s97, 1
    %p101 = scmp.eq.s32.totalorder %s16, 1
    %p102 = scmp.ne.s32.totalorder %s97, %s99
    %p103 = scmp.eq.s32.totalorder %s16, 0
    %p104 = por %p102, %p103
    %p105 = scmp.ne.s32.totalorder %s97, %s99
    %p106 = scmp.eq.s32.totalorder %s21, 1
    %p107 = por %p105, %p106
    %p108 = scmp.ne.s32.totalorder %s99, %s100
    %p109 = scmp.eq.s32.totalorder %s21, 0
    %p110 = por %p108, %p109
    %p111 = scmp.ne.s32.totalorder %s99, %s100
    %p112 = scmp.eq.s32.totalorder %s22, 1
    %p113 = por %p111, %p112
    %p115 = scmp.ne.s32.totalorder %s100, %s114
    %p116 = scmp.eq.s32.totalorder %s22, 0
    %p117 = por %p115, %p116
    %s119 = sadd.s32 %s118, 1
    %p122 = scmp.eq.s32.totalorder %s16, 1
    %p123 = scmp.ne.s32.totalorder %s118, %s120
    %p124 = scmp.eq.s32.totalorder %s16, 0
    %p125 = por %p123, %p124
    %p126 = scmp.ne.s32.totalorder %s118, %s120
    %p127 = scmp.eq.s32.totalorder %s21, 1
    %p128 = por %p126, %p127
    %p129 = scmp.ne.s32.totalorder %s120, %s121
    %p130 = scmp.eq.s32.totalorder %s21, 0
    %p131 = por %p129, %p130
    %p132 = scmp.ne.s32.totalorder %s120, %s121
    %p133 = scmp.eq.s32.totalorder %s22, 1
    %p134 = por %p132, %p133
    %p136 = scmp.ne.s32.totalorder %s121, %s135
    %p137 = scmp.eq.s32.totalorder %s22, 0
    %p138 = por %p136, %p137
    %s140 = sadd.s32 %s139, 1
    %p143 = scmp.eq.s32.totalorder %s16, 1
    %p144 = scmp.ne.s32.totalorder %s139, %s141
    %p145 = scmp.eq.s32.totalorder %s16, 0
    %p146 = por %p144, %p145
    %p147 = scmp.ne.s32.totalorder %s139, %s141
    %p148 = scmp.eq.s32.totalorder %s21, 1
    %p149 = por %p147, %p148
    %p150 = scmp.ne.s32.totalorder %s141, %s142
    %p151 = scmp.eq.s32.totalorder %s21, 0
    %p152 = por %p150, %p151
    %p153 = scmp.ne.s32.totalorder %s141, %s142
    %p154 = scmp.eq.s32.totalorder %s22, 1
    %p155 = por %p153, %p154
    %p157 = scmp.ne.s32.totalorder %s142, %s156
    %p158 = scmp.eq.s32.totalorder %s22, 0
    %p159 = por %p157, %p158
    %s161 = sadd.s32 %s160, 1
    %p164 = scmp.eq.s32.totalorder %s16, 1
    %p165 = scmp.ne.s32.totalorder %s160, %s162
    %p166 = scmp.eq.s32.totalorder %s16, 0
    %p167 = por %p165, %p166
    %p168 = scmp.ne.s32.totalorder %s160, %s162
    %p169 = scmp.eq.s32.totalorder %s21, 1
    %p170 = por %p168, %p169
    %p171 = scmp.ne.s32.totalorder %s162, %s163
    %p172 = scmp.eq.s32.totalorder %s21, 0
    %p173 = por %p171, %p172
    %p174 = scmp.ne.s32.totalorder %s162, %s163
    %p175 = scmp.eq.s32.totalorder %s22, 1
    %p176 = por %p174, %p175
    %p178 = scmp.ne.s32.totalorder %s163, %s177
    %p179 = scmp.eq.s32.totalorder %s22, 0
    %p180 = por %p178, %p179
    %s182 = sadd.s32 %s181, 1
    %p185 = scmp.eq.s32.totalorder %s16, 1
    %p186 = scmp.ne.s32.totalorder %s181, %s183
    %p187 = scmp.eq.s32.totalorder %s16, 0
    %p188 = por %p186, %p187
    %p189 = scmp.ne.s32.totalorder %s181, %s183
    %p190 = scmp.eq.s32.totalorder %s21, 1
    %p191 = por %p189, %p190
    %p192 = scmp.ne.s32.totalorder %s183, %s184
    %p193 = scmp.eq.s32.totalorder %s21, 0
    %p194 = por %p192, %p193
    %p195 = scmp.ne.s32.totalorder %s183, %s184
    %p196 = scmp.eq.s32.totalorder %s22, 1
    %p197 = por %p195, %p196
    %p199 = scmp.ne.s32.totalorder %s184, %s198
    %p200 = scmp.eq.s32.totalorder %s22, 0
    %p201 = por %p199, %p200
    %s202 = ssub.s32 %s16, %s23
    %p203 = scmp.eq.s32.totalorder %s202, 0
    %s205 = sadd.s32 %s204, 1
    %s206 = scalar_select %p203, %s204, %s205
    %p209 = pneg %p203
    %p210 = scmp.eq.s32.totalorder %s16, 1
    %p211 = por %p209, %p210
    %p212 = scmp.ne.s32.totalorder %s204, %s207
    %p213 = scmp.eq.s32.totalorder %s16, 0
    %p214 = por %p212, %p213
    %p215 = scmp.ne.s32.totalorder %s204, %s207
    %p216 = scmp.eq.s32.totalorder %s21, 1
    %p217 = por %p215, %p216
    %p218 = scmp.ne.s32.totalorder %s207, %s208
    %p219 = scmp.eq.s32.totalorder %s21, 0
    %p220 = por %p218, %p219
    %p221 = scmp.ne.s32.totalorder %s207, %s208
    %p222 = scmp.eq.s32.totalorder %s22, 1
    %p223 = por %p221, %p222
    %p225 = scmp.ne.s32.totalorder %s208, %s224
    %p226 = scmp.eq.s32.totalorder %s22, 0
    %p227 = por %p225, %p226
    %s228 = ssub.s32 %s16, %s23
    %p229 = scmp.eq.s32.totalorder %s228, 0
    %s231 = sadd.s32 %s230, 1
    %s232 = scalar_select %p229, %s230, %s231
    %p235 = pneg %p229
    %p236 = scmp.eq.s32.totalorder %s16, 1
    %p237 = por %p235, %p236
    %p238 = scmp.ne.s32.totalorder %s230, %s233
    %p239 = scmp.eq.s32.totalorder %s16, 0
    %p240 = por %p238, %p239
    %p241 = scmp.ne.s32.totalorder %s230, %s233
    %p242 = scmp.eq.s32.totalorder %s21, 1
    %p243 = por %p241, %p242
    %p244 = scmp.ne.s32.totalorder %s233, %s234
    %p245 = scmp.eq.s32.totalorder %s21, 0
    %p246 = por %p244, %p245
    %p247 = scmp.ne.s32.totalorder %s233, %s234
    %p248 = scmp.eq.s32.totalorder %s22, 1
    %p249 = por %p247, %p248
    %p251 = scmp.ne.s32.totalorder %s234, %s250
    %p252 = scmp.eq.s32.totalorder %s22, 0
    %p253 = por %p251, %p252
    %p254 = scmp.le.s32.totalorder 1, %s16
    %p255 = scmp.lt.s32.totalorder %s16, 3
    %p256 = pnand %p254, %p255
    %p257 = pneg %p256
    // Predicated region
    $region9: #{_lambda_.2} parent=5 // pred_check
      _
    $region10: #{_lambda_.2} parent=5 // pred_check_branch
      %259 = sbr.rel (%p256) target = $region12
    $region11: #{_lambda_.2} parent=5 // pred_region
      %s260 = ssub.s32 %s16, 1
      // Predicated region
      $region13: #{_lambda_.2} parent=11 // pred_check
        %p261 = pneg %p89
      $region14: #{_lambda_.2} parent=11 // pred_check_branch
        %263 = sbr.rel (%p261) target = $region16
      $region15: #{_lambda_.2} parent=11 // pred_region
        _
      $region16: #{_lambda_.2} parent=11 // pred_fallthru
        _
      // Predicated region
      $region17: #{_lambda_.2} parent=11 // pred_check
        %p264 = pneg %p110
      $region18: #{_lambda_.2} parent=11 // pred_check_branch
        %266 = sbr.rel (%p264) target = $region20
      $region19: #{_lambda_.2} parent=11 // pred_region
        _
      $region20: #{_lambda_.2} parent=11 // pred_fallthru
        _
      // Predicated region
      $region21: #{_lambda_.2} parent=11 // pred_check
        %p267 = pneg %p131
      $region22: #{_lambda_.2} parent=11 // pred_check_branch
        %269 = sbr.rel (%p267) target = $region24
      $region23: #{_lambda_.2} parent=11 // pred_region
        _
      $region24: #{_lambda_.2} parent=11 // pred_fallthru
        _
      // Predicated region
      $region25: #{_lambda_.2} parent=11 // pred_check
        %p270 = pneg %p152
      $region26: #{_lambda_.2} parent=11 // pred_check_branch
        %272 = sbr.rel (%p270) target = $region28
      $region27: #{_lambda_.2} parent=11 // pred_region
        _
      $region28: #{_lambda_.2} parent=11 // pred_fallthru
        _
      // Predicated region
      $region29: #{_lambda_.2} parent=11 // pred_check
        %p273 = pneg %p173
      $region30: #{_lambda_.2} parent=11 // pred_check_branch
        %275 = sbr.rel (%p273) target = $region32
      $region31: #{_lambda_.2} parent=11 // pred_region
        _
      $region32: #{_lambda_.2} parent=11 // pred_fallthru
        _
      // Predicated region
      $region33: #{_lambda_.2} parent=11 // pred_check
        %p276 = pneg %p194
      $region34: #{_lambda_.2} parent=11 // pred_check_branch
        %278 = sbr.rel (%p276) target = $region36
      $region35: #{_lambda_.2} parent=11 // pred_region
        _
      $region36: #{_lambda_.2} parent=11 // pred_fallthru
        _
    $region12: #{_lambda_.2} parent=5 // pred_fallthru
      _
    %p279 = scmp.lt.s32.totalorder %s16, 2
    // Predicated region
    $region37: #{_lambda_.2} parent=5 // pred_check
      %p280 = pneg %p279
    $region38: #{_lambda_.2} parent=5 // pred_check_branch
      %282 = sbr.rel (%p280) target = $region40
    $region39: #{_lambda_.2} parent=5 // pred_region
      // Predicated region
      $region41: #{_lambda_.2} parent=39 // pred_check
        %p283 = pneg %p36
      $region42: #{_lambda_.2} parent=39 // pred_check_branch
        %285 = sbr.rel (%p283) target = $region44
      $region43: #{_lambda_.2} parent=39 // pred_region
        %p286 = scmp.lt.s32.totalorder %s16, 1
        %s287 = scalar_select %p286, %s16, 1
        %s288 = smul.addr %s287, 32
        %s289 = smul.addr %s288, 8
        %s290 = scalar_lea.vmem %s0, %s289
      $region44: #{_lambda_.2} parent=39 // pred_fallthru
        _
      // Predicated region
      $region45: #{_lambda_.2} parent=39 // pred_check
        %p291 = pneg %p62
      $region46: #{_lambda_.2} parent=39 // pred_check_branch
        %293 = sbr.rel (%p291) target = $region48
      $region47: #{_lambda_.2} parent=39 // pred_region
        %p294 = scmp.lt.s32.totalorder %s16, 1
        %s295 = scalar_select %p294, %s16, 1
        %s296 = smul.addr %s295, 32
        %s297 = smul.addr %s296, 8
        %s298 = scalar_lea.vmem %s1, %s297
      $region48: #{_lambda_.2} parent=39 // pred_fallthru
        _
    $region40: #{_lambda_.2} parent=5 // pred_fallthru
      _
    %p299 = scmp.le.s32.totalorder 1, %s16
    %p300 = scmp.lt.s32.totalorder %s16, 3
    %p301 = pnand %p299, %p300
    %p302 = pneg %p301
    // Predicated region
    $region49: #{_lambda_.2} parent=5 // pred_check
      _
    $region50: #{_lambda_.2} parent=5 // pred_check_branch
      %304 = sbr.rel (%p301) target = $region52
    $region51: #{_lambda_.2} parent=5 // pred_region
      %s305 = ssub.s32 %s16, 1
      %p306 = scmp.lt.s32.totalorder %s21, 1
      %s307 = scalar_select %p306, %s21, 1
      %s308 = smul.addr %s307, 32
      %s309 = smul.addr %s308, 8
      %s310 = scalar_lea.vmem %s0, %s309
      %p311 = pneg %p42
      %p312 = pneg %p39
      %p313 = scmp.lt.s32.totalorder %s21, 1
      %s314 = scalar_select %p313, %s21, 1
      %s315 = smul.addr %s314, 32
      %s316 = smul.addr %s315, 8
      %s317 = scalar_lea.vmem %s1, %s316
      %p318 = pneg %p68
      %p319 = pneg %p65
      %p320 = pneg %p89
      %p321 = pneg %p86
      %p322 = pneg %p110
      %p323 = pneg %p107
      %p324 = pneg %p131
      %p325 = pneg %p128
      %p326 = pneg %p152
      %p327 = pneg %p149
      %p328 = pneg %p173
      %p329 = pneg %p170
      %p330 = pneg %p194
      %p331 = pneg %p191
      %p332 = pneg %p220
      %p333 = pneg %p217
      %p334 = scmp.lt.s32.totalorder %s21, 1
      %s335 = scalar_select %p334, %s21, 1
      %s336 = smul.addr %s335, 32
      %s337 = smul.addr %s336, 4
      %s338 = scalar_lea.vmem %s8, %s337
      %p339 = pneg %p246
      %p340 = pneg %p243
      %p341 = scmp.lt.s32.totalorder %s21, 1
      %s342 = scalar_select %p341, %s21, 1
      %s343 = smul.addr %s342, 8
      %s344 = scalar_lea.vmem %s9, %s343
      %p345 = scmp.lt.s32.totalorder %s21, 1
      %s346 = scalar_select %p345, %s21, 1
      %s347 = smul.addr %s346, 32
      %s348 = smul.addr %s347, 8
      %s349 = scalar_lea.vmem %s0, %s348
      %p350 = scmp.lt.s32.totalorder %s21, 1
      %s351 = scalar_select %p350, %s21, 1
      %s352 = smul.addr %s351, 32
      %s353 = smul.addr %s352, 8
      %s354 = scalar_lea.vmem %s1, %s353
      %p355 = scmp.lt.s32.totalorder %s21, 1
      %s356 = scalar_select %p355, %s21, 1
      %s357 = smul.addr %s356, 32
      %s358 = smul.addr %s357, 4
      %s359 = scalar_lea.vmem %s8, %s358
      %p360 = scmp.lt.s32.totalorder %s21, 1
      %s361 = scalar_select %p360, %s21, 1
      %s362 = smul.addr %s361, 8
      %s363 = scalar_lea.vmem %s9, %s362
      %v365 = vld [vmem:[%s349] sm:$0xff]
      %v366 = vld [vmem:[%s349 + $0x8] sm:$0xff]
      %v367 = vld [vmem:[%s349 + $0x10] sm:$0xff]
      %v368 = vld [vmem:[%s349 + $0x18] sm:$0xff]
      %v369 = vld [vmem:[%s349 + $0x20] sm:$0xff]
      %v370 = vld [vmem:[%s349 + $0x28] sm:$0xff]
      %v371 = vld [vmem:[%s349 + $0x30] sm:$0xff]
      %v372 = vld [vmem:[%s349 + $0x38] sm:$0xff]
      %v373 = vld [vmem:[%s349 + $0x40] sm:$0xff]
      %v374 = vld [vmem:[%s349 + $0x48] sm:$0xff]
      %v375 = vld [vmem:[%s349 + $0x50] sm:$0xff]
      %v376 = vld [vmem:[%s349 + $0x58] sm:$0xff]
      %v377 = vld [vmem:[%s349 + $0x60] sm:$0xff]
      %v378 = vld [vmem:[%s349 + $0x68] sm:$0xff]
      %v379 = vld [vmem:[%s349 + $0x70] sm:$0xff]
      %v380 = vld [vmem:[%s349 + $0x78] sm:$0xff]
      %v381 = vld [vmem:[%s349 + $0x80] sm:$0xff]
      %v382 = vld [vmem:[%s349 + $0x88] sm:$0xff]
      %v383 = vld [vmem:[%s349 + $0x90] sm:$0xff]
      %v384 = vld [vmem:[%s349 + $0x98] sm:$0xff]
      %v385 = vld [vmem:[%s349 + $0xa0] sm:$0xff]
      %v386 = vld [vmem:[%s349 + $0xa8] sm:$0xff]
      %v387 = vld [vmem:[%s349 + $0xb0] sm:$0xff]
      %v388 = vld [vmem:[%s349 + $0xb8] sm:$0xff]
      %v389 = vld [vmem:[%s349 + $0xc0] sm:$0xff]
      %v390 = vld [vmem:[%s349 + $0xc8] sm:$0xff]
      %v391 = vld [vmem:[%s349 + $0xd0] sm:$0xff]
      %v392 = vld [vmem:[%s349 + $0xd8] sm:$0xff]
      %v393 = vld [vmem:[%s349 + $0xe0] sm:$0xff]
      %v394 = vld [vmem:[%s349 + $0xe8] sm:$0xff]
      %v395 = vld [vmem:[%s349 + $0xf0] sm:$0xff]
      %v396 = vld [vmem:[%s349 + $0xf8] sm:$0xff]
      %vm430 = vcmask 1040384
      %v431 = vrot.slane 0.0, 7
      %v432 = vsel %vm430, %v431, %v431
      %v433 = vrot.slane %v365, 7
      %v434 = vrot.slane %v366, 7
      %v435 = vsel %vm430, %v433, %v434
      %v436 = vrot.slane %v367, 7
      %v437 = vrot.slane %v368, 7
      %v438 = vsel %vm430, %v436, %v437
      %v439 = vrot.slane %v369, 7
      %v440 = vrot.slane %v370, 7
      %v441 = vsel %vm430, %v439, %v440
      %v442 = vrot.slane %v371, 7
      %v443 = vrot.slane %v372, 7
      %v444 = vsel %vm430, %v442, %v443
      %v445 = vrot.slane %v373, 7
      %v446 = vrot.slane %v374, 7
      %v447 = vsel %vm430, %v445, %v446
      %v448 = vrot.slane %v375, 7
      %v449 = vrot.slane %v376, 7
      %v450 = vsel %vm430, %v448, %v449
      %v451 = vrot.slane %v377, 7
      %v452 = vrot.slane %v378, 7
      %v453 = vsel %vm430, %v451, %v452
      %v454 = vrot.slane %v379, 7
      %v455 = vrot.slane %v380, 7
      %v456 = vsel %vm430, %v454, %v455
      %v457 = vrot.slane %v381, 7
      %v458 = vrot.slane %v382, 7
      %v459 = vsel %vm430, %v457, %v458
      %v460 = vrot.slane %v383, 7
      %v461 = vrot.slane %v384, 7
      %v462 = vsel %vm430, %v460, %v461
      %v463 = vrot.slane %v385, 7
      %v464 = vrot.slane %v386, 7
      %v465 = vsel %vm430, %v463, %v464
      %v466 = vrot.slane %v387, 7
      %v467 = vrot.slane %v388, 7
      %v468 = vsel %vm430, %v466, %v467
      %v469 = vrot.slane %v389, 7
      %v470 = vrot.slane %v390, 7
      %v471 = vsel %vm430, %v469, %v470
      %v472 = vrot.slane %v391, 7
      %v473 = vrot.slane %v392, 7
      %v474 = vsel %vm430, %v472, %v473
      %v475 = vrot.slane %v393, 7
      %v476 = vrot.slane %v394, 7
      %v477 = vsel %vm430, %v475, %v476
      %v478 = vrot.slane %v395, 7
      %v479 = vrot.slane %v396, 7
      %v480 = vsel %vm430, %v478, %v479
      %v530 = vsel %vm430, 0.0, %v431
      %v531 = vsel %vm430, 0.0, %v433
      %v532 = vsel %vm430, 0.0, %v436
      %v533 = vsel %vm430, 0.0, %v439
      %v534 = vsel %vm430, 0.0, %v442
      %v535 = vsel %vm430, 0.0, %v445
      %v536 = vsel %vm430, 0.0, %v448
      %v537 = vsel %vm430, 0.0, %v451
      %v538 = vsel %vm430, 0.0, %v454
      %v539 = vsel %vm430, 0.0, %v457
      %v540 = vsel %vm430, 0.0, %v460
      %v541 = vsel %vm430, 0.0, %v463
      %v542 = vsel %vm430, 0.0, %v466
      %v543 = vsel %vm430, 0.0, %v469
      %v544 = vsel %vm430, 0.0, %v472
      %v545 = vsel %vm430, 0.0, %v475
      %v546 = vsel %vm430, 0.0, %v478
      %v547 = vsel %vm430, %v431, 0.0
      %v548 = vsel %vm430, %v434, 0.0
      %v549 = vsel %vm430, %v437, 0.0
      %v550 = vsel %vm430, %v440, 0.0
      %v551 = vsel %vm430, %v443, 0.0
      %v552 = vsel %vm430, %v446, 0.0
      %v553 = vsel %vm430, %v449, 0.0
      %v554 = vsel %vm430, %v452, 0.0
      %v555 = vsel %vm430, %v455, 0.0
      %v556 = vsel %vm430, %v458, 0.0
      %v557 = vsel %vm430, %v461, 0.0
      %v558 = vsel %vm430, %v464, 0.0
      %v559 = vsel %vm430, %v467, 0.0
      %v560 = vsel %vm430, %v470, 0.0
      %v561 = vsel %vm430, %v473, 0.0
      %v562 = vsel %vm430, %v476, 0.0
      %v563 = vsel %vm430, %v479, 0.0
      %vm596 = vcmask 1046528
      %v597 = vrot.slane %v530, 1
      %v598 = vrot.slane %v432, 1
      %v599 = vsel %vm596, %v597, %v598
      %v600 = vrot.slane %v547, 1
      %v601 = vsel %vm596, %v598, %v600
      %v602 = vrot.slane %v531, 1
      %v603 = vrot.slane %v435, 1
      %v604 = vsel %vm596, %v602, %v603
      %v605 = vrot.slane %v548, 1
      %v606 = vsel %vm596, %v603, %v605
      %v607 = vrot.slane %v532, 1
      %v608 = vrot.slane %v438, 1
      %v609 = vsel %vm596, %v607, %v608
      %v610 = vrot.slane %v549, 1
      %v611 = vsel %vm596, %v608, %v610
      %v612 = vrot.slane %v533, 1
      %v613 = vrot.slane %v441, 1
      %v614 = vsel %vm596, %v612, %v613
      %v615 = vrot.slane %v550, 1
      %v616 = vsel %vm596, %v613, %v615
      %v617 = vrot.slane %v534, 1
      %v618 = vrot.slane %v444, 1
      %v619 = vsel %vm596, %v617, %v618
      %v620 = vrot.slane %v551, 1
      %v621 = vsel %vm596, %v618, %v620
      %v622 = vrot.slane %v535, 1
      %v623 = vrot.slane %v447, 1
      %v624 = vsel %vm596, %v622, %v623
      %v625 = vrot.slane %v552, 1
      %v626 = vsel %vm596, %v623, %v625
      %v627 = vrot.slane %v536, 1
      %v628 = vrot.slane %v450, 1
      %v629 = vsel %vm596, %v627, %v628
      %v630 = vrot.slane %v553, 1
      %v631 = vsel %vm596, %v628, %v630
      %v632 = vrot.slane %v537, 1
      %v633 = vrot.slane %v453, 1
      %v634 = vsel %vm596, %v632, %v633
      %v635 = vrot.slane %v554, 1
      %v636 = vsel %vm596, %v633, %v635
      %v637 = vrot.slane %v538, 1
      %v638 = vrot.slane %v456, 1
      %v639 = vsel %vm596, %v637, %v638
      %v640 = vrot.slane %v555, 1
      %v641 = vsel %vm596, %v638, %v640
      %v642 = vrot.slane %v539, 1
      %v643 = vrot.slane %v459, 1
      %v644 = vsel %vm596, %v642, %v643
      %v645 = vrot.slane %v556, 1
      %v646 = vsel %vm596, %v643, %v645
      %v647 = vrot.slane %v540, 1
      %v648 = vrot.slane %v462, 1
      %v649 = vsel %vm596, %v647, %v648
      %v650 = vrot.slane %v557, 1
      %v651 = vsel %vm596, %v648, %v650
      %v652 = vrot.slane %v541, 1
      %v653 = vrot.slane %v465, 1
      %v654 = vsel %vm596, %v652, %v653
      %v655 = vrot.slane %v558, 1
      %v656 = vsel %vm596, %v653, %v655
      %v657 = vrot.slane %v542, 1
      %v658 = vrot.slane %v468, 1
      %v659 = vsel %vm596, %v657, %v658
      %v660 = vrot.slane %v559, 1
      %v661 = vsel %vm596, %v658, %v660
      %v662 = vrot.slane %v543, 1
      %v663 = vrot.slane %v471, 1
      %v664 = vsel %vm596, %v662, %v663
      %v665 = vrot.slane %v560, 1
      %v666 = vsel %vm596, %v663, %v665
      %v667 = vrot.slane %v544, 1
      %v668 = vrot.slane %v474, 1
      %v669 = vsel %vm596, %v667, %v668
      %v670 = vrot.slane %v561, 1
      %v671 = vsel %vm596, %v668, %v670
      %v672 = vrot.slane %v545, 1
      %v673 = vrot.slane %v477, 1
      %v674 = vsel %vm596, %v672, %v673
      %v675 = vrot.slane %v562, 1
      %v676 = vsel %vm596, %v673, %v675
      %677 = vrot.lane.b32.xlu0 %v599, 8
      %v678 = vpop.permute.xlu0 %677
      %679 = vrot.lane.b32.xlu0 %v601, 8
      %v680 = vpop.permute.xlu0 %679
      %681 = vrot.lane.b32.xlu0 %v604, 8
      %v682 = vpop.permute.xlu0 %681
      %683 = vrot.lane.b32.xlu0 %v606, 8
      %v684 = vpop.permute.xlu0 %683
      %685 = vrot.lane.b32.xlu0 %v609, 8
      %v686 = vpop.permute.xlu0 %685
      %687 = vrot.lane.b32.xlu0 %v611, 8
      %v688 = vpop.permute.xlu0 %687
      %689 = vrot.lane.b32.xlu0 %v614, 8
      %v690 = vpop.permute.xlu0 %689
      %691 = vrot.lane.b32.xlu0 %v616, 8
      %v692 = vpop.permute.xlu0 %691
      %693 = vrot.lane.b32.xlu0 %v619, 8
      %v694 = vpop.permute.xlu0 %693
      %695 = vrot.lane.b32.xlu0 %v621, 8
      %v696 = vpop.permute.xlu0 %695
      %697 = vrot.lane.b32.xlu0 %v624, 8
      %v698 = vpop.permute.xlu0 %697
      %699 = vrot.lane.b32.xlu0 %v626, 8
      %v700 = vpop.permute.xlu0 %699
      %701 = vrot.lane.b32.xlu0 %v629, 8
      %v702 = vpop.permute.xlu0 %701
      %703 = vrot.lane.b32.xlu0 %v631, 8
      %v704 = vpop.permute.xlu0 %703
      %705 = vrot.lane.b32.xlu0 %v634, 8
      %v706 = vpop.permute.xlu0 %705
      %707 = vrot.lane.b32.xlu0 %v636, 8
      %v708 = vpop.permute.xlu0 %707
      %709 = vrot.lane.b32.xlu0 %v639, 8
      %v710 = vpop.permute.xlu0 %709
      %711 = vrot.lane.b32.xlu0 %v641, 8
      %v712 = vpop.permute.xlu0 %711
      %713 = vrot.lane.b32.xlu0 %v644, 8
      %v714 = vpop.permute.xlu0 %713
      %715 = vrot.lane.b32.xlu0 %v646, 8
      %v716 = vpop.permute.xlu0 %715
      %717 = vrot.lane.b32.xlu0 %v649, 8
      %v718 = vpop.permute.xlu0 %717
      %719 = vrot.lane.b32.xlu0 %v651, 8
      %v720 = vpop.permute.xlu0 %719
      %721 = vrot.lane.b32.xlu0 %v654, 8
      %v722 = vpop.permute.xlu0 %721
      %723 = vrot.lane.b32.xlu0 %v656, 8
      %v724 = vpop.permute.xlu0 %723
      %725 = vrot.lane.b32.xlu0 %v659, 8
      %v726 = vpop.permute.xlu0 %725
      %727 = vrot.lane.b32.xlu0 %v661, 8
      %v728 = vpop.permute.xlu0 %727
      %729 = vrot.lane.b32.xlu0 %v664, 8
      %v730 = vpop.permute.xlu0 %729
      %731 = vrot.lane.b32.xlu0 %v666, 8
      %v732 = vpop.permute.xlu0 %731
      %733 = vrot.lane.b32.xlu0 %v669, 8
      %v734 = vpop.permute.xlu0 %733
      %735 = vrot.lane.b32.xlu0 %v671, 8
      %v736 = vpop.permute.xlu0 %735
      %737 = vrot.lane.b32.xlu0 %v674, 8
      %v738 = vpop.permute.xlu0 %737
      %739 = vrot.lane.b32.xlu0 %v676, 8
      %v740 = vpop.permute.xlu0 %739
      %vm773 = vcmask 1045504
      %v774 = vrot.slane %v530, 2
      %v775 = vrot.slane %v432, 2
      %v776 = vsel %vm773, %v774, %v775
      %v777 = vrot.slane %v547, 2
      %v778 = vsel %vm773, %v775, %v777
      %v779 = vrot.slane %v531, 2
      %v780 = vrot.slane %v435, 2
      %v781 = vsel %vm773, %v779, %v780
      %v782 = vrot.slane %v548, 2
      %v783 = vsel %vm773, %v780, %v782
      %v784 = vrot.slane %v532, 2
      %v785 = vrot.slane %v438, 2
      %v786 = vsel %vm773, %v784, %v785
      %v787 = vrot.slane %v549, 2
      %v788 = vsel %vm773, %v785, %v787
      %v789 = vrot.slane %v533, 2
      %v790 = vrot.slane %v441, 2
      %v791 = vsel %vm773, %v789, %v790
      %v792 = vrot.slane %v550, 2
      %v793 = vsel %vm773, %v790, %v792
      %v794 = vrot.slane %v534, 2
      %v795 = vrot.slane %v444, 2
      %v796 = vsel %vm773, %v794, %v795
      %v797 = vrot.slane %v551, 2
      %v798 = vsel %vm773, %v795, %v797
      %v799 = vrot.slane %v535, 2
      %v800 = vrot.slane %v447, 2
      %v801 = vsel %vm773, %v799, %v800
      %v802 = vrot.slane %v552, 2
      %v803 = vsel %vm773, %v800, %v802
      %v804 = vrot.slane %v536, 2
      %v805 = vrot.slane %v450, 2
      %v806 = vsel %vm773, %v804, %v805
      %v807 = vrot.slane %v553, 2
      %v808 = vsel %vm773, %v805, %v807
      %v809 = vrot.slane %v537, 2
      %v810 = vrot.slane %v453, 2
      %v811 = vsel %vm773, %v809, %v810
      %v812 = vrot.slane %v554, 2
      %v813 = vsel %vm773, %v810, %v812
      %v814 = vrot.slane %v538, 2
      %v815 = vrot.slane %v456, 2
      %v816 = vsel %vm773, %v814, %v815
      %v817 = vrot.slane %v555, 2
      %v818 = vsel %vm773, %v815, %v817
      %v819 = vrot.slane %v539, 2
      %v820 = vrot.slane %v459, 2
      %v821 = vsel %vm773, %v819, %v820
      %v822 = vrot.slane %v556, 2
      %v823 = vsel %vm773, %v820, %v822
      %v824 = vrot.slane %v540, 2
      %v825 = vrot.slane %v462, 2
      %v826 = vsel %vm773, %v824, %v825
      %v827 = vrot.slane %v557, 2
      %v828 = vsel %vm773, %v825, %v827
      %v829 = vrot.slane %v541, 2
      %v830 = vrot.slane %v465, 2
      %v831 = vsel %vm773, %v829, %v830
      %v832 = vrot.slane %v558, 2
      %v833 = vsel %vm773, %v830, %v832
      %v834 = vrot.slane %v542, 2
      %v835 = vrot.slane %v468, 2
      %v836 = vsel %vm773, %v834, %v835
      %v837 = vrot.slane %v559, 2
      %v838 = vsel %vm773, %v835, %v837
      %v839 = vrot.slane %v543, 2
      %v840 = vrot.slane %v471, 2
      %v841 = vsel %vm773, %v839, %v840
      %v842 = vrot.slane %v560, 2
      %v843 = vsel %vm773, %v840, %v842
      %v844 = vrot.slane %v544, 2
      %v845 = vrot.slane %v474, 2
      %v846 = vsel %vm773, %v844, %v845
      %v847 = vrot.slane %v561, 2
      %v848 = vsel %vm773, %v845, %v847
      %v849 = vrot.slane %v545, 2
      %v850 = vrot.slane %v477, 2
      %v851 = vsel %vm773, %v849, %v850
      %v852 = vrot.slane %v562, 2
      %v853 = vsel %vm773, %v850, %v852
      %854 = vrot.lane.b32.xlu0 %v776, 16
      %v855 = vpop.permute.xlu0 %854
      %856 = vrot.lane.b32.xlu0 %v778, 16
      %v857 = vpop.permute.xlu0 %856
      %858 = vrot.lane.b32.xlu0 %v781, 16
      %v859 = vpop.permute.xlu0 %858
      %860 = vrot.lane.b32.xlu0 %v783, 16
      %v861 = vpop.permute.xlu0 %860
      %862 = vrot.lane.b32.xlu0 %v786, 16
      %v863 = vpop.permute.xlu0 %862
      %864 = vrot.lane.b32.xlu0 %v788, 16
      %v865 = vpop.permute.xlu0 %864
      %866 = vrot.lane.b32.xlu0 %v791, 16
      %v867 = vpop.permute.xlu0 %866
      %868 = vrot.lane.b32.xlu0 %v793, 16
      %v869 = vpop.permute.xlu0 %868
      %870 = vrot.lane.b32.xlu0 %v796, 16
      %v871 = vpop.permute.xlu0 %870
      %872 = vrot.lane.b32.xlu0 %v798, 16
      %v873 = vpop.permute.xlu0 %872
      %874 = vrot.lane.b32.xlu0 %v801, 16
      %v875 = vpop.permute.xlu0 %874
      %876 = vrot.lane.b32.xlu0 %v803, 16
      %v877 = vpop.permute.xlu0 %876
      %878 = vrot.lane.b32.xlu0 %v806, 16
      %v879 = vpop.permute.xlu0 %878
      %880 = vrot.lane.b32.xlu0 %v808, 16
      %v881 = vpop.permute.xlu0 %880
      %882 = vrot.lane.b32.xlu0 %v811, 16
      %v883 = vpop.permute.xlu0 %882
      %884 = vrot.lane.b32.xlu0 %v813, 16
      %v885 = vpop.permute.xlu0 %884
      %886 = vrot.lane.b32.xlu0 %v816, 16
      %v887 = vpop.permute.xlu0 %886
      %888 = vrot.lane.b32.xlu0 %v818, 16
      %v889 = vpop.permute.xlu0 %888
      %890 = vrot.lane.b32.xlu0 %v821, 16
      %v891 = vpop.permute.xlu0 %890
      %892 = vrot.lane.b32.xlu0 %v823, 16
      %v893 = vpop.permute.xlu0 %892
      %894 = vrot.lane.b32.xlu0 %v826, 16
      %v895 = vpop.permute.xlu0 %894
      %896 = vrot.lane.b32.xlu0 %v828, 16
      %v897 = vpop.permute.xlu0 %896
      %898 = vrot.lane.b32.xlu0 %v831, 16
      %v899 = vpop.permute.xlu0 %898
      %900 = vrot.lane.b32.xlu0 %v833, 16
      %v901 = vpop.permute.xlu0 %900
      %902 = vrot.lane.b32.xlu0 %v836, 16
      %v903 = vpop.permute.xlu0 %902
      %904 = vrot.lane.b32.xlu0 %v838, 16
      %v905 = vpop.permute.xlu0 %904
      %906 = vrot.lane.b32.xlu0 %v841, 16
      %v907 = vpop.permute.xlu0 %906
      %908 = vrot.lane.b32.xlu0 %v843, 16
      %v909 = vpop.permute.xlu0 %908
      %910 = vrot.lane.b32.xlu0 %v846, 16
      %v911 = vpop.permute.xlu0 %910
      %912 = vrot.lane.b32.xlu0 %v848, 16
      %v913 = vpop.permute.xlu0 %912
      %914 = vrot.lane.b32.xlu0 %v851, 16
      %v915 = vpop.permute.xlu0 %914
      %916 = vrot.lane.b32.xlu0 %v853, 16
      %v917 = vpop.permute.xlu0 %916
      %951 = vrot.lane.b32.xlu0 %v531, 24
      %v952 = vpop.permute.xlu0 %951
      %953 = vrot.lane.b32.xlu0 %v435, 24
      %v954 = vpop.permute.xlu0 %953
      %955 = vrot.lane.b32.xlu0 %v532, 24
      %v956 = vpop.permute.xlu0 %955
      %957 = vrot.lane.b32.xlu0 %v438, 24
      %v958 = vpop.permute.xlu0 %957
      %959 = vrot.lane.b32.xlu0 %v533, 24
      %v960 = vpop.permute.xlu0 %959
      %961 = vrot.lane.b32.xlu0 %v441, 24
      %v962 = vpop.permute.xlu0 %961
      %963 = vrot.lane.b32.xlu0 %v534, 24
      %v964 = vpop.permute.xlu0 %963
      %965 = vrot.lane.b32.xlu0 %v444, 24
      %v966 = vpop.permute.xlu0 %965
      %967 = vrot.lane.b32.xlu0 %v535, 24
      %v968 = vpop.permute.xlu0 %967
      %969 = vrot.lane.b32.xlu0 %v447, 24
      %v970 = vpop.permute.xlu0 %969
      %971 = vrot.lane.b32.xlu0 %v536, 24
      %v972 = vpop.permute.xlu0 %971
      %973 = vrot.lane.b32.xlu0 %v450, 24
      %v974 = vpop.permute.xlu0 %973
      %975 = vrot.lane.b32.xlu0 %v537, 24
      %v976 = vpop.permute.xlu0 %975
      %977 = vrot.lane.b32.xlu0 %v453, 24
      %v978 = vpop.permute.xlu0 %977
      %979 = vrot.lane.b32.xlu0 %v538, 24
      %v980 = vpop.permute.xlu0 %979
      %981 = vrot.lane.b32.xlu0 %v456, 24
      %v982 = vpop.permute.xlu0 %981
      %983 = vrot.lane.b32.xlu0 %v539, 24
      %v984 = vpop.permute.xlu0 %983
      %985 = vrot.lane.b32.xlu0 %v459, 24
      %v986 = vpop.permute.xlu0 %985
      %987 = vrot.lane.b32.xlu0 %v540, 24
      %v988 = vpop.permute.xlu0 %987
      %989 = vrot.lane.b32.xlu0 %v462, 24
      %v990 = vpop.permute.xlu0 %989
      %991 = vrot.lane.b32.xlu0 %v541, 24
      %v992 = vpop.permute.xlu0 %991
      %993 = vrot.lane.b32.xlu0 %v465, 24
      %v994 = vpop.permute.xlu0 %993
      %995 = vrot.lane.b32.xlu0 %v542, 24
      %v996 = vpop.permute.xlu0 %995
      %997 = vrot.lane.b32.xlu0 %v468, 24
      %v998 = vpop.permute.xlu0 %997
      %999 = vrot.lane.b32.xlu0 %v543, 24
      %v1000 = vpop.permute.xlu0 %999
      %1001 = vrot.lane.b32.xlu0 %v471, 24
      %v1002 = vpop.permute.xlu0 %1001
      %1003 = vrot.lane.b32.xlu0 %v544, 24
      %v1004 = vpop.permute.xlu0 %1003
      %1005 = vrot.lane.b32.xlu0 %v474, 24
      %v1006 = vpop.permute.xlu0 %1005
      %1007 = vrot.lane.b32.xlu0 %v545, 24
      %v1008 = vpop.permute.xlu0 %1007
      %1009 = vrot.lane.b32.xlu0 %v477, 24
      %v1010 = vpop.permute.xlu0 %1009
      %1011 = vrot.lane.b32.xlu0 %v546, 24
      %v1012 = vpop.permute.xlu0 %1011
      %1013 = vrot.lane.b32.xlu0 %v480, 24
      %v1014 = vpop.permute.xlu0 %1013
      %v1048 = vrot.slane %v546, 1
      %v1049 = vrot.slane %v480, 1
      %v1050 = vsel %vm596, %v1048, %v1049
      %v1051 = vrot.slane %v563, 1
      %v1052 = vsel %vm596, %v1049, %v1051
      %1053 = vrot.lane.b32.xlu0 %v604, 32
      %v1054 = vpop.permute.xlu0 %1053
      %1055 = vrot.lane.b32.xlu0 %v606, 32
      %v1056 = vpop.permute.xlu0 %1055
      %1057 = vrot.lane.b32.xlu0 %v609, 32
      %v1058 = vpop.permute.xlu0 %1057
      %1059 = vrot.lane.b32.xlu0 %v611, 32
      %v1060 = vpop.permute.xlu0 %1059
      %1061 = vrot.lane.b32.xlu0 %v614, 32
      %v1062 = vpop.permute.xlu0 %1061
      %1063 = vrot.lane.b32.xlu0 %v616, 32
      %v1064 = vpop.permute.xlu0 %1063
      %1065 = vrot.lane.b32.xlu0 %v619, 32
      %v1066 = vpop.permute.xlu0 %1065
      %1067 = vrot.lane.b32.xlu0 %v621, 32
      %v1068 = vpop.permute.xlu0 %1067
      %1069 = vrot.lane.b32.xlu0 %v624, 32
      %v1070 = vpop.permute.xlu0 %1069
      %1071 = vrot.lane.b32.xlu0 %v626, 32
      %v1072 = vpop.permute.xlu0 %1071
      %1073 = vrot.lane.b32.xlu0 %v629, 32
      %v1074 = vpop.permute.xlu0 %1073
      %1075 = vrot.lane.b32.xlu0 %v631, 32
      %v1076 = vpop.permute.xlu0 %1075
      %1077 = vrot.lane.b32.xlu0 %v634, 32
      %v1078 = vpop.permute.xlu0 %1077
      %1079 = vrot.lane.b32.xlu0 %v636, 32
      %v1080 = vpop.permute.xlu0 %1079
      %1081 = vrot.lane.b32.xlu0 %v639, 32
      %v1082 = vpop.permute.xlu0 %1081
      %1083 = vrot.lane.b32.xlu0 %v641, 32
      %v1084 = vpop.permute.xlu0 %1083
      %1085 = vrot.lane.b32.xlu0 %v644, 32
      %v1086 = vpop.permute.xlu0 %1085
      %1087 = vrot.lane.b32.xlu0 %v646, 32
      %v1088 = vpop.permute.xlu0 %1087
      %1089 = vrot.lane.b32.xlu0 %v649, 32
      %v1090 = vpop.permute.xlu0 %1089
      %1091 = vrot.lane.b32.xlu0 %v651, 32
      %v1092 = vpop.permute.xlu0 %1091
      %1093 = vrot.lane.b32.xlu0 %v654, 32
      %v1094 = vpop.permute.xlu0 %1093
      %1095 = vrot.lane.b32.xlu0 %v656, 32
      %v1096 = vpop.permute.xlu0 %1095
      %1097 = vrot.lane.b32.xlu0 %v659, 32
      %v1098 = vpop.permute.xlu0 %1097
      %1099 = vrot.lane.b32.xlu0 %v661, 32
      %v1100 = vpop.permute.xlu0 %1099
      %1101 = vrot.lane.b32.xlu0 %v664, 32
      %v1102 = vpop.permute.xlu0 %1101
      %1103 = vrot.lane.b32.xlu0 %v666, 32
      %v1104 = vpop.permute.xlu0 %1103
      %1105 = vrot.lane.b32.xlu0 %v669, 32
      %v1106 = vpop.permute.xlu0 %1105
      %1107 = vrot.lane.b32.xlu0 %v671, 32
      %v1108 = vpop.permute.xlu0 %1107
      %1109 = vrot.lane.b32.xlu0 %v674, 32
      %v1110 = vpop.permute.xlu0 %1109
      %1111 = vrot.lane.b32.xlu0 %v676, 32
      %v1112 = vpop.permute.xlu0 %1111
      %1113 = vrot.lane.b32.xlu0 %v1050, 32
      %v1114 = vpop.permute.xlu0 %1113
      %1115 = vrot.lane.b32.xlu0 %v1052, 32
      %v1116 = vpop.permute.xlu0 %1115
      %v1149 = vrot.slane %v546, 2
      %v1150 = vrot.slane %v480, 2
      %v1151 = vsel %vm773, %v1149, %v1150
      %v1152 = vrot.slane %v563, 2
      %v1153 = vsel %vm773, %v1150, %v1152
      %1154 = vrot.lane.b32.xlu0 %v781, 40
      %v1155 = vpop.permute.xlu0 %1154
      %1156 = vrot.lane.b32.xlu0 %v783, 40
      %v1157 = vpop.permute.xlu0 %1156
      %1158 = vrot.lane.b32.xlu0 %v786, 40
      %v1159 = vpop.permute.xlu0 %1158
      %1160 = vrot.lane.b32.xlu0 %v788, 40
      %v1161 = vpop.permute.xlu0 %1160
      %1162 = vrot.lane.b32.xlu0 %v791, 40
      %v1163 = vpop.permute.xlu0 %1162
      %1164 = vrot.lane.b32.xlu0 %v793, 40
      %v1165 = vpop.permute.xlu0 %1164
      %1166 = vrot.lane.b32.xlu0 %v796, 40
      %v1167 = vpop.permute.xlu0 %1166
      %1168 = vrot.lane.b32.xlu0 %v798, 40
      %v1169 = vpop.permute.xlu0 %1168
      %1170 = vrot.lane.b32.xlu0 %v801, 40
      %v1171 = vpop.permute.xlu0 %1170
      %1172 = vrot.lane.b32.xlu0 %v803, 40
      %v1173 = vpop.permute.xlu0 %1172
      %1174 = vrot.lane.b32.xlu0 %v806, 40
      %v1175 = vpop.permute.xlu0 %1174
      %1176 = vrot.lane.b32.xlu0 %v808, 40
      %v1177 = vpop.permute.xlu0 %1176
      %1178 = vrot.lane.b32.xlu0 %v811, 40
      %v1179 = vpop.permute.xlu0 %1178
      %1180 = vrot.lane.b32.xlu0 %v813, 40
      %v1181 = vpop.permute.xlu0 %1180
      %1182 = vrot.lane.b32.xlu0 %v816, 40
      %v1183 = vpop.permute.xlu0 %1182
      %1184 = vrot.lane.b32.xlu0 %v818, 40
      %v1185 = vpop.permute.xlu0 %1184
      %1186 = vrot.lane.b32.xlu0 %v821, 40
      %v1187 = vpop.permute.xlu0 %1186
      %1188 = vrot.lane.b32.xlu0 %v823, 40
      %v1189 = vpop.permute.xlu0 %1188
      %1190 = vrot.lane.b32.xlu0 %v826, 40
      %v1191 = vpop.permute.xlu0 %1190
      %1192 = vrot.lane.b32.xlu0 %v828, 40
      %v1193 = vpop.permute.xlu0 %1192
      %1194 = vrot.lane.b32.xlu0 %v831, 40
      %v1195 = vpop.permute.xlu0 %1194
      %1196 = vrot.lane.b32.xlu0 %v833, 40
      %v1197 = vpop.permute.xlu0 %1196
      %1198 = vrot.lane.b32.xlu0 %v836, 40
      %v1199 = vpop.permute.xlu0 %1198
      %1200 = vrot.lane.b32.xlu0 %v838, 40
      %v1201 = vpop.permute.xlu0 %1200
      %1202 = vrot.lane.b32.xlu0 %v841, 40
      %v1203 = vpop.permute.xlu0 %1202
      %1204 = vrot.lane.b32.xlu0 %v843, 40
      %v1205 = vpop.permute.xlu0 %1204
      %1206 = vrot.lane.b32.xlu0 %v846, 40
      %v1207 = vpop.permute.xlu0 %1206
      %1208 = vrot.lane.b32.xlu0 %v848, 40
      %v1209 = vpop.permute.xlu0 %1208
      %1210 = vrot.lane.b32.xlu0 %v851, 40
      %v1211 = vpop.permute.xlu0 %1210
      %1212 = vrot.lane.b32.xlu0 %v853, 40
      %v1213 = vpop.permute.xlu0 %1212
      %1214 = vrot.lane.b32.xlu0 %v1151, 40
      %v1215 = vpop.permute.xlu0 %1214
      %1216 = vrot.lane.b32.xlu0 %v1153, 40
      %v1217 = vpop.permute.xlu0 %1216
      %1250 = vrot.lane.b32.xlu0 %v532, 48
      %v1251 = vpop.permute.xlu0 %1250
      %1252 = vrot.lane.b32.xlu0 %v438, 48
      %v1253 = vpop.permute.xlu0 %1252
      %1254 = vrot.lane.b32.xlu0 %v533, 48
      %v1255 = vpop.permute.xlu0 %1254
      %1256 = vrot.lane.b32.xlu0 %v441, 48
      %v1257 = vpop.permute.xlu0 %1256
      %1258 = vrot.lane.b32.xlu0 %v534, 48
      %v1259 = vpop.permute.xlu0 %1258
      %1260 = vrot.lane.b32.xlu0 %v444, 48
      %v1261 = vpop.permute.xlu0 %1260
      %1262 = vrot.lane.b32.xlu0 %v535, 48
      %v1263 = vpop.permute.xlu0 %1262
      %1264 = vrot.lane.b32.xlu0 %v447, 48
      %v1265 = vpop.permute.xlu0 %1264
      %1266 = vrot.lane.b32.xlu0 %v536, 48
      %v1267 = vpop.permute.xlu0 %1266
      %1268 = vrot.lane.b32.xlu0 %v450, 48
      %v1269 = vpop.permute.xlu0 %1268
      %1270 = vrot.lane.b32.xlu0 %v537, 48
      %v1271 = vpop.permute.xlu0 %1270
      %1272 = vrot.lane.b32.xlu0 %v453, 48
      %v1273 = vpop.permute.xlu0 %1272
      %1274 = vrot.lane.b32.xlu0 %v538, 48
      %v1275 = vpop.permute.xlu0 %1274
      %1276 = vrot.lane.b32.xlu0 %v456, 48
      %v1277 = vpop.permute.xlu0 %1276
      %1278 = vrot.lane.b32.xlu0 %v539, 48
      %v1279 = vpop.permute.xlu0 %1278
      %1280 = vrot.lane.b32.xlu0 %v459, 48
      %v1281 = vpop.permute.xlu0 %1280
      %1282 = vrot.lane.b32.xlu0 %v540, 48
      %v1283 = vpop.permute.xlu0 %1282
      %1284 = vrot.lane.b32.xlu0 %v462, 48
      %v1285 = vpop.permute.xlu0 %1284
      %1286 = vrot.lane.b32.xlu0 %v541, 48
      %v1287 = vpop.permute.xlu0 %1286
      %1288 = vrot.lane.b32.xlu0 %v465, 48
      %v1289 = vpop.permute.xlu0 %1288
      %1290 = vrot.lane.b32.xlu0 %v542, 48
      %v1291 = vpop.permute.xlu0 %1290
      %1292 = vrot.lane.b32.xlu0 %v468, 48
      %v1293 = vpop.permute.xlu0 %1292
      %1294 = vrot.lane.b32.xlu0 %v543, 48
      %v1295 = vpop.permute.xlu0 %1294
      %1296 = vrot.lane.b32.xlu0 %v471, 48
      %v1297 = vpop.permute.xlu0 %1296
      %1298 = vrot.lane.b32.xlu0 %v544, 48
      %v1299 = vpop.permute.xlu0 %1298
      %1300 = vrot.lane.b32.xlu0 %v474, 48
      %v1301 = vpop.permute.xlu0 %1300
      %1302 = vrot.lane.b32.xlu0 %v545, 48
      %v1303 = vpop.permute.xlu0 %1302
      %1304 = vrot.lane.b32.xlu0 %v477, 48
      %v1305 = vpop.permute.xlu0 %1304
      %1306 = vrot.lane.b32.xlu0 %v546, 48
      %v1307 = vpop.permute.xlu0 %1306
      %1308 = vrot.lane.b32.xlu0 %v480, 48
      %v1309 = vpop.permute.xlu0 %1308
      %1310 = vrot.lane.b32.xlu0 %v530, 48
      %v1311 = vpop.permute.xlu0 %1310
      %1312 = vrot.lane.b32.xlu0 %v432, 48
      %v1313 = vpop.permute.xlu0 %1312
      %1346 = vrot.lane.b32.xlu0 %v609, 56
      %v1347 = vpop.permute.xlu0 %1346
      %1348 = vrot.lane.b32.xlu0 %v611, 56
      %v1349 = vpop.permute.xlu0 %1348
      %1350 = vrot.lane.b32.xlu0 %v614, 56
      %v1351 = vpop.permute.xlu0 %1350
      %1352 = vrot.lane.b32.xlu0 %v616, 56
      %v1353 = vpop.permute.xlu0 %1352
      %1354 = vrot.lane.b32.xlu0 %v619, 56
      %v1355 = vpop.permute.xlu0 %1354
      %1356 = vrot.lane.b32.xlu0 %v621, 56
      %v1357 = vpop.permute.xlu0 %1356
      %1358 = vrot.lane.b32.xlu0 %v624, 56
      %v1359 = vpop.permute.xlu0 %1358
      %1360 = vrot.lane.b32.xlu0 %v626, 56
      %v1361 = vpop.permute.xlu0 %1360
      %1362 = vrot.lane.b32.xlu0 %v629, 56
      %v1363 = vpop.permute.xlu0 %1362
      %1364 = vrot.lane.b32.xlu0 %v631, 56
      %v1365 = vpop.permute.xlu0 %1364
      %1366 = vrot.lane.b32.xlu0 %v634, 56
      %v1367 = vpop.permute.xlu0 %1366
      %1368 = vrot.lane.b32.xlu0 %v636, 56
      %v1369 = vpop.permute.xlu0 %1368
      %1370 = vrot.lane.b32.xlu0 %v639, 56
      %v1371 = vpop.permute.xlu0 %1370
      %1372 = vrot.lane.b32.xlu0 %v641, 56
      %v1373 = vpop.permute.xlu0 %1372
      %1374 = vrot.lane.b32.xlu0 %v644, 56
      %v1375 = vpop.permute.xlu0 %1374
      %1376 = vrot.lane.b32.xlu0 %v646, 56
      %v1377 = vpop.permute.xlu0 %1376
      %1378 = vrot.lane.b32.xlu0 %v649, 56
      %v1379 = vpop.permute.xlu0 %1378
      %1380 = vrot.lane.b32.xlu0 %v651, 56
      %v1381 = vpop.permute.xlu0 %1380
      %1382 = vrot.lane.b32.xlu0 %v654, 56
      %v1383 = vpop.permute.xlu0 %1382
      %1384 = vrot.lane.b32.xlu0 %v656, 56
      %v1385 = vpop.permute.xlu0 %1384
      %1386 = vrot.lane.b32.xlu0 %v659, 56
      %v1387 = vpop.permute.xlu0 %1386
      %1388 = vrot.lane.b32.xlu0 %v661, 56
      %v1389 = vpop.permute.xlu0 %1388
      %1390 = vrot.lane.b32.xlu0 %v664, 56
      %v1391 = vpop.permute.xlu0 %1390
      %1392 = vrot.lane.b32.xlu0 %v666, 56
      %v1393 = vpop.permute.xlu0 %1392
      %1394 = vrot.lane.b32.xlu0 %v669, 56
      %v1395 = vpop.permute.xlu0 %1394
      %1396 = vrot.lane.b32.xlu0 %v671, 56
      %v1397 = vpop.permute.xlu0 %1396
      %1398 = vrot.lane.b32.xlu0 %v674, 56
      %v1399 = vpop.permute.xlu0 %1398
      %1400 = vrot.lane.b32.xlu0 %v676, 56
      %v1401 = vpop.permute.xlu0 %1400
      %1402 = vrot.lane.b32.xlu0 %v1050, 56
      %v1403 = vpop.permute.xlu0 %1402
      %1404 = vrot.lane.b32.xlu0 %v1052, 56
      %v1405 = vpop.permute.xlu0 %1404
      %1406 = vrot.lane.b32.xlu0 %v599, 56
      %v1407 = vpop.permute.xlu0 %1406
      %1408 = vrot.lane.b32.xlu0 %v601, 56
      %v1409 = vpop.permute.xlu0 %1408
      %1442 = vrot.lane.b32.xlu0 %v786, 64
      %v1443 = vpop.permute.xlu0 %1442
      %1444 = vrot.lane.b32.xlu0 %v788, 64
      %v1445 = vpop.permute.xlu0 %1444
      %1446 = vrot.lane.b32.xlu0 %v791, 64
      %v1447 = vpop.permute.xlu0 %1446
      %1448 = vrot.lane.b32.xlu0 %v793, 64
      %v1449 = vpop.permute.xlu0 %1448
      %1450 = vrot.lane.b32.xlu0 %v796, 64
      %v1451 = vpop.permute.xlu0 %1450
      %1452 = vrot.lane.b32.xlu0 %v798, 64
      %v1453 = vpop.permute.xlu0 %1452
      %1454 = vrot.lane.b32.xlu0 %v801, 64
      %v1455 = vpop.permute.xlu0 %1454
      %1456 = vrot.lane.b32.xlu0 %v803, 64
      %v1457 = vpop.permute.xlu0 %1456
      %1458 = vrot.lane.b32.xlu0 %v806, 64
      %v1459 = vpop.permute.xlu0 %1458
      %1460 = vrot.lane.b32.xlu0 %v808, 64
      %v1461 = vpop.permute.xlu0 %1460
      %1462 = vrot.lane.b32.xlu0 %v811, 64
      %v1463 = vpop.permute.xlu0 %1462
      %1464 = vrot.lane.b32.xlu0 %v813, 64
      %v1465 = vpop.permute.xlu0 %1464
      %1466 = vrot.lane.b32.xlu0 %v816, 64
      %v1467 = vpop.permute.xlu0 %1466
      %1468 = vrot.lane.b32.xlu0 %v818, 64
      %v1469 = vpop.permute.xlu0 %1468
      %1470 = vrot.lane.b32.xlu0 %v821, 64
      %v1471 = vpop.permute.xlu0 %1470
      %1472 = vrot.lane.b32.xlu0 %v823, 64
      %v1473 = vpop.permute.xlu0 %1472
      %1474 = vrot.lane.b32.xlu0 %v826, 64
      %v1475 = vpop.permute.xlu0 %1474
      %1476 = vrot.lane.b32.xlu0 %v828, 64
      %v1477 = vpop.permute.xlu0 %1476
      %1478 = vrot.lane.b32.xlu0 %v831, 64
      %v1479 = vpop.permute.xlu0 %1478
      %1480 = vrot.lane.b32.xlu0 %v833, 64
      %v1481 = vpop.permute.xlu0 %1480
      %1482 = vrot.lane.b32.xlu0 %v836, 64
      %v1483 = vpop.permute.xlu0 %1482
      %1484 = vrot.lane.b32.xlu0 %v838, 64
      %v1485 = vpop.permute.xlu0 %1484
      %1486 = vrot.lane.b32.xlu0 %v841, 64
      %v1487 = vpop.permute.xlu0 %1486
      %1488 = vrot.lane.b32.xlu0 %v843, 64
      %v1489 = vpop.permute.xlu0 %1488
      %1490 = vrot.lane.b32.xlu0 %v846, 64
      %v1491 = vpop.permute.xlu0 %1490
      %1492 = vrot.lane.b32.xlu0 %v848, 64
      %v1493 = vpop.permute.xlu0 %1492
      %1494 = vrot.lane.b32.xlu0 %v851, 64
      %v1495 = vpop.permute.xlu0 %1494
      %1496 = vrot.lane.b32.xlu0 %v853, 64
      %v1497 = vpop.permute.xlu0 %1496
      %1498 = vrot.lane.b32.xlu0 %v1151, 64
      %v1499 = vpop.permute.xlu0 %1498
      %1500 = vrot.lane.b32.xlu0 %v1153, 64
      %v1501 = vpop.permute.xlu0 %1500
      %1502 = vrot.lane.b32.xlu0 %v776, 64
      %v1503 = vpop.permute.xlu0 %1502
      %1504 = vrot.lane.b32.xlu0 %v778, 64
      %v1505 = vpop.permute.xlu0 %1504
      %vm1538 = vcmask 64512
      %v1539 = vsel %vm1538, %v530, %v678
      %v1540 = vsel %vm1538, %v432, %v680
      %v1541 = vsel %vm1538, %v531, %v682
      %v1542 = vsel %vm1538, %v435, %v684
      %v1543 = vsel %vm1538, %v532, %v686
      %v1544 = vsel %vm1538, %v438, %v688
      %v1545 = vsel %vm1538, %v533, %v690
      %v1546 = vsel %vm1538, %v441, %v692
      %v1547 = vsel %vm1538, %v534, %v694
      %v1548 = vsel %vm1538, %v444, %v696
      %v1549 = vsel %vm1538, %v535, %v698
      %v1550 = vsel %vm1538, %v447, %v700
      %v1551 = vsel %vm1538, %v536, %v702
      %v1552 = vsel %vm1538, %v450, %v704
      %v1553 = vsel %vm1538, %v537, %v706
      %v1554 = vsel %vm1538, %v453, %v708
      %v1555 = vsel %vm1538, %v538, %v710
      %v1556 = vsel %vm1538, %v456, %v712
      %v1557 = vsel %vm1538, %v539, %v714
      %v1558 = vsel %vm1538, %v459, %v716
      %v1559 = vsel %vm1538, %v540, %v718
      %v1560 = vsel %vm1538, %v462, %v720
      %v1561 = vsel %vm1538, %v541, %v722
      %v1562 = vsel %vm1538, %v465, %v724
      %v1563 = vsel %vm1538, %v542, %v726
      %v1564 = vsel %vm1538, %v468, %v728
      %v1565 = vsel %vm1538, %v543, %v730
      %v1566 = vsel %vm1538, %v471, %v732
      %v1567 = vsel %vm1538, %v544, %v734
      %v1568 = vsel %vm1538, %v474, %v736
      %v1569 = vsel %vm1538, %v545, %v738
      %v1570 = vsel %vm1538, %v477, %v740
      %vm1571 = vcmask 130048
      %v1572 = vsel %vm1571, %v1539, %v855
      %v1573 = vsel %vm1571, %v1540, %v857
      %v1574 = vsel %vm1571, %v1541, %v859
      %v1575 = vsel %vm1571, %v1542, %v861
      %v1576 = vsel %vm1571, %v1543, %v863
      %v1577 = vsel %vm1571, %v1544, %v865
      %v1578 = vsel %vm1571, %v1545, %v867
      %v1579 = vsel %vm1571, %v1546, %v869
      %v1580 = vsel %vm1571, %v1547, %v871
      %v1581 = vsel %vm1571, %v1548, %v873
      %v1582 = vsel %vm1571, %v1549, %v875
      %v1583 = vsel %vm1571, %v1550, %v877
      %v1584 = vsel %vm1571, %v1551, %v879
      %v1585 = vsel %vm1571, %v1552, %v881
      %v1586 = vsel %vm1571, %v1553, %v883
      %v1587 = vsel %vm1571, %v1554, %v885
      %v1588 = vsel %vm1571, %v1555, %v887
      %v1589 = vsel %vm1571, %v1556, %v889
      %v1590 = vsel %vm1571, %v1557, %v891
      %v1591 = vsel %vm1571, %v1558, %v893
      %v1592 = vsel %vm1571, %v1559, %v895
      %v1593 = vsel %vm1571, %v1560, %v897
      %v1594 = vsel %vm1571, %v1561, %v899
      %v1595 = vsel %vm1571, %v1562, %v901
      %v1596 = vsel %vm1571, %v1563, %v903
      %v1597 = vsel %vm1571, %v1564, %v905
      %v1598 = vsel %vm1571, %v1565, %v907
      %v1599 = vsel %vm1571, %v1566, %v909
      %v1600 = vsel %vm1571, %v1567, %v911
      %v1601 = vsel %vm1571, %v1568, %v913
      %v1602 = vsel %vm1571, %v1569, %v915
      %v1603 = vsel %vm1571, %v1570, %v917
      %vm1604 = vcmask 195584
      %v1605 = vsel %vm1604, %v1572, %v952
      %v1606 = vsel %vm1604, %v1573, %v954
      %v1607 = vsel %vm1604, %v1574, %v956
      %v1608 = vsel %vm1604, %v1575, %v958
      %v1609 = vsel %vm1604, %v1576, %v960
      %v1610 = vsel %vm1604, %v1577, %v962
      %v1611 = vsel %vm1604, %v1578, %v964
      %v1612 = vsel %vm1604, %v1579, %v966
      %v1613 = vsel %vm1604, %v1580, %v968
      %v1614 = vsel %vm1604, %v1581, %v970
      %v1615 = vsel %vm1604, %v1582, %v972
      %v1616 = vsel %vm1604, %v1583, %v974
      %v1617 = vsel %vm1604, %v1584, %v976
      %v1618 = vsel %vm1604, %v1585, %v978
      %v1619 = vsel %vm1604, %v1586, %v980
      %v1620 = vsel %vm1604, %v1587, %v982
      %v1621 = vsel %vm1604, %v1588, %v984
      %v1622 = vsel %vm1604, %v1589, %v986
      %v1623 = vsel %vm1604, %v1590, %v988
      %v1624 = vsel %vm1604, %v1591, %v990
      %v1625 = vsel %vm1604, %v1592, %v992
      %v1626 = vsel %vm1604, %v1593, %v994
      %v1627 = vsel %vm1604, %v1594, %v996
      %v1628 = vsel %vm1604, %v1595, %v998
      %v1629 = vsel %vm1604, %v1596, %v1000
      %v1630 = vsel %vm1604, %v1597, %v1002
      %v1631 = vsel %vm1604, %v1598, %v1004
      %v1632 = vsel %vm1604, %v1599, %v1006
      %v1633 = vsel %vm1604, %v1600, %v1008
      %v1634 = vsel %vm1604, %v1601, %v1010
      %v1635 = vsel %vm1604, %v1602, %v1012
      %v1636 = vsel %vm1604, %v1603, %v1014
      %vm1637 = vcmask 261120
      %v1638 = vsel %vm1637, %v1605, %v1054
      %v1639 = vsel %vm1637, %v1606, %v1056
      %v1640 = vsel %vm1637, %v1607, %v1058
      %v1641 = vsel %vm1637, %v1608, %v1060
      %v1642 = vsel %vm1637, %v1609, %v1062
      %v1643 = vsel %vm1637, %v1610, %v1064
      %v1644 = vsel %vm1637, %v1611, %v1066
      %v1645 = vsel %vm1637, %v1612, %v1068
      %v1646 = vsel %vm1637, %v1613, %v1070
      %v1647 = vsel %vm1637, %v1614, %v1072
      %v1648 = vsel %vm1637, %v1615, %v1074
      %v1649 = vsel %vm1637, %v1616, %v1076
      %v1650 = vsel %vm1637, %v1617, %v1078
      %v1651 = vsel %vm1637, %v1618, %v1080
      %v1652 = vsel %vm1637, %v1619, %v1082
      %v1653 = vsel %vm1637, %v1620, %v1084
      %v1654 = vsel %vm1637, %v1621, %v1086
      %v1655 = vsel %vm1637, %v1622, %v1088
      %v1656 = vsel %vm1637, %v1623, %v1090
      %v1657 = vsel %vm1637, %v1624, %v1092
      %v1658 = vsel %vm1637, %v1625, %v1094
      %v1659 = vsel %vm1637, %v1626, %v1096
      %v1660 = vsel %vm1637, %v1627, %v1098
      %v1661 = vsel %vm1637, %v1628, %v1100
      %v1662 = vsel %vm1637, %v1629, %v1102
      %v1663 = vsel %vm1637, %v1630, %v1104
      %v1664 = vsel %vm1637, %v1631, %v1106
      %v1665 = vsel %vm1637, %v1632, %v1108
      %v1666 = vsel %vm1637, %v1633, %v1110
      %v1667 = vsel %vm1637, %v1634, %v1112
      %v1668 = vsel %vm1637, %v1635, %v1114
      %v1669 = vsel %vm1637, %v1636, %v1116
      %vm1670 = vcmask 326656
      %v1671 = vsel %vm1670, %v1638, %v1155
      %v1672 = vsel %vm1670, %v1639, %v1157
      %v1673 = vsel %vm1670, %v1640, %v1159
      %v1674 = vsel %vm1670, %v1641, %v1161
      %v1675 = vsel %vm1670, %v1642, %v1163
      %v1676 = vsel %vm1670, %v1643, %v1165
      %v1677 = vsel %vm1670, %v1644, %v1167
      %v1678 = vsel %vm1670, %v1645, %v1169
      %v1679 = vsel %vm1670, %v1646, %v1171
      %v1680 = vsel %vm1670, %v1647, %v1173
      %v1681 = vsel %vm1670, %v1648, %v1175
      %v1682 = vsel %vm1670, %v1649, %v1177
      %v1683 = vsel %vm1670, %v1650, %v1179
      %v1684 = vsel %vm1670, %v1651, %v1181
      %v1685 = vsel %vm1670, %v1652, %v1183
      %v1686 = vsel %vm1670, %v1653, %v1185
      %v1687 = vsel %vm1670, %v1654, %v1187
      %v1688 = vsel %vm1670, %v1655, %v1189
      %v1689 = vsel %vm1670, %v1656, %v1191
      %v1690 = vsel %vm1670, %v1657, %v1193
      %v1691 = vsel %vm1670, %v1658, %v1195
      %v1692 = vsel %vm1670, %v1659, %v1197
      %v1693 = vsel %vm1670, %v1660, %v1199
      %v1694 = vsel %vm1670, %v1661, %v1201
      %v1695 = vsel %vm1670, %v1662, %v1203
      %v1696 = vsel %vm1670, %v1663, %v1205
      %v1697 = vsel %vm1670, %v1664, %v1207
      %v1698 = vsel %vm1670, %v1665, %v1209
      %v1699 = vsel %vm1670, %v1666, %v1211
      %v1700 = vsel %vm1670, %v1667, %v1213
      %v1701 = vsel %vm1670, %v1668, %v1215
      %v1702 = vsel %vm1670, %v1669, %v1217
      %vm1703 = vcmask 392192
      %v1704 = vsel %vm1703, %v1671, %v1251
      %v1705 = vsel %vm1703, %v1672, %v1253
      %v1706 = vsel %vm1703, %v1673, %v1255
      %v1707 = vsel %vm1703, %v1674, %v1257
      %v1708 = vsel %vm1703, %v1675, %v1259
      %v1709 = vsel %vm1703, %v1676, %v1261
      %v1710 = vsel %vm1703, %v1677, %v1263
      %v1711 = vsel %vm1703, %v1678, %v1265
      %v1712 = vsel %vm1703, %v1679, %v1267
      %v1713 = vsel %vm1703, %v1680, %v1269
      %v1714 = vsel %vm1703, %v1681, %v1271
      %v1715 = vsel %vm1703, %v1682, %v1273
      %v1716 = vsel %vm1703, %v1683, %v1275
      %v1717 = vsel %vm1703, %v1684, %v1277
      %v1718 = vsel %vm1703, %v1685, %v1279
      %v1719 = vsel %vm1703, %v1686, %v1281
      %v1720 = vsel %vm1703, %v1687, %v1283
      %v1721 = vsel %vm1703, %v1688, %v1285
      %v1722 = vsel %vm1703, %v1689, %v1287
      %v1723 = vsel %vm1703, %v1690, %v1289
      %v1724 = vsel %vm1703, %v1691, %v1291
      %v1725 = vsel %vm1703, %v1692, %v1293
      %v1726 = vsel %vm1703, %v1693, %v1295
      %v1727 = vsel %vm1703, %v1694, %v1297
      %v1728 = vsel %vm1703, %v1695, %v1299
      %v1729 = vsel %vm1703, %v1696, %v1301
      %v1730 = vsel %vm1703, %v1697, %v1303
      %v1731 = vsel %vm1703, %v1698, %v1305
      %v1732 = vsel %vm1703, %v1699, %v1307
      %v1733 = vsel %vm1703, %v1700, %v1309
      %v1734 = vsel %vm1703, %v1701, %v1311
      %v1735 = vsel %vm1703, %v1702, %v1313
      %vm1736 = vcmask 457728
      %v1737 = vsel %vm1736, %v1704, %v1347
      %v1738 = vsel %vm1736, %v1705, %v1349
      %v1739 = vsel %vm1736, %v1706, %v1351
      %v1740 = vsel %vm1736, %v1707, %v1353
      %v1741 = vsel %vm1736, %v1708, %v1355
      %v1742 = vsel %vm1736, %v1709, %v1357
      %v1743 = vsel %vm1736, %v1710, %v1359
      %v1744 = vsel %vm1736, %v1711, %v1361
      %v1745 = vsel %vm1736, %v1712, %v1363
      %v1746 = vsel %vm1736, %v1713, %v1365
      %v1747 = vsel %vm1736, %v1714, %v1367
      %v1748 = vsel %vm1736, %v1715, %v1369
      %v1749 = vsel %vm1736, %v1716, %v1371
      %v1750 = vsel %vm1736, %v1717, %v1373
      %v1751 = vsel %vm1736, %v1718, %v1375
      %v1752 = vsel %vm1736, %v1719, %v1377
      %v1753 = vsel %vm1736, %v1720, %v1379
      %v1754 = vsel %vm1736, %v1721, %v1381
      %v1755 = vsel %vm1736, %v1722, %v1383
      %v1756 = vsel %vm1736, %v1723, %v1385
      %v1757 = vsel %vm1736, %v1724, %v1387
      %v1758 = vsel %vm1736, %v1725, %v1389
      %v1759 = vsel %vm1736, %v1726, %v1391
      %v1760 = vsel %vm1736, %v1727, %v1393
      %v1761 = vsel %vm1736, %v1728, %v1395
      %v1762 = vsel %vm1736, %v1729, %v1397
      %v1763 = vsel %vm1736, %v1730, %v1399
      %v1764 = vsel %vm1736, %v1731, %v1401
      %v1765 = vsel %vm1736, %v1732, %v1403
      %v1766 = vsel %vm1736, %v1733, %v1405
      %v1767 = vsel %vm1736, %v1734, %v1407
      %v1768 = vsel %vm1736, %v1735, %v1409
      %vm1769 = vcmask 523264
      %v1770 = vsel %vm1769, %v1737, %v1443
      %v1771 = vsel %vm1769, %v1738, %v1445
      %v1772 = vsel %vm1769, %v1739, %v1447
      %v1773 = vsel %vm1769, %v1740, %v1449
      %v1774 = vsel %vm1769, %v1741, %v1451
      %v1775 = vsel %vm1769, %v1742, %v1453
      %v1776 = vsel %vm1769, %v1743, %v1455
      %v1777 = vsel %vm1769, %v1744, %v1457
      %v1778 = vsel %vm1769, %v1745, %v1459
      %v1779 = vsel %vm1769, %v1746, %v1461
      %v1780 = vsel %vm1769, %v1747, %v1463
      %v1781 = vsel %vm1769, %v1748, %v1465
      %v1782 = vsel %vm1769, %v1749, %v1467
      %v1783 = vsel %vm1769, %v1750, %v1469
      %v1784 = vsel %vm1769, %v1751, %v1471
      %v1785 = vsel %vm1769, %v1752, %v1473
      %v1786 = vsel %vm1769, %v1753, %v1475
      %v1787 = vsel %vm1769, %v1754, %v1477
      %v1788 = vsel %vm1769, %v1755, %v1479
      %v1789 = vsel %vm1769, %v1756, %v1481
      %v1790 = vsel %vm1769, %v1757, %v1483
      %v1791 = vsel %vm1769, %v1758, %v1485
      %v1792 = vsel %vm1769, %v1759, %v1487
      %v1793 = vsel %vm1769, %v1760, %v1489
      %v1794 = vsel %vm1769, %v1761, %v1491
      %v1795 = vsel %vm1769, %v1762, %v1493
      %v1796 = vsel %vm1769, %v1763, %v1495
      %v1797 = vsel %vm1769, %v1764, %v1497
      %v1798 = vsel %vm1769, %v1765, %v1499
      %v1799 = vsel %vm1769, %v1766, %v1501
      %v1800 = vsel %vm1769, %v1767, %v1503
      %v1801 = vsel %vm1769, %v1768, %v1505
      %v1802 = vpack.c.bf16 %v1771, %v1770
      %v1803 = vpack.c.bf16 %v1773, %v1772
      %v1804 = vpack.c.bf16 %v1775, %v1774
      %v1805 = vpack.c.bf16 %v1777, %v1776
      %v1806 = vpack.c.bf16 %v1779, %v1778
      %v1807 = vpack.c.bf16 %v1781, %v1780
      %v1808 = vpack.c.bf16 %v1783, %v1782
      %v1809 = vpack.c.bf16 %v1785, %v1784
      %v1810 = vpack.c.bf16 %v1787, %v1786
      %v1811 = vpack.c.bf16 %v1789, %v1788
      %v1812 = vpack.c.bf16 %v1791, %v1790
      %v1813 = vpack.c.bf16 %v1793, %v1792
      %v1814 = vpack.c.bf16 %v1795, %v1794
      %v1815 = vpack.c.bf16 %v1797, %v1796
      %v1816 = vpack.c.bf16 %v1799, %v1798
      %v1817 = vpack.c.bf16 %v1801, %v1800
      %v1818 = vld [vmem:[%s2] sm:$0xf]
      %v1819 = vld [vmem:[%s2 + $0x4] sm:$0xf]
      %v1820 = vld [vmem:[%s2 + $0x8] sm:$0xf]
      %v1821 = vld [vmem:[%s2 + $0xc] sm:$0xf]
      %v1822 = vld [vmem:[%s2 + $0x10] sm:$0xf]
      %v1823 = vld [vmem:[%s2 + $0x14] sm:$0xf]
      %v1824 = vld [vmem:[%s2 + $0x18] sm:$0xf]
      %v1825 = vld [vmem:[%s2 + $0x1c] sm:$0xf]
      %v1826 = vld [vmem:[%s2 + $0x20] sm:$0xf]
      %v1836 = vunpack.c.l.b16 %v1818
      %v1837 = vunpack.c.l.b16 %v1819
      %v1838 = vunpack.c.l.b16 %v1820
      %v1839 = vunpack.c.l.b16 %v1821
      %v1840 = vunpack.c.l.b16 %v1822
      %v1841 = vunpack.c.l.b16 %v1823
      %v1842 = vunpack.c.l.b16 %v1824
      %v1843 = vunpack.c.l.b16 %v1825
      %v1844 = vunpack.c.l.b16 %v1826
      %v1845 = vpack.c.b16 %v1837, %v1836
      %v1846 = vpack.c.b16 %v1839, %v1838
      %v1847 = vpack.c.b16 %v1841, %v1840
      %v1848 = vpack.c.b16 %v1843, %v1842
      %v1849 = vpack.c.b16 %v1844, %v1844
      %vm1854 = vcmask 588800
      %v1856 = vsel %vm1854, %v1802, 0
      %v1859 = vsel %vm1854, %v1803, 0
      %v1862 = vsel %vm1854, %v1804, 0
      %v1865 = vsel %vm1854, %v1805, 0
      %v1868 = vsel %vm1854, %v1806, 0
      %v1871 = vsel %vm1854, %v1807, 0
      %v1874 = vsel %vm1854, %v1808, 0
      %v1877 = vsel %vm1854, %v1809, 0
      %v1880 = vsel %vm1854, %v1810, 0
      %v1883 = vsel %vm1854, %v1811, 0
      %v1886 = vsel %vm1854, %v1812, 0
      %v1889 = vsel %vm1854, %v1813, 0
      %v1892 = vsel %vm1854, %v1814, 0
      %v1895 = vsel %vm1854, %v1815, 0
      %v1898 = vsel %vm1854, %v1816, 0
      %v1901 = vsel %vm1854, %v1817, 0
      %vm1903 = vcmask 1043456
      %v1905 = vsel %vm1903, %v1849, 0
      %1907 = vmatprep.subr.bf16.mxu0 0
      %1908 = vmatpush1.bf16.msra.mxu0 %v1845
      %1909 = vmatprep.subr.bf16.mxu0 0
      %1910 = vmatpush1.bf16.msra.mxu0 %v1846
      %1911 = vmatprep.subr.bf16.mxu0 0
      %1912 = vmatpush1.bf16.msra.mxu0 %v1847
      %1913 = vmatprep.subr.bf16.mxu0 0
      %1914 = vmatpush1.bf16.msra.mxu0 %v1848
      %1915 = vmatprep.subr.bf16.mxu0 0
      %1916 = vmatpush1.bf16.msra.mxu0 %v1905
      %1917 = vmatprep.subr.bf16.mxu0 0
      %1918 = vmatpush1.bf16.msra.mxu0 0
      %1919 = vmatprep.subr.bf16.mxu0 0
      %1920 = vmatpush1.bf16.msra.mxu0 0
      %1921 = vmatprep.subr.bf16.mxu0 0
      %1922 = vmatpush1.bf16.msra.mxu0 0
      %1923 = vmatprep.subr.bf16.mxu0 0
      %1924 = vmatpush1.bf16.msra.mxu0 0
      %1925 = vmatprep.subr.bf16.mxu0 0
      %1926 = vmatpush1.bf16.msra.mxu0 0
      %1927 = vmatprep.subr.bf16.mxu0 0
      %1928 = vmatpush1.bf16.msra.mxu0 0
      %1929 = vmatprep.subr.bf16.mxu0 0
      %1930 = vmatpush1.bf16.msra.mxu0 0
      %1931 = vmatprep.subr.bf16.mxu0 0
      %1932 = vmatpush1.bf16.msra.mxu0 0
      %1933 = vmatprep.subr.bf16.mxu0 0
      %1934 = vmatpush1.bf16.msra.mxu0 0
      %1935 = vmatprep.subr.bf16.mxu0 0
      %1936 = vmatpush1.bf16.msra.mxu0 0
      %1937 = vmatprep.subr.bf16.mxu0 0
      %1938 = vmatpush1.bf16.msra.mxu0 0
      %1939 = vmatprep.mubr.bf16.mxu0 0
      %1940 = vmatmul.mubr.bf16.gmra.mrb[0].mxu0 %v1856
      %v1941 = vpop.f32.mrb[0].mxu0
      %v1942 = vadd.f32 0.0, %v1941
      %v1943 = vpop.f32.mrb[0].mxu0
      %v1944 = vpop.f32.mrb[0].mxu0
      %v1945 = vadd.f32 0.0, %v1944
      %v1946 = vpop.f32.mrb[0].mxu0
      %1947 = vmatprep.mubr.bf16.mxu0 0
      %1948 = vmatmul.mubr.bf16.gmra.mrb[0].mxu0 %v1859
      %v1949 = vpop.f32.mrb[0].mxu0
      %v1950 = vadd.f32 0.0, %v1949
      %v1951 = vpop.f32.mrb[0].mxu0
      %v1952 = vpop.f32.mrb[0].mxu0
      %v1953 = vadd.f32 0.0, %v1952
      %v1954 = vpop.f32.mrb[0].mxu0
      %1955 = vmatprep.mubr.bf16.mxu0 0
      %1956 = vmatmul.mubr.bf16.gmra.mrb[0].mxu0 %v1862
      %v1957 = vpop.f32.mrb[0].mxu0
      %v1958 = vadd.f32 0.0, %v1957
      %v1959 = vpop.f32.mrb[0].mxu0
      %v1960 = vpop.f32.mrb[0].mxu0
      %v1961 = vadd.f32 0.0, %v1960
      %v1962 = vpop.f32.mrb[0].mxu0
      %1963 = vmatprep.mubr.bf16.mxu0 0
      %1964 = vmatmul.mubr.bf16.gmra.mrb[0].mxu0 %v1865
      %v1965 = vpop.f32.mrb[0].mxu0
      %v1966 = vadd.f32 0.0, %v1965
      %v1967 = vpop.f32.mrb[0].mxu0
      %v1968 = vpop.f32.mrb[0].mxu0
      %v1969 = vadd.f32 0.0, %v1968
      %v1970 = vpop.f32.mrb[0].mxu0
      %1971 = vmatprep.mubr.bf16.mxu0 0
      %1972 = vmatmul.mubr.bf16.gmra.mrb[0].mxu0 %v1868
      %v1973 = vpop.f32.mrb[0].mxu0
      %v1974 = vadd.f32 0.0, %v1973
      %v1975 = vpop.f32.mrb[0].mxu0
      %v1976 = vpop.f32.mrb[0].mxu0
      %v1977 = vadd.f32 0.0, %v1976
      %v1978 = vpop.f32.mrb[0].mxu0
      %1979 = vmatprep.mubr.bf16.mxu0 0
      %1980 = vmatmul.mubr.bf16.gmra.mrb[0].mxu0 %v1871
      %v1981 = vpop.f32.mrb[0].mxu0
      %v1982 = vadd.f32 0.0, %v1981
      %v1983 = vpop.f32.mrb[0].mxu0
      %v1984 = vpop.f32.mrb[0].mxu0
      %v1985 = vadd.f32 0.0, %v1984
      %v1986 = vpop.f32.mrb[0].mxu0
      %1987 = vmatprep.mubr.bf16.mxu0 0
      %1988 = vmatmul.mubr.bf16.gmra.mrb[0].mxu0 %v1874
      %v1989 = vpop.f32.mrb[0].mxu0
      %v1990 = vadd.f32 0.0, %v1989
      %v1991 = vpop.f32.mrb[0].mxu0
      %v1992 = vpop.f32.mrb[0].mxu0
      %v1993 = vadd.f32 0.0, %v1992
      %v1994 = vpop.f32.mrb[0].mxu0
      %1995 = vmatprep.mubr.bf16.mxu0 0
      %1996 = vmatmul.mubr.bf16.gmra.mrb[0].mxu0 %v1877
      %v1997 = vpop.f32.mrb[0].mxu0
      %v1998 = vadd.f32 0.0, %v1997
      %v1999 = vpop.f32.mrb[0].mxu0
      %v2000 = vpop.f32.mrb[0].mxu0
      %v2001 = vadd.f32 0.0, %v2000
      %v2002 = vpop.f32.mrb[0].mxu0
      %2003 = vmatprep.mubr.bf16.mxu0 0
      %2004 = vmatmul.mubr.bf16.gmra.mrb[0].mxu0 %v1880
      %v2005 = vpop.f32.mrb[0].mxu0
      %v2006 = vadd.f32 0.0, %v2005
      %v2007 = vpop.f32.mrb[0].mxu0
      %v2008 = vpop.f32.mrb[0].mxu0
      %v2009 = vadd.f32 0.0, %v2008
      %v2010 = vpop.f32.mrb[0].mxu0
      %2011 = vmatprep.mubr.bf16.mxu0 0
      %2012 = vmatmul.mubr.bf16.gmra.mrb[0].mxu0 %v1883
      %v2013 = vpop.f32.mrb[0].mxu0
      %v2014 = vadd.f32 0.0, %v2013
      %v2015 = vpop.f32.mrb[0].mxu0
      %v2016 = vpop.f32.mrb[0].mxu0
      %v2017 = vadd.f32 0.0, %v2016
      %v2018 = vpop.f32.mrb[0].mxu0
      %2019 = vmatprep.mubr.bf16.mxu0 0
      %2020 = vmatmul.mubr.bf16.gmra.mrb[0].mxu0 %v1886
      %v2021 = vpop.f32.mrb[0].mxu0
      %v2022 = vadd.f32 0.0, %v2021
      %v2023 = vpop.f32.mrb[0].mxu0
      %v2024 = vpop.f32.mrb[0].mxu0
      %v2025 = vadd.f32 0.0, %v2024
      %v2026 = vpop.f32.mrb[0].mxu0
      %2027 = vmatprep.mubr.bf16.mxu0 0
      %2028 = vmatmul.mubr.bf16.gmra.mrb[0].mxu0 %v1889
      %v2029 = vpop.f32.mrb[0].mxu0
      %v2030 = vadd.f32 0.0, %v2029
      %v2031 = vpop.f32.mrb[0].mxu0
      %v2032 = vpop.f32.mrb[0].mxu0
      %v2033 = vadd.f32 0.0, %v2032
      %v2034 = vpop.f32.mrb[0].mxu0
      %2035 = vmatprep.mubr.bf16.mxu0 0
      %2036 = vmatmul.mubr.bf16.gmra.mrb[0].mxu0 %v1892
      %v2037 = vpop.f32.mrb[0].mxu0
      %v2038 = vadd.f32 0.0, %v2037
      %v2039 = vpop.f32.mrb[0].mxu0
      %v2040 = vpop.f32.mrb[0].mxu0
      %v2041 = vadd.f32 0.0, %v2040
      %v2042 = vpop.f32.mrb[0].mxu0
      %2043 = vmatprep.mubr.bf16.mxu0 0
      %2044 = vmatmul.mubr.bf16.gmra.mrb[0].mxu0 %v1895
      %v2045 = vpop.f32.mrb[0].mxu0
      %v2046 = vadd.f32 0.0, %v2045
      %v2047 = vpop.f32.mrb[0].mxu0
      %v2048 = vpop.f32.mrb[0].mxu0
      %v2049 = vadd.f32 0.0, %v2048
      %v2050 = vpop.f32.mrb[0].mxu0
      %2051 = vmatprep.mubr.bf16.mxu0 0
      %2052 = vmatmul.mubr.bf16.gmra.mrb[0].mxu0 %v1898
      %v2053 = vpop.f32.mrb[0].mxu0
      %v2054 = vadd.f32 0.0, %v2053
      %v2055 = vpop.f32.mrb[0].mxu0
      %v2056 = vpop.f32.mrb[0].mxu0
      %v2057 = vadd.f32 0.0, %v2056
      %v2058 = vpop.f32.mrb[0].mxu0
      %2059 = vmatprep.mubr.bf16.mxu0 0
      %2060 = vmatmul.mubr.bf16.gmra.mrb[0].mxu0 %v1901
      %v2061 = vpop.f32.mrb[0].mxu0
      %v2062 = vadd.f32 0.0, %v2061
      %v2063 = vpop.f32.mrb[0].mxu0
      %v2064 = vpop.f32.mrb[0].mxu0
      %v2065 = vadd.f32 0.0, %v2064
      %v2066 = vpop.f32.mrb[0].mxu0
      %2067 = vdwg.mxu0
      %v2068 = vld [vmem:[%s4] sm:$0x1]
      %v2070 = vlaneseq
      %v2071 = vshrl.u32 %v2070, 7
      %v2072 = vsub.s32 0, %v2071
      %v2073 = vrot.slane %v2068, %v2072
      %v2075 = vmul.f32 %v1942, %v2073
      %v2076 = vmul.f32 %v1945, %v2073
      %v2077 = vmul.f32 %v1950, %v2073
      %v2078 = vmul.f32 %v1953, %v2073
      %v2079 = vmul.f32 %v1958, %v2073
      %v2080 = vmul.f32 %v1961, %v2073
      %v2081 = vmul.f32 %v1966, %v2073
      %v2082 = vmul.f32 %v1969, %v2073
      %v2083 = vmul.f32 %v1974, %v2073
      %v2084 = vmul.f32 %v1977, %v2073
      %v2085 = vmul.f32 %v1982, %v2073
      %v2086 = vmul.f32 %v1985, %v2073
      %v2087 = vmul.f32 %v1990, %v2073
      %v2088 = vmul.f32 %v1993, %v2073
      %v2089 = vmul.f32 %v1998, %v2073
      %v2090 = vmul.f32 %v2001, %v2073
      %v2091 = vmul.f32 %v2006, %v2073
      %v2092 = vmul.f32 %v2009, %v2073
      %v2093 = vmul.f32 %v2014, %v2073
      %v2094 = vmul.f32 %v2017, %v2073
      %v2095 = vmul.f32 %v2022, %v2073
      %v2096 = vmul.f32 %v2025, %v2073
      %v2097 = vmul.f32 %v2030, %v2073
      %v2098 = vmul.f32 %v2033, %v2073
      %v2099 = vmul.f32 %v2038, %v2073
      %v2100 = vmul.f32 %v2041, %v2073
      %v2101 = vmul.f32 %v2046, %v2073
      %v2102 = vmul.f32 %v2049, %v2073
      %v2103 = vmul.f32 %v2054, %v2073
      %v2104 = vmul.f32 %v2057, %v2073
      %v2105 = vmul.f32 %v2062, %v2073
      %v2106 = vmul.f32 %v2065, %v2073
      %v2107 = vld [vmem:[%s5] sm:$0x1]
      %v2109 = vlaneseq
      %v2110 = vshrl.u32 %v2109, 7
      %v2111 = vsub.s32 0, %v2110
      %v2112 = vrot.slane %v2107, %v2111
      %v2114 = vadd.f32 %v2075, %v2112
      %v2115 = vadd.f32 %v2076, %v2112
      %v2116 = vadd.f32 %v2077, %v2112
      %v2117 = vadd.f32 %v2078, %v2112
      %v2118 = vadd.f32 %v2079, %v2112
      %v2119 = vadd.f32 %v2080, %v2112
      %v2120 = vadd.f32 %v2081, %v2112
      %v2121 = vadd.f32 %v2082, %v2112
      %v2122 = vadd.f32 %v2083, %v2112
      %v2123 = vadd.f32 %v2084, %v2112
      %v2124 = vadd.f32 %v2085, %v2112
      %v2125 = vadd.f32 %v2086, %v2112
      %v2126 = vadd.f32 %v2087, %v2112
      %v2127 = vadd.f32 %v2088, %v2112
      %v2128 = vadd.f32 %v2089, %v2112
      %v2129 = vadd.f32 %v2090, %v2112
      %v2130 = vadd.f32 %v2091, %v2112
      %v2131 = vadd.f32 %v2092, %v2112
      %v2132 = vadd.f32 %v2093, %v2112
      %v2133 = vadd.f32 %v2094, %v2112
      %v2134 = vadd.f32 %v2095, %v2112
      %v2135 = vadd.f32 %v2096, %v2112
      %v2136 = vadd.f32 %v2097, %v2112
      %v2137 = vadd.f32 %v2098, %v2112
      %v2138 = vadd.f32 %v2099, %v2112
      %v2139 = vadd.f32 %v2100, %v2112
      %v2140 = vadd.f32 %v2101, %v2112
      %v2141 = vadd.f32 %v2102, %v2112
      %v2142 = vadd.f32 %v2103, %v2112
      %v2143 = vadd.f32 %v2104, %v2112
      %v2144 = vadd.f32 %v2105, %v2112
      %v2145 = vadd.f32 %v2106, %v2112
      %v2146 = vmax.f32 %v2114, 0.0
      %v2147 = vmax.f32 %v2115, 0.0
      %v2148 = vmax.f32 %v2116, 0.0
      %v2149 = vmax.f32 %v2117, 0.0
      %v2150 = vmax.f32 %v2118, 0.0
      %v2151 = vmax.f32 %v2119, 0.0
      %v2152 = vmax.f32 %v2120, 0.0
      %v2153 = vmax.f32 %v2121, 0.0
      %v2154 = vmax.f32 %v2122, 0.0
      %v2155 = vmax.f32 %v2123, 0.0
      %v2156 = vmax.f32 %v2124, 0.0
      %v2157 = vmax.f32 %v2125, 0.0
      %v2158 = vmax.f32 %v2126, 0.0
      %v2159 = vmax.f32 %v2127, 0.0
      %v2160 = vmax.f32 %v2128, 0.0
      %v2161 = vmax.f32 %v2129, 0.0
      %v2162 = vmax.f32 %v2130, 0.0
      %v2163 = vmax.f32 %v2131, 0.0
      %v2164 = vmax.f32 %v2132, 0.0
      %v2165 = vmax.f32 %v2133, 0.0
      %v2166 = vmax.f32 %v2134, 0.0
      %v2167 = vmax.f32 %v2135, 0.0
      %v2168 = vmax.f32 %v2136, 0.0
      %v2169 = vmax.f32 %v2137, 0.0
      %v2170 = vmax.f32 %v2138, 0.0
      %v2171 = vmax.f32 %v2139, 0.0
      %v2172 = vmax.f32 %v2140, 0.0
      %v2173 = vmax.f32 %v2141, 0.0
      %v2174 = vmax.f32 %v2142, 0.0
      %v2175 = vmax.f32 %v2143, 0.0
      %v2176 = vmax.f32 %v2144, 0.0
      %v2177 = vmax.f32 %v2145, 0.0
      %v2210 = vrot.slane %v2146, 7
      %v2211 = vrot.slane %v2147, 7
      %v2212 = vsel %vm430, %v2210, %v2211
      %v2213 = vrot.slane %v2148, 7
      %v2214 = vrot.slane %v2149, 7
      %v2215 = vsel %vm430, %v2213, %v2214
      %v2216 = vrot.slane %v2150, 7
      %v2217 = vrot.slane %v2151, 7
      %v2218 = vsel %vm430, %v2216, %v2217
      %v2219 = vrot.slane %v2152, 7
      %v2220 = vrot.slane %v2153, 7
      %v2221 = vsel %vm430, %v2219, %v2220
      %v2222 = vrot.slane %v2154, 7
      %v2223 = vrot.slane %v2155, 7
      %v2224 = vsel %vm430, %v2222, %v2223
      %v2225 = vrot.slane %v2156, 7
      %v2226 = vrot.slane %v2157, 7
      %v2227 = vsel %vm430, %v2225, %v2226
      %v2228 = vrot.slane %v2158, 7
      %v2229 = vrot.slane %v2159, 7
      %v2230 = vsel %vm430, %v2228, %v2229
      %v2231 = vrot.slane %v2160, 7
      %v2232 = vrot.slane %v2161, 7
      %v2233 = vsel %vm430, %v2231, %v2232
      %v2234 = vrot.slane %v2162, 7
      %v2235 = vrot.slane %v2163, 7
      %v2236 = vsel %vm430, %v2234, %v2235
      %v2237 = vrot.slane %v2164, 7
      %v2238 = vrot.slane %v2165, 7
      %v2239 = vsel %vm430, %v2237, %v2238
      %v2240 = vrot.slane %v2166, 7
      %v2241 = vrot.slane %v2167, 7
      %v2242 = vsel %vm430, %v2240, %v2241
      %v2243 = vrot.slane %v2168, 7
      %v2244 = vrot.slane %v2169, 7
      %v2245 = vsel %vm430, %v2243, %v2244
      %v2246 = vrot.slane %v2170, 7
      %v2247 = vrot.slane %v2171, 7
      %v2248 = vsel %vm430, %v2246, %v2247
      %v2249 = vrot.slane %v2172, 7
      %v2250 = vrot.slane %v2173, 7
      %v2251 = vsel %vm430, %v2249, %v2250
      %v2252 = vrot.slane %v2174, 7
      %v2253 = vrot.slane %v2175, 7
      %v2254 = vsel %vm430, %v2252, %v2253
      %v2255 = vrot.slane %v2176, 7
      %v2256 = vrot.slane %v2177, 7
      %v2257 = vsel %vm430, %v2255, %v2256
      %v2306 = vsel %vm430, 0.0, %v2210
      %v2307 = vsel %vm430, 0.0, %v2213
      %v2308 = vsel %vm430, 0.0, %v2216
      %v2309 = vsel %vm430, 0.0, %v2219
      %v2310 = vsel %vm430, 0.0, %v2222
      %v2311 = vsel %vm430, 0.0, %v2225
      %v2312 = vsel %vm430, 0.0, %v2228
      %v2313 = vsel %vm430, 0.0, %v2231
      %v2314 = vsel %vm430, 0.0, %v2234
      %v2315 = vsel %vm430, 0.0, %v2237
      %v2316 = vsel %vm430, 0.0, %v2240
      %v2317 = vsel %vm430, 0.0, %v2243
      %v2318 = vsel %vm430, 0.0, %v2246
      %v2319 = vsel %vm430, 0.0, %v2249
      %v2320 = vsel %vm430, 0.0, %v2252
      %v2321 = vsel %vm430, 0.0, %v2255
      %v2322 = vsel %vm430, %v2211, 0.0
      %v2323 = vsel %vm430, %v2214, 0.0
      %v2324 = vsel %vm430, %v2217, 0.0
      %v2325 = vsel %vm430, %v2220, 0.0
      %v2326 = vsel %vm430, %v2223, 0.0
      %v2327 = vsel %vm430, %v2226, 0.0
      %v2328 = vsel %vm430, %v2229, 0.0
      %v2329 = vsel %vm430, %v2232, 0.0
      %v2330 = vsel %vm430, %v2235, 0.0
      %v2331 = vsel %vm430, %v2238, 0.0
      %v2332 = vsel %vm430, %v2241, 0.0
      %v2333 = vsel %vm430, %v2244, 0.0
      %v2334 = vsel %vm430, %v2247, 0.0
      %v2335 = vsel %vm430, %v2250, 0.0
      %v2336 = vsel %vm430, %v2253, 0.0
      %v2337 = vsel %vm430, %v2256, 0.0
      %v2368 = vrot.slane %v2306, 1
      %v2369 = vrot.slane %v2212, 1
      %v2370 = vsel %vm596, %v2368, %v2369
      %v2371 = vrot.slane %v2322, 1
      %v2372 = vsel %vm596, %v2369, %v2371
      %v2373 = vrot.slane %v2307, 1
      %v2374 = vrot.slane %v2215, 1
      %v2375 = vsel %vm596, %v2373, %v2374
      %v2376 = vrot.slane %v2323, 1
      %v2377 = vsel %vm596, %v2374, %v2376
      %v2378 = vrot.slane %v2308, 1
      %v2379 = vrot.slane %v2218, 1
      %v2380 = vsel %vm596, %v2378, %v2379
      %v2381 = vrot.slane %v2324, 1
      %v2382 = vsel %vm596, %v2379, %v2381
      %v2383 = vrot.slane %v2309, 1
      %v2384 = vrot.slane %v2221, 1
      %v2385 = vsel %vm596, %v2383, %v2384
      %v2386 = vrot.slane %v2325, 1
      %v2387 = vsel %vm596, %v2384, %v2386
      %v2388 = vrot.slane %v2310, 1
      %v2389 = vrot.slane %v2224, 1
      %v2390 = vsel %vm596, %v2388, %v2389
      %v2391 = vrot.slane %v2326, 1
      %v2392 = vsel %vm596, %v2389, %v2391
      %v2393 = vrot.slane %v2311, 1
      %v2394 = vrot.slane %v2227, 1
      %v2395 = vsel %vm596, %v2393, %v2394
      %v2396 = vrot.slane %v2327, 1
      %v2397 = vsel %vm596, %v2394, %v2396
      %v2398 = vrot.slane %v2312, 1
      %v2399 = vrot.slane %v2230, 1
      %v2400 = vsel %vm596, %v2398, %v2399
      %v2401 = vrot.slane %v2328, 1
      %v2402 = vsel %vm596, %v2399, %v2401
      %v2403 = vrot.slane %v2313, 1
      %v2404 = vrot.slane %v2233, 1
      %v2405 = vsel %vm596, %v2403, %v2404
      %v2406 = vrot.slane %v2329, 1
      %v2407 = vsel %vm596, %v2404, %v2406
      %v2408 = vrot.slane %v2314, 1
      %v2409 = vrot.slane %v2236, 1
      %v2410 = vsel %vm596, %v2408, %v2409
      %v2411 = vrot.slane %v2330, 1
      %v2412 = vsel %vm596, %v2409, %v2411
      %v2413 = vrot.slane %v2315, 1
      %v2414 = vrot.slane %v2239, 1
      %v2415 = vsel %vm596, %v2413, %v2414
      %v2416 = vrot.slane %v2331, 1
      %v2417 = vsel %vm596, %v2414, %v2416
      %v2418 = vrot.slane %v2316, 1
      %v2419 = vrot.slane %v2242, 1
      %v2420 = vsel %vm596, %v2418, %v2419
      %v2421 = vrot.slane %v2332, 1
      %v2422 = vsel %vm596, %v2419, %v2421
      %v2423 = vrot.slane %v2317, 1
      %v2424 = vrot.slane %v2245, 1
      %v2425 = vsel %vm596, %v2423, %v2424
      %v2426 = vrot.slane %v2333, 1
      %v2427 = vsel %vm596, %v2424, %v2426
      %v2428 = vrot.slane %v2318, 1
      %v2429 = vrot.slane %v2248, 1
      %v2430 = vsel %vm596, %v2428, %v2429
      %v2431 = vrot.slane %v2334, 1
      %v2432 = vsel %vm596, %v2429, %v2431
      %v2433 = vrot.slane %v2319, 1
      %v2434 = vrot.slane %v2251, 1
      %v2435 = vsel %vm596, %v2433, %v2434
      %v2436 = vrot.slane %v2335, 1
      %v2437 = vsel %vm596, %v2434, %v2436
      %v2438 = vrot.slane %v2320, 1
      %v2439 = vrot.slane %v2254, 1
      %v2440 = vsel %vm596, %v2438, %v2439
      %v2441 = vrot.slane %v2336, 1
      %v2442 = vsel %vm596, %v2439, %v2441
      %2443 = vrot.lane.b32.xlu0 %v599, 64
      %v2444 = vpop.permute.xlu0 %2443
      %2445 = vrot.lane.b32.xlu0 %v601, 64
      %v2446 = vpop.permute.xlu0 %2445
      %2447 = vrot.lane.b32.xlu0 %v2370, 64
      %v2448 = vpop.permute.xlu0 %2447
      %2449 = vrot.lane.b32.xlu0 %v2372, 64
      %v2450 = vpop.permute.xlu0 %2449
      %2451 = vrot.lane.b32.xlu0 %v2375, 64
      %v2452 = vpop.permute.xlu0 %2451
      %2453 = vrot.lane.b32.xlu0 %v2377, 64
      %v2454 = vpop.permute.xlu0 %2453
      %2455 = vrot.lane.b32.xlu0 %v2380, 64
      %v2456 = vpop.permute.xlu0 %2455
      %2457 = vrot.lane.b32.xlu0 %v2382, 64
      %v2458 = vpop.permute.xlu0 %2457
      %2459 = vrot.lane.b32.xlu0 %v2385, 64
      %v2460 = vpop.permute.xlu0 %2459
      %2461 = vrot.lane.b32.xlu0 %v2387, 64
      %v2462 = vpop.permute.xlu0 %2461
      %2463 = vrot.lane.b32.xlu0 %v2390, 64
      %v2464 = vpop.permute.xlu0 %2463
      %2465 = vrot.lane.b32.xlu0 %v2392, 64
      %v2466 = vpop.permute.xlu0 %2465
      %2467 = vrot.lane.b32.xlu0 %v2395, 64
      %v2468 = vpop.permute.xlu0 %2467
      %2469 = vrot.lane.b32.xlu0 %v2397, 64
      %v2470 = vpop.permute.xlu0 %2469
      %2471 = vrot.lane.b32.xlu0 %v2400, 64
      %v2472 = vpop.permute.xlu0 %2471
      %2473 = vrot.lane.b32.xlu0 %v2402, 64
      %v2474 = vpop.permute.xlu0 %2473
      %2475 = vrot.lane.b32.xlu0 %v2405, 64
      %v2476 = vpop.permute.xlu0 %2475
      %2477 = vrot.lane.b32.xlu0 %v2407, 64
      %v2478 = vpop.permute.xlu0 %2477
      %2479 = vrot.lane.b32.xlu0 %v2410, 64
      %v2480 = vpop.permute.xlu0 %2479
      %2481 = vrot.lane.b32.xlu0 %v2412, 64
      %v2482 = vpop.permute.xlu0 %2481
      %2483 = vrot.lane.b32.xlu0 %v2415, 64
      %v2484 = vpop.permute.xlu0 %2483
      %2485 = vrot.lane.b32.xlu0 %v2417, 64
      %v2486 = vpop.permute.xlu0 %2485
      %2487 = vrot.lane.b32.xlu0 %v2420, 64
      %v2488 = vpop.permute.xlu0 %2487
      %2489 = vrot.lane.b32.xlu0 %v2422, 64
      %v2490 = vpop.permute.xlu0 %2489
      %2491 = vrot.lane.b32.xlu0 %v2425, 64
      %v2492 = vpop.permute.xlu0 %2491
      %2493 = vrot.lane.b32.xlu0 %v2427, 64
      %v2494 = vpop.permute.xlu0 %2493
      %2495 = vrot.lane.b32.xlu0 %v2430, 64
      %v2496 = vpop.permute.xlu0 %2495
      %2497 = vrot.lane.b32.xlu0 %v2432, 64
      %v2498 = vpop.permute.xlu0 %2497
      %2499 = vrot.lane.b32.xlu0 %v2435, 64
      %v2500 = vpop.permute.xlu0 %2499
      %2501 = vrot.lane.b32.xlu0 %v2437, 64
      %v2502 = vpop.permute.xlu0 %2501
      %2503 = vrot.lane.b32.xlu0 %v2440, 64
      %v2504 = vpop.permute.xlu0 %2503
      %2505 = vrot.lane.b32.xlu0 %v2442, 64
      %v2506 = vpop.permute.xlu0 %2505
      %v2539 = vrot.slane %v2306, 2
      %v2540 = vrot.slane %v2212, 2
      %v2541 = vsel %vm773, %v2539, %v2540
      %v2542 = vrot.slane %v2322, 2
      %v2543 = vsel %vm773, %v2540, %v2542
      %v2544 = vrot.slane %v2307, 2
      %v2545 = vrot.slane %v2215, 2
      %v2546 = vsel %vm773, %v2544, %v2545
      %v2547 = vrot.slane %v2323, 2
      %v2548 = vsel %vm773, %v2545, %v2547
      %v2549 = vrot.slane %v2308, 2
      %v2550 = vrot.slane %v2218, 2
      %v2551 = vsel %vm773, %v2549, %v2550
      %v2552 = vrot.slane %v2324, 2
      %v2553 = vsel %vm773, %v2550, %v2552
      %v2554 = vrot.slane %v2309, 2
      %v2555 = vrot.slane %v2221, 2
      %v2556 = vsel %vm773, %v2554, %v2555
      %v2557 = vrot.slane %v2325, 2
      %v2558 = vsel %vm773, %v2555, %v2557
      %v2559 = vrot.slane %v2310, 2
      %v2560 = vrot.slane %v2224, 2
      %v2561 = vsel %vm773, %v2559, %v2560
      %v2562 = vrot.slane %v2326, 2
      %v2563 = vsel %vm773, %v2560, %v2562
      %v2564 = vrot.slane %v2311, 2
      %v2565 = vrot.slane %v2227, 2
      %v2566 = vsel %vm773, %v2564, %v2565
      %v2567 = vrot.slane %v2327, 2
      %v2568 = vsel %vm773, %v2565, %v2567
      %v2569 = vrot.slane %v2312, 2
      %v2570 = vrot.slane %v2230, 2
      %v2571 = vsel %vm773, %v2569, %v2570
      %v2572 = vrot.slane %v2328, 2
      %v2573 = vsel %vm773, %v2570, %v2572
      %v2574 = vrot.slane %v2313, 2
      %v2575 = vrot.slane %v2233, 2
      %v2576 = vsel %vm773, %v2574, %v2575
      %v2577 = vrot.slane %v2329, 2
      %v2578 = vsel %vm773, %v2575, %v2577
      %v2579 = vrot.slane %v2314, 2
      %v2580 = vrot.slane %v2236, 2
      %v2581 = vsel %vm773, %v2579, %v2580
      %v2582 = vrot.slane %v2330, 2
      %v2583 = vsel %vm773, %v2580, %v2582
      %v2584 = vrot.slane %v2315, 2
      %v2585 = vrot.slane %v2239, 2
      %v2586 = vsel %vm773, %v2584, %v2585
      %v2587 = vrot.slane %v2331, 2
      %v2588 = vsel %vm773, %v2585, %v2587
      %v2589 = vrot.slane %v2316, 2
      %v2590 = vrot.slane %v2242, 2
      %v2591 = vsel %vm773, %v2589, %v2590
      %v2592 = vrot.slane %v2332, 2
      %v2593 = vsel %vm773, %v2590, %v2592
      %v2594 = vrot.slane %v2317, 2
      %v2595 = vrot.slane %v2245, 2
      %v2596 = vsel %vm773, %v2594, %v2595
      %v2597 = vrot.slane %v2333, 2
      %v2598 = vsel %vm773, %v2595, %v2597
      %v2599 = vrot.slane %v2318, 2
      %v2600 = vrot.slane %v2248, 2
      %v2601 = vsel %vm773, %v2599, %v2600
      %v2602 = vrot.slane %v2334, 2
      %v2603 = vsel %vm773, %v2600, %v2602
      %v2604 = vrot.slane %v2319, 2
      %v2605 = vrot.slane %v2251, 2
      %v2606 = vsel %vm773, %v2604, %v2605
      %v2607 = vrot.slane %v2335, 2
      %v2608 = vsel %vm773, %v2605, %v2607
      %v2609 = vrot.slane %v2320, 2
      %v2610 = vrot.slane %v2254, 2
      %v2611 = vsel %vm773, %v2609, %v2610
      %v2612 = vrot.slane %v2336, 2
      %v2613 = vsel %vm773, %v2610, %v2612
      %2647 = vrot.lane.b32.xlu0 %v2306, 64
      %v2648 = vpop.permute.xlu0 %2647
      %2649 = vrot.lane.b32.xlu0 %v2212, 64
      %v2650 = vpop.permute.xlu0 %2649
      %2651 = vrot.lane.b32.xlu0 %v2307, 64
      %v2652 = vpop.permute.xlu0 %2651
      %2653 = vrot.lane.b32.xlu0 %v2215, 64
      %v2654 = vpop.permute.xlu0 %2653
      %2655 = vrot.lane.b32.xlu0 %v2308, 64
      %v2656 = vpop.permute.xlu0 %2655
      %2657 = vrot.lane.b32.xlu0 %v2218, 64
      %v2658 = vpop.permute.xlu0 %2657
      %2659 = vrot.lane.b32.xlu0 %v2309, 64
      %v2660 = vpop.permute.xlu0 %2659
      %2661 = vrot.lane.b32.xlu0 %v2221, 64
      %v2662 = vpop.permute.xlu0 %2661
      %2663 = vrot.lane.b32.xlu0 %v2310, 64
      %v2664 = vpop.permute.xlu0 %2663
      %2665 = vrot.lane.b32.xlu0 %v2224, 64
      %v2666 = vpop.permute.xlu0 %2665
      %2667 = vrot.lane.b32.xlu0 %v2311, 64
      %v2668 = vpop.permute.xlu0 %2667
      %2669 = vrot.lane.b32.xlu0 %v2227, 64
      %v2670 = vpop.permute.xlu0 %2669
      %2671 = vrot.lane.b32.xlu0 %v2312, 64
      %v2672 = vpop.permute.xlu0 %2671
      %2673 = vrot.lane.b32.xlu0 %v2230, 64
      %v2674 = vpop.permute.xlu0 %2673
      %2675 = vrot.lane.b32.xlu0 %v2313, 64
      %v2676 = vpop.permute.xlu0 %2675
      %2677 = vrot.lane.b32.xlu0 %v2233, 64
      %v2678 = vpop.permute.xlu0 %2677
      %2679 = vrot.lane.b32.xlu0 %v2314, 64
      %v2680 = vpop.permute.xlu0 %2679
      %2681 = vrot.lane.b32.xlu0 %v2236, 64
      %v2682 = vpop.permute.xlu0 %2681
      %2683 = vrot.lane.b32.xlu0 %v2315, 64
      %v2684 = vpop.permute.xlu0 %2683
      %2685 = vrot.lane.b32.xlu0 %v2239, 64
      %v2686 = vpop.permute.xlu0 %2685
      %2687 = vrot.lane.b32.xlu0 %v2316, 64
      %v2688 = vpop.permute.xlu0 %2687
      %2689 = vrot.lane.b32.xlu0 %v2242, 64
      %v2690 = vpop.permute.xlu0 %2689
      %2691 = vrot.lane.b32.xlu0 %v2317, 64
      %v2692 = vpop.permute.xlu0 %2691
      %2693 = vrot.lane.b32.xlu0 %v2245, 64
      %v2694 = vpop.permute.xlu0 %2693
      %2695 = vrot.lane.b32.xlu0 %v2318, 64
      %v2696 = vpop.permute.xlu0 %2695
      %2697 = vrot.lane.b32.xlu0 %v2248, 64
      %v2698 = vpop.permute.xlu0 %2697
      %2699 = vrot.lane.b32.xlu0 %v2319, 64
      %v2700 = vpop.permute.xlu0 %2699
      %2701 = vrot.lane.b32.xlu0 %v2251, 64
      %v2702 = vpop.permute.xlu0 %2701
      %2703 = vrot.lane.b32.xlu0 %v2320, 64
      %v2704 = vpop.permute.xlu0 %2703
      %2705 = vrot.lane.b32.xlu0 %v2254, 64
      %v2706 = vpop.permute.xlu0 %2705
      %2707 = vrot.lane.b32.xlu0 %v2321, 64
      %v2708 = vpop.permute.xlu0 %2707
      %2709 = vrot.lane.b32.xlu0 %v2257, 64
      %v2710 = vpop.permute.xlu0 %2709
      %v2744 = vrot.slane %v2321, 1
      %v2745 = vrot.slane %v2257, 1
      %v2746 = vsel %vm596, %v2744, %v2745
      %v2747 = vrot.slane %v2337, 1
      %v2748 = vsel %vm596, %v2745, %v2747
      %v2781 = vrot.slane %v2321, 2
      %v2782 = vrot.slane %v2257, 2
      %v2783 = vsel %vm773, %v2781, %v2782
      %v2784 = vrot.slane %v2337, 2
      %v2785 = vsel %vm773, %v2782, %v2784
      %2786 = vrot.lane.b32.xlu0 %v2541, 64
      %v2787 = vpop.permute.xlu0 %2786
      %2788 = vrot.lane.b32.xlu0 %v2543, 64
      %v2789 = vpop.permute.xlu0 %2788
      %2790 = vrot.lane.b32.xlu0 %v2546, 64
      %v2791 = vpop.permute.xlu0 %2790
      %2792 = vrot.lane.b32.xlu0 %v2548, 64
      %v2793 = vpop.permute.xlu0 %2792
      %2794 = vrot.lane.b32.xlu0 %v2551, 64
      %v2795 = vpop.permute.xlu0 %2794
      %2796 = vrot.lane.b32.xlu0 %v2553, 64
      %v2797 = vpop.permute.xlu0 %2796
      %2798 = vrot.lane.b32.xlu0 %v2556, 64
      %v2799 = vpop.permute.xlu0 %2798
      %2800 = vrot.lane.b32.xlu0 %v2558, 64
      %v2801 = vpop.permute.xlu0 %2800
      %2802 = vrot.lane.b32.xlu0 %v2561, 64
      %v2803 = vpop.permute.xlu0 %2802
      %2804 = vrot.lane.b32.xlu0 %v2563, 64
      %v2805 = vpop.permute.xlu0 %2804
      %2806 = vrot.lane.b32.xlu0 %v2566, 64
      %v2807 = vpop.permute.xlu0 %2806
      %2808 = vrot.lane.b32.xlu0 %v2568, 64
      %v2809 = vpop.permute.xlu0 %2808
      %2810 = vrot.lane.b32.xlu0 %v2571, 64
      %v2811 = vpop.permute.xlu0 %2810
      %2812 = vrot.lane.b32.xlu0 %v2573, 64
      %v2813 = vpop.permute.xlu0 %2812
      %2814 = vrot.lane.b32.xlu0 %v2576, 64
      %v2815 = vpop.permute.xlu0 %2814
      %2816 = vrot.lane.b32.xlu0 %v2578, 64
      %v2817 = vpop.permute.xlu0 %2816
      %2818 = vrot.lane.b32.xlu0 %v2581, 64
      %v2819 = vpop.permute.xlu0 %2818
      %2820 = vrot.lane.b32.xlu0 %v2583, 64
      %v2821 = vpop.permute.xlu0 %2820
      %2822 = vrot.lane.b32.xlu0 %v2586, 64
      %v2823 = vpop.permute.xlu0 %2822
      %2824 = vrot.lane.b32.xlu0 %v2588, 64
      %v2825 = vpop.permute.xlu0 %2824
      %2826 = vrot.lane.b32.xlu0 %v2591, 64
      %v2827 = vpop.permute.xlu0 %2826
      %2828 = vrot.lane.b32.xlu0 %v2593, 64
      %v2829 = vpop.permute.xlu0 %2828
      %2830 = vrot.lane.b32.xlu0 %v2596, 64
      %v2831 = vpop.permute.xlu0 %2830
      %2832 = vrot.lane.b32.xlu0 %v2598, 64
      %v2833 = vpop.permute.xlu0 %2832
      %2834 = vrot.lane.b32.xlu0 %v2601, 64
      %v2835 = vpop.permute.xlu0 %2834
      %2836 = vrot.lane.b32.xlu0 %v2603, 64
      %v2837 = vpop.permute.xlu0 %2836
      %2838 = vrot.lane.b32.xlu0 %v2606, 64
      %v2839 = vpop.permute.xlu0 %2838
      %2840 = vrot.lane.b32.xlu0 %v2608, 64
      %v2841 = vpop.permute.xlu0 %2840
      %2842 = vrot.lane.b32.xlu0 %v2611, 64
      %v2843 = vpop.permute.xlu0 %2842
      %2844 = vrot.lane.b32.xlu0 %v2613, 64
      %v2845 = vpop.permute.xlu0 %2844
      %2846 = vrot.lane.b32.xlu0 %v2783, 64
      %v2847 = vpop.permute.xlu0 %2846
      %2848 = vrot.lane.b32.xlu0 %v2785, 64
      %v2849 = vpop.permute.xlu0 %2848
      %2882 = vrot.lane.b32.xlu0 %v2746, 64
      %v2883 = vpop.permute.xlu0 %2882
      %2884 = vrot.lane.b32.xlu0 %v2748, 64
      %v2885 = vpop.permute.xlu0 %2884
      %v2890 = vsel %vm1769, %v530, %v2444
      %v2891 = vsel %vm1769, %v432, %v2446
      %v2892 = vsel %vm1769, %v2306, %v2448
      %v2893 = vsel %vm1769, %v2212, %v2450
      %v2894 = vsel %vm1769, %v2307, %v2452
      %v2895 = vsel %vm1769, %v2215, %v2454
      %v2896 = vsel %vm1769, %v2308, %v2456
      %v2897 = vsel %vm1769, %v2218, %v2458
      %v2898 = vsel %vm1769, %v2309, %v2460
      %v2899 = vsel %vm1769, %v2221, %v2462
      %v2900 = vsel %vm1769, %v2310, %v2464
      %v2901 = vsel %vm1769, %v2224, %v2466
      %v2902 = vsel %vm1769, %v2311, %v2468
      %v2903 = vsel %vm1769, %v2227, %v2470
      %v2904 = vsel %vm1769, %v2312, %v2472
      %v2905 = vsel %vm1769, %v2230, %v2474
      %v2906 = vsel %vm1769, %v2313, %v2476
      %v2907 = vsel %vm1769, %v2233, %v2478
      %v2908 = vsel %vm1769, %v2314, %v2480
      %v2909 = vsel %vm1769, %v2236, %v2482
      %v2910 = vsel %vm1769, %v2315, %v2484
      %v2911 = vsel %vm1769, %v2239, %v2486
      %v2912 = vsel %vm1769, %v2316, %v2488
      %v2913 = vsel %vm1769, %v2242, %v2490
      %v2914 = vsel %vm1769, %v2317, %v2492
      %v2915 = vsel %vm1769, %v2245, %v2494
      %v2916 = vsel %vm1769, %v2318, %v2496
      %v2917 = vsel %vm1769, %v2248, %v2498
      %v2918 = vsel %vm1769, %v2319, %v2500
      %v2919 = vsel %vm1769, %v2251, %v2502
      %v2920 = vsel %vm1769, %v2320, %v2504
      %v2921 = vsel %vm1769, %v2254, %v2506
      %v2922 = vsel %vm1769, %v776, %v2648
      %v2923 = vsel %vm1769, %v778, %v2650
      %v2924 = vsel %vm1769, %v2541, %v2652
      %v2925 = vsel %vm1769, %v2543, %v2654
      %v2926 = vsel %vm1769, %v2546, %v2656
      %v2927 = vsel %vm1769, %v2548, %v2658
      %v2928 = vsel %vm1769, %v2551, %v2660
      %v2929 = vsel %vm1769, %v2553, %v2662
      %v2930 = vsel %vm1769, %v2556, %v2664
      %v2931 = vsel %vm1769, %v2558, %v2666
      %v2932 = vsel %vm1769, %v2561, %v2668
      %v2933 = vsel %vm1769, %v2563, %v2670
      %v2934 = vsel %vm1769, %v2566, %v2672
      %v2935 = vsel %vm1769, %v2568, %v2674
      %v2936 = vsel %vm1769, %v2571, %v2676
      %v2937 = vsel %vm1769, %v2573, %v2678
      %v2938 = vsel %vm1769, %v2576, %v2680
      %v2939 = vsel %vm1769, %v2578, %v2682
      %v2940 = vsel %vm1769, %v2581, %v2684
      %v2941 = vsel %vm1769, %v2583, %v2686
      %v2942 = vsel %vm1769, %v2586, %v2688
      %v2943 = vsel %vm1769, %v2588, %v2690
      %v2944 = vsel %vm1769, %v2591, %v2692
      %v2945 = vsel %vm1769, %v2593, %v2694
      %v2946 = vsel %vm1769, %v2596, %v2696
      %v2947 = vsel %vm1769, %v2598, %v2698
      %v2948 = vsel %vm1769, %v2601, %v2700
      %v2949 = vsel %vm1769, %v2603, %v2702
      %v2950 = vsel %vm1769, %v2606, %v2704
      %v2951 = vsel %vm1769, %v2608, %v2706
      %v2952 = vsel %vm1769, %v2611, %v2708
      %v2953 = vsel %vm1769, %v2613, %v2710
      %v2954 = vsel %vm1769, %v2370, %v2787
      %v2955 = vsel %vm1769, %v2372, %v2789
      %v2956 = vsel %vm1769, %v2375, %v2791
      %v2957 = vsel %vm1769, %v2377, %v2793
      %v2958 = vsel %vm1769, %v2380, %v2795
      %v2959 = vsel %vm1769, %v2382, %v2797
      %v2960 = vsel %vm1769, %v2385, %v2799
      %v2961 = vsel %vm1769, %v2387, %v2801
      %v2962 = vsel %vm1769, %v2390, %v2803
      %v2963 = vsel %vm1769, %v2392, %v2805
      %v2964 = vsel %vm1769, %v2395, %v2807
      %v2965 = vsel %vm1769, %v2397, %v2809
      %v2966 = vsel %vm1769, %v2400, %v2811
      %v2967 = vsel %vm1769, %v2402, %v2813
      %v2968 = vsel %vm1769, %v2405, %v2815
      %v2969 = vsel %vm1769, %v2407, %v2817
      %v2970 = vsel %vm1769, %v2410, %v2819
      %v2971 = vsel %vm1769, %v2412, %v2821
      %v2972 = vsel %vm1769, %v2415, %v2823
      %v2973 = vsel %vm1769, %v2417, %v2825
      %v2974 = vsel %vm1769, %v2420, %v2827
      %v2975 = vsel %vm1769, %v2422, %v2829
      %v2976 = vsel %vm1769, %v2425, %v2831
      %v2977 = vsel %vm1769, %v2427, %v2833
      %v2978 = vsel %vm1769, %v2430, %v2835
      %v2979 = vsel %vm1769, %v2432, %v2837
      %v2980 = vsel %vm1769, %v2435, %v2839
      %v2981 = vsel %vm1769, %v2437, %v2841
      %v2982 = vsel %vm1769, %v2440, %v2843
      %v2983 = vsel %vm1769, %v2442, %v2845
      %v2984 = vsel %vm1769, %v2746, %v2847
      %v2985 = vsel %vm1769, %v2748, %v2849
      %v2986 = vsel %vm1769, %v2321, %v2883
      %v2987 = vsel %vm1769, %v2257, %v2885
      %v2988 = vpack.c.bf16 %v2891, %v2890
      %v2989 = vpack.c.bf16 %v2923, %v2922
      %v2990 = vpack.c.bf16 %v2955, %v2954
      %v2991 = vpack.c.bf16 %v2895, %v2894
      %v2992 = vpack.c.bf16 %v2548, %v2546
      %v2993 = vpack.c.bf16 %v2893, %v2892
      %v2994 = vpack.c.bf16 %v2925, %v2924
      %v2995 = vpack.c.bf16 %v2957, %v2956
      %v2996 = vpack.c.bf16 %v2897, %v2896
      %v2997 = vpack.c.bf16 %v2553, %v2551
      %v2998 = vpack.c.bf16 %v2927, %v2926
      %v2999 = vpack.c.bf16 %v2959, %v2958
      %v3000 = vpack.c.bf16 %v2899, %v2898
      %v3001 = vpack.c.bf16 %v2558, %v2556
      %v3002 = vpack.c.bf16 %v2929, %v2928
      %v3003 = vpack.c.bf16 %v2961, %v2960
      %v3004 = vpack.c.bf16 %v2901, %v2900
      %v3005 = vpack.c.bf16 %v2563, %v2561
      %v3006 = vpack.c.bf16 %v2931, %v2930
      %v3007 = vpack.c.bf16 %v2963, %v2962
      %v3008 = vpack.c.bf16 %v2903, %v2902
      %v3009 = vpack.c.bf16 %v2568, %v2566
      %v3010 = vpack.c.bf16 %v2933, %v2932
      %v3011 = vpack.c.bf16 %v2965, %v2964
      %v3012 = vpack.c.bf16 %v2905, %v2904
      %v3013 = vpack.c.bf16 %v2573, %v2571
      %v3014 = vpack.c.bf16 %v2935, %v2934
      %v3015 = vpack.c.bf16 %v2967, %v2966
      %v3016 = vpack.c.bf16 %v2907, %v2906
      %v3017 = vpack.c.bf16 %v2578, %v2576
      %v3018 = vpack.c.bf16 %v2937, %v2936
      %v3019 = vpack.c.bf16 %v2969, %v2968
      %v3020 = vpack.c.bf16 %v2909, %v2908
      %v3021 = vpack.c.bf16 %v2583, %v2581
      %v3022 = vpack.c.bf16 %v2939, %v2938
      %v3023 = vpack.c.bf16 %v2971, %v2970
      %v3024 = vpack.c.bf16 %v2911, %v2910
      %v3025 = vpack.c.bf16 %v2588, %v2586
      %v3026 = vpack.c.bf16 %v2941, %v2940
      %v3027 = vpack.c.bf16 %v2973, %v2972
      %v3028 = vpack.c.bf16 %v2913, %v2912
      %v3029 = vpack.c.bf16 %v2593, %v2591
      %v3030 = vpack.c.bf16 %v2943, %v2942
      %v3031 = vpack.c.bf16 %v2975, %v2974
      %v3032 = vpack.c.bf16 %v2915, %v2914
      %v3033 = vpack.c.bf16 %v2598, %v2596
      %v3034 = vpack.c.bf16 %v2945, %v2944
      %v3035 = vpack.c.bf16 %v2977, %v2976
      %v3036 = vpack.c.bf16 %v2917, %v2916
      %v3037 = vpack.c.bf16 %v2603, %v2601
      %v3038 = vpack.c.bf16 %v2947, %v2946
      %v3039 = vpack.c.bf16 %v2979, %v2978
      %v3040 = vpack.c.bf16 %v2919, %v2918
      %v3041 = vpack.c.bf16 %v2608, %v2606
      %v3042 = vpack.c.bf16 %v2949, %v2948
      %v3043 = vpack.c.bf16 %v2981, %v2980
      %v3044 = vpack.c.bf16 %v2921, %v2920
      %v3045 = vpack.c.bf16 %v2613, %v2611
      %v3046 = vpack.c.bf16 %v2951, %v2950
      %v3047 = vpack.c.bf16 %v2983, %v2982
      %v3048 = vpack.c.bf16 %v2987, %v2986
      %v3049 = vpack.c.bf16 %v2785, %v2783
      %v3050 = vpack.c.bf16 %v2953, %v2952
      %v3051 = vpack.c.bf16 %v2985, %v2984
      %v3052 = vpack.c.bf16 %v778, %v776
      %v3053 = vld [vmem:[%s3] sm:$0xf]
      %v3054 = vld [vmem:[%s3 + $0x4] sm:$0xf]
      %v3055 = vld [vmem:[%s3 + $0x8] sm:$0xf]
      %v3056 = vld [vmem:[%s3 + $0xc] sm:$0xf]
      %v3057 = vld [vmem:[%s3 + $0x10] sm:$0xf]
      %v3058 = vld [vmem:[%s3 + $0x14] sm:$0xf]
      %v3059 = vld [vmem:[%s3 + $0x18] sm:$0xf]
      %v3060 = vld [vmem:[%s3 + $0x1c] sm:$0xf]
      %v3061 = vld [vmem:[%s3 + $0x20] sm:$0xf]
      %v3062 = vld [vmem:[%s3 + $0x24] sm:$0xf]
      %v3063 = vld [vmem:[%s3 + $0x28] sm:$0xf]
      %v3064 = vld [vmem:[%s3 + $0x2c] sm:$0xf]
      %v3065 = vld [vmem:[%s3 + $0x30] sm:$0xf]
      %v3066 = vld [vmem:[%s3 + $0x34] sm:$0xf]
      %v3067 = vld [vmem:[%s3 + $0x38] sm:$0xf]
      %v3068 = vld [vmem:[%s3 + $0x3c] sm:$0xf]
      %v3069 = vld [vmem:[%s3 + $0x40] sm:$0xf]
      %v3070 = vld [vmem:[%s3 + $0x44] sm:$0xf]
      %v3071 = vld [vmem:[%s3 + $0x48] sm:$0xf]
      %v3072 = vld [vmem:[%s3 + $0x4c] sm:$0xf]
      %v3073 = vld [vmem:[%s3 + $0x50] sm:$0xf]
      %v3074 = vld [vmem:[%s3 + $0x54] sm:$0xf]
      %v3075 = vld [vmem:[%s3 + $0x58] sm:$0xf]
      %v3076 = vld [vmem:[%s3 + $0x5c] sm:$0xf]
      %v3077 = vld [vmem:[%s3 + $0x60] sm:$0xf]
      %v3078 = vld [vmem:[%s3 + $0x64] sm:$0xf]
      %v3079 = vld [vmem:[%s3 + $0x68] sm:$0xf]
      %v3080 = vld [vmem:[%s3 + $0x6c] sm:$0xf]
      %v3081 = vld [vmem:[%s3 + $0x70] sm:$0xf]
      %v3082 = vld [vmem:[%s3 + $0x74] sm:$0xf]
      %v3083 = vld [vmem:[%s3 + $0x78] sm:$0xf]
      %v3084 = vld [vmem:[%s3 + $0x7c] sm:$0xf]
      %v3085 = vld [vmem:[%s3 + $0x80] sm:$0xf]
      %v3086 = vld [vmem:[%s3 + $0x84] sm:$0xf]
      %v3087 = vld [vmem:[%s3 + $0x88] sm:$0xf]
      %v3088 = vld [vmem:[%s3 + $0x8c] sm:$0xf]
      %v3089 = vld [vmem:[%s3 + $0x90] sm:$0xf]
      %v3090 = vld [vmem:[%s3 + $0x94] sm:$0xf]
      %v3091 = vld [vmem:[%s3 + $0x98] sm:$0xf]
      %v3092 = vld [vmem:[%s3 + $0x9c] sm:$0xf]
      %v3093 = vld [vmem:[%s3 + $0xa0] sm:$0xf]
      %v3094 = vld [vmem:[%s3 + $0xa4] sm:$0xf]
      %v3095 = vld [vmem:[%s3 + $0xa8] sm:$0xf]
      %v3096 = vld [vmem:[%s3 + $0xac] sm:$0xf]
      %v3097 = vld [vmem:[%s3 + $0xb0] sm:$0xf]
      %v3098 = vld [vmem:[%s3 + $0xb4] sm:$0xf]
      %v3099 = vld [vmem:[%s3 + $0xb8] sm:$0xf]
      %v3100 = vld [vmem:[%s3 + $0xbc] sm:$0xf]
      %v3101 = vld [vmem:[%s3 + $0xc0] sm:$0xf]
      %v3102 = vld [vmem:[%s3 + $0xc4] sm:$0xf]
      %v3103 = vld [vmem:[%s3 + $0xc8] sm:$0xf]
      %v3104 = vld [vmem:[%s3 + $0xcc] sm:$0xf]
      %v3105 = vld [vmem:[%s3 + $0xd0] sm:$0xf]
      %v3106 = vld [vmem:[%s3 + $0xd4] sm:$0xf]
      %v3107 = vld [vmem:[%s3 + $0xd8] sm:$0xf]
      %v3108 = vld [vmem:[%s3 + $0xdc] sm:$0xf]
      %v3109 = vld [vmem:[%s3 + $0xe0] sm:$0xf]
      %v3110 = vld [vmem:[%s3 + $0xe4] sm:$0xf]
      %v3111 = vld [vmem:[%s3 + $0xe8] sm:$0xf]
      %v3112 = vld [vmem:[%s3 + $0xec] sm:$0xf]
      %v3113 = vld [vmem:[%s3 + $0xf0] sm:$0xf]
      %v3114 = vld [vmem:[%s3 + $0xf4] sm:$0xf]
      %v3115 = vld [vmem:[%s3 + $0xf8] sm:$0xf]
      %v3116 = vld [vmem:[%s3 + $0xfc] sm:$0xf]
      %v3117 = vld [vmem:[%s3 + $0x100] sm:$0xf]
      %v3118 = vld [vmem:[%s3 + $0x104] sm:$0xf]
      %v3119 = vld [vmem:[%s3 + $0x108] sm:$0xf]
      %v3120 = vld [vmem:[%s3 + $0x10c] sm:$0xf]
      %v3121 = vld [vmem:[%s3 + $0x110] sm:$0xf]
      %v3122 = vld [vmem:[%s3 + $0x114] sm:$0xf]
      %v3123 = vld [vmem:[%s3 + $0x118] sm:$0xf]
      %v3124 = vld [vmem:[%s3 + $0x11c] sm:$0xf]
      %v3197 = vunpack.c.l.b16 %v3053
      %v3198 = vunpack.c.l.b16 %v3054
      %v3199 = vunpack.c.l.b16 %v3055
      %v3200 = vunpack.c.l.b16 %v3056
      %v3201 = vunpack.c.l.b16 %v3057
      %v3202 = vunpack.c.l.b16 %v3058
      %v3203 = vunpack.c.l.b16 %v3059
      %v3204 = vunpack.c.l.b16 %v3060
      %v3205 = vunpack.c.l.b16 %v3061
      %v3206 = vunpack.c.l.b16 %v3062
      %v3207 = vunpack.c.l.b16 %v3063
      %v3208 = vunpack.c.l.b16 %v3064
      %v3209 = vunpack.c.l.b16 %v3065
      %v3210 = vunpack.c.l.b16 %v3066
      %v3211 = vunpack.c.l.b16 %v3067
      %v3212 = vunpack.c.l.b16 %v3068
      %v3213 = vunpack.c.l.b16 %v3069
      %v3214 = vunpack.c.l.b16 %v3070
      %v3215 = vunpack.c.l.b16 %v3071
      %v3216 = vunpack.c.l.b16 %v3072
      %v3217 = vunpack.c.l.b16 %v3073
      %v3218 = vunpack.c.l.b16 %v3074
      %v3219 = vunpack.c.l.b16 %v3075
      %v3220 = vunpack.c.l.b16 %v3076
      %v3221 = vunpack.c.l.b16 %v3077
      %v3222 = vunpack.c.l.b16 %v3078
      %v3223 = vunpack.c.l.b16 %v3079
      %v3224 = vunpack.c.l.b16 %v3080
      %v3225 = vunpack.c.l.b16 %v3081
      %v3226 = vunpack.c.l.b16 %v3082
      %v3227 = vunpack.c.l.b16 %v3083
      %v3228 = vunpack.c.l.b16 %v3084
      %v3229 = vunpack.c.l.b16 %v3085
      %v3230 = vunpack.c.l.b16 %v3086
      %v3231 = vunpack.c.l.b16 %v3087
      %v3232 = vunpack.c.l.b16 %v3088
      %v3233 = vunpack.c.l.b16 %v3089
      %v3234 = vunpack.c.l.b16 %v3090
      %v3235 = vunpack.c.l.b16 %v3091
      %v3236 = vunpack.c.l.b16 %v3092
      %v3237 = vunpack.c.l.b16 %v3093
      %v3238 = vunpack.c.l.b16 %v3094
      %v3239 = vunpack.c.l.b16 %v3095
      %v3240 = vunpack.c.l.b16 %v3096
      %v3241 = vunpack.c.l.b16 %v3097
      %v3242 = vunpack.c.l.b16 %v3098
      %v3243 = vunpack.c.l.b16 %v3099
      %v3244 = vunpack.c.l.b16 %v3100
      %v3245 = vunpack.c.l.b16 %v3101
      %v3246 = vunpack.c.l.b16 %v3102
      %v3247 = vunpack.c.l.b16 %v3103
      %v3248 = vunpack.c.l.b16 %v3104
      %v3249 = vunpack.c.l.b16 %v3105
      %v3250 = vunpack.c.l.b16 %v3106
      %v3251 = vunpack.c.l.b16 %v3107
      %v3252 = vunpack.c.l.b16 %v3108
      %v3253 = vunpack.c.l.b16 %v3109
      %v3254 = vunpack.c.l.b16 %v3110
      %v3255 = vunpack.c.l.b16 %v3111
      %v3256 = vunpack.c.l.b16 %v3112
      %v3257 = vunpack.c.l.b16 %v3113
      %v3258 = vunpack.c.l.b16 %v3114
      %v3259 = vunpack.c.l.b16 %v3115
      %v3260 = vunpack.c.l.b16 %v3116
      %v3261 = vunpack.c.l.b16 %v3117
      %v3262 = vunpack.c.l.b16 %v3118
      %v3263 = vunpack.c.l.b16 %v3119
      %v3264 = vunpack.c.l.b16 %v3120
      %v3265 = vunpack.c.l.b16 %v3121
      %v3266 = vunpack.c.l.b16 %v3122
      %v3267 = vunpack.c.l.b16 %v3123
      %v3268 = vunpack.c.l.b16 %v3124
      %v3269 = vpack.c.b16 %v3198, %v3197
      %v3270 = vpack.c.b16 %v3200, %v3199
      %v3271 = vpack.c.b16 %v3202, %v3201
      %v3272 = vpack.c.b16 %v3204, %v3203
      %v3273 = vpack.c.b16 %v3206, %v3205
      %v3274 = vpack.c.b16 %v3208, %v3207
      %v3275 = vpack.c.b16 %v3210, %v3209
      %v3276 = vpack.c.b16 %v3212, %v3211
      %v3277 = vpack.c.b16 %v3214, %v3213
      %v3278 = vpack.c.b16 %v3216, %v3215
      %v3279 = vpack.c.b16 %v3218, %v3217
      %v3280 = vpack.c.b16 %v3220, %v3219
      %v3281 = vpack.c.b16 %v3222, %v3221
      %v3282 = vpack.c.b16 %v3224, %v3223
      %v3283 = vpack.c.b16 %v3226, %v3225
      %v3284 = vpack.c.b16 %v3228, %v3227
      %v3285 = vpack.c.b16 %v3230, %v3229
      %v3286 = vpack.c.b16 %v3232, %v3231
      %v3287 = vpack.c.b16 %v3234, %v3233
      %v3288 = vpack.c.b16 %v3236, %v3235
      %v3289 = vpack.c.b16 %v3238, %v3237
      %v3290 = vpack.c.b16 %v3240, %v3239
      %v3291 = vpack.c.b16 %v3242, %v3241
      %v3292 = vpack.c.b16 %v3244, %v3243
      %v3293 = vpack.c.b16 %v3246, %v3245
      %v3294 = vpack.c.b16 %v3248, %v3247
      %v3295 = vpack.c.b16 %v3250, %v3249
      %v3296 = vpack.c.b16 %v3252, %v3251
      %v3297 = vpack.c.b16 %v3254, %v3253
      %v3298 = vpack.c.b16 %v3256, %v3255
      %v3299 = vpack.c.b16 %v3258, %v3257
      %v3300 = vpack.c.b16 %v3260, %v3259
      %v3301 = vpack.c.b16 %v3262, %v3261
      %v3302 = vpack.c.b16 %v3264, %v3263
      %v3303 = vpack.c.b16 %v3266, %v3265
      %v3304 = vpack.c.b16 %v3268, %v3267
      %v3342 = vsel %vm1769, %v2992, 0
      %v3345 = vsel %vm1769, %v2997, 0
      %v3348 = vsel %vm1769, %v3001, 0
      %v3351 = vsel %vm1769, %v3005, 0
      %v3354 = vsel %vm1769, %v3009, 0
      %v3357 = vsel %vm1769, %v3013, 0
      %v3360 = vsel %vm1769, %v3017, 0
      %v3363 = vsel %vm1769, %v3021, 0
      %v3366 = vsel %vm1769, %v3025, 0
      %v3369 = vsel %vm1769, %v3029, 0
      %v3372 = vsel %vm1769, %v3033, 0
      %v3375 = vsel %vm1769, %v3037, 0
      %v3378 = vsel %vm1769, %v3041, 0
      %v3381 = vsel %vm1769, %v3045, 0
      %v3384 = vsel %vm1769, %v3049, 0
      %v3387 = vsel %vm1769, %v3052, 0
      %3389 = vmatprep.subr.bf16.mxu0 0
      %3390 = vmatpush1.bf16.msra.mxu0 %v3269
      %3391 = vmatprep.subr.bf16.mxu0 0
      %3392 = vmatpush1.bf16.msra.mxu0 %v3270
      %3393 = vmatprep.subr.bf16.mxu0 0
      %3394 = vmatpush1.bf16.msra.mxu0 %v3271
      %3395 = vmatprep.subr.bf16.mxu0 0
      %3396 = vmatpush1.bf16.msra.mxu0 %v3272
      %3397 = vmatprep.subr.bf16.mxu0 0
      %3398 = vmatpush1.bf16.msra.mxu0 %v3273
      %3399 = vmatprep.subr.bf16.mxu0 0
      %3400 = vmatpush1.bf16.msra.mxu0 %v3274
      %3401 = vmatprep.subr.bf16.mxu0 0
      %3402 = vmatpush1.bf16.msra.mxu0 %v3275
      %3403 = vmatprep.subr.bf16.mxu0 0
      %3404 = vmatpush1.bf16.msra.mxu0 %v3276
      %3405 = vmatprep.subr.bf16.mxu0 0
      %3406 = vmatpush1.bf16.msra.mxu0 %v3277
      %3407 = vmatprep.subr.bf16.mxu0 0
      %3408 = vmatpush1.bf16.msra.mxu0 %v3278
      %3409 = vmatprep.subr.bf16.mxu0 0
      %3410 = vmatpush1.bf16.msra.mxu0 %v3279
      %3411 = vmatprep.subr.bf16.mxu0 0
      %3412 = vmatpush1.bf16.msra.mxu0 %v3280
      %3413 = vmatprep.subr.bf16.mxu0 0
      %3414 = vmatpush1.bf16.msra.mxu0 %v3281
      %3415 = vmatprep.subr.bf16.mxu0 0
      %3416 = vmatpush1.bf16.msra.mxu0 %v3282
      %3417 = vmatprep.subr.bf16.mxu0 0
      %3418 = vmatpush1.bf16.msra.mxu0 %v3283
      %3419 = vmatprep.subr.bf16.mxu0 0
      %3420 = vmatpush1.bf16.msra.mxu0 %v3284
      %3421 = vmatprep.mubr.bf16.mxu0 %v2989
      %3422 = vmatmul.mubr.bf16.gmra.mrb[0].mxu0 %v2988
      %v3423 = vpop.f32.mrb[0].mxu0
      %v3424 = vadd.f32 0.0, %v3423
      %v3425 = vpop.f32.mrb[0].mxu0
      %v3426 = vpop.f32.mrb[0].mxu0
      %v3427 = vadd.f32 0.0, %v3426
      %v3428 = vpop.f32.mrb[0].mxu0
      %3429 = vmatprep.mubr.bf16.mxu0 %v2994
      %3430 = vmatmul.mubr.bf16.gmra.mrb[0].mxu0 %v2993
      %v3431 = vpop.f32.mrb[0].mxu0
      %v3432 = vadd.f32 0.0, %v3431
      %v3433 = vpop.f32.mrb[0].mxu0
      %v3434 = vpop.f32.mrb[0].mxu0
      %v3435 = vadd.f32 0.0, %v3434
      %v3436 = vpop.f32.mrb[0].mxu0
      %3437 = vmatprep.mubr.bf16.mxu0 %v2998
      %3438 = vmatmul.mubr.bf16.gmra.mrb[0].mxu0 %v2991
      %v3439 = vpop.f32.mrb[0].mxu0
      %v3440 = vadd.f32 0.0, %v3439
      %v3441 = vpop.f32.mrb[0].mxu0
      %v3442 = vpop.f32.mrb[0].mxu0
      %v3443 = vadd.f32 0.0, %v3442
      %v3444 = vpop.f32.mrb[0].mxu0
      %3445 = vmatprep.mubr.bf16.mxu0 %v3002
      %3446 = vmatmul.mubr.bf16.gmra.mrb[0].mxu0 %v2996
      %v3447 = vpop.f32.mrb[0].mxu0
      %v3448 = vadd.f32 0.0, %v3447
      %v3449 = vpop.f32.mrb[0].mxu0
      %v3450 = vpop.f32.mrb[0].mxu0
      %v3451 = vadd.f32 0.0, %v3450
      %v3452 = vpop.f32.mrb[0].mxu0
      %3453 = vmatprep.mubr.bf16.mxu0 %v3006
      %3454 = vmatmul.mubr.bf16.gmra.mrb[0].mxu0 %v3000
      %v3455 = vpop.f32.mrb[0].mxu0
      %v3456 = vadd.f32 0.0, %v3455
      %v3457 = vpop.f32.mrb[0].mxu0
      %v3458 = vpop.f32.mrb[0].mxu0
      %v3459 = vadd.f32 0.0, %v3458
      %v3460 = vpop.f32.mrb[0].mxu0
      %3461 = vmatprep.mubr.bf16.mxu0 %v3010
      %3462 = vmatmul.mubr.bf16.gmra.mrb[0].mxu0 %v3004
      %v3463 = vpop.f32.mrb[0].mxu0
      %v3464 = vadd.f32 0.0, %v3463
      %v3465 = vpop.f32.mrb[0].mxu0
      %v3466 = vpop.f32.mrb[0].mxu0
      %v3467 = vadd.f32 0.0, %v3466
      %v3468 = vpop.f32.mrb[0].mxu0
      %3469 = vmatprep.mubr.bf16.mxu0 %v3014
      %3470 = vmatmul.mubr.bf16.gmra.mrb[0].mxu0 %v3008
      %v3471 = vpop.f32.mrb[0].mxu0
      %v3472 = vadd.f32 0.0, %v3471
      %v3473 = vpop.f32.mrb[0].mxu0
      %v3474 = vpop.f32.mrb[0].mxu0
      %v3475 = vadd.f32 0.0, %v3474
      %v3476 = vpop.f32.mrb[0].mxu0
      %3477 = vmatprep.mubr.bf16.mxu0 %v3018
      %3478 = vmatmul.mubr.bf16.gmra.mrb[0].mxu0 %v3012
      %v3479 = vpop.f32.mrb[0].mxu0
      %v3480 = vadd.f32 0.0, %v3479
      %v3481 = vpop.f32.mrb[0].mxu0
      %v3482 = vpop.f32.mrb[0].mxu0
      %v3483 = vadd.f32 0.0, %v3482
      %v3484 = vpop.f32.mrb[0].mxu0
      %3485 = vmatprep.mubr.bf16.mxu0 %v3022
      %3486 = vmatmul.mubr.bf16.gmra.mrb[0].mxu0 %v3016
      %v3487 = vpop.f32.mrb[0].mxu0
      %v3488 = vadd.f32 0.0, %v3487
      %v3489 = vpop.f32.mrb[0].mxu0
      %v3490 = vpop.f32.mrb[0].mxu0
      %v3491 = vadd.f32 0.0, %v3490
      %v3492 = vpop.f32.mrb[0].mxu0
      %3493 = vmatprep.mubr.bf16.mxu0 %v3026
      %3494 = vmatmul.mubr.bf16.gmra.mrb[0].mxu0 %v3020
      %v3495 = vpop.f32.mrb[0].mxu0
      %v3496 = vadd.f32 0.0, %v3495
      %v3497 = vpop.f32.mrb[0].mxu0
      %v3498 = vpop.f32.mrb[0].mxu0
      %v3499 = vadd.f32 0.0, %v3498
      %v3500 = vpop.f32.mrb[0].mxu0
      %3501 = vmatprep.mubr.bf16.mxu0 %v3030
      %3502 = vmatmul.mubr.bf16.gmra.mrb[0].mxu0 %v3024
      %v3503 = vpop.f32.mrb[0].mxu0
      %v3504 = vadd.f32 0.0, %v3503
      %v3505 = vpop.f32.mrb[0].mxu0
      %v3506 = vpop.f32.mrb[0].mxu0
      %v3507 = vadd.f32 0.0, %v3506
      %v3508 = vpop.f32.mrb[0].mxu0
      %3509 = vmatprep.mubr.bf16.mxu0 %v3034
      %3510 = vmatmul.mubr.bf16.gmra.mrb[0].mxu0 %v3028
      %v3511 = vpop.f32.mrb[0].mxu0
      %v3512 = vadd.f32 0.0, %v3511
      %v3513 = vpop.f32.mrb[0].mxu0
      %v3514 = vpop.f32.mrb[0].mxu0
      %v3515 = vadd.f32 0.0, %v3514
      %v3516 = vpop.f32.mrb[0].mxu0
      %3517 = vmatprep.mubr.bf16.mxu0 %v3038
      %3518 = vmatmul.mubr.bf16.gmra.mrb[0].mxu0 %v3032
      %v3519 = vpop.f32.mrb[0].mxu0
      %v3520 = vadd.f32 0.0, %v3519
      %v3521 = vpop.f32.mrb[0].mxu0
      %v3522 = vpop.f32.mrb[0].mxu0
      %v3523 = vadd.f32 0.0, %v3522
      %v3524 = vpop.f32.mrb[0].mxu0
      %3525 = vmatprep.mubr.bf16.mxu0 %v3042
      %3526 = vmatmul.mubr.bf16.gmra.mrb[0].mxu0 %v3036
      %v3527 = vpop.f32.mrb[0].mxu0
      %v3528 = vadd.f32 0.0, %v3527
      %v3529 = vpop.f32.mrb[0].mxu0
      %v3530 = vpop.f32.mrb[0].mxu0
      %v3531 = vadd.f32 0.0, %v3530
      %v3532 = vpop.f32.mrb[0].mxu0
      %3533 = vmatprep.mubr.bf16.mxu0 %v3046
      %3534 = vmatmul.mubr.bf16.gmra.mrb[0].mxu0 %v3040
      %v3535 = vpop.f32.mrb[0].mxu0
      %v3536 = vadd.f32 0.0, %v3535
      %v3537 = vpop.f32.mrb[0].mxu0
      %v3538 = vpop.f32.mrb[0].mxu0
      %v3539 = vadd.f32 0.0, %v3538
      %v3540 = vpop.f32.mrb[0].mxu0
      %3541 = vmatprep.mubr.bf16.mxu0 %v3050
      %3542 = vmatmul.mubr.bf16.gmra.mrb[0].mxu0 %v3044
      %v3543 = vpop.f32.mrb[0].mxu0
      %v3544 = vadd.f32 0.0, %v3543
      %v3545 = vpop.f32.mrb[0].mxu0
      %v3546 = vpop.f32.mrb[0].mxu0
      %v3547 = vadd.f32 0.0, %v3546
      %v3548 = vpop.f32.mrb[0].mxu0
      %3549 = vdwg.mxu0
      %3550 = vmatprep.subr.bf16.mxu0 0
      %3551 = vmatpush1.bf16.msra.mxu0 %v3285
      %3552 = vmatprep.subr.bf16.mxu0 0
      %3553 = vmatpush1.bf16.msra.mxu0 %v3286
      %3554 = vmatprep.subr.bf16.mxu0 0
      %3555 = vmatpush1.bf16.msra.mxu0 %v3287
      %3556 = vmatprep.subr.bf16.mxu0 0
      %3557 = vmatpush1.bf16.msra.mxu0 %v3288
      %3558 = vmatprep.subr.bf16.mxu0 0
      %3559 = vmatpush1.bf16.msra.mxu0 %v3289
      %3560 = vmatprep.subr.bf16.mxu0 0
      %3561 = vmatpush1.bf16.msra.mxu0 %v3290
      %3562 = vmatprep.subr.bf16.mxu0 0
      %3563 = vmatpush1.bf16.msra.mxu0 %v3291
      %3564 = vmatprep.subr.bf16.mxu0 0
      %3565 = vmatpush1.bf16.msra.mxu0 %v3292
      %3566 = vmatprep.subr.bf16.mxu0 0
      %3567 = vmatpush1.bf16.msra.mxu0 %v3293
      %3568 = vmatprep.subr.bf16.mxu0 0
      %3569 = vmatpush1.bf16.msra.mxu0 %v3294
      %3570 = vmatprep.subr.bf16.mxu0 0
      %3571 = vmatpush1.bf16.msra.mxu0 %v3295
      %3572 = vmatprep.subr.bf16.mxu0 0
      %3573 = vmatpush1.bf16.msra.mxu0 %v3296
      %3574 = vmatprep.subr.bf16.mxu0 0
      %3575 = vmatpush1.bf16.msra.mxu0 %v3297
      %3576 = vmatprep.subr.bf16.mxu0 0
      %3577 = vmatpush1.bf16.msra.mxu0 %v3298
      %3578 = vmatprep.subr.bf16.mxu0 0
      %3579 = vmatpush1.bf16.msra.mxu0 %v3299
      %3580 = vmatprep.subr.bf16.mxu0 0
      %3581 = vmatpush1.bf16.msra.mxu0 %v3300
      %3582 = vmatprep.mubr.bf16.mxu0 %v2991
      %3583 = vmatmul.mubr.bf16.gmra.mrb[0].mxu0 %v2990
      %v3584 = vpop.f32.mrb[0].mxu0
      %v3585 = vadd.f32 %v3424, %v3584
      %v3586 = vpop.f32.mrb[0].mxu0
      %v3587 = vpop.f32.mrb[0].mxu0
      %v3588 = vadd.f32 %v3427, %v3587
      %v3589 = vpop.f32.mrb[0].mxu0
      %3590 = vmatprep.mubr.bf16.mxu0 %v2996
      %3591 = vmatmul.mubr.bf16.gmra.mrb[0].mxu0 %v2995
      %v3592 = vpop.f32.mrb[0].mxu0
      %v3593 = vadd.f32 %v3432, %v3592
      %v3594 = vpop.f32.mrb[0].mxu0
      %v3595 = vpop.f32.mrb[0].mxu0
      %v3596 = vadd.f32 %v3435, %v3595
      %v3597 = vpop.f32.mrb[0].mxu0
      %3598 = vmatprep.mubr.bf16.mxu0 %v3000
      %3599 = vmatmul.mubr.bf16.gmra.mrb[0].mxu0 %v2999
      %v3600 = vpop.f32.mrb[0].mxu0
      %v3601 = vadd.f32 %v3440, %v3600
      %v3602 = vpop.f32.mrb[0].mxu0
      %v3603 = vpop.f32.mrb[0].mxu0
      %v3604 = vadd.f32 %v3443, %v3603
      %v3605 = vpop.f32.mrb[0].mxu0
      %3606 = vmatprep.mubr.bf16.mxu0 %v3004
      %3607 = vmatmul.mubr.bf16.gmra.mrb[0].mxu0 %v3003
      %v3608 = vpop.f32.mrb[0].mxu0
      %v3609 = vadd.f32 %v3448, %v3608
      %v3610 = vpop.f32.mrb[0].mxu0
      %v3611 = vpop.f32.mrb[0].mxu0
      %v3612 = vadd.f32 %v3451, %v3611
      %v3613 = vpop.f32.mrb[0].mxu0
      %3614 = vmatprep.mubr.bf16.mxu0 %v3008
      %3615 = vmatmul.mubr.bf16.gmra.mrb[0].mxu0 %v3007
      %v3616 = vpop.f32.mrb[0].mxu0
      %v3617 = vadd.f32 %v3456, %v3616
      %v3618 = vpop.f32.mrb[0].mxu0
      %v3619 = vpop.f32.mrb[0].mxu0
      %v3620 = vadd.f32 %v3459, %v3619
      %v3621 = vpop.f32.mrb[0].mxu0
      %3622 = vmatprep.mubr.bf16.mxu0 %v3012
      %3623 = vmatmul.mubr.bf16.gmra.mrb[0].mxu0 %v3011
      %v3624 = vpop.f32.mrb[0].mxu0
      %v3625 = vadd.f32 %v3464, %v3624
      %v3626 = vpop.f32.mrb[0].mxu0
      %v3627 = vpop.f32.mrb[0].mxu0
      %v3628 = vadd.f32 %v3467, %v3627
      %v3629 = vpop.f32.mrb[0].mxu0
      %3630 = vmatprep.mubr.bf16.mxu0 %v3016
      %3631 = vmatmul.mubr.bf16.gmra.mrb[0].mxu0 %v3015
      %v3632 = vpop.f32.mrb[0].mxu0
      %v3633 = vadd.f32 %v3472, %v3632
      %v3634 = vpop.f32.mrb[0].mxu0
      %v3635 = vpop.f32.mrb[0].mxu0
      %v3636 = vadd.f32 %v3475, %v3635
      %v3637 = vpop.f32.mrb[0].mxu0
      %3638 = vmatprep.mubr.bf16.mxu0 %v3020
      %3639 = vmatmul.mubr.bf16.gmra.mrb[0].mxu0 %v3019
      %v3640 = vpop.f32.mrb[0].mxu0
      %v3641 = vadd.f32 %v3480, %v3640
      %v3642 = vpop.f32.mrb[0].mxu0
      %v3643 = vpop.f32.mrb[0].mxu0
      %v3644 = vadd.f32 %v3483, %v3643
      %v3645 = vpop.f32.mrb[0].mxu0
      %3646 = vmatprep.mubr.bf16.mxu0 %v3024
      %3647 = vmatmul.mubr.bf16.gmra.mrb[0].mxu0 %v3023
      %v3648 = vpop.f32.mrb[0].mxu0
      %v3649 = vadd.f32 %v3488, %v3648
      %v3650 = vpop.f32.mrb[0].mxu0
      %v3651 = vpop.f32.mrb[0].mxu0
      %v3652 = vadd.f32 %v3491, %v3651
      %v3653 = vpop.f32.mrb[0].mxu0
      %3654 = vmatprep.mubr.bf16.mxu0 %v3028
      %3655 = vmatmul.mubr.bf16.gmra.mrb[0].mxu0 %v3027
      %v3656 = vpop.f32.mrb[0].mxu0
      %v3657 = vadd.f32 %v3496, %v3656
      %v3658 = vpop.f32.mrb[0].mxu0
      %v3659 = vpop.f32.mrb[0].mxu0
      %v3660 = vadd.f32 %v3499, %v3659
      %v3661 = vpop.f32.mrb[0].mxu0
      %3662 = vmatprep.mubr.bf16.mxu0 %v3032
      %3663 = vmatmul.mubr.bf16.gmra.mrb[0].mxu0 %v3031
      %v3664 = vpop.f32.mrb[0].mxu0
      %v3665 = vadd.f32 %v3504, %v3664
      %v3666 = vpop.f32.mrb[0].mxu0
      %v3667 = vpop.f32.mrb[0].mxu0
      %v3668 = vadd.f32 %v3507, %v3667
      %v3669 = vpop.f32.mrb[0].mxu0
      %3670 = vmatprep.mubr.bf16.mxu0 %v3036
      %3671 = vmatmul.mubr.bf16.gmra.mrb[0].mxu0 %v3035
      %v3672 = vpop.f32.mrb[0].mxu0
      %v3673 = vadd.f32 %v3512, %v3672
      %v3674 = vpop.f32.mrb[0].mxu0
      %v3675 = vpop.f32.mrb[0].mxu0
      %v3676 = vadd.f32 %v3515, %v3675
      %v3677 = vpop.f32.mrb[0].mxu0
      %3678 = vmatprep.mubr.bf16.mxu0 %v3040
      %3679 = vmatmul.mubr.bf16.gmra.mrb[0].mxu0 %v3039
      %v3680 = vpop.f32.mrb[0].mxu0
      %v3681 = vadd.f32 %v3520, %v3680
      %v3682 = vpop.f32.mrb[0].mxu0
      %v3683 = vpop.f32.mrb[0].mxu0
      %v3684 = vadd.f32 %v3523, %v3683
      %v3685 = vpop.f32.mrb[0].mxu0
      %3686 = vmatprep.mubr.bf16.mxu0 %v3044
      %3687 = vmatmul.mubr.bf16.gmra.mrb[0].mxu0 %v3043
      %v3688 = vpop.f32.mrb[0].mxu0
      %v3689 = vadd.f32 %v3528, %v3688
      %v3690 = vpop.f32.mrb[0].mxu0
      %v3691 = vpop.f32.mrb[0].mxu0
      %v3692 = vadd.f32 %v3531, %v3691
      %v3693 = vpop.f32.mrb[0].mxu0
      %3694 = vmatprep.mubr.bf16.mxu0 %v3048
      %3695 = vmatmul.mubr.bf16.gmra.mrb[0].mxu0 %v3047
      %v3696 = vpop.f32.mrb[0].mxu0
      %v3697 = vadd.f32 %v3536, %v3696
      %v3698 = vpop.f32.mrb[0].mxu0
      %v3699 = vpop.f32.mrb[0].mxu0
      %v3700 = vadd.f32 %v3539, %v3699
      %v3701 = vpop.f32.mrb[0].mxu0
      %3702 = vmatprep.mubr.bf16.mxu0 %v2988
      %3703 = vmatmul.mubr.bf16.gmra.mrb[0].mxu0 %v3051
      %v3704 = vpop.f32.mrb[0].mxu0
      %v3705 = vadd.f32 %v3544, %v3704
      %v3706 = vpop.f32.mrb[0].mxu0
      %v3707 = vpop.f32.mrb[0].mxu0
      %v3708 = vadd.f32 %v3547, %v3707
      %v3709 = vpop.f32.mrb[0].mxu0
      %3710 = vdwg.mxu0
      %3711 = vmatprep.subr.bf16.mxu0 0
      %3712 = vmatpush1.bf16.msra.mxu0 %v3301
      %3713 = vmatprep.subr.bf16.mxu0 0
      %3714 = vmatpush1.bf16.msra.mxu0 %v3302
      %3715 = vmatprep.subr.bf16.mxu0 0
      %3716 = vmatpush1.bf16.msra.mxu0 %v3303
      %3717 = vmatprep.subr.bf16.mxu0 0
      %3718 = vmatpush1.bf16.msra.mxu0 %v3304
      %3719 = vmatprep.subr.bf16.mxu0 0
      %3720 = vmatpush1.bf16.msra.mxu0 0
      %3721 = vmatprep.subr.bf16.mxu0 0
      %3722 = vmatpush1.bf16.msra.mxu0 0
      %3723 = vmatprep.subr.bf16.mxu0 0
      %3724 = vmatpush1.bf16.msra.mxu0 0
      %3725 = vmatprep.subr.bf16.mxu0 0
      %3726 = vmatpush1.bf16.msra.mxu0 0
      %3727 = vmatprep.subr.bf16.mxu0 0
      %3728 = vmatpush1.bf16.msra.mxu0 0
      %3729 = vmatprep.subr.bf16.mxu0 0
      %3730 = vmatpush1.bf16.msra.mxu0 0
      %3731 = vmatprep.subr.bf16.mxu0 0
      %3732 = vmatpush1.bf16.msra.mxu0 0
      %3733 = vmatprep.subr.bf16.mxu0 0
      %3734 = vmatpush1.bf16.msra.mxu0 0
      %3735 = vmatprep.subr.bf16.mxu0 0
      %3736 = vmatpush1.bf16.msra.mxu0 0
      %3737 = vmatprep.subr.bf16.mxu0 0
      %3738 = vmatpush1.bf16.msra.mxu0 0
      %3739 = vmatprep.subr.bf16.mxu0 0
      %3740 = vmatpush1.bf16.msra.mxu0 0
      %3741 = vmatprep.subr.bf16.mxu0 0
      %3742 = vmatpush1.bf16.msra.mxu0 0
      %3743 = vmatprep.mubr.bf16.mxu0 0
      %3744 = vmatmul.mubr.bf16.gmra.mrb[0].mxu0 %v3342
      %v3745 = vpop.f32.mrb[0].mxu0
      %v3746 = vadd.f32 %v3585, %v3745
      %v3747 = vpop.f32.mrb[0].mxu0
      %v3748 = vpop.f32.mrb[0].mxu0
      %v3749 = vadd.f32 %v3588, %v3748
      %v3750 = vpop.f32.mrb[0].mxu0
      %3751 = vmatprep.mubr.bf16.mxu0 0
      %3752 = vmatmul.mubr.bf16.gmra.mrb[0].mxu0 %v3345
      %v3753 = vpop.f32.mrb[0].mxu0
      %v3754 = vadd.f32 %v3593, %v3753
      %v3755 = vpop.f32.mrb[0].mxu0
      %v3756 = vpop.f32.mrb[0].mxu0
      %v3757 = vadd.f32 %v3596, %v3756
      %v3758 = vpop.f32.mrb[0].mxu0
      %3759 = vmatprep.mubr.bf16.mxu0 0
      %3760 = vmatmul.mubr.bf16.gmra.mrb[0].mxu0 %v3348
      %v3761 = vpop.f32.mrb[0].mxu0
      %v3762 = vadd.f32 %v3601, %v3761
      %v3763 = vpop.f32.mrb[0].mxu0
      %v3764 = vpop.f32.mrb[0].mxu0
      %v3765 = vadd.f32 %v3604, %v3764
      %v3766 = vpop.f32.mrb[0].mxu0
      %3767 = vmatprep.mubr.bf16.mxu0 0
      %3768 = vmatmul.mubr.bf16.gmra.mrb[0].mxu0 %v3351
      %v3769 = vpop.f32.mrb[0].mxu0
      %v3770 = vadd.f32 %v3609, %v3769
      %v3771 = vpop.f32.mrb[0].mxu0
      %v3772 = vpop.f32.mrb[0].mxu0
      %v3773 = vadd.f32 %v3612, %v3772
      %v3774 = vpop.f32.mrb[0].mxu0
      %3775 = vmatprep.mubr.bf16.mxu0 0
      %3776 = vmatmul.mubr.bf16.gmra.mrb[0].mxu0 %v3354
      %v3777 = vpop.f32.mrb[0].mxu0
      %v3778 = vadd.f32 %v3617, %v3777
      %v3779 = vpop.f32.mrb[0].mxu0
      %v3780 = vpop.f32.mrb[0].mxu0
      %v3781 = vadd.f32 %v3620, %v3780
      %v3782 = vpop.f32.mrb[0].mxu0
      %3783 = vmatprep.mubr.bf16.mxu0 0
      %3784 = vmatmul.mubr.bf16.gmra.mrb[0].mxu0 %v3357
      %v3785 = vpop.f32.mrb[0].mxu0
      %v3786 = vadd.f32 %v3625, %v3785
      %v3787 = vpop.f32.mrb[0].mxu0
      %v3788 = vpop.f32.mrb[0].mxu0
      %v3789 = vadd.f32 %v3628, %v3788
      %v3790 = vpop.f32.mrb[0].mxu0
      %3791 = vmatprep.mubr.bf16.mxu0 0
      %3792 = vmatmul.mubr.bf16.gmra.mrb[0].mxu0 %v3360
      %v3793 = vpop.f32.mrb[0].mxu0
      %v3794 = vadd.f32 %v3633, %v3793
      %v3795 = vpop.f32.mrb[0].mxu0
      %v3796 = vpop.f32.mrb[0].mxu0
      %v3797 = vadd.f32 %v3636, %v3796
      %v3798 = vpop.f32.mrb[0].mxu0
      %3799 = vmatprep.mubr.bf16.mxu0 0
      %3800 = vmatmul.mubr.bf16.gmra.mrb[0].mxu0 %v3363
      %v3801 = vpop.f32.mrb[0].mxu0
      %v3802 = vadd.f32 %v3641, %v3801
      %v3803 = vpop.f32.mrb[0].mxu0
      %v3804 = vpop.f32.mrb[0].mxu0
      %v3805 = vadd.f32 %v3644, %v3804
      %v3806 = vpop.f32.mrb[0].mxu0
      %3807 = vmatprep.mubr.bf16.mxu0 0
      %3808 = vmatmul.mubr.bf16.gmra.mrb[0].mxu0 %v3366
      %v3809 = vpop.f32.mrb[0].mxu0
      %v3810 = vadd.f32 %v3649, %v3809
      %v3811 = vpop.f32.mrb[0].mxu0
      %v3812 = vpop.f32.mrb[0].mxu0
      %v3813 = vadd.f32 %v3652, %v3812
      %v3814 = vpop.f32.mrb[0].mxu0
      %3815 = vmatprep.mubr.bf16.mxu0 0
      %3816 = vmatmul.mubr.bf16.gmra.mrb[0].mxu0 %v3369
      %v3817 = vpop.f32.mrb[0].mxu0
      %v3818 = vadd.f32 %v3657, %v3817
      %v3819 = vpop.f32.mrb[0].mxu0
      %v3820 = vpop.f32.mrb[0].mxu0
      %v3821 = vadd.f32 %v3660, %v3820
      %v3822 = vpop.f32.mrb[0].mxu0
      %3823 = vmatprep.mubr.bf16.mxu0 0
      %3824 = vmatmul.mubr.bf16.gmra.mrb[0].mxu0 %v3372
      %v3825 = vpop.f32.mrb[0].mxu0
      %v3826 = vadd.f32 %v3665, %v3825
      %v3827 = vpop.f32.mrb[0].mxu0
      %v3828 = vpop.f32.mrb[0].mxu0
      %v3829 = vadd.f32 %v3668, %v3828
      %v3830 = vpop.f32.mrb[0].mxu0
      %3831 = vmatprep.mubr.bf16.mxu0 0
      %3832 = vmatmul.mubr.bf16.gmra.mrb[0].mxu0 %v3375
      %v3833 = vpop.f32.mrb[0].mxu0
      %v3834 = vadd.f32 %v3673, %v3833
      %v3835 = vpop.f32.mrb[0].mxu0
      %v3836 = vpop.f32.mrb[0].mxu0
      %v3837 = vadd.f32 %v3676, %v3836
      %v3838 = vpop.f32.mrb[0].mxu0
      %3839 = vmatprep.mubr.bf16.mxu0 0
      %3840 = vmatmul.mubr.bf16.gmra.mrb[0].mxu0 %v3378
      %v3841 = vpop.f32.mrb[0].mxu0
      %v3842 = vadd.f32 %v3681, %v3841
      %v3843 = vpop.f32.mrb[0].mxu0
      %v3844 = vpop.f32.mrb[0].mxu0
      %v3845 = vadd.f32 %v3684, %v3844
      %v3846 = vpop.f32.mrb[0].mxu0
      %3847 = vmatprep.mubr.bf16.mxu0 0
      %3848 = vmatmul.mubr.bf16.gmra.mrb[0].mxu0 %v3381
      %v3849 = vpop.f32.mrb[0].mxu0
      %v3850 = vadd.f32 %v3689, %v3849
      %v3851 = vpop.f32.mrb[0].mxu0
      %v3852 = vpop.f32.mrb[0].mxu0
      %v3853 = vadd.f32 %v3692, %v3852
      %v3854 = vpop.f32.mrb[0].mxu0
      %3855 = vmatprep.mubr.bf16.mxu0 0
      %3856 = vmatmul.mubr.bf16.gmra.mrb[0].mxu0 %v3384
      %v3857 = vpop.f32.mrb[0].mxu0
      %v3858 = vadd.f32 %v3697, %v3857
      %v3859 = vpop.f32.mrb[0].mxu0
      %v3860 = vpop.f32.mrb[0].mxu0
      %v3861 = vadd.f32 %v3700, %v3860
      %v3862 = vpop.f32.mrb[0].mxu0
      %3863 = vmatprep.mubr.bf16.mxu0 0
      %3864 = vmatmul.mubr.bf16.gmra.mrb[0].mxu0 %v3387
      %v3865 = vpop.f32.mrb[0].mxu0
      %v3866 = vadd.f32 %v3705, %v3865
      %v3867 = vpop.f32.mrb[0].mxu0
      %v3868 = vpop.f32.mrb[0].mxu0
      %v3869 = vadd.f32 %v3708, %v3868
      %v3870 = vpop.f32.mrb[0].mxu0
      %3871 = vdwg.mxu0
      %v3872 = vld [vmem:[%s6] sm:$0x1]
      %v3874 = vlaneseq
      %v3875 = vshrl.u32 %v3874, 7
      %v3876 = vsub.s32 0, %v3875
      %v3877 = vrot.slane %v3872, %v3876
      %v3879 = vmul.f32 %v3746, %v3877
      %v3880 = vmul.f32 %v3749, %v3877
      %v3881 = vmul.f32 %v3754, %v3877
      %v3882 = vmul.f32 %v3757, %v3877
      %v3883 = vmul.f32 %v3762, %v3877
      %v3884 = vmul.f32 %v3765, %v3877
      %v3885 = vmul.f32 %v3770, %v3877
      %v3886 = vmul.f32 %v3773, %v3877
      %v3887 = vmul.f32 %v3778, %v3877
      %v3888 = vmul.f32 %v3781, %v3877
      %v3889 = vmul.f32 %v3786, %v3877
      %v3890 = vmul.f32 %v3789, %v3877
      %v3891 = vmul.f32 %v3794, %v3877
      %v3892 = vmul.f32 %v3797, %v3877
      %v3893 = vmul.f32 %v3802, %v3877
      %v3894 = vmul.f32 %v3805, %v3877
      %v3895 = vmul.f32 %v3810, %v3877
      %v3896 = vmul.f32 %v3813, %v3877
      %v3897 = vmul.f32 %v3818, %v3877
      %v3898 = vmul.f32 %v3821, %v3877
      %v3899 = vmul.f32 %v3826, %v3877
      %v3900 = vmul.f32 %v3829, %v3877
      %v3901 = vmul.f32 %v3834, %v3877
      %v3902 = vmul.f32 %v3837, %v3877
      %v3903 = vmul.f32 %v3842, %v3877
      %v3904 = vmul.f32 %v3845, %v3877
      %v3905 = vmul.f32 %v3850, %v3877
      %v3906 = vmul.f32 %v3853, %v3877
      %v3907 = vmul.f32 %v3858, %v3877
      %v3908 = vmul.f32 %v3861, %v3877
      %v3909 = vmul.f32 %v3866, %v3877
      %v3910 = vmul.f32 %v3869, %v3877
      %v3911 = vld [vmem:[%s7] sm:$0x1]
      %v3913 = vlaneseq
      %v3914 = vshrl.u32 %v3913, 7
      %v3915 = vsub.s32 0, %v3914
      %v3916 = vrot.slane %v3911, %v3915
      %v3918 = vadd.f32 %v3879, %v3916
      %v3919 = vadd.f32 %v3880, %v3916
      %v3920 = vadd.f32 %v3881, %v3916
      %v3921 = vadd.f32 %v3882, %v3916
      %v3922 = vadd.f32 %v3883, %v3916
      %v3923 = vadd.f32 %v3884, %v3916
      %v3924 = vadd.f32 %v3885, %v3916
      %v3925 = vadd.f32 %v3886, %v3916
      %v3926 = vadd.f32 %v3887, %v3916
      %v3927 = vadd.f32 %v3888, %v3916
      %v3928 = vadd.f32 %v3889, %v3916
      %v3929 = vadd.f32 %v3890, %v3916
      %v3930 = vadd.f32 %v3891, %v3916
      %v3931 = vadd.f32 %v3892, %v3916
      %v3932 = vadd.f32 %v3893, %v3916
      %v3933 = vadd.f32 %v3894, %v3916
      %v3934 = vadd.f32 %v3895, %v3916
      %v3935 = vadd.f32 %v3896, %v3916
      %v3936 = vadd.f32 %v3897, %v3916
      %v3937 = vadd.f32 %v3898, %v3916
      %v3938 = vadd.f32 %v3899, %v3916
      %v3939 = vadd.f32 %v3900, %v3916
      %v3940 = vadd.f32 %v3901, %v3916
      %v3941 = vadd.f32 %v3902, %v3916
      %v3942 = vadd.f32 %v3903, %v3916
      %v3943 = vadd.f32 %v3904, %v3916
      %v3944 = vadd.f32 %v3905, %v3916
      %v3945 = vadd.f32 %v3906, %v3916
      %v3946 = vadd.f32 %v3907, %v3916
      %v3947 = vadd.f32 %v3908, %v3916
      %v3948 = vadd.f32 %v3909, %v3916
      %v3949 = vadd.f32 %v3910, %v3916
      %v3950 = vld [vmem:[%s354] sm:$0xff]
      %v3951 = vld [vmem:[%s354 + $0x8] sm:$0xff]
      %v3952 = vld [vmem:[%s354 + $0x10] sm:$0xff]
      %v3953 = vld [vmem:[%s354 + $0x18] sm:$0xff]
      %v3954 = vld [vmem:[%s354 + $0x20] sm:$0xff]
      %v3955 = vld [vmem:[%s354 + $0x28] sm:$0xff]
      %v3956 = vld [vmem:[%s354 + $0x30] sm:$0xff]
      %v3957 = vld [vmem:[%s354 + $0x38] sm:$0xff]
      %v3958 = vld [vmem:[%s354 + $0x40] sm:$0xff]
      %v3959 = vld [vmem:[%s354 + $0x48] sm:$0xff]
      %v3960 = vld [vmem:[%s354 + $0x50] sm:$0xff]
      %v3961 = vld [vmem:[%s354 + $0x58] sm:$0xff]
      %v3962 = vld [vmem:[%s354 + $0x60] sm:$0xff]
      %v3963 = vld [vmem:[%s354 + $0x68] sm:$0xff]
      %v3964 = vld [vmem:[%s354 + $0x70] sm:$0xff]
      %v3965 = vld [vmem:[%s354 + $0x78] sm:$0xff]
      %v3966 = vld [vmem:[%s354 + $0x80] sm:$0xff]
      %v3967 = vld [vmem:[%s354 + $0x88] sm:$0xff]
      %v3968 = vld [vmem:[%s354 + $0x90] sm:$0xff]
      %v3969 = vld [vmem:[%s354 + $0x98] sm:$0xff]
      %v3970 = vld [vmem:[%s354 + $0xa0] sm:$0xff]
      %v3971 = vld [vmem:[%s354 + $0xa8] sm:$0xff]
      %v3972 = vld [vmem:[%s354 + $0xb0] sm:$0xff]
      %v3973 = vld [vmem:[%s354 + $0xb8] sm:$0xff]
      %v3974 = vld [vmem:[%s354 + $0xc0] sm:$0xff]
      %v3975 = vld [vmem:[%s354 + $0xc8] sm:$0xff]
      %v3976 = vld [vmem:[%s354 + $0xd0] sm:$0xff]
      %v3977 = vld [vmem:[%s354 + $0xd8] sm:$0xff]
      %v3978 = vld [vmem:[%s354 + $0xe0] sm:$0xff]
      %v3979 = vld [vmem:[%s354 + $0xe8] sm:$0xff]
      %v3980 = vld [vmem:[%s354 + $0xf0] sm:$0xff]
      %v3981 = vld [vmem:[%s354 + $0xf8] sm:$0xff]
      %v4014 = vrot.slane %v3950, 7
      %v4015 = vrot.slane %v3951, 7
      %v4016 = vsel %vm430, %v4014, %v4015
      %v4017 = vrot.slane %v3952, 7
      %v4018 = vrot.slane %v3953, 7
      %v4019 = vsel %vm430, %v4017, %v4018
      %v4020 = vrot.slane %v3954, 7
      %v4021 = vrot.slane %v3955, 7
      %v4022 = vsel %vm430, %v4020, %v4021
      %v4023 = vrot.slane %v3956, 7
      %v4024 = vrot.slane %v3957, 7
      %v4025 = vsel %vm430, %v4023, %v4024
      %v4026 = vrot.slane %v3958, 7
      %v4027 = vrot.slane %v3959, 7
      %v4028 = vsel %vm430, %v4026, %v4027
      %v4029 = vrot.slane %v3960, 7
      %v4030 = vrot.slane %v3961, 7
      %v4031 = vsel %vm430, %v4029, %v4030
      %v4032 = vrot.slane %v3962, 7
      %v4033 = vrot.slane %v3963, 7
      %v4034 = vsel %vm430, %v4032, %v4033
      %v4035 = vrot.slane %v3964, 7
      %v4036 = vrot.slane %v3965, 7
      %v4037 = vsel %vm430, %v4035, %v4036
      %v4038 = vrot.slane %v3966, 7
      %v4039 = vrot.slane %v3967, 7
      %v4040 = vsel %vm430, %v4038, %v4039
      %v4041 = vrot.slane %v3968, 7
      %v4042 = vrot.slane %v3969, 7
      %v4043 = vsel %vm430, %v4041, %v4042
      %v4044 = vrot.slane %v3970, 7
      %v4045 = vrot.slane %v3971, 7
      %v4046 = vsel %vm430, %v4044, %v4045
      %v4047 = vrot.slane %v3972, 7
      %v4048 = vrot.slane %v3973, 7
      %v4049 = vsel %vm430, %v4047, %v4048
      %v4050 = vrot.slane %v3974, 7
      %v4051 = vrot.slane %v3975, 7
      %v4052 = vsel %vm430, %v4050, %v4051
      %v4053 = vrot.slane %v3976, 7
      %v4054 = vrot.slane %v3977, 7
      %v4055 = vsel %vm430, %v4053, %v4054
      %v4056 = vrot.slane %v3978, 7
      %v4057 = vrot.slane %v3979, 7
      %v4058 = vsel %vm430, %v4056, %v4057
      %v4059 = vrot.slane %v3980, 7
      %v4060 = vrot.slane %v3981, 7
      %v4061 = vsel %vm430, %v4059, %v4060
      %v4109 = vsel %vm430, 0.0, %v4014
      %v4110 = vsel %vm430, 0.0, %v4017
      %v4111 = vsel %vm430, 0.0, %v4020
      %v4112 = vsel %vm430, 0.0, %v4023
      %v4113 = vsel %vm430, 0.0, %v4026
      %v4114 = vsel %vm430, 0.0, %v4029
      %v4115 = vsel %vm430, 0.0, %v4032
      %v4116 = vsel %vm430, 0.0, %v4035
      %v4117 = vsel %vm430, 0.0, %v4038
      %v4118 = vsel %vm430, 0.0, %v4041
      %v4119 = vsel %vm430, 0.0, %v4044
      %v4120 = vsel %vm430, 0.0, %v4047
      %v4121 = vsel %vm430, 0.0, %v4050
      %v4122 = vsel %vm430, 0.0, %v4053
      %v4123 = vsel %vm430, 0.0, %v4056
      %v4124 = vsel %vm430, 0.0, %v4059
      %v4125 = vsel %vm430, %v4015, 0.0
      %v4126 = vsel %vm430, %v4018, 0.0
      %v4127 = vsel %vm430, %v4021, 0.0
      %v4128 = vsel %vm430, %v4024, 0.0
      %v4129 = vsel %vm430, %v4027, 0.0
      %v4130 = vsel %vm430, %v4030, 0.0
      %v4131 = vsel %vm430, %v4033, 0.0
      %v4132 = vsel %vm430, %v4036, 0.0
      %v4133 = vsel %vm430, %v4039, 0.0
      %v4134 = vsel %vm430, %v4042, 0.0
      %v4135 = vsel %vm430, %v4045, 0.0
      %v4136 = vsel %vm430, %v4048, 0.0
      %v4137 = vsel %vm430, %v4051, 0.0
      %v4138 = vsel %vm430, %v4054, 0.0
      %v4139 = vsel %vm430, %v4057, 0.0
      %v4140 = vsel %vm430, %v4060, 0.0
      %v4171 = vrot.slane %v4109, 1
      %v4172 = vrot.slane %v4016, 1
      %v4173 = vsel %vm596, %v4171, %v4172
      %v4174 = vrot.slane %v4125, 1
      %v4175 = vsel %vm596, %v4172, %v4174
      %v4176 = vrot.slane %v4110, 1
      %v4177 = vrot.slane %v4019, 1
      %v4178 = vsel %vm596, %v4176, %v4177
      %v4179 = vrot.slane %v4126, 1
      %v4180 = vsel %vm596, %v4177, %v4179
      %v4181 = vrot.slane %v4111, 1
      %v4182 = vrot.slane %v4022, 1
      %v4183 = vsel %vm596, %v4181, %v4182
      %v4184 = vrot.slane %v4127, 1
      %v4185 = vsel %vm596, %v4182, %v4184
      %v4186 = vrot.slane %v4112, 1
      %v4187 = vrot.slane %v4025, 1
      %v4188 = vsel %vm596, %v4186, %v4187
      %v4189 = vrot.slane %v4128, 1
      %v4190 = vsel %vm596, %v4187, %v4189
      %v4191 = vrot.slane %v4113, 1
      %v4192 = vrot.slane %v4028, 1
      %v4193 = vsel %vm596, %v4191, %v4192
      %v4194 = vrot.slane %v4129, 1
      %v4195 = vsel %vm596, %v4192, %v4194
      %v4196 = vrot.slane %v4114, 1
      %v4197 = vrot.slane %v4031, 1
      %v4198 = vsel %vm596, %v4196, %v4197
      %v4199 = vrot.slane %v4130, 1
      %v4200 = vsel %vm596, %v4197, %v4199
      %v4201 = vrot.slane %v4115, 1
      %v4202 = vrot.slane %v4034, 1
      %v4203 = vsel %vm596, %v4201, %v4202
      %v4204 = vrot.slane %v4131, 1
      %v4205 = vsel %vm596, %v4202, %v4204
      %v4206 = vrot.slane %v4116, 1
      %v4207 = vrot.slane %v4037, 1
      %v4208 = vsel %vm596, %v4206, %v4207
      %v4209 = vrot.slane %v4132, 1
      %v4210 = vsel %vm596, %v4207, %v4209
      %v4211 = vrot.slane %v4117, 1
      %v4212 = vrot.slane %v4040, 1
      %v4213 = vsel %vm596, %v4211, %v4212
      %v4214 = vrot.slane %v4133, 1
      %v4215 = vsel %vm596, %v4212, %v4214
      %v4216 = vrot.slane %v4118, 1
      %v4217 = vrot.slane %v4043, 1
      %v4218 = vsel %vm596, %v4216, %v4217
      %v4219 = vrot.slane %v4134, 1
      %v4220 = vsel %vm596, %v4217, %v4219
      %v4221 = vrot.slane %v4119, 1
      %v4222 = vrot.slane %v4046, 1
      %v4223 = vsel %vm596, %v4221, %v4222
      %v4224 = vrot.slane %v4135, 1
      %v4225 = vsel %vm596, %v4222, %v4224
      %v4226 = vrot.slane %v4120, 1
      %v4227 = vrot.slane %v4049, 1
      %v4228 = vsel %vm596, %v4226, %v4227
      %v4229 = vrot.slane %v4136, 1
      %v4230 = vsel %vm596, %v4227, %v4229
      %v4231 = vrot.slane %v4121, 1
      %v4232 = vrot.slane %v4052, 1
      %v4233 = vsel %vm596, %v4231, %v4232
      %v4234 = vrot.slane %v4137, 1
      %v4235 = vsel %vm596, %v4232, %v4234
      %v4236 = vrot.slane %v4122, 1
      %v4237 = vrot.slane %v4055, 1
      %v4238 = vsel %vm596, %v4236, %v4237
      %v4239 = vrot.slane %v4138, 1
      %v4240 = vsel %vm596, %v4237, %v4239
      %v4241 = vrot.slane %v4123, 1
      %v4242 = vrot.slane %v4058, 1
      %v4243 = vsel %vm596, %v4241, %v4242
      %v4244 = vrot.slane %v4139, 1
      %v4245 = vsel %vm596, %v4242, %v4244
      %4246 = vrot.lane.b32.xlu0 %v4173, 8
      %v4247 = vpop.permute.xlu0 %4246
      %4248 = vrot.lane.b32.xlu0 %v4175, 8
      %v4249 = vpop.permute.xlu0 %4248
      %4250 = vrot.lane.b32.xlu0 %v4178, 8
      %v4251 = vpop.permute.xlu0 %4250
      %4252 = vrot.lane.b32.xlu0 %v4180, 8
      %v4253 = vpop.permute.xlu0 %4252
      %4254 = vrot.lane.b32.xlu0 %v4183, 8
      %v4255 = vpop.permute.xlu0 %4254
      %4256 = vrot.lane.b32.xlu0 %v4185, 8
      %v4257 = vpop.permute.xlu0 %4256
      %4258 = vrot.lane.b32.xlu0 %v4188, 8
      %v4259 = vpop.permute.xlu0 %4258
      %4260 = vrot.lane.b32.xlu0 %v4190, 8
      %v4261 = vpop.permute.xlu0 %4260
      %4262 = vrot.lane.b32.xlu0 %v4193, 8
      %v4263 = vpop.permute.xlu0 %4262
      %4264 = vrot.lane.b32.xlu0 %v4195, 8
      %v4265 = vpop.permute.xlu0 %4264
      %4266 = vrot.lane.b32.xlu0 %v4198, 8
      %v4267 = vpop.permute.xlu0 %4266
      %4268 = vrot.lane.b32.xlu0 %v4200, 8
      %v4269 = vpop.permute.xlu0 %4268
      %4270 = vrot.lane.b32.xlu0 %v4203, 8
      %v4271 = vpop.permute.xlu0 %4270
      %4272 = vrot.lane.b32.xlu0 %v4205, 8
      %v4273 = vpop.permute.xlu0 %4272
      %4274 = vrot.lane.b32.xlu0 %v4208, 8
      %v4275 = vpop.permute.xlu0 %4274
      %4276 = vrot.lane.b32.xlu0 %v4210, 8
      %v4277 = vpop.permute.xlu0 %4276
      %4278 = vrot.lane.b32.xlu0 %v4213, 8
      %v4279 = vpop.permute.xlu0 %4278
      %4280 = vrot.lane.b32.xlu0 %v4215, 8
      %v4281 = vpop.permute.xlu0 %4280
      %4282 = vrot.lane.b32.xlu0 %v4218, 8
      %v4283 = vpop.permute.xlu0 %4282
      %4284 = vrot.lane.b32.xlu0 %v4220, 8
      %v4285 = vpop.permute.xlu0 %4284
      %4286 = vrot.lane.b32.xlu0 %v4223, 8
      %v4287 = vpop.permute.xlu0 %4286
      %4288 = vrot.lane.b32.xlu0 %v4225, 8
      %v4289 = vpop.permute.xlu0 %4288
      %4290 = vrot.lane.b32.xlu0 %v4228, 8
      %v4291 = vpop.permute.xlu0 %4290
      %4292 = vrot.lane.b32.xlu0 %v4230, 8
      %v4293 = vpop.permute.xlu0 %4292
      %4294 = vrot.lane.b32.xlu0 %v4233, 8
      %v4295 = vpop.permute.xlu0 %4294
      %4296 = vrot.lane.b32.xlu0 %v4235, 8
      %v4297 = vpop.permute.xlu0 %4296
      %4298 = vrot.lane.b32.xlu0 %v4238, 8
      %v4299 = vpop.permute.xlu0 %4298
      %4300 = vrot.lane.b32.xlu0 %v4240, 8
      %v4301 = vpop.permute.xlu0 %4300
      %4302 = vrot.lane.b32.xlu0 %v4243, 8
      %v4303 = vpop.permute.xlu0 %4302
      %4304 = vrot.lane.b32.xlu0 %v4245, 8
      %v4305 = vpop.permute.xlu0 %4304
      %v4336 = vrot.slane %v4109, 2
      %v4337 = vrot.slane %v4016, 2
      %v4338 = vsel %vm773, %v4336, %v4337
      %v4339 = vrot.slane %v4125, 2
      %v4340 = vsel %vm773, %v4337, %v4339
      %v4341 = vrot.slane %v4110, 2
      %v4342 = vrot.slane %v4019, 2
      %v4343 = vsel %vm773, %v4341, %v4342
      %v4344 = vrot.slane %v4126, 2
      %v4345 = vsel %vm773, %v4342, %v4344
      %v4346 = vrot.slane %v4111, 2
      %v4347 = vrot.slane %v4022, 2
      %v4348 = vsel %vm773, %v4346, %v4347
      %v4349 = vrot.slane %v4127, 2
      %v4350 = vsel %vm773, %v4347, %v4349
      %v4351 = vrot.slane %v4112, 2
      %v4352 = vrot.slane %v4025, 2
      %v4353 = vsel %vm773, %v4351, %v4352
      %v4354 = vrot.slane %v4128, 2
      %v4355 = vsel %vm773, %v4352, %v4354
      %v4356 = vrot.slane %v4113, 2
      %v4357 = vrot.slane %v4028, 2
      %v4358 = vsel %vm773, %v4356, %v4357
      %v4359 = vrot.slane %v4129, 2
      %v4360 = vsel %vm773, %v4357, %v4359
      %v4361 = vrot.slane %v4114, 2
      %v4362 = vrot.slane %v4031, 2
      %v4363 = vsel %vm773, %v4361, %v4362
      %v4364 = vrot.slane %v4130, 2
      %v4365 = vsel %vm773, %v4362, %v4364
      %v4366 = vrot.slane %v4115, 2
      %v4367 = vrot.slane %v4034, 2
      %v4368 = vsel %vm773, %v4366, %v4367
      %v4369 = vrot.slane %v4131, 2
      %v4370 = vsel %vm773, %v4367, %v4369
      %v4371 = vrot.slane %v4116, 2
      %v4372 = vrot.slane %v4037, 2
      %v4373 = vsel %vm773, %v4371, %v4372
      %v4374 = vrot.slane %v4132, 2
      %v4375 = vsel %vm773, %v4372, %v4374
      %v4376 = vrot.slane %v4117, 2
      %v4377 = vrot.slane %v4040, 2
      %v4378 = vsel %vm773, %v4376, %v4377
      %v4379 = vrot.slane %v4133, 2
      %v4380 = vsel %vm773, %v4377, %v4379
      %v4381 = vrot.slane %v4118, 2
      %v4382 = vrot.slane %v4043, 2
      %v4383 = vsel %vm773, %v4381, %v4382
      %v4384 = vrot.slane %v4134, 2
      %v4385 = vsel %vm773, %v4382, %v4384
      %v4386 = vrot.slane %v4119, 2
      %v4387 = vrot.slane %v4046, 2
      %v4388 = vsel %vm773, %v4386, %v4387
      %v4389 = vrot.slane %v4135, 2
      %v4390 = vsel %vm773, %v4387, %v4389
      %v4391 = vrot.slane %v4120, 2
      %v4392 = vrot.slane %v4049, 2
      %v4393 = vsel %vm773, %v4391, %v4392
      %v4394 = vrot.slane %v4136, 2
      %v4395 = vsel %vm773, %v4392, %v4394
      %v4396 = vrot.slane %v4121, 2
      %v4397 = vrot.slane %v4052, 2
      %v4398 = vsel %vm773, %v4396, %v4397
      %v4399 = vrot.slane %v4137, 2
      %v4400 = vsel %vm773, %v4397, %v4399
      %v4401 = vrot.slane %v4122, 2
      %v4402 = vrot.slane %v4055, 2
      %v4403 = vsel %vm773, %v4401, %v4402
      %v4404 = vrot.slane %v4138, 2
      %v4405 = vsel %vm773, %v4402, %v4404
      %v4406 = vrot.slane %v4123, 2
      %v4407 = vrot.slane %v4058, 2
      %v4408 = vsel %vm773, %v4406, %v4407
      %v4409 = vrot.slane %v4139, 2
      %v4410 = vsel %vm773, %v4407, %v4409
      %4411 = vrot.lane.b32.xlu0 %v4338, 16
      %v4412 = vpop.permute.xlu0 %4411
      %4413 = vrot.lane.b32.xlu0 %v4340, 16
      %v4414 = vpop.permute.xlu0 %4413
      %4415 = vrot.lane.b32.xlu0 %v4343, 16
      %v4416 = vpop.permute.xlu0 %4415
      %4417 = vrot.lane.b32.xlu0 %v4345, 16
      %v4418 = vpop.permute.xlu0 %4417
      %4419 = vrot.lane.b32.xlu0 %v4348, 16
      %v4420 = vpop.permute.xlu0 %4419
      %4421 = vrot.lane.b32.xlu0 %v4350, 16
      %v4422 = vpop.permute.xlu0 %4421
      %4423 = vrot.lane.b32.xlu0 %v4353, 16
      %v4424 = vpop.permute.xlu0 %4423
      %4425 = vrot.lane.b32.xlu0 %v4355, 16
      %v4426 = vpop.permute.xlu0 %4425
      %4427 = vrot.lane.b32.xlu0 %v4358, 16
      %v4428 = vpop.permute.xlu0 %4427
      %4429 = vrot.lane.b32.xlu0 %v4360, 16
      %v4430 = vpop.permute.xlu0 %4429
      %4431 = vrot.lane.b32.xlu0 %v4363, 16
      %v4432 = vpop.permute.xlu0 %4431
      %4433 = vrot.lane.b32.xlu0 %v4365, 16
      %v4434 = vpop.permute.xlu0 %4433
      %4435 = vrot.lane.b32.xlu0 %v4368, 16
      %v4436 = vpop.permute.xlu0 %4435
      %4437 = vrot.lane.b32.xlu0 %v4370, 16
      %v4438 = vpop.permute.xlu0 %4437
      %4439 = vrot.lane.b32.xlu0 %v4373, 16
      %v4440 = vpop.permute.xlu0 %4439
      %4441 = vrot.lane.b32.xlu0 %v4375, 16
      %v4442 = vpop.permute.xlu0 %4441
      %4443 = vrot.lane.b32.xlu0 %v4378, 16
      %v4444 = vpop.permute.xlu0 %4443
      %4445 = vrot.lane.b32.xlu0 %v4380, 16
      %v4446 = vpop.permute.xlu0 %4445
      %4447 = vrot.lane.b32.xlu0 %v4383, 16
      %v4448 = vpop.permute.xlu0 %4447
      %4449 = vrot.lane.b32.xlu0 %v4385, 16
      %v4450 = vpop.permute.xlu0 %4449
      %4451 = vrot.lane.b32.xlu0 %v4388, 16
      %v4452 = vpop.permute.xlu0 %4451
      %4453 = vrot.lane.b32.xlu0 %v4390, 16
      %v4454 = vpop.permute.xlu0 %4453
      %4455 = vrot.lane.b32.xlu0 %v4393, 16
      %v4456 = vpop.permute.xlu0 %4455
      %4457 = vrot.lane.b32.xlu0 %v4395, 16
      %v4458 = vpop.permute.xlu0 %4457
      %4459 = vrot.lane.b32.xlu0 %v4398, 16
      %v4460 = vpop.permute.xlu0 %4459
      %4461 = vrot.lane.b32.xlu0 %v4400, 16
      %v4462 = vpop.permute.xlu0 %4461
      %4463 = vrot.lane.b32.xlu0 %v4403, 16
      %v4464 = vpop.permute.xlu0 %4463
      %4465 = vrot.lane.b32.xlu0 %v4405, 16
      %v4466 = vpop.permute.xlu0 %4465
      %4467 = vrot.lane.b32.xlu0 %v4408, 16
      %v4468 = vpop.permute.xlu0 %4467
      %4469 = vrot.lane.b32.xlu0 %v4410, 16
      %v4470 = vpop.permute.xlu0 %4469
      %4502 = vrot.lane.b32.xlu0 %v4109, 24
      %v4503 = vpop.permute.xlu0 %4502
      %4504 = vrot.lane.b32.xlu0 %v4016, 24
      %v4505 = vpop.permute.xlu0 %4504
      %4506 = vrot.lane.b32.xlu0 %v4110, 24
      %v4507 = vpop.permute.xlu0 %4506
      %4508 = vrot.lane.b32.xlu0 %v4019, 24
      %v4509 = vpop.permute.xlu0 %4508
      %4510 = vrot.lane.b32.xlu0 %v4111, 24
      %v4511 = vpop.permute.xlu0 %4510
      %4512 = vrot.lane.b32.xlu0 %v4022, 24
      %v4513 = vpop.permute.xlu0 %4512
      %4514 = vrot.lane.b32.xlu0 %v4112, 24
      %v4515 = vpop.permute.xlu0 %4514
      %4516 = vrot.lane.b32.xlu0 %v4025, 24
      %v4517 = vpop.permute.xlu0 %4516
      %4518 = vrot.lane.b32.xlu0 %v4113, 24
      %v4519 = vpop.permute.xlu0 %4518
      %4520 = vrot.lane.b32.xlu0 %v4028, 24
      %v4521 = vpop.permute.xlu0 %4520
      %4522 = vrot.lane.b32.xlu0 %v4114, 24
      %v4523 = vpop.permute.xlu0 %4522
      %4524 = vrot.lane.b32.xlu0 %v4031, 24
      %v4525 = vpop.permute.xlu0 %4524
      %4526 = vrot.lane.b32.xlu0 %v4115, 24
      %v4527 = vpop.permute.xlu0 %4526
      %4528 = vrot.lane.b32.xlu0 %v4034, 24
      %v4529 = vpop.permute.xlu0 %4528
      %4530 = vrot.lane.b32.xlu0 %v4116, 24
      %v4531 = vpop.permute.xlu0 %4530
      %4532 = vrot.lane.b32.xlu0 %v4037, 24
      %v4533 = vpop.permute.xlu0 %4532
      %4534 = vrot.lane.b32.xlu0 %v4117, 24
      %v4535 = vpop.permute.xlu0 %4534
      %4536 = vrot.lane.b32.xlu0 %v4040, 24
      %v4537 = vpop.permute.xlu0 %4536
      %4538 = vrot.lane.b32.xlu0 %v4118, 24
      %v4539 = vpop.permute.xlu0 %4538
      %4540 = vrot.lane.b32.xlu0 %v4043, 24
      %v4541 = vpop.permute.xlu0 %4540
      %4542 = vrot.lane.b32.xlu0 %v4119, 24
      %v4543 = vpop.permute.xlu0 %4542
      %4544 = vrot.lane.b32.xlu0 %v4046, 24
      %v4545 = vpop.permute.xlu0 %4544
      %4546 = vrot.lane.b32.xlu0 %v4120, 24
      %v4547 = vpop.permute.xlu0 %4546
      %4548 = vrot.lane.b32.xlu0 %v4049, 24
      %v4549 = vpop.permute.xlu0 %4548
      %4550 = vrot.lane.b32.xlu0 %v4121, 24
      %v4551 = vpop.permute.xlu0 %4550
      %4552 = vrot.lane.b32.xlu0 %v4052, 24
      %v4553 = vpop.permute.xlu0 %4552
      %4554 = vrot.lane.b32.xlu0 %v4122, 24
      %v4555 = vpop.permute.xlu0 %4554
      %4556 = vrot.lane.b32.xlu0 %v4055, 24
      %v4557 = vpop.permute.xlu0 %4556
      %4558 = vrot.lane.b32.xlu0 %v4123, 24
      %v4559 = vpop.permute.xlu0 %4558
      %4560 = vrot.lane.b32.xlu0 %v4058, 24
      %v4561 = vpop.permute.xlu0 %4560
      %4562 = vrot.lane.b32.xlu0 %v4124, 24
      %v4563 = vpop.permute.xlu0 %4562
      %4564 = vrot.lane.b32.xlu0 %v4061, 24
      %v4565 = vpop.permute.xlu0 %4564
      %v4599 = vrot.slane %v4124, 1
      %v4600 = vrot.slane %v4061, 1
      %v4601 = vsel %vm596, %v4599, %v4600
      %v4602 = vrot.slane %v4140, 1
      %v4603 = vsel %vm596, %v4600, %v4602
      %4604 = vrot.lane.b32.xlu0 %v4173, 32
      %v4605 = vpop.permute.xlu0 %4604
      %4606 = vrot.lane.b32.xlu0 %v4175, 32
      %v4607 = vpop.permute.xlu0 %4606
      %4608 = vrot.lane.b32.xlu0 %v4178, 32
      %v4609 = vpop.permute.xlu0 %4608
      %4610 = vrot.lane.b32.xlu0 %v4180, 32
      %v4611 = vpop.permute.xlu0 %4610
      %4612 = vrot.lane.b32.xlu0 %v4183, 32
      %v4613 = vpop.permute.xlu0 %4612
      %4614 = vrot.lane.b32.xlu0 %v4185, 32
      %v4615 = vpop.permute.xlu0 %4614
      %4616 = vrot.lane.b32.xlu0 %v4188, 32
      %v4617 = vpop.permute.xlu0 %4616
      %4618 = vrot.lane.b32.xlu0 %v4190, 32
      %v4619 = vpop.permute.xlu0 %4618
      %4620 = vrot.lane.b32.xlu0 %v4193, 32
      %v4621 = vpop.permute.xlu0 %4620
      %4622 = vrot.lane.b32.xlu0 %v4195, 32
      %v4623 = vpop.permute.xlu0 %4622
      %4624 = vrot.lane.b32.xlu0 %v4198, 32
      %v4625 = vpop.permute.xlu0 %4624
      %4626 = vrot.lane.b32.xlu0 %v4200, 32
      %v4627 = vpop.permute.xlu0 %4626
      %4628 = vrot.lane.b32.xlu0 %v4203, 32
      %v4629 = vpop.permute.xlu0 %4628
      %4630 = vrot.lane.b32.xlu0 %v4205, 32
      %v4631 = vpop.permute.xlu0 %4630
      %4632 = vrot.lane.b32.xlu0 %v4208, 32
      %v4633 = vpop.permute.xlu0 %4632
      %4634 = vrot.lane.b32.xlu0 %v4210, 32
      %v4635 = vpop.permute.xlu0 %4634
      %4636 = vrot.lane.b32.xlu0 %v4213, 32
      %v4637 = vpop.permute.xlu0 %4636
      %4638 = vrot.lane.b32.xlu0 %v4215, 32
      %v4639 = vpop.permute.xlu0 %4638
      %4640 = vrot.lane.b32.xlu0 %v4218, 32
      %v4641 = vpop.permute.xlu0 %4640
      %4642 = vrot.lane.b32.xlu0 %v4220, 32
      %v4643 = vpop.permute.xlu0 %4642
      %4644 = vrot.lane.b32.xlu0 %v4223, 32
      %v4645 = vpop.permute.xlu0 %4644
      %4646 = vrot.lane.b32.xlu0 %v4225, 32
      %v4647 = vpop.permute.xlu0 %4646
      %4648 = vrot.lane.b32.xlu0 %v4228, 32
      %v4649 = vpop.permute.xlu0 %4648
      %4650 = vrot.lane.b32.xlu0 %v4230, 32
      %v4651 = vpop.permute.xlu0 %4650
      %4652 = vrot.lane.b32.xlu0 %v4233, 32
      %v4653 = vpop.permute.xlu0 %4652
      %4654 = vrot.lane.b32.xlu0 %v4235, 32
      %v4655 = vpop.permute.xlu0 %4654
      %4656 = vrot.lane.b32.xlu0 %v4238, 32
      %v4657 = vpop.permute.xlu0 %4656
      %4658 = vrot.lane.b32.xlu0 %v4240, 32
      %v4659 = vpop.permute.xlu0 %4658
      %4660 = vrot.lane.b32.xlu0 %v4243, 32
      %v4661 = vpop.permute.xlu0 %4660
      %4662 = vrot.lane.b32.xlu0 %v4245, 32
      %v4663 = vpop.permute.xlu0 %4662
      %4664 = vrot.lane.b32.xlu0 %v4601, 32
      %v4665 = vpop.permute.xlu0 %4664
      %4666 = vrot.lane.b32.xlu0 %v4603, 32
      %v4667 = vpop.permute.xlu0 %4666
      %v4700 = vrot.slane %v4124, 2
      %v4701 = vrot.slane %v4061, 2
      %v4702 = vsel %vm773, %v4700, %v4701
      %v4703 = vrot.slane %v4140, 2
      %v4704 = vsel %vm773, %v4701, %v4703
      %4705 = vrot.lane.b32.xlu0 %v4338, 40
      %v4706 = vpop.permute.xlu0 %4705
      %4707 = vrot.lane.b32.xlu0 %v4340, 40
      %v4708 = vpop.permute.xlu0 %4707
      %4709 = vrot.lane.b32.xlu0 %v4343, 40
      %v4710 = vpop.permute.xlu0 %4709
      %4711 = vrot.lane.b32.xlu0 %v4345, 40
      %v4712 = vpop.permute.xlu0 %4711
      %4713 = vrot.lane.b32.xlu0 %v4348, 40
      %v4714 = vpop.permute.xlu0 %4713
      %4715 = vrot.lane.b32.xlu0 %v4350, 40
      %v4716 = vpop.permute.xlu0 %4715
      %4717 = vrot.lane.b32.xlu0 %v4353, 40
      %v4718 = vpop.permute.xlu0 %4717
      %4719 = vrot.lane.b32.xlu0 %v4355, 40
      %v4720 = vpop.permute.xlu0 %4719
      %4721 = vrot.lane.b32.xlu0 %v4358, 40
      %v4722 = vpop.permute.xlu0 %4721
      %4723 = vrot.lane.b32.xlu0 %v4360, 40
      %v4724 = vpop.permute.xlu0 %4723
      %4725 = vrot.lane.b32.xlu0 %v4363, 40
      %v4726 = vpop.permute.xlu0 %4725
      %4727 = vrot.lane.b32.xlu0 %v4365, 40
      %v4728 = vpop.permute.xlu0 %4727
      %4729 = vrot.lane.b32.xlu0 %v4368, 40
      %v4730 = vpop.permute.xlu0 %4729
      %4731 = vrot.lane.b32.xlu0 %v4370, 40
      %v4732 = vpop.permute.xlu0 %4731
      %4733 = vrot.lane.b32.xlu0 %v4373, 40
      %v4734 = vpop.permute.xlu0 %4733
      %4735 = vrot.lane.b32.xlu0 %v4375, 40
      %v4736 = vpop.permute.xlu0 %4735
      %4737 = vrot.lane.b32.xlu0 %v4378, 40
      %v4738 = vpop.permute.xlu0 %4737
      %4739 = vrot.lane.b32.xlu0 %v4380, 40
      %v4740 = vpop.permute.xlu0 %4739
      %4741 = vrot.lane.b32.xlu0 %v4383, 40
      %v4742 = vpop.permute.xlu0 %4741
      %4743 = vrot.lane.b32.xlu0 %v4385, 40
      %v4744 = vpop.permute.xlu0 %4743
      %4745 = vrot.lane.b32.xlu0 %v4388, 40
      %v4746 = vpop.permute.xlu0 %4745
      %4747 = vrot.lane.b32.xlu0 %v4390, 40
      %v4748 = vpop.permute.xlu0 %4747
      %4749 = vrot.lane.b32.xlu0 %v4393, 40
      %v4750 = vpop.permute.xlu0 %4749
      %4751 = vrot.lane.b32.xlu0 %v4395, 40
      %v4752 = vpop.permute.xlu0 %4751
      %4753 = vrot.lane.b32.xlu0 %v4398, 40
      %v4754 = vpop.permute.xlu0 %4753
      %4755 = vrot.lane.b32.xlu0 %v4400, 40
      %v4756 = vpop.permute.xlu0 %4755
      %4757 = vrot.lane.b32.xlu0 %v4403, 40
      %v4758 = vpop.permute.xlu0 %4757
      %4759 = vrot.lane.b32.xlu0 %v4405, 40
      %v4760 = vpop.permute.xlu0 %4759
      %4761 = vrot.lane.b32.xlu0 %v4408, 40
      %v4762 = vpop.permute.xlu0 %4761
      %4763 = vrot.lane.b32.xlu0 %v4410, 40
      %v4764 = vpop.permute.xlu0 %4763
      %4765 = vrot.lane.b32.xlu0 %v4702, 40
      %v4766 = vpop.permute.xlu0 %4765
      %4767 = vrot.lane.b32.xlu0 %v4704, 40
      %v4768 = vpop.permute.xlu0 %4767
      %4801 = vrot.lane.b32.xlu0 %v4110, 48
      %v4802 = vpop.permute.xlu0 %4801
      %4803 = vrot.lane.b32.xlu0 %v4019, 48
      %v4804 = vpop.permute.xlu0 %4803
      %4805 = vrot.lane.b32.xlu0 %v4111, 48
      %v4806 = vpop.permute.xlu0 %4805
      %4807 = vrot.lane.b32.xlu0 %v4022, 48
      %v4808 = vpop.permute.xlu0 %4807
      %4809 = vrot.lane.b32.xlu0 %v4112, 48
      %v4810 = vpop.permute.xlu0 %4809
      %4811 = vrot.lane.b32.xlu0 %v4025, 48
      %v4812 = vpop.permute.xlu0 %4811
      %4813 = vrot.lane.b32.xlu0 %v4113, 48
      %v4814 = vpop.permute.xlu0 %4813
      %4815 = vrot.lane.b32.xlu0 %v4028, 48
      %v4816 = vpop.permute.xlu0 %4815
      %4817 = vrot.lane.b32.xlu0 %v4114, 48
      %v4818 = vpop.permute.xlu0 %4817
      %4819 = vrot.lane.b32.xlu0 %v4031, 48
      %v4820 = vpop.permute.xlu0 %4819
      %4821 = vrot.lane.b32.xlu0 %v4115, 48
      %v4822 = vpop.permute.xlu0 %4821
      %4823 = vrot.lane.b32.xlu0 %v4034, 48
      %v4824 = vpop.permute.xlu0 %4823
      %4825 = vrot.lane.b32.xlu0 %v4116, 48
      %v4826 = vpop.permute.xlu0 %4825
      %4827 = vrot.lane.b32.xlu0 %v4037, 48
      %v4828 = vpop.permute.xlu0 %4827
      %4829 = vrot.lane.b32.xlu0 %v4117, 48
      %v4830 = vpop.permute.xlu0 %4829
      %4831 = vrot.lane.b32.xlu0 %v4040, 48
      %v4832 = vpop.permute.xlu0 %4831
      %4833 = vrot.lane.b32.xlu0 %v4118, 48
      %v4834 = vpop.permute.xlu0 %4833
      %4835 = vrot.lane.b32.xlu0 %v4043, 48
      %v4836 = vpop.permute.xlu0 %4835
      %4837 = vrot.lane.b32.xlu0 %v4119, 48
      %v4838 = vpop.permute.xlu0 %4837
      %4839 = vrot.lane.b32.xlu0 %v4046, 48
      %v4840 = vpop.permute.xlu0 %4839
      %4841 = vrot.lane.b32.xlu0 %v4120, 48
      %v4842 = vpop.permute.xlu0 %4841
      %4843 = vrot.lane.b32.xlu0 %v4049, 48
      %v4844 = vpop.permute.xlu0 %4843
      %4845 = vrot.lane.b32.xlu0 %v4121, 48
      %v4846 = vpop.permute.xlu0 %4845
      %4847 = vrot.lane.b32.xlu0 %v4052, 48
      %v4848 = vpop.permute.xlu0 %4847
      %4849 = vrot.lane.b32.xlu0 %v4122, 48
      %v4850 = vpop.permute.xlu0 %4849
      %4851 = vrot.lane.b32.xlu0 %v4055, 48
      %v4852 = vpop.permute.xlu0 %4851
      %4853 = vrot.lane.b32.xlu0 %v4123, 48
      %v4854 = vpop.permute.xlu0 %4853
      %4855 = vrot.lane.b32.xlu0 %v4058, 48
      %v4856 = vpop.permute.xlu0 %4855
      %4857 = vrot.lane.b32.xlu0 %v4124, 48
      %v4858 = vpop.permute.xlu0 %4857
      %4859 = vrot.lane.b32.xlu0 %v4061, 48
      %v4860 = vpop.permute.xlu0 %4859
      %4891 = vrot.lane.b32.xlu0 %v4178, 56
      %v4892 = vpop.permute.xlu0 %4891
      %4893 = vrot.lane.b32.xlu0 %v4180, 56
      %v4894 = vpop.permute.xlu0 %4893
      %4895 = vrot.lane.b32.xlu0 %v4183, 56
      %v4896 = vpop.permute.xlu0 %4895
      %4897 = vrot.lane.b32.xlu0 %v4185, 56
      %v4898 = vpop.permute.xlu0 %4897
      %4899 = vrot.lane.b32.xlu0 %v4188, 56
      %v4900 = vpop.permute.xlu0 %4899
      %4901 = vrot.lane.b32.xlu0 %v4190, 56
      %v4902 = vpop.permute.xlu0 %4901
      %4903 = vrot.lane.b32.xlu0 %v4193, 56
      %v4904 = vpop.permute.xlu0 %4903
      %4905 = vrot.lane.b32.xlu0 %v4195, 56
      %v4906 = vpop.permute.xlu0 %4905
      %4907 = vrot.lane.b32.xlu0 %v4198, 56
      %v4908 = vpop.permute.xlu0 %4907
      %4909 = vrot.lane.b32.xlu0 %v4200, 56
      %v4910 = vpop.permute.xlu0 %4909
      %4911 = vrot.lane.b32.xlu0 %v4203, 56
      %v4912 = vpop.permute.xlu0 %4911
      %4913 = vrot.lane.b32.xlu0 %v4205, 56
      %v4914 = vpop.permute.xlu0 %4913
      %4915 = vrot.lane.b32.xlu0 %v4208, 56
      %v4916 = vpop.permute.xlu0 %4915
      %4917 = vrot.lane.b32.xlu0 %v4210, 56
      %v4918 = vpop.permute.xlu0 %4917
      %4919 = vrot.lane.b32.xlu0 %v4213, 56
      %v4920 = vpop.permute.xlu0 %4919
      %4921 = vrot.lane.b32.xlu0 %v4215, 56
      %v4922 = vpop.permute.xlu0 %4921
      %4923 = vrot.lane.b32.xlu0 %v4218, 56
      %v4924 = vpop.permute.xlu0 %4923
      %4925 = vrot.lane.b32.xlu0 %v4220, 56
      %v4926 = vpop.permute.xlu0 %4925
      %4927 = vrot.lane.b32.xlu0 %v4223, 56
      %v4928 = vpop.permute.xlu0 %4927
      %4929 = vrot.lane.b32.xlu0 %v4225, 56
      %v4930 = vpop.permute.xlu0 %4929
      %4931 = vrot.lane.b32.xlu0 %v4228, 56
      %v4932 = vpop.permute.xlu0 %4931
      %4933 = vrot.lane.b32.xlu0 %v4230, 56
      %v4934 = vpop.permute.xlu0 %4933
      %4935 = vrot.lane.b32.xlu0 %v4233, 56
      %v4936 = vpop.permute.xlu0 %4935
      %4937 = vrot.lane.b32.xlu0 %v4235, 56
      %v4938 = vpop.permute.xlu0 %4937
      %4939 = vrot.lane.b32.xlu0 %v4238, 56
      %v4940 = vpop.permute.xlu0 %4939
      %4941 = vrot.lane.b32.xlu0 %v4240, 56
      %v4942 = vpop.permute.xlu0 %4941
      %4943 = vrot.lane.b32.xlu0 %v4243, 56
      %v4944 = vpop.permute.xlu0 %4943
      %4945 = vrot.lane.b32.xlu0 %v4245, 56
      %v4946 = vpop.permute.xlu0 %4945
      %4947 = vrot.lane.b32.xlu0 %v4601, 56
      %v4948 = vpop.permute.xlu0 %4947
      %4949 = vrot.lane.b32.xlu0 %v4603, 56
      %v4950 = vpop.permute.xlu0 %4949
      %4981 = vrot.lane.b32.xlu0 %v4343, 64
      %v4982 = vpop.permute.xlu0 %4981
      %4983 = vrot.lane.b32.xlu0 %v4345, 64
      %v4984 = vpop.permute.xlu0 %4983
      %4985 = vrot.lane.b32.xlu0 %v4348, 64
      %v4986 = vpop.permute.xlu0 %4985
      %4987 = vrot.lane.b32.xlu0 %v4350, 64
      %v4988 = vpop.permute.xlu0 %4987
      %4989 = vrot.lane.b32.xlu0 %v4353, 64
      %v4990 = vpop.permute.xlu0 %4989
      %4991 = vrot.lane.b32.xlu0 %v4355, 64
      %v4992 = vpop.permute.xlu0 %4991
      %4993 = vrot.lane.b32.xlu0 %v4358, 64
      %v4994 = vpop.permute.xlu0 %4993
      %4995 = vrot.lane.b32.xlu0 %v4360, 64
      %v4996 = vpop.permute.xlu0 %4995
      %4997 = vrot.lane.b32.xlu0 %v4363, 64
      %v4998 = vpop.permute.xlu0 %4997
      %4999 = vrot.lane.b32.xlu0 %v4365, 64
      %v5000 = vpop.permute.xlu0 %4999
      %5001 = vrot.lane.b32.xlu0 %v4368, 64
      %v5002 = vpop.permute.xlu0 %5001
      %5003 = vrot.lane.b32.xlu0 %v4370, 64
      %v5004 = vpop.permute.xlu0 %5003
      %5005 = vrot.lane.b32.xlu0 %v4373, 64
      %v5006 = vpop.permute.xlu0 %5005
      %5007 = vrot.lane.b32.xlu0 %v4375, 64
      %v5008 = vpop.permute.xlu0 %5007
      %5009 = vrot.lane.b32.xlu0 %v4378, 64
      %v5010 = vpop.permute.xlu0 %5009
      %5011 = vrot.lane.b32.xlu0 %v4380, 64
      %v5012 = vpop.permute.xlu0 %5011
      %5013 = vrot.lane.b32.xlu0 %v4383, 64
      %v5014 = vpop.permute.xlu0 %5013
      %5015 = vrot.lane.b32.xlu0 %v4385, 64
      %v5016 = vpop.permute.xlu0 %5015
      %5017 = vrot.lane.b32.xlu0 %v4388, 64
      %v5018 = vpop.permute.xlu0 %5017
      %5019 = vrot.lane.b32.xlu0 %v4390, 64
      %v5020 = vpop.permute.xlu0 %5019
      %5021 = vrot.lane.b32.xlu0 %v4393, 64
      %v5022 = vpop.permute.xlu0 %5021
      %5023 = vrot.lane.b32.xlu0 %v4395, 64
      %v5024 = vpop.permute.xlu0 %5023
      %5025 = vrot.lane.b32.xlu0 %v4398, 64
      %v5026 = vpop.permute.xlu0 %5025
      %5027 = vrot.lane.b32.xlu0 %v4400, 64
      %v5028 = vpop.permute.xlu0 %5027
      %5029 = vrot.lane.b32.xlu0 %v4403, 64
      %v5030 = vpop.permute.xlu0 %5029
      %5031 = vrot.lane.b32.xlu0 %v4405, 64
      %v5032 = vpop.permute.xlu0 %5031
      %5033 = vrot.lane.b32.xlu0 %v4408, 64
      %v5034 = vpop.permute.xlu0 %5033
      %5035 = vrot.lane.b32.xlu0 %v4410, 64
      %v5036 = vpop.permute.xlu0 %5035
      %5037 = vrot.lane.b32.xlu0 %v4702, 64
      %v5038 = vpop.permute.xlu0 %5037
      %5039 = vrot.lane.b32.xlu0 %v4704, 64
      %v5040 = vpop.permute.xlu0 %5039
      %v5071 = vsel %vm1538, %v4109, %v4247
      %v5072 = vsel %vm1538, %v4016, %v4249
      %v5073 = vsel %vm1538, %v4110, %v4251
      %v5074 = vsel %vm1538, %v4019, %v4253
      %v5075 = vsel %vm1538, %v4111, %v4255
      %v5076 = vsel %vm1538, %v4022, %v4257
      %v5077 = vsel %vm1538, %v4112, %v4259
      %v5078 = vsel %vm1538, %v4025, %v4261
      %v5079 = vsel %vm1538, %v4113, %v4263
      %v5080 = vsel %vm1538, %v4028, %v4265
      %v5081 = vsel %vm1538, %v4114, %v4267
      %v5082 = vsel %vm1538, %v4031, %v4269
      %v5083 = vsel %vm1538, %v4115, %v4271
      %v5084 = vsel %vm1538, %v4034, %v4273
      %v5085 = vsel %vm1538, %v4116, %v4275
      %v5086 = vsel %vm1538, %v4037, %v4277
      %v5087 = vsel %vm1538, %v4117, %v4279
      %v5088 = vsel %vm1538, %v4040, %v4281
      %v5089 = vsel %vm1538, %v4118, %v4283
      %v5090 = vsel %vm1538, %v4043, %v4285
      %v5091 = vsel %vm1538, %v4119, %v4287
      %v5092 = vsel %vm1538, %v4046, %v4289
      %v5093 = vsel %vm1538, %v4120, %v4291
      %v5094 = vsel %vm1538, %v4049, %v4293
      %v5095 = vsel %vm1538, %v4121, %v4295
      %v5096 = vsel %vm1538, %v4052, %v4297
      %v5097 = vsel %vm1538, %v4122, %v4299
      %v5098 = vsel %vm1538, %v4055, %v4301
      %v5099 = vsel %vm1538, %v4123, %v4303
      %v5100 = vsel %vm1538, %v4058, %v4305
      %v5101 = vsel %vm1571, %v5071, %v4412
      %v5102 = vsel %vm1571, %v5072, %v4414
      %v5103 = vsel %vm1571, %v5073, %v4416
      %v5104 = vsel %vm1571, %v5074, %v4418
      %v5105 = vsel %vm1571, %v5075, %v4420
      %v5106 = vsel %vm1571, %v5076, %v4422
      %v5107 = vsel %vm1571, %v5077, %v4424
      %v5108 = vsel %vm1571, %v5078, %v4426
      %v5109 = vsel %vm1571, %v5079, %v4428
      %v5110 = vsel %vm1571, %v5080, %v4430
      %v5111 = vsel %vm1571, %v5081, %v4432
      %v5112 = vsel %vm1571, %v5082, %v4434
      %v5113 = vsel %vm1571, %v5083, %v4436
      %v5114 = vsel %vm1571, %v5084, %v4438
      %v5115 = vsel %vm1571, %v5085, %v4440
      %v5116 = vsel %vm1571, %v5086, %v4442
      %v5117 = vsel %vm1571, %v5087, %v4444
      %v5118 = vsel %vm1571, %v5088, %v4446
      %v5119 = vsel %vm1571, %v5089, %v4448
      %v5120 = vsel %vm1571, %v5090, %v4450
      %v5121 = vsel %vm1571, %v5091, %v4452
      %v5122 = vsel %vm1571, %v5092, %v4454
      %v5123 = vsel %vm1571, %v5093, %v4456
      %v5124 = vsel %vm1571, %v5094, %v4458
      %v5125 = vsel %vm1571, %v5095, %v4460
      %v5126 = vsel %vm1571, %v5096, %v4462
      %v5127 = vsel %vm1571, %v5097, %v4464
      %v5128 = vsel %vm1571, %v5098, %v4466
      %v5129 = vsel %vm1571, %v5099, %v4468
      %v5130 = vsel %vm1571, %v5100, %v4470
      %v5131 = vsel %vm1604, %v1572, %v4503
      %v5132 = vsel %vm1604, %v1573, %v4505
      %v5133 = vsel %vm1604, %v5101, %v4507
      %v5134 = vsel %vm1604, %v5102, %v4509
      %v5135 = vsel %vm1604, %v5103, %v4511
      %v5136 = vsel %vm1604, %v5104, %v4513
      %v5137 = vsel %vm1604, %v5105, %v4515
      %v5138 = vsel %vm1604, %v5106, %v4517
      %v5139 = vsel %vm1604, %v5107, %v4519
      %v5140 = vsel %vm1604, %v5108, %v4521
      %v5141 = vsel %vm1604, %v5109, %v4523
      %v5142 = vsel %vm1604, %v5110, %v4525
      %v5143 = vsel %vm1604, %v5111, %v4527
      %v5144 = vsel %vm1604, %v5112, %v4529
      %v5145 = vsel %vm1604, %v5113, %v4531
      %v5146 = vsel %vm1604, %v5114, %v4533
      %v5147 = vsel %vm1604, %v5115, %v4535
      %v5148 = vsel %vm1604, %v5116, %v4537
      %v5149 = vsel %vm1604, %v5117, %v4539
      %v5150 = vsel %vm1604, %v5118, %v4541
      %v5151 = vsel %vm1604, %v5119, %v4543
      %v5152 = vsel %vm1604, %v5120, %v4545
      %v5153 = vsel %vm1604, %v5121, %v4547
      %v5154 = vsel %vm1604, %v5122, %v4549
      %v5155 = vsel %vm1604, %v5123, %v4551
      %v5156 = vsel %vm1604, %v5124, %v4553
      %v5157 = vsel %vm1604, %v5125, %v4555
      %v5158 = vsel %vm1604, %v5126, %v4557
      %v5159 = vsel %vm1604, %v5127, %v4559
      %v5160 = vsel %vm1604, %v5128, %v4561
      %v5161 = vsel %vm1604, %v5129, %v4563
      %v5162 = vsel %vm1604, %v5130, %v4565
      %v5163 = vsel %vm1637, %v5131, %v4605
      %v5164 = vsel %vm1637, %v5132, %v4607
      %v5165 = vsel %vm1637, %v5133, %v4609
      %v5166 = vsel %vm1637, %v5134, %v4611
      %v5167 = vsel %vm1637, %v5135, %v4613
      %v5168 = vsel %vm1637, %v5136, %v4615
      %v5169 = vsel %vm1637, %v5137, %v4617
      %v5170 = vsel %vm1637, %v5138, %v4619
      %v5171 = vsel %vm1637, %v5139, %v4621
      %v5172 = vsel %vm1637, %v5140, %v4623
      %v5173 = vsel %vm1637, %v5141, %v4625
      %v5174 = vsel %vm1637, %v5142, %v4627
      %v5175 = vsel %vm1637, %v5143, %v4629
      %v5176 = vsel %vm1637, %v5144, %v4631
      %v5177 = vsel %vm1637, %v5145, %v4633
      %v5178 = vsel %vm1637, %v5146, %v4635
      %v5179 = vsel %vm1637, %v5147, %v4637
      %v5180 = vsel %vm1637, %v5148, %v4639
      %v5181 = vsel %vm1637, %v5149, %v4641
      %v5182 = vsel %vm1637, %v5150, %v4643
      %v5183 = vsel %vm1637, %v5151, %v4645
      %v5184 = vsel %vm1637, %v5152, %v4647
      %v5185 = vsel %vm1637, %v5153, %v4649
      %v5186 = vsel %vm1637, %v5154, %v4651
      %v5187 = vsel %vm1637, %v5155, %v4653
      %v5188 = vsel %vm1637, %v5156, %v4655
      %v5189 = vsel %vm1637, %v5157, %v4657
      %v5190 = vsel %vm1637, %v5158, %v4659
      %v5191 = vsel %vm1637, %v5159, %v4661
      %v5192 = vsel %vm1637, %v5160, %v4663
      %v5193 = vsel %vm1637, %v5161, %v4665
      %v5194 = vsel %vm1637, %v5162, %v4667
      %v5195 = vsel %vm1670, %v5163, %v4706
      %v5196 = vsel %vm1670, %v5164, %v4708
      %v5197 = vsel %vm1670, %v5165, %v4710
      %v5198 = vsel %vm1670, %v5166, %v4712
      %v5199 = vsel %vm1670, %v5167, %v4714
      %v5200 = vsel %vm1670, %v5168, %v4716
      %v5201 = vsel %vm1670, %v5169, %v4718
      %v5202 = vsel %vm1670, %v5170, %v4720
      %v5203 = vsel %vm1670, %v5171, %v4722
      %v5204 = vsel %vm1670, %v5172, %v4724
      %v5205 = vsel %vm1670, %v5173, %v4726
      %v5206 = vsel %vm1670, %v5174, %v4728
      %v5207 = vsel %vm1670, %v5175, %v4730
      %v5208 = vsel %vm1670, %v5176, %v4732
      %v5209 = vsel %vm1670, %v5177, %v4734
      %v5210 = vsel %vm1670, %v5178, %v4736
      %v5211 = vsel %vm1670, %v5179, %v4738
      %v5212 = vsel %vm1670, %v5180, %v4740
      %v5213 = vsel %vm1670, %v5181, %v4742
      %v5214 = vsel %vm1670, %v5182, %v4744
      %v5215 = vsel %vm1670, %v5183, %v4746
      %v5216 = vsel %vm1670, %v5184, %v4748
      %v5217 = vsel %vm1670, %v5185, %v4750
      %v5218 = vsel %vm1670, %v5186, %v4752
      %v5219 = vsel %vm1670, %v5187, %v4754
      %v5220 = vsel %vm1670, %v5188, %v4756
      %v5221 = vsel %vm1670, %v5189, %v4758
      %v5222 = vsel %vm1670, %v5190, %v4760
      %v5223 = vsel %vm1670, %v5191, %v4762
      %v5224 = vsel %vm1670, %v5192, %v4764
      %v5225 = vsel %vm1670, %v5193, %v4766
      %v5226 = vsel %vm1670, %v5194, %v4768
      %v5227 = vsel %vm1703, %v5195, %v4802
      %v5228 = vsel %vm1703, %v5196, %v4804
      %v5229 = vsel %vm1703, %v5197, %v4806
      %v5230 = vsel %vm1703, %v5198, %v4808
      %v5231 = vsel %vm1703, %v5199, %v4810
      %v5232 = vsel %vm1703, %v5200, %v4812
      %v5233 = vsel %vm1703, %v5201, %v4814
      %v5234 = vsel %vm1703, %v5202, %v4816
      %v5235 = vsel %vm1703, %v5203, %v4818
      %v5236 = vsel %vm1703, %v5204, %v4820
      %v5237 = vsel %vm1703, %v5205, %v4822
      %v5238 = vsel %vm1703, %v5206, %v4824
      %v5239 = vsel %vm1703, %v5207, %v4826
      %v5240 = vsel %vm1703, %v5208, %v4828
      %v5241 = vsel %vm1703, %v5209, %v4830
      %v5242 = vsel %vm1703, %v5210, %v4832
      %v5243 = vsel %vm1703, %v5211, %v4834
      %v5244 = vsel %vm1703, %v5212, %v4836
      %v5245 = vsel %vm1703, %v5213, %v4838
      %v5246 = vsel %vm1703, %v5214, %v4840
      %v5247 = vsel %vm1703, %v5215, %v4842
      %v5248 = vsel %vm1703, %v5216, %v4844
      %v5249 = vsel %vm1703, %v5217, %v4846
      %v5250 = vsel %vm1703, %v5218, %v4848
      %v5251 = vsel %vm1703, %v5219, %v4850
      %v5252 = vsel %vm1703, %v5220, %v4852
      %v5253 = vsel %vm1703, %v5221, %v4854
      %v5254 = vsel %vm1703, %v5222, %v4856
      %v5255 = vsel %vm1703, %v5223, %v4858
      %v5256 = vsel %vm1703, %v5224, %v4860
      %v5257 = vsel %vm1703, %v5225, %v1311
      %v5258 = vsel %vm1703, %v5226, %v1313
      %v5259 = vsel %vm1736, %v5227, %v4892
      %v5260 = vsel %vm1736, %v5228, %v4894
      %v5261 = vsel %vm1736, %v5229, %v4896
      %v5262 = vsel %vm1736, %v5230, %v4898
      %v5263 = vsel %vm1736, %v5231, %v4900
      %v5264 = vsel %vm1736, %v5232, %v4902
      %v5265 = vsel %vm1736, %v5233, %v4904
      %v5266 = vsel %vm1736, %v5234, %v4906
      %v5267 = vsel %vm1736, %v5235, %v4908
      %v5268 = vsel %vm1736, %v5236, %v4910
      %v5269 = vsel %vm1736, %v5237, %v4912
      %v5270 = vsel %vm1736, %v5238, %v4914
      %v5271 = vsel %vm1736, %v5239, %v4916
      %v5272 = vsel %vm1736, %v5240, %v4918
      %v5273 = vsel %vm1736, %v5241, %v4920
      %v5274 = vsel %vm1736, %v5242, %v4922
      %v5275 = vsel %vm1736, %v5243, %v4924
      %v5276 = vsel %vm1736, %v5244, %v4926
      %v5277 = vsel %vm1736, %v5245, %v4928
      %v5278 = vsel %vm1736, %v5246, %v4930
      %v5279 = vsel %vm1736, %v5247, %v4932
      %v5280 = vsel %vm1736, %v5248, %v4934
      %v5281 = vsel %vm1736, %v5249, %v4936
      %v5282 = vsel %vm1736, %v5250, %v4938
      %v5283 = vsel %vm1736, %v5251, %v4940
      %v5284 = vsel %vm1736, %v5252, %v4942
      %v5285 = vsel %vm1736, %v5253, %v4944
      %v5286 = vsel %vm1736, %v5254, %v4946
      %v5287 = vsel %vm1736, %v5255, %v4948
      %v5288 = vsel %vm1736, %v5256, %v4950
      %v5289 = vsel %vm1736, %v5257, %v1407
      %v5290 = vsel %vm1736, %v5258, %v1409
      %v5291 = vsel %vm1769, %v5259, %v4982
      %v5292 = vsel %vm1769, %v5260, %v4984
      %v5293 = vsel %vm1769, %v5261, %v4986
      %v5294 = vsel %vm1769, %v5262, %v4988
      %v5295 = vsel %vm1769, %v5263, %v4990
      %v5296 = vsel %vm1769, %v5264, %v4992
      %v5297 = vsel %vm1769, %v5265, %v4994
      %v5298 = vsel %vm1769, %v5266, %v4996
      %v5299 = vsel %vm1769, %v5267, %v4998
      %v5300 = vsel %vm1769, %v5268, %v5000
      %v5301 = vsel %vm1769, %v5269, %v5002
      %v5302 = vsel %vm1769, %v5270, %v5004
      %v5303 = vsel %vm1769, %v5271, %v5006
      %v5304 = vsel %vm1769, %v5272, %v5008
      %v5305 = vsel %vm1769, %v5273, %v5010
      %v5306 = vsel %vm1769, %v5274, %v5012
      %v5307 = vsel %vm1769, %v5275, %v5014
      %v5308 = vsel %vm1769, %v5276, %v5016
      %v5309 = vsel %vm1769, %v5277, %v5018
      %v5310 = vsel %vm1769, %v5278, %v5020
      %v5311 = vsel %vm1769, %v5279, %v5022
      %v5312 = vsel %vm1769, %v5280, %v5024
      %v5313 = vsel %vm1769, %v5281, %v5026
      %v5314 = vsel %vm1769, %v5282, %v5028
      %v5315 = vsel %vm1769, %v5283, %v5030
      %v5316 = vsel %vm1769, %v5284, %v5032
      %v5317 = vsel %vm1769, %v5285, %v5034
      %v5318 = vsel %vm1769, %v5286, %v5036
      %v5319 = vsel %vm1769, %v5287, %v5038
      %v5320 = vsel %vm1769, %v5288, %v5040
      %v5321 = vsel %vm1769, %v5289, %v1503
      %v5322 = vsel %vm1769, %v5290, %v1505
      %v5323 = vpack.c.bf16 %v5292, %v5291
      %v5324 = vpack.c.bf16 %v5294, %v5293
      %v5325 = vpack.c.bf16 %v5296, %v5295
      %v5326 = vpack.c.bf16 %v5298, %v5297
      %v5327 = vpack.c.bf16 %v5300, %v5299
      %v5328 = vpack.c.bf16 %v5302, %v5301
      %v5329 = vpack.c.bf16 %v5304, %v5303
      %v5330 = vpack.c.bf16 %v5306, %v5305
      %v5331 = vpack.c.bf16 %v5308, %v5307
      %v5332 = vpack.c.bf16 %v5310, %v5309
      %v5333 = vpack.c.bf16 %v5312, %v5311
      %v5334 = vpack.c.bf16 %v5314, %v5313
      %v5335 = vpack.c.bf16 %v5316, %v5315
      %v5336 = vpack.c.bf16 %v5318, %v5317
      %v5337 = vpack.c.bf16 %v5320, %v5319
      %v5338 = vpack.c.bf16 %v5322, %v5321
      %v5340 = vsel %vm1854, %v5323, 0
      %v5343 = vsel %vm1854, %v5324, 0
      %v5346 = vsel %vm1854, %v5325, 0
      %v5349 = vsel %vm1854, %v5326, 0
      %v5352 = vsel %vm1854, %v5327, 0
      %v5355 = vsel %vm1854, %v5328, 0
      %v5358 = vsel %vm1854, %v5329, 0
      %v5361 = vsel %vm1854, %v5330, 0
      %v5364 = vsel %vm1854, %v5331, 0
      %v5367 = vsel %vm1854, %v5332, 0
      %v5370 = vsel %vm1854, %v5333, 0
      %v5373 = vsel %vm1854, %v5334, 0
      %v5376 = vsel %vm1854, %v5335, 0
      %v5379 = vsel %vm1854, %v5336, 0
      %v5382 = vsel %vm1854, %v5337, 0
      %v5385 = vsel %vm1854, %v5338, 0
      %5387 = vmatprep.subr.bf16.mxu0 0
      %5388 = vmatpush1.bf16.msra.mxu0 %v1845
      %5389 = vmatprep.subr.bf16.mxu0 0
      %5390 = vmatpush1.bf16.msra.mxu0 %v1846
      %5391 = vmatprep.subr.bf16.mxu0 0
      %5392 = vmatpush1.bf16.msra.mxu0 %v1847
      %5393 = vmatprep.subr.bf16.mxu0 0
      %5394 = vmatpush1.bf16.msra.mxu0 %v1848
      %5395 = vmatprep.subr.bf16.mxu0 0
      %5396 = vmatpush1.bf16.msra.mxu0 %v1905
      %5397 = vmatprep.subr.bf16.mxu0 0
      %5398 = vmatpush1.bf16.msra.mxu0 0
      %5399 = vmatprep.subr.bf16.mxu0 0
      %5400 = vmatpush1.bf16.msra.mxu0 0
      %5401 = vmatprep.subr.bf16.mxu0 0
      %5402 = vmatpush1.bf16.msra.mxu0 0
      %5403 = vmatprep.subr.bf16.mxu0 0
      %5404 = vmatpush1.bf16.msra.mxu0 0
      %5405 = vmatprep.subr.bf16.mxu0 0
      %5406 = vmatpush1.bf16.msra.mxu0 0
      %5407 = vmatprep.subr.bf16.mxu0 0
      %5408 = vmatpush1.bf16.msra.mxu0 0
      %5409 = vmatprep.subr.bf16.mxu0 0
      %5410 = vmatpush1.bf16.msra.mxu0 0
      %5411 = vmatprep.subr.bf16.mxu0 0
      %5412 = vmatpush1.bf16.msra.mxu0 0
      %5413 = vmatprep.subr.bf16.mxu0 0
      %5414 = vmatpush1.bf16.msra.mxu0 0
      %5415 = vmatprep.subr.bf16.mxu0 0
      %5416 = vmatpush1.bf16.msra.mxu0 0
      %5417 = vmatprep.subr.bf16.mxu0 0
      %5418 = vmatpush1.bf16.msra.mxu0 0
      %5419 = vmatprep.mubr.bf16.mxu0 0
      %5420 = vmatmul.mubr.bf16.gmra.mrb[0].mxu0 %v5340
      %v5421 = vpop.f32.mrb[0].mxu0
      %v5422 = vadd.f32 0.0, %v5421
      %v5423 = vpop.f32.mrb[0].mxu0
      %v5424 = vpop.f32.mrb[0].mxu0
      %v5425 = vadd.f32 0.0, %v5424
      %v5426 = vpop.f32.mrb[0].mxu0
      %5427 = vmatprep.mubr.bf16.mxu0 0
      %5428 = vmatmul.mubr.bf16.gmra.mrb[0].mxu0 %v5343
      %v5429 = vpop.f32.mrb[0].mxu0
      %v5430 = vadd.f32 0.0, %v5429
      %v5431 = vpop.f32.mrb[0].mxu0
      %v5432 = vpop.f32.mrb[0].mxu0
      %v5433 = vadd.f32 0.0, %v5432
      %v5434 = vpop.f32.mrb[0].mxu0
      %5435 = vmatprep.mubr.bf16.mxu0 0
      %5436 = vmatmul.mubr.bf16.gmra.mrb[0].mxu0 %v5346
      %v5437 = vpop.f32.mrb[0].mxu0
      %v5438 = vadd.f32 0.0, %v5437
      %v5439 = vpop.f32.mrb[0].mxu0
      %v5440 = vpop.f32.mrb[0].mxu0
      %v5441 = vadd.f32 0.0, %v5440
      %v5442 = vpop.f32.mrb[0].mxu0
      %5443 = vmatprep.mubr.bf16.mxu0 0
      %5444 = vmatmul.mubr.bf16.gmra.mrb[0].mxu0 %v5349
      %v5445 = vpop.f32.mrb[0].mxu0
      %v5446 = vadd.f32 0.0, %v5445
      %v5447 = vpop.f32.mrb[0].mxu0
      %v5448 = vpop.f32.mrb[0].mxu0
      %v5449 = vadd.f32 0.0, %v5448
      %v5450 = vpop.f32.mrb[0].mxu0
      %5451 = vmatprep.mubr.bf16.mxu0 0
      %5452 = vmatmul.mubr.bf16.gmra.mrb[0].mxu0 %v5352
      %v5453 = vpop.f32.mrb[0].mxu0
      %v5454 = vadd.f32 0.0, %v5453
      %v5455 = vpop.f32.mrb[0].mxu0
      %v5456 = vpop.f32.mrb[0].mxu0
      %v5457 = vadd.f32 0.0, %v5456
      %v5458 = vpop.f32.mrb[0].mxu0
      %5459 = vmatprep.mubr.bf16.mxu0 0
      %5460 = vmatmul.mubr.bf16.gmra.mrb[0].mxu0 %v5355
      %v5461 = vpop.f32.mrb[0].mxu0
      %v5462 = vadd.f32 0.0, %v5461
      %v5463 = vpop.f32.mrb[0].mxu0
      %v5464 = vpop.f32.mrb[0].mxu0
      %v5465 = vadd.f32 0.0, %v5464
      %v5466 = vpop.f32.mrb[0].mxu0
      %5467 = vmatprep.mubr.bf16.mxu0 0
      %5468 = vmatmul.mubr.bf16.gmra.mrb[0].mxu0 %v5358
      %v5469 = vpop.f32.mrb[0].mxu0
      %v5470 = vadd.f32 0.0, %v5469
      %v5471 = vpop.f32.mrb[0].mxu0
      %v5472 = vpop.f32.mrb[0].mxu0
      %v5473 = vadd.f32 0.0, %v5472
      %v5474 = vpop.f32.mrb[0].mxu0
      %5475 = vmatprep.mubr.bf16.mxu0 0
      %5476 = vmatmul.mubr.bf16.gmra.mrb[0].mxu0 %v5361
      %v5477 = vpop.f32.mrb[0].mxu0
      %v5478 = vadd.f32 0.0, %v5477
      %v5479 = vpop.f32.mrb[0].mxu0
      %v5480 = vpop.f32.mrb[0].mxu0
      %v5481 = vadd.f32 0.0, %v5480
      %v5482 = vpop.f32.mrb[0].mxu0
      %5483 = vmatprep.mubr.bf16.mxu0 0
      %5484 = vmatmul.mubr.bf16.gmra.mrb[0].mxu0 %v5364
      %v5485 = vpop.f32.mrb[0].mxu0
      %v5486 = vadd.f32 0.0, %v5485
      %v5487 = vpop.f32.mrb[0].mxu0
      %v5488 = vpop.f32.mrb[0].mxu0
      %v5489 = vadd.f32 0.0, %v5488
      %v5490 = vpop.f32.mrb[0].mxu0
      %5491 = vmatprep.mubr.bf16.mxu0 0
      %5492 = vmatmul.mubr.bf16.gmra.mrb[0].mxu0 %v5367
      %v5493 = vpop.f32.mrb[0].mxu0
      %v5494 = vadd.f32 0.0, %v5493
      %v5495 = vpop.f32.mrb[0].mxu0
      %v5496 = vpop.f32.mrb[0].mxu0
      %v5497 = vadd.f32 0.0, %v5496
      %v5498 = vpop.f32.mrb[0].mxu0
      %5499 = vmatprep.mubr.bf16.mxu0 0
      %5500 = vmatmul.mubr.bf16.gmra.mrb[0].mxu0 %v5370
      %v5501 = vpop.f32.mrb[0].mxu0
      %v5502 = vadd.f32 0.0, %v5501
      %v5503 = vpop.f32.mrb[0].mxu0
      %v5504 = vpop.f32.mrb[0].mxu0
      %v5505 = vadd.f32 0.0, %v5504
      %v5506 = vpop.f32.mrb[0].mxu0
      %5507 = vmatprep.mubr.bf16.mxu0 0
      %5508 = vmatmul.mubr.bf16.gmra.mrb[0].mxu0 %v5373
      %v5509 = vpop.f32.mrb[0].mxu0
      %v5510 = vadd.f32 0.0, %v5509
      %v5511 = vpop.f32.mrb[0].mxu0
      %v5512 = vpop.f32.mrb[0].mxu0
      %v5513 = vadd.f32 0.0, %v5512
      %v5514 = vpop.f32.mrb[0].mxu0
      %5515 = vmatprep.mubr.bf16.mxu0 0
      %5516 = vmatmul.mubr.bf16.gmra.mrb[0].mxu0 %v5376
      %v5517 = vpop.f32.mrb[0].mxu0
      %v5518 = vadd.f32 0.0, %v5517
      %v5519 = vpop.f32.mrb[0].mxu0
      %v5520 = vpop.f32.mrb[0].mxu0
      %v5521 = vadd.f32 0.0, %v5520
      %v5522 = vpop.f32.mrb[0].mxu0
      %5523 = vmatprep.mubr.bf16.mxu0 0
      %5524 = vmatmul.mubr.bf16.gmra.mrb[0].mxu0 %v5379
      %v5525 = vpop.f32.mrb[0].mxu0
      %v5526 = vadd.f32 0.0, %v5525
      %v5527 = vpop.f32.mrb[0].mxu0
      %v5528 = vpop.f32.mrb[0].mxu0
      %v5529 = vadd.f32 0.0, %v5528
      %v5530 = vpop.f32.mrb[0].mxu0
      %5531 = vmatprep.mubr.bf16.mxu0 0
      %5532 = vmatmul.mubr.bf16.gmra.mrb[0].mxu0 %v5382
      %v5533 = vpop.f32.mrb[0].mxu0
      %v5534 = vadd.f32 0.0, %v5533
      %v5535 = vpop.f32.mrb[0].mxu0
      %v5536 = vpop.f32.mrb[0].mxu0
      %v5537 = vadd.f32 0.0, %v5536
      %v5538 = vpop.f32.mrb[0].mxu0
      %5539 = vmatprep.mubr.bf16.mxu0 0
      %5540 = vmatmul.mubr.bf16.gmra.mrb[0].mxu0 %v5385
      %v5541 = vpop.f32.mrb[0].mxu0
      %v5542 = vadd.f32 0.0, %v5541
      %v5543 = vpop.f32.mrb[0].mxu0
      %v5544 = vpop.f32.mrb[0].mxu0
      %v5545 = vadd.f32 0.0, %v5544
      %v5546 = vpop.f32.mrb[0].mxu0
      %5547 = vdwg.mxu0
      %v5548 = vmul.f32 %v5422, %v2073
      %v5549 = vmul.f32 %v5425, %v2073
      %v5550 = vmul.f32 %v5430, %v2073
      %v5551 = vmul.f32 %v5433, %v2073
      %v5552 = vmul.f32 %v5438, %v2073
      %v5553 = vmul.f32 %v5441, %v2073
      %v5554 = vmul.f32 %v5446, %v2073
      %v5555 = vmul.f32 %v5449, %v2073
      %v5556 = vmul.f32 %v5454, %v2073
      %v5557 = vmul.f32 %v5457, %v2073
      %v5558 = vmul.f32 %v5462, %v2073
      %v5559 = vmul.f32 %v5465, %v2073
      %v5560 = vmul.f32 %v5470, %v2073
      %v5561 = vmul.f32 %v5473, %v2073
      %v5562 = vmul.f32 %v5478, %v2073
      %v5563 = vmul.f32 %v5481, %v2073
      %v5564 = vmul.f32 %v5486, %v2073
      %v5565 = vmul.f32 %v5489, %v2073
      %v5566 = vmul.f32 %v5494, %v2073
      %v5567 = vmul.f32 %v5497, %v2073
      %v5568 = vmul.f32 %v5502, %v2073
      %v5569 = vmul.f32 %v5505, %v2073
      %v5570 = vmul.f32 %v5510, %v2073
      %v5571 = vmul.f32 %v5513, %v2073
      %v5572 = vmul.f32 %v5518, %v2073
      %v5573 = vmul.f32 %v5521, %v2073
      %v5574 = vmul.f32 %v5526, %v2073
      %v5575 = vmul.f32 %v5529, %v2073
      %v5576 = vmul.f32 %v5534, %v2073
      %v5577 = vmul.f32 %v5537, %v2073
      %v5578 = vmul.f32 %v5542, %v2073
      %v5579 = vmul.f32 %v5545, %v2073
      %v5580 = vadd.f32 %v5548, %v2112
      %v5581 = vadd.f32 %v5549, %v2112
      %v5582 = vadd.f32 %v5550, %v2112
      %v5583 = vadd.f32 %v5551, %v2112
      %v5584 = vadd.f32 %v5552, %v2112
      %v5585 = vadd.f32 %v5553, %v2112
      %v5586 = vadd.f32 %v5554, %v2112
      %v5587 = vadd.f32 %v5555, %v2112
      %v5588 = vadd.f32 %v5556, %v2112
      %v5589 = vadd.f32 %v5557, %v2112
      %v5590 = vadd.f32 %v5558, %v2112
      %v5591 = vadd.f32 %v5559, %v2112
      %v5592 = vadd.f32 %v5560, %v2112
      %v5593 = vadd.f32 %v5561, %v2112
      %v5594 = vadd.f32 %v5562, %v2112
      %v5595 = vadd.f32 %v5563, %v2112
      %v5596 = vadd.f32 %v5564, %v2112
      %v5597 = vadd.f32 %v5565, %v2112
      %v5598 = vadd.f32 %v5566, %v2112
      %v5599 = vadd.f32 %v5567, %v2112
      %v5600 = vadd.f32 %v5568, %v2112
      %v5601 = vadd.f32 %v5569, %v2112
      %v5602 = vadd.f32 %v5570, %v2112
      %v5603 = vadd.f32 %v5571, %v2112
      %v5604 = vadd.f32 %v5572, %v2112
      %v5605 = vadd.f32 %v5573, %v2112
      %v5606 = vadd.f32 %v5574, %v2112
      %v5607 = vadd.f32 %v5575, %v2112
      %v5608 = vadd.f32 %v5576, %v2112
      %v5609 = vadd.f32 %v5577, %v2112
      %v5610 = vadd.f32 %v5578, %v2112
      %v5611 = vadd.f32 %v5579, %v2112
      %v5612 = vmax.f32 %v5580, 0.0
      %v5613 = vmax.f32 %v5581, 0.0
      %v5614 = vmax.f32 %v5582, 0.0
      %v5615 = vmax.f32 %v5583, 0.0
      %v5616 = vmax.f32 %v5584, 0.0
      %v5617 = vmax.f32 %v5585, 0.0
      %v5618 = vmax.f32 %v5586, 0.0
      %v5619 = vmax.f32 %v5587, 0.0
      %v5620 = vmax.f32 %v5588, 0.0
      %v5621 = vmax.f32 %v5589, 0.0
      %v5622 = vmax.f32 %v5590, 0.0
      %v5623 = vmax.f32 %v5591, 0.0
      %v5624 = vmax.f32 %v5592, 0.0
      %v5625 = vmax.f32 %v5593, 0.0
      %v5626 = vmax.f32 %v5594, 0.0
      %v5627 = vmax.f32 %v5595, 0.0
      %v5628 = vmax.f32 %v5596, 0.0
      %v5629 = vmax.f32 %v5597, 0.0
      %v5630 = vmax.f32 %v5598, 0.0
      %v5631 = vmax.f32 %v5599, 0.0
      %v5632 = vmax.f32 %v5600, 0.0
      %v5633 = vmax.f32 %v5601, 0.0
      %v5634 = vmax.f32 %v5602, 0.0
      %v5635 = vmax.f32 %v5603, 0.0
      %v5636 = vmax.f32 %v5604, 0.0
      %v5637 = vmax.f32 %v5605, 0.0
      %v5638 = vmax.f32 %v5606, 0.0
      %v5639 = vmax.f32 %v5607, 0.0
      %v5640 = vmax.f32 %v5608, 0.0
      %v5641 = vmax.f32 %v5609, 0.0
      %v5642 = vmax.f32 %v5610, 0.0
      %v5643 = vmax.f32 %v5611, 0.0
      %v5676 = vrot.slane %v5612, 7
      %v5677 = vrot.slane %v5613, 7
      %v5678 = vsel %vm430, %v5676, %v5677
      %v5679 = vrot.slane %v5614, 7
      %v5680 = vrot.slane %v5615, 7
      %v5681 = vsel %vm430, %v5679, %v5680
      %v5682 = vrot.slane %v5616, 7
      %v5683 = vrot.slane %v5617, 7
      %v5684 = vsel %vm430, %v5682, %v5683
      %v5685 = vrot.slane %v5618, 7
      %v5686 = vrot.slane %v5619, 7
      %v5687 = vsel %vm430, %v5685, %v5686
      %v5688 = vrot.slane %v5620, 7
      %v5689 = vrot.slane %v5621, 7
      %v5690 = vsel %vm430, %v5688, %v5689
      %v5691 = vrot.slane %v5622, 7
      %v5692 = vrot.slane %v5623, 7
      %v5693 = vsel %vm430, %v5691, %v5692
      %v5694 = vrot.slane %v5624, 7
      %v5695 = vrot.slane %v5625, 7
      %v5696 = vsel %vm430, %v5694, %v5695
      %v5697 = vrot.slane %v5626, 7
      %v5698 = vrot.slane %v5627, 7
      %v5699 = vsel %vm430, %v5697, %v5698
      %v5700 = vrot.slane %v5628, 7
      %v5701 = vrot.slane %v5629, 7
      %v5702 = vsel %vm430, %v5700, %v5701
      %v5703 = vrot.slane %v5630, 7
      %v5704 = vrot.slane %v5631, 7
      %v5705 = vsel %vm430, %v5703, %v5704
      %v5706 = vrot.slane %v5632, 7
      %v5707 = vrot.slane %v5633, 7
      %v5708 = vsel %vm430, %v5706, %v5707
      %v5709 = vrot.slane %v5634, 7
      %v5710 = vrot.slane %v5635, 7
      %v5711 = vsel %vm430, %v5709, %v5710
      %v5712 = vrot.slane %v5636, 7
      %v5713 = vrot.slane %v5637, 7
      %v5714 = vsel %vm430, %v5712, %v5713
      %v5715 = vrot.slane %v5638, 7
      %v5716 = vrot.slane %v5639, 7
      %v5717 = vsel %vm430, %v5715, %v5716
      %v5718 = vrot.slane %v5640, 7
      %v5719 = vrot.slane %v5641, 7
      %v5720 = vsel %vm430, %v5718, %v5719
      %v5721 = vrot.slane %v5642, 7
      %v5722 = vrot.slane %v5643, 7
      %v5723 = vsel %vm430, %v5721, %v5722
      %v5772 = vsel %vm430, 0.0, %v5676
      %v5773 = vsel %vm430, 0.0, %v5679
      %v5774 = vsel %vm430, 0.0, %v5682
      %v5775 = vsel %vm430, 0.0, %v5685
      %v5776 = vsel %vm430, 0.0, %v5688
      %v5777 = vsel %vm430, 0.0, %v5691
      %v5778 = vsel %vm430, 0.0, %v5694
      %v5779 = vsel %vm430, 0.0, %v5697
      %v5780 = vsel %vm430, 0.0, %v5700
      %v5781 = vsel %vm430, 0.0, %v5703
      %v5782 = vsel %vm430, 0.0, %v5706
      %v5783 = vsel %vm430, 0.0, %v5709
      %v5784 = vsel %vm430, 0.0, %v5712
      %v5785 = vsel %vm430, 0.0, %v5715
      %v5786 = vsel %vm430, 0.0, %v5718
      %v5787 = vsel %vm430, 0.0, %v5721
      %v5788 = vsel %vm430, %v5677, 0.0
      %v5789 = vsel %vm430, %v5680, 0.0
      %v5790 = vsel %vm430, %v5683, 0.0
      %v5791 = vsel %vm430, %v5686, 0.0
      %v5792 = vsel %vm430, %v5689, 0.0
      %v5793 = vsel %vm430, %v5692, 0.0
      %v5794 = vsel %vm430, %v5695, 0.0
      %v5795 = vsel %vm430, %v5698, 0.0
      %v5796 = vsel %vm430, %v5701, 0.0
      %v5797 = vsel %vm430, %v5704, 0.0
      %v5798 = vsel %vm430, %v5707, 0.0
      %v5799 = vsel %vm430, %v5710, 0.0
      %v5800 = vsel %vm430, %v5713, 0.0
      %v5801 = vsel %vm430, %v5716, 0.0
      %v5802 = vsel %vm430, %v5719, 0.0
      %v5803 = vsel %vm430, %v5722, 0.0
      %v5834 = vrot.slane %v5772, 1
      %v5835 = vrot.slane %v5678, 1
      %v5836 = vsel %vm596, %v5834, %v5835
      %v5837 = vrot.slane %v5788, 1
      %v5838 = vsel %vm596, %v5835, %v5837
      %v5839 = vrot.slane %v5773, 1
      %v5840 = vrot.slane %v5681, 1
      %v5841 = vsel %vm596, %v5839, %v5840
      %v5842 = vrot.slane %v5789, 1
      %v5843 = vsel %vm596, %v5840, %v5842
      %v5844 = vrot.slane %v5774, 1
      %v5845 = vrot.slane %v5684, 1
      %v5846 = vsel %vm596, %v5844, %v5845
      %v5847 = vrot.slane %v5790, 1
      %v5848 = vsel %vm596, %v5845, %v5847
      %v5849 = vrot.slane %v5775, 1
      %v5850 = vrot.slane %v5687, 1
      %v5851 = vsel %vm596, %v5849, %v5850
      %v5852 = vrot.slane %v5791, 1
      %v5853 = vsel %vm596, %v5850, %v5852
      %v5854 = vrot.slane %v5776, 1
      %v5855 = vrot.slane %v5690, 1
      %v5856 = vsel %vm596, %v5854, %v5855
      %v5857 = vrot.slane %v5792, 1
      %v5858 = vsel %vm596, %v5855, %v5857
      %v5859 = vrot.slane %v5777, 1
      %v5860 = vrot.slane %v5693, 1
      %v5861 = vsel %vm596, %v5859, %v5860
      %v5862 = vrot.slane %v5793, 1
      %v5863 = vsel %vm596, %v5860, %v5862
      %v5864 = vrot.slane %v5778, 1
      %v5865 = vrot.slane %v5696, 1
      %v5866 = vsel %vm596, %v5864, %v5865
      %v5867 = vrot.slane %v5794, 1
      %v5868 = vsel %vm596, %v5865, %v5867
      %v5869 = vrot.slane %v5779, 1
      %v5870 = vrot.slane %v5699, 1
      %v5871 = vsel %vm596, %v5869, %v5870
      %v5872 = vrot.slane %v5795, 1
      %v5873 = vsel %vm596, %v5870, %v5872
      %v5874 = vrot.slane %v5780, 1
      %v5875 = vrot.slane %v5702, 1
      %v5876 = vsel %vm596, %v5874, %v5875
      %v5877 = vrot.slane %v5796, 1
      %v5878 = vsel %vm596, %v5875, %v5877
      %v5879 = vrot.slane %v5781, 1
      %v5880 = vrot.slane %v5705, 1
      %v5881 = vsel %vm596, %v5879, %v5880
      %v5882 = vrot.slane %v5797, 1
      %v5883 = vsel %vm596, %v5880, %v5882
      %v5884 = vrot.slane %v5782, 1
      %v5885 = vrot.slane %v5708, 1
      %v5886 = vsel %vm596, %v5884, %v5885
      %v5887 = vrot.slane %v5798, 1
      %v5888 = vsel %vm596, %v5885, %v5887
      %v5889 = vrot.slane %v5783, 1
      %v5890 = vrot.slane %v5711, 1
      %v5891 = vsel %vm596, %v5889, %v5890
      %v5892 = vrot.slane %v5799, 1
      %v5893 = vsel %vm596, %v5890, %v5892
      %v5894 = vrot.slane %v5784, 1
      %v5895 = vrot.slane %v5714, 1
      %v5896 = vsel %vm596, %v5894, %v5895
      %v5897 = vrot.slane %v5800, 1
      %v5898 = vsel %vm596, %v5895, %v5897
      %v5899 = vrot.slane %v5785, 1
      %v5900 = vrot.slane %v5717, 1
      %v5901 = vsel %vm596, %v5899, %v5900
      %v5902 = vrot.slane %v5801, 1
      %v5903 = vsel %vm596, %v5900, %v5902
      %v5904 = vrot.slane %v5786, 1
      %v5905 = vrot.slane %v5720, 1
      %v5906 = vsel %vm596, %v5904, %v5905
      %v5907 = vrot.slane %v5802, 1
      %v5908 = vsel %vm596, %v5905, %v5907
      %5909 = vrot.lane.b32.xlu0 %v5836, 64
      %v5910 = vpop.permute.xlu0 %5909
      %5911 = vrot.lane.b32.xlu0 %v5838, 64
      %v5912 = vpop.permute.xlu0 %5911
      %5913 = vrot.lane.b32.xlu0 %v5841, 64
      %v5914 = vpop.permute.xlu0 %5913
      %5915 = vrot.lane.b32.xlu0 %v5843, 64
      %v5916 = vpop.permute.xlu0 %5915
      %5917 = vrot.lane.b32.xlu0 %v5846, 64
      %v5918 = vpop.permute.xlu0 %5917
      %5919 = vrot.lane.b32.xlu0 %v5848, 64
      %v5920 = vpop.permute.xlu0 %5919
      %5921 = vrot.lane.b32.xlu0 %v5851, 64
      %v5922 = vpop.permute.xlu0 %5921
      %5923 = vrot.lane.b32.xlu0 %v5853, 64
      %v5924 = vpop.permute.xlu0 %5923
      %5925 = vrot.lane.b32.xlu0 %v5856, 64
      %v5926 = vpop.permute.xlu0 %5925
      %5927 = vrot.lane.b32.xlu0 %v5858, 64
      %v5928 = vpop.permute.xlu0 %5927
      %5929 = vrot.lane.b32.xlu0 %v5861, 64
      %v5930 = vpop.permute.xlu0 %5929
      %5931 = vrot.lane.b32.xlu0 %v5863, 64
      %v5932 = vpop.permute.xlu0 %5931
      %5933 = vrot.lane.b32.xlu0 %v5866, 64
      %v5934 = vpop.permute.xlu0 %5933
      %5935 = vrot.lane.b32.xlu0 %v5868, 64
      %v5936 = vpop.permute.xlu0 %5935
      %5937 = vrot.lane.b32.xlu0 %v5871, 64
      %v5938 = vpop.permute.xlu0 %5937
      %5939 = vrot.lane.b32.xlu0 %v5873, 64
      %v5940 = vpop.permute.xlu0 %5939
      %5941 = vrot.lane.b32.xlu0 %v5876, 64
      %v5942 = vpop.permute.xlu0 %5941
      %5943 = vrot.lane.b32.xlu0 %v5878, 64
      %v5944 = vpop.permute.xlu0 %5943
      %5945 = vrot.lane.b32.xlu0 %v5881, 64
      %v5946 = vpop.permute.xlu0 %5945
      %5947 = vrot.lane.b32.xlu0 %v5883, 64
      %v5948 = vpop.permute.xlu0 %5947
      %5949 = vrot.lane.b32.xlu0 %v5886, 64
      %v5950 = vpop.permute.xlu0 %5949
      %5951 = vrot.lane.b32.xlu0 %v5888, 64
      %v5952 = vpop.permute.xlu0 %5951
      %5953 = vrot.lane.b32.xlu0 %v5891, 64
      %v5954 = vpop.permute.xlu0 %5953
      %5955 = vrot.lane.b32.xlu0 %v5893, 64
      %v5956 = vpop.permute.xlu0 %5955
      %5957 = vrot.lane.b32.xlu0 %v5896, 64
      %v5958 = vpop.permute.xlu0 %5957
      %5959 = vrot.lane.b32.xlu0 %v5898, 64
      %v5960 = vpop.permute.xlu0 %5959
      %5961 = vrot.lane.b32.xlu0 %v5901, 64
      %v5962 = vpop.permute.xlu0 %5961
      %5963 = vrot.lane.b32.xlu0 %v5903, 64
      %v5964 = vpop.permute.xlu0 %5963
      %5965 = vrot.lane.b32.xlu0 %v5906, 64
      %v5966 = vpop.permute.xlu0 %5965
      %5967 = vrot.lane.b32.xlu0 %v5908, 64
      %v5968 = vpop.permute.xlu0 %5967
      %v5999 = vrot.slane %v5772, 2
      %v6000 = vrot.slane %v5678, 2
      %v6001 = vsel %vm773, %v5999, %v6000
      %v6002 = vrot.slane %v5788, 2
      %v6003 = vsel %vm773, %v6000, %v6002
      %v6004 = vrot.slane %v5773, 2
      %v6005 = vrot.slane %v5681, 2
      %v6006 = vsel %vm773, %v6004, %v6005
      %v6007 = vrot.slane %v5789, 2
      %v6008 = vsel %vm773, %v6005, %v6007
      %v6009 = vrot.slane %v5774, 2
      %v6010 = vrot.slane %v5684, 2
      %v6011 = vsel %vm773, %v6009, %v6010
      %v6012 = vrot.slane %v5790, 2
      %v6013 = vsel %vm773, %v6010, %v6012
      %v6014 = vrot.slane %v5775, 2
      %v6015 = vrot.slane %v5687, 2
      %v6016 = vsel %vm773, %v6014, %v6015
      %v6017 = vrot.slane %v5791, 2
      %v6018 = vsel %vm773, %v6015, %v6017
      %v6019 = vrot.slane %v5776, 2
      %v6020 = vrot.slane %v5690, 2
      %v6021 = vsel %vm773, %v6019, %v6020
      %v6022 = vrot.slane %v5792, 2
      %v6023 = vsel %vm773, %v6020, %v6022
      %v6024 = vrot.slane %v5777, 2
      %v6025 = vrot.slane %v5693, 2
      %v6026 = vsel %vm773, %v6024, %v6025
      %v6027 = vrot.slane %v5793, 2
      %v6028 = vsel %vm773, %v6025, %v6027
      %v6029 = vrot.slane %v5778, 2
      %v6030 = vrot.slane %v5696, 2
      %v6031 = vsel %vm773, %v6029, %v6030
      %v6032 = vrot.slane %v5794, 2
      %v6033 = vsel %vm773, %v6030, %v6032
      %v6034 = vrot.slane %v5779, 2
      %v6035 = vrot.slane %v5699, 2
      %v6036 = vsel %vm773, %v6034, %v6035
      %v6037 = vrot.slane %v5795, 2
      %v6038 = vsel %vm773, %v6035, %v6037
      %v6039 = vrot.slane %v5780, 2
      %v6040 = vrot.slane %v5702, 2
      %v6041 = vsel %vm773, %v6039, %v6040
      %v6042 = vrot.slane %v5796, 2
      %v6043 = vsel %vm773, %v6040, %v6042
      %v6044 = vrot.slane %v5781, 2
      %v6045 = vrot.slane %v5705, 2
      %v6046 = vsel %vm773, %v6044, %v6045
      %v6047 = vrot.slane %v5797, 2
      %v6048 = vsel %vm773, %v6045, %v6047
      %v6049 = vrot.slane %v5782, 2
      %v6050 = vrot.slane %v5708, 2
      %v6051 = vsel %vm773, %v6049, %v6050
      %v6052 = vrot.slane %v5798, 2
      %v6053 = vsel %vm773, %v6050, %v6052
      %v6054 = vrot.slane %v5783, 2
      %v6055 = vrot.slane %v5711, 2
      %v6056 = vsel %vm773, %v6054, %v6055
      %v6057 = vrot.slane %v5799, 2
      %v6058 = vsel %vm773, %v6055, %v6057
      %v6059 = vrot.slane %v5784, 2
      %v6060 = vrot.slane %v5714, 2
      %v6061 = vsel %vm773, %v6059, %v6060
      %v6062 = vrot.slane %v5800, 2
      %v6063 = vsel %vm773, %v6060, %v6062
      %v6064 = vrot.slane %v5785, 2
      %v6065 = vrot.slane %v5717, 2
      %v6066 = vsel %vm773, %v6064, %v6065
      %v6067 = vrot.slane %v5801, 2
      %v6068 = vsel %vm773, %v6065, %v6067
      %v6069 = vrot.slane %v5786, 2
      %v6070 = vrot.slane %v5720, 2
      %v6071 = vsel %vm773, %v6069, %v6070
      %v6072 = vrot.slane %v5802, 2
      %v6073 = vsel %vm773, %v6070, %v6072
      %6105 = vrot.lane.b32.xlu0 %v5772, 64
      %v6106 = vpop.permute.xlu0 %6105
      %6107 = vrot.lane.b32.xlu0 %v5678, 64
      %v6108 = vpop.permute.xlu0 %6107
      %6109 = vrot.lane.b32.xlu0 %v5773, 64
      %v6110 = vpop.permute.xlu0 %6109
      %6111 = vrot.lane.b32.xlu0 %v5681, 64
      %v6112 = vpop.permute.xlu0 %6111
      %6113 = vrot.lane.b32.xlu0 %v5774, 64
      %v6114 = vpop.permute.xlu0 %6113
      %6115 = vrot.lane.b32.xlu0 %v5684, 64
      %v6116 = vpop.permute.xlu0 %6115
      %6117 = vrot.lane.b32.xlu0 %v5775, 64
      %v6118 = vpop.permute.xlu0 %6117
      %6119 = vrot.lane.b32.xlu0 %v5687, 64
      %v6120 = vpop.permute.xlu0 %6119
      %6121 = vrot.lane.b32.xlu0 %v5776, 64
      %v6122 = vpop.permute.xlu0 %6121
      %6123 = vrot.lane.b32.xlu0 %v5690, 64
      %v6124 = vpop.permute.xlu0 %6123
      %6125 = vrot.lane.b32.xlu0 %v5777, 64
      %v6126 = vpop.permute.xlu0 %6125
      %6127 = vrot.lane.b32.xlu0 %v5693, 64
      %v6128 = vpop.permute.xlu0 %6127
      %6129 = vrot.lane.b32.xlu0 %v5778, 64
      %v6130 = vpop.permute.xlu0 %6129
      %6131 = vrot.lane.b32.xlu0 %v5696, 64
      %v6132 = vpop.permute.xlu0 %6131
      %6133 = vrot.lane.b32.xlu0 %v5779, 64
      %v6134 = vpop.permute.xlu0 %6133
      %6135 = vrot.lane.b32.xlu0 %v5699, 64
      %v6136 = vpop.permute.xlu0 %6135
      %6137 = vrot.lane.b32.xlu0 %v5780, 64
      %v6138 = vpop.permute.xlu0 %6137
      %6139 = vrot.lane.b32.xlu0 %v5702, 64
      %v6140 = vpop.permute.xlu0 %6139
      %6141 = vrot.lane.b32.xlu0 %v5781, 64
      %v6142 = vpop.permute.xlu0 %6141
      %6143 = vrot.lane.b32.xlu0 %v5705, 64
      %v6144 = vpop.permute.xlu0 %6143
      %6145 = vrot.lane.b32.xlu0 %v5782, 64
      %v6146 = vpop.permute.xlu0 %6145
      %6147 = vrot.lane.b32.xlu0 %v5708, 64
      %v6148 = vpop.permute.xlu0 %6147
      %6149 = vrot.lane.b32.xlu0 %v5783, 64
      %v6150 = vpop.permute.xlu0 %6149
      %6151 = vrot.lane.b32.xlu0 %v5711, 64
      %v6152 = vpop.permute.xlu0 %6151
      %6153 = vrot.lane.b32.xlu0 %v5784, 64
      %v6154 = vpop.permute.xlu0 %6153
      %6155 = vrot.lane.b32.xlu0 %v5714, 64
      %v6156 = vpop.permute.xlu0 %6155
      %6157 = vrot.lane.b32.xlu0 %v5785, 64
      %v6158 = vpop.permute.xlu0 %6157
      %6159 = vrot.lane.b32.xlu0 %v5717, 64
      %v6160 = vpop.permute.xlu0 %6159
      %6161 = vrot.lane.b32.xlu0 %v5786, 64
      %v6162 = vpop.permute.xlu0 %6161
      %6163 = vrot.lane.b32.xlu0 %v5720, 64
      %v6164 = vpop.permute.xlu0 %6163
      %6165 = vrot.lane.b32.xlu0 %v5787, 64
      %v6166 = vpop.permute.xlu0 %6165
      %6167 = vrot.lane.b32.xlu0 %v5723, 64
      %v6168 = vpop.permute.xlu0 %6167
      %v6202 = vrot.slane %v5787, 1
      %v6203 = vrot.slane %v5723, 1
      %v6204 = vsel %vm596, %v6202, %v6203
      %v6205 = vrot.slane %v5803, 1
      %v6206 = vsel %vm596, %v6203, %v6205
      %v6239 = vrot.slane %v5787, 2
      %v6240 = vrot.slane %v5723, 2
      %v6241 = vsel %vm773, %v6239, %v6240
      %v6242 = vrot.slane %v5803, 2
      %v6243 = vsel %vm773, %v6240, %v6242
      %6244 = vrot.lane.b32.xlu0 %v6001, 64
      %v6245 = vpop.permute.xlu0 %6244
      %6246 = vrot.lane.b32.xlu0 %v6003, 64
      %v6247 = vpop.permute.xlu0 %6246
      %6248 = vrot.lane.b32.xlu0 %v6006, 64
      %v6249 = vpop.permute.xlu0 %6248
      %6250 = vrot.lane.b32.xlu0 %v6008, 64
      %v6251 = vpop.permute.xlu0 %6250
      %6252 = vrot.lane.b32.xlu0 %v6011, 64
      %v6253 = vpop.permute.xlu0 %6252
      %6254 = vrot.lane.b32.xlu0 %v6013, 64
      %v6255 = vpop.permute.xlu0 %6254
      %6256 = vrot.lane.b32.xlu0 %v6016, 64
      %v6257 = vpop.permute.xlu0 %6256
      %6258 = vrot.lane.b32.xlu0 %v6018, 64
      %v6259 = vpop.permute.xlu0 %6258
      %6260 = vrot.lane.b32.xlu0 %v6021, 64
      %v6261 = vpop.permute.xlu0 %6260
      %6262 = vrot.lane.b32.xlu0 %v6023, 64
      %v6263 = vpop.permute.xlu0 %6262
      %6264 = vrot.lane.b32.xlu0 %v6026, 64
      %v6265 = vpop.permute.xlu0 %6264
      %6266 = vrot.lane.b32.xlu0 %v6028, 64
      %v6267 = vpop.permute.xlu0 %6266
      %6268 = vrot.lane.b32.xlu0 %v6031, 64
      %v6269 = vpop.permute.xlu0 %6268
      %6270 = vrot.lane.b32.xlu0 %v6033, 64
      %v6271 = vpop.permute.xlu0 %6270
      %6272 = vrot.lane.b32.xlu0 %v6036, 64
      %v6273 = vpop.permute.xlu0 %6272
      %6274 = vrot.lane.b32.xlu0 %v6038, 64
      %v6275 = vpop.permute.xlu0 %6274
      %6276 = vrot.lane.b32.xlu0 %v6041, 64
      %v6277 = vpop.permute.xlu0 %6276
      %6278 = vrot.lane.b32.xlu0 %v6043, 64
      %v6279 = vpop.permute.xlu0 %6278
      %6280 = vrot.lane.b32.xlu0 %v6046, 64
      %v6281 = vpop.permute.xlu0 %6280
      %6282 = vrot.lane.b32.xlu0 %v6048, 64
      %v6283 = vpop.permute.xlu0 %6282
      %6284 = vrot.lane.b32.xlu0 %v6051, 64
      %v6285 = vpop.permute.xlu0 %6284
      %6286 = vrot.lane.b32.xlu0 %v6053, 64
      %v6287 = vpop.permute.xlu0 %6286
      %6288 = vrot.lane.b32.xlu0 %v6056, 64
      %v6289 = vpop.permute.xlu0 %6288
      %6290 = vrot.lane.b32.xlu0 %v6058, 64
      %v6291 = vpop.permute.xlu0 %6290
      %6292 = vrot.lane.b32.xlu0 %v6061, 64
      %v6293 = vpop.permute.xlu0 %6292
      %6294 = vrot.lane.b32.xlu0 %v6063, 64
      %v6295 = vpop.permute.xlu0 %6294
      %6296 = vrot.lane.b32.xlu0 %v6066, 64
      %v6297 = vpop.permute.xlu0 %6296
      %6298 = vrot.lane.b32.xlu0 %v6068, 64
      %v6299 = vpop.permute.xlu0 %6298
      %6300 = vrot.lane.b32.xlu0 %v6071, 64
      %v6301 = vpop.permute.xlu0 %6300
      %6302 = vrot.lane.b32.xlu0 %v6073, 64
      %v6303 = vpop.permute.xlu0 %6302
      %6304 = vrot.lane.b32.xlu0 %v6241, 64
      %v6305 = vpop.permute.xlu0 %6304
      %6306 = vrot.lane.b32.xlu0 %v6243, 64
      %v6307 = vpop.permute.xlu0 %6306
      %6340 = vrot.lane.b32.xlu0 %v6204, 64
      %v6341 = vpop.permute.xlu0 %6340
      %6342 = vrot.lane.b32.xlu0 %v6206, 64
      %v6343 = vpop.permute.xlu0 %6342
      %v6348 = vsel %vm1769, %v5772, %v5910
      %v6349 = vsel %vm1769, %v5678, %v5912
      %v6350 = vsel %vm1769, %v5773, %v5914
      %v6351 = vsel %vm1769, %v5681, %v5916
      %v6352 = vsel %vm1769, %v5774, %v5918
      %v6353 = vsel %vm1769, %v5684, %v5920
      %v6354 = vsel %vm1769, %v5775, %v5922
      %v6355 = vsel %vm1769, %v5687, %v5924
      %v6356 = vsel %vm1769, %v5776, %v5926
      %v6357 = vsel %vm1769, %v5690, %v5928
      %v6358 = vsel %vm1769, %v5777, %v5930
      %v6359 = vsel %vm1769, %v5693, %v5932
      %v6360 = vsel %vm1769, %v5778, %v5934
      %v6361 = vsel %vm1769, %v5696, %v5936
      %v6362 = vsel %vm1769, %v5779, %v5938
      %v6363 = vsel %vm1769, %v5699, %v5940
      %v6364 = vsel %vm1769, %v5780, %v5942
      %v6365 = vsel %vm1769, %v5702, %v5944
      %v6366 = vsel %vm1769, %v5781, %v5946
      %v6367 = vsel %vm1769, %v5705, %v5948
      %v6368 = vsel %vm1769, %v5782, %v5950
      %v6369 = vsel %vm1769, %v5708, %v5952
      %v6370 = vsel %vm1769, %v5783, %v5954
      %v6371 = vsel %vm1769, %v5711, %v5956
      %v6372 = vsel %vm1769, %v5784, %v5958
      %v6373 = vsel %vm1769, %v5714, %v5960
      %v6374 = vsel %vm1769, %v5785, %v5962
      %v6375 = vsel %vm1769, %v5717, %v5964
      %v6376 = vsel %vm1769, %v5786, %v5966
      %v6377 = vsel %vm1769, %v5720, %v5968
      %v6378 = vsel %vm1769, %v776, %v6106
      %v6379 = vsel %vm1769, %v778, %v6108
      %v6380 = vsel %vm1769, %v6001, %v6110
      %v6381 = vsel %vm1769, %v6003, %v6112
      %v6382 = vsel %vm1769, %v6006, %v6114
      %v6383 = vsel %vm1769, %v6008, %v6116
      %v6384 = vsel %vm1769, %v6011, %v6118
      %v6385 = vsel %vm1769, %v6013, %v6120
      %v6386 = vsel %vm1769, %v6016, %v6122
      %v6387 = vsel %vm1769, %v6018, %v6124
      %v6388 = vsel %vm1769, %v6021, %v6126
      %v6389 = vsel %vm1769, %v6023, %v6128
      %v6390 = vsel %vm1769, %v6026, %v6130
      %v6391 = vsel %vm1769, %v6028, %v6132
      %v6392 = vsel %vm1769, %v6031, %v6134
      %v6393 = vsel %vm1769, %v6033, %v6136
      %v6394 = vsel %vm1769, %v6036, %v6138
      %v6395 = vsel %vm1769, %v6038, %v6140
      %v6396 = vsel %vm1769, %v6041, %v6142
      %v6397 = vsel %vm1769, %v6043, %v6144
      %v6398 = vsel %vm1769, %v6046, %v6146
      %v6399 = vsel %vm1769, %v6048, %v6148
      %v6400 = vsel %vm1769, %v6051, %v6150
      %v6401 = vsel %vm1769, %v6053, %v6152
      %v6402 = vsel %vm1769, %v6056, %v6154
      %v6403 = vsel %vm1769, %v6058, %v6156
      %v6404 = vsel %vm1769, %v6061, %v6158
      %v6405 = vsel %vm1769, %v6063, %v6160
      %v6406 = vsel %vm1769, %v6066, %v6162
      %v6407 = vsel %vm1769, %v6068, %v6164
      %v6408 = vsel %vm1769, %v6071, %v6166
      %v6409 = vsel %vm1769, %v6073, %v6168
      %v6410 = vsel %vm1769, %v5836, %v6245
      %v6411 = vsel %vm1769, %v5838, %v6247
      %v6412 = vsel %vm1769, %v5841, %v6249
      %v6413 = vsel %vm1769, %v5843, %v6251
      %v6414 = vsel %vm1769, %v5846, %v6253
      %v6415 = vsel %vm1769, %v5848, %v6255
      %v6416 = vsel %vm1769, %v5851, %v6257
      %v6417 = vsel %vm1769, %v5853, %v6259
      %v6418 = vsel %vm1769, %v5856, %v6261
      %v6419 = vsel %vm1769, %v5858, %v6263
      %v6420 = vsel %vm1769, %v5861, %v6265
      %v6421 = vsel %vm1769, %v5863, %v6267
      %v6422 = vsel %vm1769, %v5866, %v6269
      %v6423 = vsel %vm1769, %v5868, %v6271
      %v6424 = vsel %vm1769, %v5871, %v6273
      %v6425 = vsel %vm1769, %v5873, %v6275
      %v6426 = vsel %vm1769, %v5876, %v6277
      %v6427 = vsel %vm1769, %v5878, %v6279
      %v6428 = vsel %vm1769, %v5881, %v6281
      %v6429 = vsel %vm1769, %v5883, %v6283
      %v6430 = vsel %vm1769, %v5886, %v6285
      %v6431 = vsel %vm1769, %v5888, %v6287
      %v6432 = vsel %vm1769, %v5891, %v6289
      %v6433 = vsel %vm1769, %v5893, %v6291
      %v6434 = vsel %vm1769, %v5896, %v6293
      %v6435 = vsel %vm1769, %v5898, %v6295
      %v6436 = vsel %vm1769, %v5901, %v6297
      %v6437 = vsel %vm1769, %v5903, %v6299
      %v6438 = vsel %vm1769, %v5906, %v6301
      %v6439 = vsel %vm1769, %v5908, %v6303
      %v6440 = vsel %vm1769, %v6204, %v6305
      %v6441 = vsel %vm1769, %v6206, %v6307
      %v6442 = vsel %vm1769, %v5787, %v6341
      %v6443 = vsel %vm1769, %v5723, %v6343
      %v6444 = vpack.c.bf16 %v6379, %v6378
      %v6445 = vpack.c.bf16 %v6411, %v6410
      %v6446 = vpack.c.bf16 %v6351, %v6350
      %v6447 = vpack.c.bf16 %v6008, %v6006
      %v6448 = vpack.c.bf16 %v6349, %v6348
      %v6449 = vpack.c.bf16 %v6381, %v6380
      %v6450 = vpack.c.bf16 %v6413, %v6412
      %v6451 = vpack.c.bf16 %v6353, %v6352
      %v6452 = vpack.c.bf16 %v6013, %v6011
      %v6453 = vpack.c.bf16 %v6383, %v6382
      %v6454 = vpack.c.bf16 %v6415, %v6414
      %v6455 = vpack.c.bf16 %v6355, %v6354
      %v6456 = vpack.c.bf16 %v6018, %v6016
      %v6457 = vpack.c.bf16 %v6385, %v6384
      %v6458 = vpack.c.bf16 %v6417, %v6416
      %v6459 = vpack.c.bf16 %v6357, %v6356
      %v6460 = vpack.c.bf16 %v6023, %v6021
      %v6461 = vpack.c.bf16 %v6387, %v6386
      %v6462 = vpack.c.bf16 %v6419, %v6418
      %v6463 = vpack.c.bf16 %v6359, %v6358
      %v6464 = vpack.c.bf16 %v6028, %v6026
      %v6465 = vpack.c.bf16 %v6389, %v6388
      %v6466 = vpack.c.bf16 %v6421, %v6420
      %v6467 = vpack.c.bf16 %v6361, %v6360
      %v6468 = vpack.c.bf16 %v6033, %v6031
      %v6469 = vpack.c.bf16 %v6391, %v6390
      %v6470 = vpack.c.bf16 %v6423, %v6422
      %v6471 = vpack.c.bf16 %v6363, %v6362
      %v6472 = vpack.c.bf16 %v6038, %v6036
      %v6473 = vpack.c.bf16 %v6393, %v6392
      %v6474 = vpack.c.bf16 %v6425, %v6424
      %v6475 = vpack.c.bf16 %v6365, %v6364
      %v6476 = vpack.c.bf16 %v6043, %v6041
      %v6477 = vpack.c.bf16 %v6395, %v6394
      %v6478 = vpack.c.bf16 %v6427, %v6426
      %v6479 = vpack.c.bf16 %v6367, %v6366
      %v6480 = vpack.c.bf16 %v6048, %v6046
      %v6481 = vpack.c.bf16 %v6397, %v6396
      %v6482 = vpack.c.bf16 %v6429, %v6428
      %v6483 = vpack.c.bf16 %v6369, %v6368
      %v6484 = vpack.c.bf16 %v6053, %v6051
      %v6485 = vpack.c.bf16 %v6399, %v6398
      %v6486 = vpack.c.bf16 %v6431, %v6430
      %v6487 = vpack.c.bf16 %v6371, %v6370
      %v6488 = vpack.c.bf16 %v6058, %v6056
      %v6489 = vpack.c.bf16 %v6401, %v6400
      %v6490 = vpack.c.bf16 %v6433, %v6432
      %v6491 = vpack.c.bf16 %v6373, %v6372
      %v6492 = vpack.c.bf16 %v6063, %v6061
      %v6493 = vpack.c.bf16 %v6403, %v6402
      %v6494 = vpack.c.bf16 %v6435, %v6434
      %v6495 = vpack.c.bf16 %v6375, %v6374
      %v6496 = vpack.c.bf16 %v6068, %v6066
      %v6497 = vpack.c.bf16 %v6405, %v6404
      %v6498 = vpack.c.bf16 %v6437, %v6436
      %v6499 = vpack.c.bf16 %v6377, %v6376
      %v6500 = vpack.c.bf16 %v6073, %v6071
      %v6501 = vpack.c.bf16 %v6407, %v6406
      %v6502 = vpack.c.bf16 %v6439, %v6438
      %v6503 = vpack.c.bf16 %v6443, %v6442
      %v6504 = vpack.c.bf16 %v6243, %v6241
      %v6505 = vpack.c.bf16 %v6409, %v6408
      %v6506 = vpack.c.bf16 %v6441, %v6440
      %v6508 = vsel %vm1769, %v6447, 0
      %v6511 = vsel %vm1769, %v6452, 0
      %v6514 = vsel %vm1769, %v6456, 0
      %v6517 = vsel %vm1769, %v6460, 0
      %v6520 = vsel %vm1769, %v6464, 0
      %v6523 = vsel %vm1769, %v6468, 0
      %v6526 = vsel %vm1769, %v6472, 0
      %v6529 = vsel %vm1769, %v6476, 0
      %v6532 = vsel %vm1769, %v6480, 0
      %v6535 = vsel %vm1769, %v6484, 0
      %v6538 = vsel %vm1769, %v6488, 0
      %v6541 = vsel %vm1769, %v6492, 0
      %v6544 = vsel %vm1769, %v6496, 0
      %v6547 = vsel %vm1769, %v6500, 0
      %v6550 = vsel %vm1769, %v6504, 0
      %6552 = vmatprep.subr.bf16.mxu0 0
      %6553 = vmatpush1.bf16.msra.mxu0 %v3269
      %6554 = vmatprep.subr.bf16.mxu0 0
      %6555 = vmatpush1.bf16.msra.mxu0 %v3270
      %6556 = vmatprep.subr.bf16.mxu0 0
      %6557 = vmatpush1.bf16.msra.mxu0 %v3271
      %6558 = vmatprep.subr.bf16.mxu0 0
      %6559 = vmatpush1.bf16.msra.mxu0 %v3272
      %6560 = vmatprep.subr.bf16.mxu0 0
      %6561 = vmatpush1.bf16.msra.mxu0 %v3273
      %6562 = vmatprep.subr.bf16.mxu0 0
      %6563 = vmatpush1.bf16.msra.mxu0 %v3274
      %6564 = vmatprep.subr.bf16.mxu0 0
      %6565 = vmatpush1.bf16.msra.mxu0 %v3275
      %6566 = vmatprep.subr.bf16.mxu0 0
      %6567 = vmatpush1.bf16.msra.mxu0 %v3276
      %6568 = vmatprep.subr.bf16.mxu0 0
      %6569 = vmatpush1.bf16.msra.mxu0 %v3277
      %6570 = vmatprep.subr.bf16.mxu0 0
      %6571 = vmatpush1.bf16.msra.mxu0 %v3278
      %6572 = vmatprep.subr.bf16.mxu0 0
      %6573 = vmatpush1.bf16.msra.mxu0 %v3279
      %6574 = vmatprep.subr.bf16.mxu0 0
      %6575 = vmatpush1.bf16.msra.mxu0 %v3280
      %6576 = vmatprep.subr.bf16.mxu0 0
      %6577 = vmatpush1.bf16.msra.mxu0 %v3281
      %6578 = vmatprep.subr.bf16.mxu0 0
      %6579 = vmatpush1.bf16.msra.mxu0 %v3282
      %6580 = vmatprep.subr.bf16.mxu0 0
      %6581 = vmatpush1.bf16.msra.mxu0 %v3283
      %6582 = vmatprep.subr.bf16.mxu0 0
      %6583 = vmatpush1.bf16.msra.mxu0 %v3284
      %6584 = vmatprep.mubr.bf16.mxu0 %v6444
      %6585 = vmatmul.mubr.bf16.gmra.mrb[0].mxu0 %v2988
      %v6586 = vpop.f32.mrb[0].mxu0
      %v6587 = vadd.f32 0.0, %v6586
      %v6588 = vpop.f32.mrb[0].mxu0
      %v6589 = vpop.f32.mrb[0].mxu0
      %v6590 = vadd.f32 0.0, %v6589
      %v6591 = vpop.f32.mrb[0].mxu0
      %6592 = vmatprep.mubr.bf16.mxu0 %v6449
      %6593 = vmatmul.mubr.bf16.gmra.mrb[0].mxu0 %v6448
      %v6594 = vpop.f32.mrb[0].mxu0
      %v6595 = vadd.f32 0.0, %v6594
      %v6596 = vpop.f32.mrb[0].mxu0
      %v6597 = vpop.f32.mrb[0].mxu0
      %v6598 = vadd.f32 0.0, %v6597
      %v6599 = vpop.f32.mrb[0].mxu0
      %6600 = vmatprep.mubr.bf16.mxu0 %v6453
      %6601 = vmatmul.mubr.bf16.gmra.mrb[0].mxu0 %v6446
      %v6602 = vpop.f32.mrb[0].mxu0
      %v6603 = vadd.f32 0.0, %v6602
      %v6604 = vpop.f32.mrb[0].mxu0
      %v6605 = vpop.f32.mrb[0].mxu0
      %v6606 = vadd.f32 0.0, %v6605
      %v6607 = vpop.f32.mrb[0].mxu0
      %6608 = vmatprep.mubr.bf16.mxu0 %v6457
      %6609 = vmatmul.mubr.bf16.gmra.mrb[0].mxu0 %v6451
      %v6610 = vpop.f32.mrb[0].mxu0
      %v6611 = vadd.f32 0.0, %v6610
      %v6612 = vpop.f32.mrb[0].mxu0
      %v6613 = vpop.f32.mrb[0].mxu0
      %v6614 = vadd.f32 0.0, %v6613
      %v6615 = vpop.f32.mrb[0].mxu0
      %6616 = vmatprep.mubr.bf16.mxu0 %v6461
      %6617 = vmatmul.mubr.bf16.gmra.mrb[0].mxu0 %v6455
      %v6618 = vpop.f32.mrb[0].mxu0
      %v6619 = vadd.f32 0.0, %v6618
      %v6620 = vpop.f32.mrb[0].mxu0
      %v6621 = vpop.f32.mrb[0].mxu0
      %v6622 = vadd.f32 0.0, %v6621
      %v6623 = vpop.f32.mrb[0].mxu0
      %6624 = vmatprep.mubr.bf16.mxu0 %v6465
      %6625 = vmatmul.mubr.bf16.gmra.mrb[0].mxu0 %v6459
      %v6626 = vpop.f32.mrb[0].mxu0
      %v6627 = vadd.f32 0.0, %v6626
      %v6628 = vpop.f32.mrb[0].mxu0
      %v6629 = vpop.f32.mrb[0].mxu0
      %v6630 = vadd.f32 0.0, %v6629
      %v6631 = vpop.f32.mrb[0].mxu0
      %6632 = vmatprep.mubr.bf16.mxu0 %v6469
      %6633 = vmatmul.mubr.bf16.gmra.mrb[0].mxu0 %v6463
      %v6634 = vpop.f32.mrb[0].mxu0
      %v6635 = vadd.f32 0.0, %v6634
      %v6636 = vpop.f32.mrb[0].mxu0
      %v6637 = vpop.f32.mrb[0].mxu0
      %v6638 = vadd.f32 0.0, %v6637
      %v6639 = vpop.f32.mrb[0].mxu0
      %6640 = vmatprep.mubr.bf16.mxu0 %v6473
      %6641 = vmatmul.mubr.bf16.gmra.mrb[0].mxu0 %v6467
      %v6642 = vpop.f32.mrb[0].mxu0
      %v6643 = vadd.f32 0.0, %v6642
      %v6644 = vpop.f32.mrb[0].mxu0
      %v6645 = vpop.f32.mrb[0].mxu0
      %v6646 = vadd.f32 0.0, %v6645
      %v6647 = vpop.f32.mrb[0].mxu0
      %6648 = vmatprep.mubr.bf16.mxu0 %v6477
      %6649 = vmatmul.mubr.bf16.gmra.mrb[0].mxu0 %v6471
      %v6650 = vpop.f32.mrb[0].mxu0
      %v6651 = vadd.f32 0.0, %v6650
      %v6652 = vpop.f32.mrb[0].mxu0
      %v6653 = vpop.f32.mrb[0].mxu0
      %v6654 = vadd.f32 0.0, %v6653
      %v6655 = vpop.f32.mrb[0].mxu0
      %6656 = vmatprep.mubr.bf16.mxu0 %v6481
      %6657 = vmatmul.mubr.bf16.gmra.mrb[0].mxu0 %v6475
      %v6658 = vpop.f32.mrb[0].mxu0
      %v6659 = vadd.f32 0.0, %v6658
      %v6660 = vpop.f32.mrb[0].mxu0
      %v6661 = vpop.f32.mrb[0].mxu0
      %v6662 = vadd.f32 0.0, %v6661
      %v6663 = vpop.f32.mrb[0].mxu0
      %6664 = vmatprep.mubr.bf16.mxu0 %v6485
      %6665 = vmatmul.mubr.bf16.gmra.mrb[0].mxu0 %v6479
      %v6666 = vpop.f32.mrb[0].mxu0
      %v6667 = vadd.f32 0.0, %v6666
      %v6668 = vpop.f32.mrb[0].mxu0
      %v6669 = vpop.f32.mrb[0].mxu0
      %v6670 = vadd.f32 0.0, %v6669
      %v6671 = vpop.f32.mrb[0].mxu0
      %6672 = vmatprep.mubr.bf16.mxu0 %v6489
      %6673 = vmatmul.mubr.bf16.gmra.mrb[0].mxu0 %v6483
      %v6674 = vpop.f32.mrb[0].mxu0
      %v6675 = vadd.f32 0.0, %v6674
      %v6676 = vpop.f32.mrb[0].mxu0
      %v6677 = vpop.f32.mrb[0].mxu0
      %v6678 = vadd.f32 0.0, %v6677
      %v6679 = vpop.f32.mrb[0].mxu0
      %6680 = vmatprep.mubr.bf16.mxu0 %v6493
      %6681 = vmatmul.mubr.bf16.gmra.mrb[0].mxu0 %v6487
      %v6682 = vpop.f32.mrb[0].mxu0
      %v6683 = vadd.f32 0.0, %v6682
      %v6684 = vpop.f32.mrb[0].mxu0
      %v6685 = vpop.f32.mrb[0].mxu0
      %v6686 = vadd.f32 0.0, %v6685
      %v6687 = vpop.f32.mrb[0].mxu0
      %6688 = vmatprep.mubr.bf16.mxu0 %v6497
      %6689 = vmatmul.mubr.bf16.gmra.mrb[0].mxu0 %v6491
      %v6690 = vpop.f32.mrb[0].mxu0
      %v6691 = vadd.f32 0.0, %v6690
      %v6692 = vpop.f32.mrb[0].mxu0
      %v6693 = vpop.f32.mrb[0].mxu0
      %v6694 = vadd.f32 0.0, %v6693
      %v6695 = vpop.f32.mrb[0].mxu0
      %6696 = vmatprep.mubr.bf16.mxu0 %v6501
      %6697 = vmatmul.mubr.bf16.gmra.mrb[0].mxu0 %v6495
      %v6698 = vpop.f32.mrb[0].mxu0
      %v6699 = vadd.f32 0.0, %v6698
      %v6700 = vpop.f32.mrb[0].mxu0
      %v6701 = vpop.f32.mrb[0].mxu0
      %v6702 = vadd.f32 0.0, %v6701
      %v6703 = vpop.f32.mrb[0].mxu0
      %6704 = vmatprep.mubr.bf16.mxu0 %v6505
      %6705 = vmatmul.mubr.bf16.gmra.mrb[0].mxu0 %v6499
      %v6706 = vpop.f32.mrb[0].mxu0
      %v6707 = vadd.f32 0.0, %v6706
      %v6708 = vpop.f32.mrb[0].mxu0
      %v6709 = vpop.f32.mrb[0].mxu0
      %v6710 = vadd.f32 0.0, %v6709
      %v6711 = vpop.f32.mrb[0].mxu0
      %6712 = vdwg.mxu0
      %6713 = vmatprep.subr.bf16.mxu0 0
      %6714 = vmatpush1.bf16.msra.mxu0 %v3285
      %6715 = vmatprep.subr.bf16.mxu0 0
      %6716 = vmatpush1.bf16.msra.mxu0 %v3286
      %6717 = vmatprep.subr.bf16.mxu0 0
      %6718 = vmatpush1.bf16.msra.mxu0 %v3287
      %6719 = vmatprep.subr.bf16.mxu0 0
      %6720 = vmatpush1.bf16.msra.mxu0 %v3288
      %6721 = vmatprep.subr.bf16.mxu0 0
      %6722 = vmatpush1.bf16.msra.mxu0 %v3289
      %6723 = vmatprep.subr.bf16.mxu0 0
      %6724 = vmatpush1.bf16.msra.mxu0 %v3290
      %6725 = vmatprep.subr.bf16.mxu0 0
      %6726 = vmatpush1.bf16.msra.mxu0 %v3291
      %6727 = vmatprep.subr.bf16.mxu0 0
      %6728 = vmatpush1.bf16.msra.mxu0 %v3292
      %6729 = vmatprep.subr.bf16.mxu0 0
      %6730 = vmatpush1.bf16.msra.mxu0 %v3293
      %6731 = vmatprep.subr.bf16.mxu0 0
      %6732 = vmatpush1.bf16.msra.mxu0 %v3294
      %6733 = vmatprep.subr.bf16.mxu0 0
      %6734 = vmatpush1.bf16.msra.mxu0 %v3295
      %6735 = vmatprep.subr.bf16.mxu0 0
      %6736 = vmatpush1.bf16.msra.mxu0 %v3296
      %6737 = vmatprep.subr.bf16.mxu0 0
      %6738 = vmatpush1.bf16.msra.mxu0 %v3297
      %6739 = vmatprep.subr.bf16.mxu0 0
      %6740 = vmatpush1.bf16.msra.mxu0 %v3298
      %6741 = vmatprep.subr.bf16.mxu0 0
      %6742 = vmatpush1.bf16.msra.mxu0 %v3299
      %6743 = vmatprep.subr.bf16.mxu0 0
      %6744 = vmatpush1.bf16.msra.mxu0 %v3300
      %6745 = vmatprep.mubr.bf16.mxu0 %v6446
      %6746 = vmatmul.mubr.bf16.gmra.mrb[0].mxu0 %v6445
      %v6747 = vpop.f32.mrb[0].mxu0
      %v6748 = vadd.f32 %v6587, %v6747
      %v6749 = vpop.f32.mrb[0].mxu0
      %v6750 = vpop.f32.mrb[0].mxu0
      %v6751 = vadd.f32 %v6590, %v6750
      %v6752 = vpop.f32.mrb[0].mxu0
      %6753 = vmatprep.mubr.bf16.mxu0 %v6451
      %6754 = vmatmul.mubr.bf16.gmra.mrb[0].mxu0 %v6450
      %v6755 = vpop.f32.mrb[0].mxu0
      %v6756 = vadd.f32 %v6595, %v6755
      %v6757 = vpop.f32.mrb[0].mxu0
      %v6758 = vpop.f32.mrb[0].mxu0
      %v6759 = vadd.f32 %v6598, %v6758
      %v6760 = vpop.f32.mrb[0].mxu0
      %6761 = vmatprep.mubr.bf16.mxu0 %v6455
      %6762 = vmatmul.mubr.bf16.gmra.mrb[0].mxu0 %v6454
      %v6763 = vpop.f32.mrb[0].mxu0
      %v6764 = vadd.f32 %v6603, %v6763
      %v6765 = vpop.f32.mrb[0].mxu0
      %v6766 = vpop.f32.mrb[0].mxu0
      %v6767 = vadd.f32 %v6606, %v6766
      %v6768 = vpop.f32.mrb[0].mxu0
      %6769 = vmatprep.mubr.bf16.mxu0 %v6459
      %6770 = vmatmul.mubr.bf16.gmra.mrb[0].mxu0 %v6458
      %v6771 = vpop.f32.mrb[0].mxu0
      %v6772 = vadd.f32 %v6611, %v6771
      %v6773 = vpop.f32.mrb[0].mxu0
      %v6774 = vpop.f32.mrb[0].mxu0
      %v6775 = vadd.f32 %v6614, %v6774
      %v6776 = vpop.f32.mrb[0].mxu0
      %6777 = vmatprep.mubr.bf16.mxu0 %v6463
      %6778 = vmatmul.mubr.bf16.gmra.mrb[0].mxu0 %v6462
      %v6779 = vpop.f32.mrb[0].mxu0
      %v6780 = vadd.f32 %v6619, %v6779
      %v6781 = vpop.f32.mrb[0].mxu0
      %v6782 = vpop.f32.mrb[0].mxu0
      %v6783 = vadd.f32 %v6622, %v6782
      %v6784 = vpop.f32.mrb[0].mxu0
      %6785 = vmatprep.mubr.bf16.mxu0 %v6467
      %6786 = vmatmul.mubr.bf16.gmra.mrb[0].mxu0 %v6466
      %v6787 = vpop.f32.mrb[0].mxu0
      %v6788 = vadd.f32 %v6627, %v6787
      %v6789 = vpop.f32.mrb[0].mxu0
      %v6790 = vpop.f32.mrb[0].mxu0
      %v6791 = vadd.f32 %v6630, %v6790
      %v6792 = vpop.f32.mrb[0].mxu0
      %6793 = vmatprep.mubr.bf16.mxu0 %v6471
      %6794 = vmatmul.mubr.bf16.gmra.mrb[0].mxu0 %v6470
      %v6795 = vpop.f32.mrb[0].mxu0
      %v6796 = vadd.f32 %v6635, %v6795
      %v6797 = vpop.f32.mrb[0].mxu0
      %v6798 = vpop.f32.mrb[0].mxu0
      %v6799 = vadd.f32 %v6638, %v6798
      %v6800 = vpop.f32.mrb[0].mxu0
      %6801 = vmatprep.mubr.bf16.mxu0 %v6475
      %6802 = vmatmul.mubr.bf16.gmra.mrb[0].mxu0 %v6474
      %v6803 = vpop.f32.mrb[0].mxu0
      %v6804 = vadd.f32 %v6643, %v6803
      %v6805 = vpop.f32.mrb[0].mxu0
      %v6806 = vpop.f32.mrb[0].mxu0
      %v6807 = vadd.f32 %v6646, %v6806
      %v6808 = vpop.f32.mrb[0].mxu0
      %6809 = vmatprep.mubr.bf16.mxu0 %v6479
      %6810 = vmatmul.mubr.bf16.gmra.mrb[0].mxu0 %v6478
      %v6811 = vpop.f32.mrb[0].mxu0
      %v6812 = vadd.f32 %v6651, %v6811
      %v6813 = vpop.f32.mrb[0].mxu0
      %v6814 = vpop.f32.mrb[0].mxu0
      %v6815 = vadd.f32 %v6654, %v6814
      %v6816 = vpop.f32.mrb[0].mxu0
      %6817 = vmatprep.mubr.bf16.mxu0 %v6483
      %6818 = vmatmul.mubr.bf16.gmra.mrb[0].mxu0 %v6482
      %v6819 = vpop.f32.mrb[0].mxu0
      %v6820 = vadd.f32 %v6659, %v6819
      %v6821 = vpop.f32.mrb[0].mxu0
      %v6822 = vpop.f32.mrb[0].mxu0
      %v6823 = vadd.f32 %v6662, %v6822
      %v6824 = vpop.f32.mrb[0].mxu0
      %6825 = vmatprep.mubr.bf16.mxu0 %v6487
      %6826 = vmatmul.mubr.bf16.gmra.mrb[0].mxu0 %v6486
      %v6827 = vpop.f32.mrb[0].mxu0
      %v6828 = vadd.f32 %v6667, %v6827
      %v6829 = vpop.f32.mrb[0].mxu0
      %v6830 = vpop.f32.mrb[0].mxu0
      %v6831 = vadd.f32 %v6670, %v6830
      %v6832 = vpop.f32.mrb[0].mxu0
      %6833 = vmatprep.mubr.bf16.mxu0 %v6491
      %6834 = vmatmul.mubr.bf16.gmra.mrb[0].mxu0 %v6490
      %v6835 = vpop.f32.mrb[0].mxu0
      %v6836 = vadd.f32 %v6675, %v6835
      %v6837 = vpop.f32.mrb[0].mxu0
      %v6838 = vpop.f32.mrb[0].mxu0
      %v6839 = vadd.f32 %v6678, %v6838
      %v6840 = vpop.f32.mrb[0].mxu0
      %6841 = vmatprep.mubr.bf16.mxu0 %v6495
      %6842 = vmatmul.mubr.bf16.gmra.mrb[0].mxu0 %v6494
      %v6843 = vpop.f32.mrb[0].mxu0
      %v6844 = vadd.f32 %v6683, %v6843
      %v6845 = vpop.f32.mrb[0].mxu0
      %v6846 = vpop.f32.mrb[0].mxu0
      %v6847 = vadd.f32 %v6686, %v6846
      %v6848 = vpop.f32.mrb[0].mxu0
      %6849 = vmatprep.mubr.bf16.mxu0 %v6499
      %6850 = vmatmul.mubr.bf16.gmra.mrb[0].mxu0 %v6498
      %v6851 = vpop.f32.mrb[0].mxu0
      %v6852 = vadd.f32 %v6691, %v6851
      %v6853 = vpop.f32.mrb[0].mxu0
      %v6854 = vpop.f32.mrb[0].mxu0
      %v6855 = vadd.f32 %v6694, %v6854
      %v6856 = vpop.f32.mrb[0].mxu0
      %6857 = vmatprep.mubr.bf16.mxu0 %v6503
      %6858 = vmatmul.mubr.bf16.gmra.mrb[0].mxu0 %v6502
      %v6859 = vpop.f32.mrb[0].mxu0
      %v6860 = vadd.f32 %v6699, %v6859
      %v6861 = vpop.f32.mrb[0].mxu0
      %v6862 = vpop.f32.mrb[0].mxu0
      %v6863 = vadd.f32 %v6702, %v6862
      %v6864 = vpop.f32.mrb[0].mxu0
      %6865 = vmatprep.mubr.bf16.mxu0 %v2988
      %6866 = vmatmul.mubr.bf16.gmra.mrb[0].mxu0 %v6506
      %v6867 = vpop.f32.mrb[0].mxu0
      %v6868 = vadd.f32 %v6707, %v6867
      %v6869 = vpop.f32.mrb[0].mxu0
      %v6870 = vpop.f32.mrb[0].mxu0
      %v6871 = vadd.f32 %v6710, %v6870
      %v6872 = vpop.f32.mrb[0].mxu0
      %6873 = vdwg.mxu0
      %6874 = vmatprep.subr.bf16.mxu0 0
      %6875 = vmatpush1.bf16.msra.mxu0 %v3301
      %6876 = vmatprep.subr.bf16.mxu0 0
      %6877 = vmatpush1.bf16.msra.mxu0 %v3302
      %6878 = vmatprep.subr.bf16.mxu0 0
      %6879 = vmatpush1.bf16.msra.mxu0 %v3303
      %6880 = vmatprep.subr.bf16.mxu0 0
      %6881 = vmatpush1.bf16.msra.mxu0 %v3304
      %6882 = vmatprep.subr.bf16.mxu0 0
      %6883 = vmatpush1.bf16.msra.mxu0 0
      %6884 = vmatprep.subr.bf16.mxu0 0
      %6885 = vmatpush1.bf16.msra.mxu0 0
      %6886 = vmatprep.subr.bf16.mxu0 0
      %6887 = vmatpush1.bf16.msra.mxu0 0
      %6888 = vmatprep.subr.bf16.mxu0 0
      %6889 = vmatpush1.bf16.msra.mxu0 0
      %6890 = vmatprep.subr.bf16.mxu0 0
      %6891 = vmatpush1.bf16.msra.mxu0 0
      %6892 = vmatprep.subr.bf16.mxu0 0
      %6893 = vmatpush1.bf16.msra.mxu0 0
      %6894 = vmatprep.subr.bf16.mxu0 0
      %6895 = vmatpush1.bf16.msra.mxu0 0
      %6896 = vmatprep.subr.bf16.mxu0 0
      %6897 = vmatpush1.bf16.msra.mxu0 0
      %6898 = vmatprep.subr.bf16.mxu0 0
      %6899 = vmatpush1.bf16.msra.mxu0 0
      %6900 = vmatprep.subr.bf16.mxu0 0
      %6901 = vmatpush1.bf16.msra.mxu0 0
      %6902 = vmatprep.subr.bf16.mxu0 0
      %6903 = vmatpush1.bf16.msra.mxu0 0
      %6904 = vmatprep.subr.bf16.mxu0 0
      %6905 = vmatpush1.bf16.msra.mxu0 0
      %6906 = vmatprep.mubr.bf16.mxu0 0
      %6907 = vmatmul.mubr.bf16.gmra.mrb[0].mxu0 %v6508
      %v6908 = vpop.f32.mrb[0].mxu0
      %v6909 = vadd.f32 %v6748, %v6908
      %v6910 = vpop.f32.mrb[0].mxu0
      %v6911 = vpop.f32.mrb[0].mxu0
      %v6912 = vadd.f32 %v6751, %v6911
      %v6913 = vpop.f32.mrb[0].mxu0
      %6914 = vmatprep.mubr.bf16.mxu0 0
      %6915 = vmatmul.mubr.bf16.gmra.mrb[0].mxu0 %v6511
      %v6916 = vpop.f32.mrb[0].mxu0
      %v6917 = vadd.f32 %v6756, %v6916
      %v6918 = vpop.f32.mrb[0].mxu0
      %v6919 = vpop.f32.mrb[0].mxu0
      %v6920 = vadd.f32 %v6759, %v6919
      %v6921 = vpop.f32.mrb[0].mxu0
      %6922 = vmatprep.mubr.bf16.mxu0 0
      %6923 = vmatmul.mubr.bf16.gmra.mrb[0].mxu0 %v6514
      %v6924 = vpop.f32.mrb[0].mxu0
      %v6925 = vadd.f32 %v6764, %v6924
      %v6926 = vpop.f32.mrb[0].mxu0
      %v6927 = vpop.f32.mrb[0].mxu0
      %v6928 = vadd.f32 %v6767, %v6927
      %v6929 = vpop.f32.mrb[0].mxu0
      %6930 = vmatprep.mubr.bf16.mxu0 0
      %6931 = vmatmul.mubr.bf16.gmra.mrb[0].mxu0 %v6517
      %v6932 = vpop.f32.mrb[0].mxu0
      %v6933 = vadd.f32 %v6772, %v6932
      %v6934 = vpop.f32.mrb[0].mxu0
      %v6935 = vpop.f32.mrb[0].mxu0
      %v6936 = vadd.f32 %v6775, %v6935
      %v6937 = vpop.f32.mrb[0].mxu0
      %6938 = vmatprep.mubr.bf16.mxu0 0
      %6939 = vmatmul.mubr.bf16.gmra.mrb[0].mxu0 %v6520
      %v6940 = vpop.f32.mrb[0].mxu0
      %v6941 = vadd.f32 %v6780, %v6940
      %v6942 = vpop.f32.mrb[0].mxu0
      %v6943 = vpop.f32.mrb[0].mxu0
      %v6944 = vadd.f32 %v6783, %v6943
      %v6945 = vpop.f32.mrb[0].mxu0
      %6946 = vmatprep.mubr.bf16.mxu0 0
      %6947 = vmatmul.mubr.bf16.gmra.mrb[0].mxu0 %v6523
      %v6948 = vpop.f32.mrb[0].mxu0
      %v6949 = vadd.f32 %v6788, %v6948
      %v6950 = vpop.f32.mrb[0].mxu0
      %v6951 = vpop.f32.mrb[0].mxu0
      %v6952 = vadd.f32 %v6791, %v6951
      %v6953 = vpop.f32.mrb[0].mxu0
      %6954 = vmatprep.mubr.bf16.mxu0 0
      %6955 = vmatmul.mubr.bf16.gmra.mrb[0].mxu0 %v6526
      %v6956 = vpop.f32.mrb[0].mxu0
      %v6957 = vadd.f32 %v6796, %v6956
      %v6958 = vpop.f32.mrb[0].mxu0
      %v6959 = vpop.f32.mrb[0].mxu0
      %v6960 = vadd.f32 %v6799, %v6959
      %v6961 = vpop.f32.mrb[0].mxu0
      %6962 = vmatprep.mubr.bf16.mxu0 0
      %6963 = vmatmul.mubr.bf16.gmra.mrb[0].mxu0 %v6529
      %v6964 = vpop.f32.mrb[0].mxu0
      %v6965 = vadd.f32 %v6804, %v6964
      %v6966 = vpop.f32.mrb[0].mxu0
      %v6967 = vpop.f32.mrb[0].mxu0
      %v6968 = vadd.f32 %v6807, %v6967
      %v6969 = vpop.f32.mrb[0].mxu0
      %6970 = vmatprep.mubr.bf16.mxu0 0
      %6971 = vmatmul.mubr.bf16.gmra.mrb[0].mxu0 %v6532
      %v6972 = vpop.f32.mrb[0].mxu0
      %v6973 = vadd.f32 %v6812, %v6972
      %v6974 = vpop.f32.mrb[0].mxu0
      %v6975 = vpop.f32.mrb[0].mxu0
      %v6976 = vadd.f32 %v6815, %v6975
      %v6977 = vpop.f32.mrb[0].mxu0
      %6978 = vmatprep.mubr.bf16.mxu0 0
      %6979 = vmatmul.mubr.bf16.gmra.mrb[0].mxu0 %v6535
      %v6980 = vpop.f32.mrb[0].mxu0
      %v6981 = vadd.f32 %v6820, %v6980
      %v6982 = vpop.f32.mrb[0].mxu0
      %v6983 = vpop.f32.mrb[0].mxu0
      %v6984 = vadd.f32 %v6823, %v6983
      %v6985 = vpop.f32.mrb[0].mxu0
      %6986 = vmatprep.mubr.bf16.mxu0 0
      %6987 = vmatmul.mubr.bf16.gmra.mrb[0].mxu0 %v6538
      %v6988 = vpop.f32.mrb[0].mxu0
      %v6989 = vadd.f32 %v6828, %v6988
      %v6990 = vpop.f32.mrb[0].mxu0
      %v6991 = vpop.f32.mrb[0].mxu0
      %v6992 = vadd.f32 %v6831, %v6991
      %v6993 = vpop.f32.mrb[0].mxu0
      %6994 = vmatprep.mubr.bf16.mxu0 0
      %6995 = vmatmul.mubr.bf16.gmra.mrb[0].mxu0 %v6541
      %v6996 = vpop.f32.mrb[0].mxu0
      %v6997 = vadd.f32 %v6836, %v6996
      %v6998 = vpop.f32.mrb[0].mxu0
      %v6999 = vpop.f32.mrb[0].mxu0
      %v7000 = vadd.f32 %v6839, %v6999
      %v7001 = vpop.f32.mrb[0].mxu0
      %7002 = vmatprep.mubr.bf16.mxu0 0
      %7003 = vmatmul.mubr.bf16.gmra.mrb[0].mxu0 %v6544
      %v7004 = vpop.f32.mrb[0].mxu0
      %v7005 = vadd.f32 %v6844, %v7004
      %v7006 = vpop.f32.mrb[0].mxu0
      %v7007 = vpop.f32.mrb[0].mxu0
      %v7008 = vadd.f32 %v6847, %v7007
      %v7009 = vpop.f32.mrb[0].mxu0
      %7010 = vmatprep.mubr.bf16.mxu0 0
      %7011 = vmatmul.mubr.bf16.gmra.mrb[0].mxu0 %v6547
      %v7012 = vpop.f32.mrb[0].mxu0
      %v7013 = vadd.f32 %v6852, %v7012
      %v7014 = vpop.f32.mrb[0].mxu0
      %v7015 = vpop.f32.mrb[0].mxu0
      %v7016 = vadd.f32 %v6855, %v7015
      %v7017 = vpop.f32.mrb[0].mxu0
      %7018 = vmatprep.mubr.bf16.mxu0 0
      %7019 = vmatmul.mubr.bf16.gmra.mrb[0].mxu0 %v6550
      %v7020 = vpop.f32.mrb[0].mxu0
      %v7021 = vadd.f32 %v6860, %v7020
      %v7022 = vpop.f32.mrb[0].mxu0
      %v7023 = vpop.f32.mrb[0].mxu0
      %v7024 = vadd.f32 %v6863, %v7023
      %v7025 = vpop.f32.mrb[0].mxu0
      %7026 = vmatprep.mubr.bf16.mxu0 0
      %7027 = vmatmul.mubr.bf16.gmra.mrb[0].mxu0 %v3387
      %v7028 = vpop.f32.mrb[0].mxu0
      %v7029 = vadd.f32 %v6868, %v7028
      %v7030 = vpop.f32.mrb[0].mxu0
      %v7031 = vpop.f32.mrb[0].mxu0
      %v7032 = vadd.f32 %v6871, %v7031
      %v7033 = vpop.f32.mrb[0].mxu0
      %7034 = vdwg.mxu0
      %v7035 = vmul.f32 %v6909, %v3877
      %v7036 = vmul.f32 %v6912, %v3877
      %v7037 = vmul.f32 %v6917, %v3877
      %v7038 = vmul.f32 %v6920, %v3877
      %v7039 = vmul.f32 %v6925, %v3877
      %v7040 = vmul.f32 %v6928, %v3877
      %v7041 = vmul.f32 %v6933, %v3877
      %v7042 = vmul.f32 %v6936, %v3877
      %v7043 = vmul.f32 %v6941, %v3877
      %v7044 = vmul.f32 %v6944, %v3877
      %v7045 = vmul.f32 %v6949, %v3877
      %v7046 = vmul.f32 %v6952, %v3877
      %v7047 = vmul.f32 %v6957, %v3877
      %v7048 = vmul.f32 %v6960, %v3877
      %v7049 = vmul.f32 %v6965, %v3877
      %v7050 = vmul.f32 %v6968, %v3877
      %v7051 = vmul.f32 %v6973, %v3877
      %v7052 = vmul.f32 %v6976, %v3877
      %v7053 = vmul.f32 %v6981, %v3877
      %v7054 = vmul.f32 %v6984, %v3877
      %v7055 = vmul.f32 %v6989, %v3877
      %v7056 = vmul.f32 %v6992, %v3877
      %v7057 = vmul.f32 %v6997, %v3877
      %v7058 = vmul.f32 %v7000, %v3877
      %v7059 = vmul.f32 %v7005, %v3877
      %v7060 = vmul.f32 %v7008, %v3877
      %v7061 = vmul.f32 %v7013, %v3877
      %v7062 = vmul.f32 %v7016, %v3877
      %v7063 = vmul.f32 %v7021, %v3877
      %v7064 = vmul.f32 %v7024, %v3877
      %v7065 = vmul.f32 %v7029, %v3877
      %v7066 = vmul.f32 %v7032, %v3877
      %v7067 = vadd.f32 %v7035, %v3916
      %v7068 = vadd.f32 %v7036, %v3916
      %v7069 = vadd.f32 %v7037, %v3916
      %v7070 = vadd.f32 %v7038, %v3916
      %v7071 = vadd.f32 %v7039, %v3916
      %v7072 = vadd.f32 %v7040, %v3916
      %v7073 = vadd.f32 %v7041, %v3916
      %v7074 = vadd.f32 %v7042, %v3916
      %v7075 = vadd.f32 %v7043, %v3916
      %v7076 = vadd.f32 %v7044, %v3916
      %v7077 = vadd.f32 %v7045, %v3916
      %v7078 = vadd.f32 %v7046, %v3916
      %v7079 = vadd.f32 %v7047, %v3916
      %v7080 = vadd.f32 %v7048, %v3916
      %v7081 = vadd.f32 %v7049, %v3916
      %v7082 = vadd.f32 %v7050, %v3916
      %v7083 = vadd.f32 %v7051, %v3916
      %v7084 = vadd.f32 %v7052, %v3916
      %v7085 = vadd.f32 %v7053, %v3916
      %v7086 = vadd.f32 %v7054, %v3916
      %v7087 = vadd.f32 %v7055, %v3916
      %v7088 = vadd.f32 %v7056, %v3916
      %v7089 = vadd.f32 %v7057, %v3916
      %v7090 = vadd.f32 %v7058, %v3916
      %v7091 = vadd.f32 %v7059, %v3916
      %v7092 = vadd.f32 %v7060, %v3916
      %v7093 = vadd.f32 %v7061, %v3916
      %v7094 = vadd.f32 %v7062, %v3916
      %v7095 = vadd.f32 %v7063, %v3916
      %v7096 = vadd.f32 %v7064, %v3916
      %v7097 = vadd.f32 %v7065, %v3916
      %v7098 = vadd.f32 %v7066, %v3916
      %v7099 = vsub.f32 %v3918, %v7067
      %v7100 = vsub.f32 %v3919, %v7068
      %v7101 = vsub.f32 %v3920, %v7069
      %v7102 = vsub.f32 %v3921, %v7070
      %v7103 = vsub.f32 %v3922, %v7071
      %v7104 = vsub.f32 %v3923, %v7072
      %v7105 = vsub.f32 %v3924, %v7073
      %v7106 = vsub.f32 %v3925, %v7074
      %v7107 = vsub.f32 %v3926, %v7075
      %v7108 = vsub.f32 %v3927, %v7076
      %v7109 = vsub.f32 %v3928, %v7077
      %v7110 = vsub.f32 %v3929, %v7078
      %v7111 = vsub.f32 %v3930, %v7079
      %v7112 = vsub.f32 %v3931, %v7080
      %v7113 = vsub.f32 %v3932, %v7081
      %v7114 = vsub.f32 %v3933, %v7082
      %v7115 = vsub.f32 %v3934, %v7083
      %v7116 = vsub.f32 %v3935, %v7084
      %v7117 = vsub.f32 %v3936, %v7085
      %v7118 = vsub.f32 %v3937, %v7086
      %v7119 = vsub.f32 %v3938, %v7087
      %v7120 = vsub.f32 %v3939, %v7088
      %v7121 = vsub.f32 %v3940, %v7089
      %v7122 = vsub.f32 %v3941, %v7090
      %v7123 = vsub.f32 %v3942, %v7091
      %v7124 = vsub.f32 %v3943, %v7092
      %v7125 = vsub.f32 %v3944, %v7093
      %v7126 = vsub.f32 %v3945, %v7094
      %v7127 = vsub.f32 %v3946, %v7095
      %v7128 = vsub.f32 %v3947, %v7096
      %v7129 = vsub.f32 %v3948, %v7097
      %v7130 = vsub.f32 %v3949, %v7098
      %v7131 = vmul.f32 %v7099, %v7099
      %v7132 = vmul.f32 %v7100, %v7100
      %v7133 = vmul.f32 %v7101, %v7101
      %v7134 = vmul.f32 %v7102, %v7102
      %v7135 = vmul.f32 %v7103, %v7103
      %v7136 = vmul.f32 %v7104, %v7104
      %v7137 = vmul.f32 %v7105, %v7105
      %v7138 = vmul.f32 %v7106, %v7106
      %v7139 = vmul.f32 %v7107, %v7107
      %v7140 = vmul.f32 %v7108, %v7108
      %v7141 = vmul.f32 %v7109, %v7109
      %v7142 = vmul.f32 %v7110, %v7110
      %v7143 = vmul.f32 %v7111, %v7111
      %v7144 = vmul.f32 %v7112, %v7112
      %v7145 = vmul.f32 %v7113, %v7113
      %v7146 = vmul.f32 %v7114, %v7114
      %v7147 = vmul.f32 %v7115, %v7115
      %v7148 = vmul.f32 %v7116, %v7116
      %v7149 = vmul.f32 %v7117, %v7117
      %v7150 = vmul.f32 %v7118, %v7118
      %v7151 = vmul.f32 %v7119, %v7119
      %v7152 = vmul.f32 %v7120, %v7120
      %v7153 = vmul.f32 %v7121, %v7121
      %v7154 = vmul.f32 %v7122, %v7122
      %v7155 = vmul.f32 %v7123, %v7123
      %v7156 = vmul.f32 %v7124, %v7124
      %v7157 = vmul.f32 %v7125, %v7125
      %v7158 = vmul.f32 %v7126, %v7126
      %v7159 = vmul.f32 %v7127, %v7127
      %v7160 = vmul.f32 %v7128, %v7128
      %v7161 = vmul.f32 %v7129, %v7129
      %v7162 = vmul.f32 %v7130, %v7130
      %v7163 = vsel %vm1769, %v7131, 0.0
      %v7164 = vsel %vm1769, %v7132, 0.0
      %v7165 = vadd.f32 %v7163, %v7164
      %v7166 = vsel %vm1769, %v7133, 0.0
      %v7167 = vadd.f32 %v7165, %v7166
      %v7168 = vsel %vm1769, %v7134, 0.0
      %v7169 = vadd.f32 %v7167, %v7168
      %v7170 = vsel %vm1769, %v7135, 0.0
      %v7171 = vadd.f32 %v7169, %v7170
      %v7172 = vsel %vm1769, %v7136, 0.0
      %v7173 = vadd.f32 %v7171, %v7172
      %v7174 = vsel %vm1769, %v7137, 0.0
      %v7175 = vadd.f32 %v7173, %v7174
      %v7176 = vsel %vm1769, %v7138, 0.0
      %v7177 = vadd.f32 %v7175, %v7176
      %v7178 = vsel %vm1769, %v7139, 0.0
      %v7179 = vadd.f32 %v7177, %v7178
      %v7180 = vsel %vm1769, %v7140, 0.0
      %v7181 = vadd.f32 %v7179, %v7180
      %v7182 = vsel %vm1769, %v7141, 0.0
      %v7183 = vadd.f32 %v7181, %v7182
      %v7184 = vsel %vm1769, %v7142, 0.0
      %v7185 = vadd.f32 %v7183, %v7184
      %v7186 = vsel %vm1769, %v7143, 0.0
      %v7187 = vadd.f32 %v7185, %v7186
      %v7188 = vsel %vm1769, %v7144, 0.0
      %v7189 = vadd.f32 %v7187, %v7188
      %v7190 = vsel %vm1769, %v7145, 0.0
      %v7191 = vadd.f32 %v7189, %v7190
      %v7192 = vsel %vm1769, %v7146, 0.0
      %v7193 = vadd.f32 %v7191, %v7192
      %v7194 = vsel %vm1769, %v7147, 0.0
      %v7195 = vadd.f32 %v7193, %v7194
      %v7196 = vsel %vm1769, %v7148, 0.0
      %v7197 = vadd.f32 %v7195, %v7196
      %v7198 = vsel %vm1769, %v7149, 0.0
      %v7199 = vadd.f32 %v7197, %v7198
      %v7200 = vsel %vm1769, %v7150, 0.0
      %v7201 = vadd.f32 %v7199, %v7200
      %v7202 = vsel %vm1769, %v7151, 0.0
      %v7203 = vadd.f32 %v7201, %v7202
      %v7204 = vsel %vm1769, %v7152, 0.0
      %v7205 = vadd.f32 %v7203, %v7204
      %v7206 = vsel %vm1769, %v7153, 0.0
      %v7207 = vadd.f32 %v7205, %v7206
      %v7208 = vsel %vm1769, %v7154, 0.0
      %v7209 = vadd.f32 %v7207, %v7208
      %v7210 = vsel %vm1769, %v7155, 0.0
      %v7211 = vadd.f32 %v7209, %v7210
      %v7212 = vsel %vm1769, %v7156, 0.0
      %v7213 = vadd.f32 %v7211, %v7212
      %v7214 = vsel %vm1769, %v7157, 0.0
      %v7215 = vadd.f32 %v7213, %v7214
      %v7216 = vsel %vm1769, %v7158, 0.0
      %v7217 = vadd.f32 %v7215, %v7216
      %v7218 = vsel %vm1769, %v7159, 0.0
      %v7219 = vadd.f32 %v7217, %v7218
      %v7220 = vsel %vm1769, %v7160, 0.0
      %v7221 = vadd.f32 %v7219, %v7220
      %v7222 = vsel %vm1769, %v7161, 0.0
      %v7223 = vadd.f32 %v7221, %v7222
      %v7224 = vsel %vm1769, %v7162, 0.0
      %v7225 = vadd.f32 %v7223, %v7224
      %7226 = vadd.xlane.f32.xlu0 %v7225
      %v7227 = vpop.xlane.xlu0 %7226
      %v7228 = vrot.slane %v7227, 4
      %v7229 = vadd.f32 %v7227, %v7228
      %v7230 = vrot.slane %v7229, 2
      %v7231 = vadd.f32 %v7229, %v7230
      %v7232 = vrot.slane %v7231, 1
      %v7233 = vadd.f32 %v7231, %v7232
      %s7234 = vtos %v7233
      %v7235 = vstv %s7234
      %7236 = vst [vmem:[%s363] sm:$0xff] %v7235
      %v7237 = vmax.f32 %v3918, 0.0
      %v7238 = vmax.f32 %v3919, 0.0
      %v7239 = vmax.f32 %v3920, 0.0
      %v7240 = vmax.f32 %v3921, 0.0
      %v7241 = vmax.f32 %v3922, 0.0
      %v7242 = vmax.f32 %v3923, 0.0
      %v7243 = vmax.f32 %v3924, 0.0
      %v7244 = vmax.f32 %v3925, 0.0
      %v7245 = vmax.f32 %v3926, 0.0
      %v7246 = vmax.f32 %v3927, 0.0
      %v7247 = vmax.f32 %v3928, 0.0
      %v7248 = vmax.f32 %v3929, 0.0
      %v7249 = vmax.f32 %v3930, 0.0
      %v7250 = vmax.f32 %v3931, 0.0
      %v7251 = vmax.f32 %v3932, 0.0
      %v7252 = vmax.f32 %v3933, 0.0
      %v7253 = vmax.f32 %v3934, 0.0
      %v7254 = vmax.f32 %v3935, 0.0
      %v7255 = vmax.f32 %v3936, 0.0
      %v7256 = vmax.f32 %v3937, 0.0
      %v7257 = vmax.f32 %v3938, 0.0
      %v7258 = vmax.f32 %v3939, 0.0
      %v7259 = vmax.f32 %v3940, 0.0
      %v7260 = vmax.f32 %v3941, 0.0
      %v7261 = vmax.f32 %v3942, 0.0
      %v7262 = vmax.f32 %v3943, 0.0
      %v7263 = vmax.f32 %v3944, 0.0
      %v7264 = vmax.f32 %v3945, 0.0
      %v7265 = vmax.f32 %v3946, 0.0
      %v7266 = vmax.f32 %v3947, 0.0
      %v7267 = vmax.f32 %v3948, 0.0
      %v7268 = vmax.f32 %v3949, 0.0
      %v7269 = vmax.f32 %v7067, 0.0
      %v7270 = vmax.f32 %v7068, 0.0
      %v7271 = vmax.f32 %v7069, 0.0
      %v7272 = vmax.f32 %v7070, 0.0
      %v7273 = vmax.f32 %v7071, 0.0
      %v7274 = vmax.f32 %v7072, 0.0
      %v7275 = vmax.f32 %v7073, 0.0
      %v7276 = vmax.f32 %v7074, 0.0
      %v7277 = vmax.f32 %v7075, 0.0
      %v7278 = vmax.f32 %v7076, 0.0
      %v7279 = vmax.f32 %v7077, 0.0
      %v7280 = vmax.f32 %v7078, 0.0
      %v7281 = vmax.f32 %v7079, 0.0
      %v7282 = vmax.f32 %v7080, 0.0
      %v7283 = vmax.f32 %v7081, 0.0
      %v7284 = vmax.f32 %v7082, 0.0
      %v7285 = vmax.f32 %v7083, 0.0
      %v7286 = vmax.f32 %v7084, 0.0
      %v7287 = vmax.f32 %v7085, 0.0
      %v7288 = vmax.f32 %v7086, 0.0
      %v7289 = vmax.f32 %v7087, 0.0
      %v7290 = vmax.f32 %v7088, 0.0
      %v7291 = vmax.f32 %v7089, 0.0
      %v7292 = vmax.f32 %v7090, 0.0
      %v7293 = vmax.f32 %v7091, 0.0
      %v7294 = vmax.f32 %v7092, 0.0
      %v7295 = vmax.f32 %v7093, 0.0
      %v7296 = vmax.f32 %v7094, 0.0
      %v7297 = vmax.f32 %v7095, 0.0
      %v7298 = vmax.f32 %v7096, 0.0
      %v7299 = vmax.f32 %v7097, 0.0
      %v7300 = vmax.f32 %v7098, 0.0
      %7333 = vrot.lane.b32.xlu0 %v7269, 64
      %v7334 = vpop.permute.xlu0 %7333
      %7335 = vrot.lane.b32.xlu0 %v7270, 64
      %v7336 = vpop.permute.xlu0 %7335
      %7337 = vrot.lane.b32.xlu0 %v7271, 64
      %v7338 = vpop.permute.xlu0 %7337
      %7339 = vrot.lane.b32.xlu0 %v7272, 64
      %v7340 = vpop.permute.xlu0 %7339
      %7341 = vrot.lane.b32.xlu0 %v7273, 64
      %v7342 = vpop.permute.xlu0 %7341
      %7343 = vrot.lane.b32.xlu0 %v7274, 64
      %v7344 = vpop.permute.xlu0 %7343
      %7345 = vrot.lane.b32.xlu0 %v7275, 64
      %v7346 = vpop.permute.xlu0 %7345
      %7347 = vrot.lane.b32.xlu0 %v7276, 64
      %v7348 = vpop.permute.xlu0 %7347
      %7349 = vrot.lane.b32.xlu0 %v7277, 64
      %v7350 = vpop.permute.xlu0 %7349
      %7351 = vrot.lane.b32.xlu0 %v7278, 64
      %v7352 = vpop.permute.xlu0 %7351
      %7353 = vrot.lane.b32.xlu0 %v7279, 64
      %v7354 = vpop.permute.xlu0 %7353
      %7355 = vrot.lane.b32.xlu0 %v7280, 64
      %v7356 = vpop.permute.xlu0 %7355
      %7357 = vrot.lane.b32.xlu0 %v7281, 64
      %v7358 = vpop.permute.xlu0 %7357
      %7359 = vrot.lane.b32.xlu0 %v7282, 64
      %v7360 = vpop.permute.xlu0 %7359
      %7361 = vrot.lane.b32.xlu0 %v7283, 64
      %v7362 = vpop.permute.xlu0 %7361
      %7363 = vrot.lane.b32.xlu0 %v7284, 64
      %v7364 = vpop.permute.xlu0 %7363
      %7365 = vrot.lane.b32.xlu0 %v7285, 64
      %v7366 = vpop.permute.xlu0 %7365
      %7367 = vrot.lane.b32.xlu0 %v7286, 64
      %v7368 = vpop.permute.xlu0 %7367
      %7369 = vrot.lane.b32.xlu0 %v7287, 64
      %v7370 = vpop.permute.xlu0 %7369
      %7371 = vrot.lane.b32.xlu0 %v7288, 64
      %v7372 = vpop.permute.xlu0 %7371
      %7373 = vrot.lane.b32.xlu0 %v7289, 64
      %v7374 = vpop.permute.xlu0 %7373
      %7375 = vrot.lane.b32.xlu0 %v7290, 64
      %v7376 = vpop.permute.xlu0 %7375
      %7377 = vrot.lane.b32.xlu0 %v7291, 64
      %v7378 = vpop.permute.xlu0 %7377
      %7379 = vrot.lane.b32.xlu0 %v7292, 64
      %v7380 = vpop.permute.xlu0 %7379
      %7381 = vrot.lane.b32.xlu0 %v7293, 64
      %v7382 = vpop.permute.xlu0 %7381
      %7383 = vrot.lane.b32.xlu0 %v7294, 64
      %v7384 = vpop.permute.xlu0 %7383
      %7385 = vrot.lane.b32.xlu0 %v7295, 64
      %v7386 = vpop.permute.xlu0 %7385
      %7387 = vrot.lane.b32.xlu0 %v7296, 64
      %v7388 = vpop.permute.xlu0 %7387
      %7389 = vrot.lane.b32.xlu0 %v7297, 64
      %v7390 = vpop.permute.xlu0 %7389
      %7391 = vrot.lane.b32.xlu0 %v7298, 64
      %v7392 = vpop.permute.xlu0 %7391
      %7393 = vrot.lane.b32.xlu0 %v7299, 64
      %v7394 = vpop.permute.xlu0 %7393
      %7395 = vrot.lane.b32.xlu0 %v7300, 64
      %v7396 = vpop.permute.xlu0 %7395
      %v7429 = vsel %vm1769, %v7237, %v7334
      %v7430 = vsel %vm1769, %v7238, %v7336
      %v7431 = vsel %vm1769, %v7239, %v7338
      %v7432 = vsel %vm1769, %v7240, %v7340
      %v7433 = vsel %vm1769, %v7241, %v7342
      %v7434 = vsel %vm1769, %v7242, %v7344
      %v7435 = vsel %vm1769, %v7243, %v7346
      %v7436 = vsel %vm1769, %v7244, %v7348
      %v7437 = vsel %vm1769, %v7245, %v7350
      %v7438 = vsel %vm1769, %v7246, %v7352
      %v7439 = vsel %vm1769, %v7247, %v7354
      %v7440 = vsel %vm1769, %v7248, %v7356
      %v7441 = vsel %vm1769, %v7249, %v7358
      %v7442 = vsel %vm1769, %v7250, %v7360
      %v7443 = vsel %vm1769, %v7251, %v7362
      %v7444 = vsel %vm1769, %v7252, %v7364
      %v7445 = vsel %vm1769, %v7253, %v7366
      %v7446 = vsel %vm1769, %v7254, %v7368
      %v7447 = vsel %vm1769, %v7255, %v7370
      %v7448 = vsel %vm1769, %v7256, %v7372
      %v7449 = vsel %vm1769, %v7257, %v7374
      %v7450 = vsel %vm1769, %v7258, %v7376
      %v7451 = vsel %vm1769, %v7259, %v7378
      %v7452 = vsel %vm1769, %v7260, %v7380
      %v7453 = vsel %vm1769, %v7261, %v7382
      %v7454 = vsel %vm1769, %v7262, %v7384
      %v7455 = vsel %vm1769, %v7263, %v7386
      %v7456 = vsel %vm1769, %v7264, %v7388
      %v7457 = vsel %vm1769, %v7265, %v7390
      %v7458 = vsel %vm1769, %v7266, %v7392
      %v7459 = vsel %vm1769, %v7267, %v7394
      %v7460 = vsel %vm1769, %v7268, %v7396
      %v7461 = vpack.c.bf16 %v7430, %v7429
      %v7462 = vpack.c.bf16 %v7432, %v7431
      %v7463 = vpack.c.bf16 %v7434, %v7433
      %v7464 = vpack.c.bf16 %v7436, %v7435
      %v7465 = vpack.c.bf16 %v7438, %v7437
      %v7466 = vpack.c.bf16 %v7440, %v7439
      %v7467 = vpack.c.bf16 %v7442, %v7441
      %v7468 = vpack.c.bf16 %v7444, %v7443
      %v7469 = vpack.c.bf16 %v7446, %v7445
      %v7470 = vpack.c.bf16 %v7448, %v7447
      %v7471 = vpack.c.bf16 %v7450, %v7449
      %v7472 = vpack.c.bf16 %v7452, %v7451
      %v7473 = vpack.c.bf16 %v7454, %v7453
      %v7474 = vpack.c.bf16 %v7456, %v7455
      %v7475 = vpack.c.bf16 %v7458, %v7457
      %v7476 = vpack.c.bf16 %v7460, %v7459
      %v7493 = vunpack.c.l.b16 %v7461
      %v7494 = vunpack.c.h.b16 %v7461
      %v7495 = vunpack.c.l.b16 %v7462
      %v7496 = vunpack.c.h.b16 %v7462
      %v7497 = vunpack.c.l.b16 %v7463
      %v7498 = vunpack.c.h.b16 %v7463
      %v7499 = vunpack.c.l.b16 %v7464
      %v7500 = vunpack.c.h.b16 %v7464
      %v7501 = vunpack.c.l.b16 %v7465
      %v7502 = vunpack.c.h.b16 %v7465
      %v7503 = vunpack.c.l.b16 %v7466
      %v7504 = vunpack.c.h.b16 %v7466
      %v7505 = vunpack.c.l.b16 %v7467
      %v7506 = vunpack.c.h.b16 %v7467
      %v7507 = vunpack.c.l.b16 %v7468
      %v7508 = vunpack.c.h.b16 %v7468
      %v7509 = vunpack.c.l.b16 %v7469
      %v7510 = vunpack.c.h.b16 %v7469
      %v7511 = vunpack.c.l.b16 %v7470
      %v7512 = vunpack.c.h.b16 %v7470
      %v7513 = vunpack.c.l.b16 %v7471
      %v7514 = vunpack.c.h.b16 %v7471
      %v7515 = vunpack.c.l.b16 %v7472
      %v7516 = vunpack.c.h.b16 %v7472
      %v7517 = vunpack.c.l.b16 %v7473
      %v7518 = vunpack.c.h.b16 %v7473
      %v7519 = vunpack.c.l.b16 %v7474
      %v7520 = vunpack.c.h.b16 %v7474
      %v7521 = vunpack.c.l.b16 %v7475
      %v7522 = vunpack.c.h.b16 %v7475
      %v7523 = vunpack.c.l.b16 %v7476
      %v7524 = vunpack.c.h.b16 %v7476
      %v7525 = vpack.c.b16 %v7493, %v7493
      %v7526 = vpack.c.b16 %v7494, %v7494
      %v7527 = vpack.c.b16 %v7495, %v7495
      %v7528 = vpack.c.b16 %v7496, %v7496
      %v7529 = vpack.c.b16 %v7497, %v7497
      %v7530 = vpack.c.b16 %v7498, %v7498
      %v7531 = vpack.c.b16 %v7499, %v7499
      %v7532 = vpack.c.b16 %v7500, %v7500
      %v7533 = vpack.c.b16 %v7501, %v7501
      %v7534 = vpack.c.b16 %v7502, %v7502
      %v7535 = vpack.c.b16 %v7503, %v7503
      %v7536 = vpack.c.b16 %v7504, %v7504
      %v7537 = vpack.c.b16 %v7505, %v7505
      %v7538 = vpack.c.b16 %v7506, %v7506
      %v7539 = vpack.c.b16 %v7507, %v7507
      %v7540 = vpack.c.b16 %v7508, %v7508
      %v7541 = vpack.c.b16 %v7509, %v7509
      %v7542 = vpack.c.b16 %v7510, %v7510
      %v7543 = vpack.c.b16 %v7511, %v7511
      %v7544 = vpack.c.b16 %v7512, %v7512
      %v7545 = vpack.c.b16 %v7513, %v7513
      %v7546 = vpack.c.b16 %v7514, %v7514
      %v7547 = vpack.c.b16 %v7515, %v7515
      %v7548 = vpack.c.b16 %v7516, %v7516
      %v7549 = vpack.c.b16 %v7517, %v7517
      %v7550 = vpack.c.b16 %v7518, %v7518
      %v7551 = vpack.c.b16 %v7519, %v7519
      %v7552 = vpack.c.b16 %v7520, %v7520
      %v7553 = vpack.c.b16 %v7521, %v7521
      %v7554 = vpack.c.b16 %v7522, %v7522
      %v7555 = vpack.c.b16 %v7523, %v7523
      %v7556 = vpack.c.b16 %v7524, %v7524
      %7589 = vst [vmem:[%s359] sm:$0xf] %v7525
      %7590 = vst [vmem:[%s359 + $0x4] sm:$0xf] %v7526
      %7591 = vst [vmem:[%s359 + $0x8] sm:$0xf] %v7527
      %7592 = vst [vmem:[%s359 + $0xc] sm:$0xf] %v7528
      %7593 = vst [vmem:[%s359 + $0x10] sm:$0xf] %v7529
      %7594 = vst [vmem:[%s359 + $0x14] sm:$0xf] %v7530
      %7595 = vst [vmem:[%s359 + $0x18] sm:$0xf] %v7531
      %7596 = vst [vmem:[%s359 + $0x1c] sm:$0xf] %v7532
      %7597 = vst [vmem:[%s359 + $0x20] sm:$0xf] %v7533
      %7598 = vst [vmem:[%s359 + $0x24] sm:$0xf] %v7534
      %7599 = vst [vmem:[%s359 + $0x28] sm:$0xf] %v7535
      %7600 = vst [vmem:[%s359 + $0x2c] sm:$0xf] %v7536
      %7601 = vst [vmem:[%s359 + $0x30] sm:$0xf] %v7537
      %7602 = vst [vmem:[%s359 + $0x34] sm:$0xf] %v7538
      %7603 = vst [vmem:[%s359 + $0x38] sm:$0xf] %v7539
      %7604 = vst [vmem:[%s359 + $0x3c] sm:$0xf] %v7540
      %7605 = vst [vmem:[%s359 + $0x40] sm:$0xf] %v7541
      %7606 = vst [vmem:[%s359 + $0x44] sm:$0xf] %v7542
      %7607 = vst [vmem:[%s359 + $0x48] sm:$0xf] %v7543
      %7608 = vst [vmem:[%s359 + $0x4c] sm:$0xf] %v7544
      %7609 = vst [vmem:[%s359 + $0x50] sm:$0xf] %v7545
      %7610 = vst [vmem:[%s359 + $0x54] sm:$0xf] %v7546
      %7611 = vst [vmem:[%s359 + $0x58] sm:$0xf] %v7547
      %7612 = vst [vmem:[%s359 + $0x5c] sm:$0xf] %v7548
      %7613 = vst [vmem:[%s359 + $0x60] sm:$0xf] %v7549
      %7614 = vst [vmem:[%s359 + $0x64] sm:$0xf] %v7550
      %7615 = vst [vmem:[%s359 + $0x68] sm:$0xf] %v7551
      %7616 = vst [vmem:[%s359 + $0x6c] sm:$0xf] %v7552
      %7617 = vst [vmem:[%s359 + $0x70] sm:$0xf] %v7553
      %7618 = vst [vmem:[%s359 + $0x74] sm:$0xf] %v7554
      %7619 = vst [vmem:[%s359 + $0x78] sm:$0xf] %v7555
      %7620 = vst [vmem:[%s359 + $0x7c] sm:$0xf] %v7556
      %p7621 = scmp.lt.s32.totalorder %s21, 1
      %s7622 = scalar_select %p7621, %s21, 1
      %s7623 = smul.addr %s7622, 32
      %s7624 = smul.addr %s7623, 4
      %s7625 = scalar_lea.vmem %s8, %s7624
      %p7626 = scmp.lt.s32.totalorder %s21, 1
      %s7627 = scalar_select %p7626, %s21, 1
      %s7628 = smul.addr %s7627, 8
      %s7629 = scalar_lea.vmem %s9, %s7628
      // Predicated region
      $region53: #{_lambda_.2} parent=51 // pred_check
        %p7630 = pneg %p217
      $region54: #{_lambda_.2} parent=51 // pred_check_branch
        %7632 = sbr.rel (%p7630) target = $region56
      $region55: #{_lambda_.2} parent=51 // pred_region
        _
      $region56: #{_lambda_.2} parent=51 // pred_fallthru
        _
      // Predicated region
      $region57: #{_lambda_.2} parent=51 // pred_check
        %p7633 = pneg %p243
      $region58: #{_lambda_.2} parent=51 // pred_check_branch
        %7635 = sbr.rel (%p7633) target = $region60
      $region59: #{_lambda_.2} parent=51 // pred_region
        _
      $region60: #{_lambda_.2} parent=51 // pred_fallthru
        _
    $region52: #{_lambda_.2} parent=5 // pred_fallthru
      _
    %p7636 = scmp.le.s32.totalorder 2, %s16
    // Predicated region
    $region61: #{_lambda_.2} parent=5 // pred_check
      %p7637 = pneg %p7636
    $region62: #{_lambda_.2} parent=5 // pred_check_branch
      %7639 = sbr.rel (%p7637) target = $region64
    $region63: #{_lambda_.2} parent=5 // pred_region
      %s7640 = ssub.s32 %s16, 2
      // Predicated region
      $region65: #{_lambda_.2} parent=63 // pred_check
        %p7641 = pneg %p223
      $region66: #{_lambda_.2} parent=63 // pred_check_branch
        %7643 = sbr.rel (%p7641) target = $region68
      $region67: #{_lambda_.2} parent=63 // pred_region
        %p7644 = scmp.lt.s32.totalorder %s22, 1
        %s7645 = scalar_select %p7644, %s22, 1
        %s7646 = smul.addr %s7645, 32
        %s7647 = smul.addr %s7646, 4
        %s7648 = scalar_lea.vmem %s8, %s7647
      $region68: #{_lambda_.2} parent=63 // pred_fallthru
        _
      // Predicated region
      $region69: #{_lambda_.2} parent=63 // pred_check
        %p7649 = pneg %p249
      $region70: #{_lambda_.2} parent=63 // pred_check_branch
        %7651 = sbr.rel (%p7649) target = $region72
      $region71: #{_lambda_.2} parent=63 // pred_region
        %p7652 = scmp.lt.s32.totalorder %s22, 1
        %s7653 = scalar_select %p7652, %s22, 1
        %s7654 = smul.addr %s7653, 8
        %s7655 = scalar_lea.vmem %s9, %s7654
      $region72: #{_lambda_.2} parent=63 // pred_fallthru
        _
    $region64: #{_lambda_.2} parent=5 // pred_fallthru
      _
  $region6: #{_lambda_.2} parent=0 // loop_footer
    %s20 = sadd.s32 1, %s16
  $region7: #{_lambda_.2} parent=0 // loop_footer_branch
    %15 = sbr.rel target = $region3
  $region8: #{_lambda_.2} parent=0 // loop_exit
    _

</llo_original>
